<compile_context>
chip_gen: v6e
topology: v6e:2x2x1
jax: 0.10.0
libtpu: 0.0.40
codegen_flags: <defaults>
</compile_context>

<pallas_src>
import functools

import jax
import jax.numpy as jnp
from jax.experimental import pallas as pl
from jax.experimental.pallas import tpu as pltpu

C_FEAT = 960   # MobileViTv3-S final feature channels
D_OUT = 4      # projection width of self.W


def head_kernel(feat_ref, w_ref, out_ref, acc_ref, *, hw_total, tile_hw):
    """Grid = (batch tiles [parallel], spatial tiles [arbitrary reduction]).

    feat_ref: (b_tile, C, tile_hw)  channels on sublanes, spatial on lanes
    w_ref:    (C, D_OUT)            projection matrix (block fixed -> resident)
    out_ref:  (b_tile, D_OUT)       logits for this batch tile (written once)
    acc_ref:  (b_tile, C) f32 VMEM  running spatial sum for this batch tile
    """
    k = pl.program_id(1)
    last = pl.num_programs(1) - 1

    @pl.when(k == 0)
    def _init():
        acc_ref[...] = jnp.zeros_like(acc_ref)

    feat = feat_ref[...].astype(jnp.float32)               # (b_tile, C, tile_hw)

    rem = hw_total % tile_hw
    if rem == 0:
        # Every tile is full: no masking anywhere.
        acc_ref[...] += jnp.sum(feat, axis=-1)
    else:
        # Steady state: unmasked cross-lane sum (XLU) — free filler while the
        # next tile's DMA streams in.
        @pl.when(k < last)
        def _steady():
            acc_ref[...] += jnp.sum(feat, axis=-1)

        # Last (partial) tile only: static (1, 1, tile_hw) lane mask broadcast
        # in the where, so padded lanes never pollute the mean.
        @pl.when(k == last)
        def _tail():
            lane = jax.lax.broadcasted_iota(jnp.int32, (1, 1, tile_hw), 2)
            masked = jnp.where(lane < rem, feat, 0.0)
            acc_ref[...] += jnp.sum(masked, axis=-1)

    @pl.when(k == last)
    def _finalize():
        # AdaptiveAvgPool2d(1): one scale by 1/HW at the end, not per tile.
        pooled = acc_ref[...] * (1.0 / hw_total)            # (b_tile, C)
        # squeeze() + torch.mm(x, W)  — tiny one-shot MXU matmul, not a bottleneck.
        out_ref[...] = jnp.dot(
            pooled, w_ref[...], preferred_element_type=jnp.float32
        ).astype(out_ref.dtype)


def _vmem_budget():
    """Returns (double-buffered-input budget bytes, explicit scoped-VMEM limit)."""
    phys = 64 << 20                      # assume the tightest generation (v7x) if unknown
    try:
        info = pltpu.get_tpu_info()
        phys = int(getattr(info, "vmem_capacity_bytes", phys)) or phys
    except Exception:
        pass
    # Allow the double-buffered feature block up to ~1/3 of physical VMEM,
    # capped at 24 MiB (v5e/v6e have 128 MiB physical; v7x only 64 MiB).
    budget = max(6 << 20, min(24 << 20, phys // 3))
    # Explicit scoped limit: input budget + W/out/acc + generous headroom.
    vmem_limit = min(phys - (8 << 20), budget + (8 << 20))
    return budget, vmem_limit


def _pick_tiles(B, C, hw, itemsize):
    """Pick (b_tile, tile_hw, vmem_limit) so double-buffered input fits VMEM."""
    budget, vmem_limit = _vmem_budget()

    def block_bytes(bt, thw):
        return 2 * bt * C * thw * itemsize      # double-buffered feature block

    # --- spatial tile --------------------------------------------------------
    if hw <= 512:
        tile_hw = hw                            # single full-extent step
    else:
        # Largest 128-multiple such that even a b_tile=1 block fits the budget,
        # capped at 2048 lanes per step.
        tile_hw = budget // (2 * C * itemsize)
        tile_hw = max(128, min(2048, (tile_hw // 128) * 128))
        if tile_hw >= hw:                       # whole map fits in one step
            tile_hw = hw

    # --- batch tile ----------------------------------------------------------
    # Largest divisor of B whose double-buffered block respects the budget
    # (fixes the old floor that could silently exceed VMEM for large B).
    b_tile = B
    while b_tile > 1 and block_bytes(b_tile, tile_hw) > budget:
        b_tile = max(d for d in range(1, b_tile) if B % d == 0)

    # Use both v7x TensorCores when the workload is big enough to amortize it.
    total_bytes = B * C * hw * itemsize
    if total_bytes > (4 << 20) and b_tile == B and B % 2 == 0:
        b_tile = B // 2

    return b_tile, tile_hw, vmem_limit


def encoder_head(feat_nchw, W, *, force_tiles=None):
    """feat_nchw: (B, C_FEAT, H, W) backbone features (NCHW, f32 or bf16).
       W:         (C_FEAT, D_OUT) projection.
       returns    (B, D_OUT) — matches Encoder.forward output."""
    B, C, H, Wd = feat_nchw.shape
    assert C == C_FEAT and W.shape == (C_FEAT, D_OUT)
    HW = H * Wd

    # NCHW -> (B, C, HW): pure reshape of the native layout — no transpose,
    # no extra HBM pass.
    feat = feat_nchw.reshape(B, C, HW)

    b_tile, tile_hw, vmem_limit = _pick_tiles(B, C, HW, feat.dtype.itemsize)
    if force_tiles is not None:          # test hook: exercise tiled paths at small shapes
        b_tile, tile_hw = force_tiles
    assert B % b_tile == 0

    num_b = B // b_tile
    num_hw = pl.cdiv(HW, tile_hw)

    kernel = functools.partial(head_kernel, hw_total=HW, tile_hw=tile_hw)

    # NOTE: if a trace ever shows exposed DMA between spatial steps on v7x,
    # pipeline_mode=pl.Buffered(3) on the feature BlockSpec is the next knob.
    return pl.pallas_call(
        kernel,
        out_shape=jax.ShapeDtypeStruct((B, D_OUT), jnp.float32),
        grid_spec=pltpu.PrefetchScalarGridSpec(
            num_scalar_prefetch=0,
            grid=(num_b, num_hw),                # (batch parallel, HW reduction)
            in_specs=[
                pl.BlockSpec((b_tile, C, tile_hw), lambda b, k: (b, 0, k)),
                pl.BlockSpec((C, D_OUT), lambda b, k: (0, 0)),   # W resident
            ],
            out_specs=pl.BlockSpec((b_tile, D_OUT), lambda b, k: (b, 0)),
            scratch_shapes=[pltpu.VMEM((b_tile, C_FEAT), jnp.float32)],
        ),
        compiler_params=pltpu.CompilerParams(
            dimension_semantics=("parallel", "arbitrary"),
            vmem_limit_bytes=int(vmem_limit),
        ),
    )(feat, W)


if __name__ == "__main__":
    key = jax.random.PRNGKey(0)
    k_feat, k_w, k_feat2 = jax.random.split(key, 3)

    # nn.init.xavier_normal_(W, gain=1): std = sqrt(2 / (fan_in + fan_out))
    xavier_std = (2.0 / (C_FEAT + D_OUT)) ** 0.5
    W = xavier_std * jax.random.normal(k_w, (C_FEAT, D_OUT), dtype=jnp.float32)

    # Case 1: small map, single grid step, f32 features (matches module's test-time use).
    B, H, Wd = 2, 8, 8
    feat = jax.random.normal(k_feat, (B, C_FEAT, H, Wd), dtype=jnp.float32)
    out = jax.block_until_ready(encoder_head(feat, W))
    ref = jnp.mean(feat, axis=(2, 3)) @ W                      # pool -> squeeze -> mm
    assert out.shape == (B, D_OUT)
    assert jnp.allclose(out, ref, atol=1e-4, rtol=1e-4)

    # Case 2: exercise the tiled reduction path (partial last spatial tile,
    # batch-tiled "parallel" axis) with bf16 features, via forced small tiles.
    H2, Wd2 = 8, 20                                            # HW = 160 -> tiles 128 + 32
    feat2 = jax.random.normal(
        k_feat2, (B, C_FEAT, H2, Wd2), dtype=jnp.float32).astype(jnp.bfloat16)
    out2 = jax.block_until_ready(encoder_head(feat2, W, force_tiles=(1, 128)))
    ref2 = jnp.mean(feat2.astype(jnp.float32), axis=(2, 3)) @ W
    assert jnp.allclose(out2, ref2, atol=1e-3, rtol=1e-3)

    print("KERNEL_OK")
</pallas_src>

<mosaic_0001>
module attributes {stable_mosaic.version = 11 : i64} {
  func.func @head_kernel(%arg0: i32, %arg1: i32, %arg2: memref<2x960x64xf32, #tpu.memory_space<vmem>>, %arg3: memref<960x4xf32, #tpu.memory_space<vmem>>, %arg4: memref<2x4xf32, #tpu.memory_space<vmem>>, %arg5: memref<2x960xf32, #tpu.memory_space<vmem>>) attributes {dimension_semantics = [#tpu.dimension_semantics<parallel>, #tpu.dimension_semantics<arbitrary>], iteration_bounds = array<i64: 1, 1>, scalar_prefetch = 0 : i64, scratch_operands = 1 : i64, tpu.core_type = #tpu.core_type<tc>, window_params = [{transform_indices = @transform_0, window_bounds = array<i64: 2, 960, 64>}, {pipeline_mode = #tpu.pipeline_mode<synchronous>, transform_indices = @transform_1, window_bounds = array<i64: 960, 4>}, {transform_indices = @transform_2, window_bounds = array<i64: 2, 4>}]} {
    %c0_i32 = arith.constant 0 : i32
    %0 = arith.cmpi eq, %arg1, %c0_i32 : i32
    %1 = arith.extui %0 : i1 to i32
    %c0_i32_0 = arith.constant 0 : i32
    %2 = arith.cmpi ne, %1, %c0_i32_0 : i32
    scf.if %2 {
      %cst_9 = arith.constant 0.000000e+00 : f32
      %11 = vector.broadcast %cst_9 : f32 to vector<2x960xf32>
      %c0_10 = arith.constant 0 : index
      %c0_11 = arith.constant 0 : index
      %12 = vector.load %arg5[%c0_10, %c0_11] : memref<2x960xf32, #tpu.memory_space<vmem>>, vector<2x960xf32>
      tpu.vector_store %arg5[%c0_10, %c0_11], %11 {strides = array<i32>} : memref<2x960xf32, #tpu.memory_space<vmem>>, vector<2x960xf32>,
    } else {
    }
    %c0 = arith.constant 0 : index
    %c0_1 = arith.constant 0 : index
    %c0_2 = arith.constant 0 : index
    %3 = vector.load %arg2[%c0, %c0_1, %c0_2] : memref<2x960x64xf32, #tpu.memory_space<vmem>>, vector<2x960x64xf32>
    %c0_3 = arith.constant 0 : index
    %c0_4 = arith.constant 0 : index
    %4 = vector.load %arg5[%c0_3, %c0_4] : memref<2x960xf32, #tpu.memory_space<vmem>>, vector<2x960xf32>
    %cst = arith.constant dense<0.000000e+00> : vector<2x960xf32>
    %5 = vector.multi_reduction <add>, %3, %cst [2] : vector<2x960x64xf32> to vector<2x960xf32>
    %6 = arith.addf %4, %5 : vector<2x960xf32>
    %c0_5 = arith.constant 0 : index
    %c0_6 = arith.constant 0 : index
    %7 = vector.load %arg5[%c0_5, %c0_6] : memref<2x960xf32, #tpu.memory_space<vmem>>, vector<2x960xf32>
    tpu.vector_store %arg5[%c0_5, %c0_6], %6 {strides = array<i32>} : memref<2x960xf32, #tpu.memory_space<vmem>>, vector<2x960xf32>,
    %c0_i32_7 = arith.constant 0 : i32
    %8 = arith.cmpi eq, %arg1, %c0_i32_7 : i32
    %9 = arith.extui %8 : i1 to i32
    %c0_i32_8 = arith.constant 0 : i32
    %10 = arith.cmpi ne, %9, %c0_i32_8 : i32
    scf.if %10 {
      %c0_9 = arith.constant 0 : index
      %c0_10 = arith.constant 0 : index
      %11 = vector.load %arg5[%c0_9, %c0_10] : memref<2x960xf32, #tpu.memory_space<vmem>>, vector<2x960xf32>
      %cst_11 = arith.constant 1.562500e-02 : f32
      %12 = vector.broadcast %cst_11 : f32 to vector<2x960xf32>
      %13 = arith.mulf %11, %12 : vector<2x960xf32>
      %c0_12 = arith.constant 0 : index
      %c0_13 = arith.constant 0 : index
      %14 = vector.load %arg3[%c0_12, %c0_13] : memref<960x4xf32, #tpu.memory_space<vmem>>, vector<960x4xf32>
      %cst_14 = arith.constant dense<0.000000e+00> : vector<2x4xf32>
      %15 = tpu.matmul %13, %14, %cst_14 {dimension_numbers = #tpu.dot_dimension_numbers<[1], [0], [0], [1], [0, 0, 1, 1], [], []>} : vector<2x960xf32>, vector<960x4xf32>, vector<2x4xf32> -> vector<2x4xf32>
      %c0_15 = arith.constant 0 : index
      %c0_16 = arith.constant 0 : index
      %16 = vector.load %arg4[%c0_15, %c0_16] : memref<2x4xf32, #tpu.memory_space<vmem>>, vector<2x4xf32>
      tpu.vector_store %arg4[%c0_15, %c0_16], %15 {strides = array<i32>} : memref<2x4xf32, #tpu.memory_space<vmem>>, vector<2x4xf32>,
    } else {
    }
    return
  }
  func.func @transform_0(%arg0: i32, %arg1: i32) -> (i32, i32, i32) {
    %c0_i32 = arith.constant 0 : i32
    %c0_i32_0 = arith.constant 0 : i32
    return %arg0, %c0_i32, %arg1 : i32, i32, i32
  }
  func.func @transform_1(%arg0: i32, %arg1: i32) -> (i32, i32) {
    %c0_i32 = arith.constant 0 : i32
    %c0_i32_0 = arith.constant 0 : i32
    %c0_i32_1 = arith.constant 0 : i32
    return %c0_i32, %c0_i32_0 : i32, i32
  }
  func.func @transform_2(%arg0: i32, %arg1: i32) -> (i32, i32) {
    %c0_i32 = arith.constant 0 : i32
    %c0_i32_0 = arith.constant 0 : i32
    return %arg0, %c0_i32 : i32, i32
  }
}

</mosaic_0001>

<llo_original>
// kernel: tpu_custom_call.1
$region0: #{tpu_custom_call.1}
  #allocation0 [shape = 'u32[]', space=smem, size = 0x4, offset = 0x4, fixed_abs, tag = 'smem constant byte address 0x4 - core index']
  #allocation1 [shape = 'u32[144,128]{1,0:T(1,128)}', space=vmem, size = 0x12000, scoped, tag = 'internal scratch']
  #allocation2 [shape = 'f32[2,960]{1,0:T(2,128)}', space=vmem, size = 0x2000, scoped, tag = 'scratch operand']
  %s0 = inlined_call_operand.vmem [shape: f32[2,960,64], index: 0, kind: input, shape index: {}]
  %s1 = inlined_call_operand.vmem [shape: f32[960,4], index: 1, kind: input, shape index: {}]
  %s2 = inlined_call_operand.hbm [shape: f32[2,4], index: 2, kind: output, shape index: {}]
  %s3 = sld [smem:[#allocation0]]
  $region26: #{tpu_custom_call.1} parent=0
    _
  %s5 = ssub.s32 1, %s3
  %s6 = scalar_select 0, %s5, %s3
  $region1: #{tpu_custom_call.1} parent=0
    #allocation3 [shape = 'u8[1024]{0}', space=vmem, size = 0x400, scoped, tag = 'output window, operand 0, single buffered']
    #allocation4 [shape = 's32[1]{0}', space=sflag, size = 0x4, scoped, tag = 'scoped memory for tpu_custom_call.1']
    %7 = vsyncpa [#allocation4], 0
    // Predicated region
    $region2: #{tpu_custom_call.1} parent=1 // pred_check
      _
    $region3: #{tpu_custom_call.1} parent=1 // pred_check_branch
      %9 = sbr.rel (0) target = $region5
    $region4: #{tpu_custom_call.1} parent=1 // pred_region
      _
    $region5: #{tpu_custom_call.1} parent=1 // pred_fallthru
      _
    // Predicated region
    $region6: #{tpu_custom_call.1} parent=1 // pred_check
      _
    $region7: #{tpu_custom_call.1} parent=1 // pred_check_branch
      %11 = sbr.rel (0) target = $region9
    $region8: #{tpu_custom_call.1} parent=1 // pred_region
      _
    $region9: #{tpu_custom_call.1} parent=1 // pred_fallthru
      _
    %p12 = scmp.eq.s32.totalorder 0, 0
    // Predicated region
    $region10: #{tpu_custom_call.1} parent=1 // pred_check
      %p13 = pneg %p12
    $region11: #{tpu_custom_call.1} parent=1 // pred_check_branch
      %15 = sbr.rel (%p13) target = $region13
    $region12: #{tpu_custom_call.1} parent=1 // pred_region
      %16 = vst [vmem:[#allocation2] sm:$0xff] 0.0
      %vm17 = vcmask 1041408
      %vm18 = vcmask 1043458
      %vm19 = vmor %vm18, %vm17
      %vm20 = vcmask 1045508
      %vm21 = vmor %vm20, %vm19
      %vm22 = vcmask 523270
      %vm23 = vmor %vm22, %vm21
      %24 = vst.msk [vmem:[#allocation2 + $0x8] sm:$0xff] %vm23, 0.0
    $region13: #{tpu_custom_call.1} parent=1 // pred_fallthru
      _
    %v25 = vld [vmem:[%s0] sm:$0xff]
    %v26 = vld [vmem:[%s0 + $0x8] sm:$0xff]
    %v27 = vld [vmem:[%s0 + $0x10] sm:$0xff]
    %v28 = vld [vmem:[%s0 + $0x18] sm:$0xff]
    %v29 = vld [vmem:[%s0 + $0x20] sm:$0xff]
    %v30 = vld [vmem:[%s0 + $0x28] sm:$0xff]
    %v31 = vld [vmem:[%s0 + $0x30] sm:$0xff]
    %v32 = vld [vmem:[%s0 + $0x38] sm:$0xff]
    %v33 = vld [vmem:[%s0 + $0x40] sm:$0xff]
    %v34 = vld [vmem:[%s0 + $0x48] sm:$0xff]
    %v35 = vld [vmem:[%s0 + $0x50] sm:$0xff]
    %v36 = vld [vmem:[%s0 + $0x58] sm:$0xff]
    %v37 = vld [vmem:[%s0 + $0x60] sm:$0xff]
    %v38 = vld [vmem:[%s0 + $0x68] sm:$0xff]
    %v39 = vld [vmem:[%s0 + $0x70] sm:$0xff]
    %v40 = vld [vmem:[%s0 + $0x78] sm:$0xff]
    %v41 = vld [vmem:[%s0 + $0x80] sm:$0xff]
    %v42 = vld [vmem:[%s0 + $0x88] sm:$0xff]
    %v43 = vld [vmem:[%s0 + $0x90] sm:$0xff]
    %v44 = vld [vmem:[%s0 + $0x98] sm:$0xff]
    %v45 = vld [vmem:[%s0 + $0xa0] sm:$0xff]
    %v46 = vld [vmem:[%s0 + $0xa8] sm:$0xff]
    %v47 = vld [vmem:[%s0 + $0xb0] sm:$0xff]
    %v48 = vld [vmem:[%s0 + $0xb8] sm:$0xff]
    %v49 = vld [vmem:[%s0 + $0xc0] sm:$0xff]
    %v50 = vld [vmem:[%s0 + $0xc8] sm:$0xff]
    %v51 = vld [vmem:[%s0 + $0xd0] sm:$0xff]
    %v52 = vld [vmem:[%s0 + $0xd8] sm:$0xff]
    %v53 = vld [vmem:[%s0 + $0xe0] sm:$0xff]
    %v54 = vld [vmem:[%s0 + $0xe8] sm:$0xff]
    %v55 = vld [vmem:[%s0 + $0xf0] sm:$0xff]
    %v56 = vld [vmem:[%s0 + $0xf8] sm:$0xff]
    %v57 = vld [vmem:[%s0 + $0x100] sm:$0xff]
    %v58 = vld [vmem:[%s0 + $0x108] sm:$0xff]
    %v59 = vld [vmem:[%s0 + $0x110] sm:$0xff]
    %v60 = vld [vmem:[%s0 + $0x118] sm:$0xff]
    %v61 = vld [vmem:[%s0 + $0x120] sm:$0xff]
    %v62 = vld [vmem:[%s0 + $0x128] sm:$0xff]
    %v63 = vld [vmem:[%s0 + $0x130] sm:$0xff]
    %v64 = vld [vmem:[%s0 + $0x138] sm:$0xff]
    %v65 = vld [vmem:[%s0 + $0x140] sm:$0xff]
    %v66 = vld [vmem:[%s0 + $0x148] sm:$0xff]
    %v67 = vld [vmem:[%s0 + $0x150] sm:$0xff]
    %v68 = vld [vmem:[%s0 + $0x158] sm:$0xff]
    %v69 = vld [vmem:[%s0 + $0x160] sm:$0xff]
    %v70 = vld [vmem:[%s0 + $0x168] sm:$0xff]
    %v71 = vld [vmem:[%s0 + $0x170] sm:$0xff]
    %v72 = vld [vmem:[%s0 + $0x178] sm:$0xff]
    %v73 = vld [vmem:[%s0 + $0x180] sm:$0xff]
    %v74 = vld [vmem:[%s0 + $0x188] sm:$0xff]
    %v75 = vld [vmem:[%s0 + $0x190] sm:$0xff]
    %v76 = vld [vmem:[%s0 + $0x198] sm:$0xff]
    %v77 = vld [vmem:[%s0 + $0x1a0] sm:$0xff]
    %v78 = vld [vmem:[%s0 + $0x1a8] sm:$0xff]
    %v79 = vld [vmem:[%s0 + $0x1b0] sm:$0xff]
    %v80 = vld [vmem:[%s0 + $0x1b8] sm:$0xff]
    %v81 = vld [vmem:[%s0 + $0x1c0] sm:$0xff]
    %v82 = vld [vmem:[%s0 + $0x1c8] sm:$0xff]
    %v83 = vld [vmem:[%s0 + $0x1d0] sm:$0xff]
    %v84 = vld [vmem:[%s0 + $0x1d8] sm:$0xff]
    %v85 = vld [vmem:[%s0 + $0x1e0] sm:$0xff]
    %v86 = vld [vmem:[%s0 + $0x1e8] sm:$0xff]
    %v87 = vld [vmem:[%s0 + $0x1f0] sm:$0xff]
    %v88 = vld [vmem:[%s0 + $0x1f8] sm:$0xff]
    %v89 = vld [vmem:[%s0 + $0x200] sm:$0xff]
    %v90 = vld [vmem:[%s0 + $0x208] sm:$0xff]
    %v91 = vld [vmem:[%s0 + $0x210] sm:$0xff]
    %v92 = vld [vmem:[%s0 + $0x218] sm:$0xff]
    %v93 = vld [vmem:[%s0 + $0x220] sm:$0xff]
    %v94 = vld [vmem:[%s0 + $0x228] sm:$0xff]
    %v95 = vld [vmem:[%s0 + $0x230] sm:$0xff]
    %v96 = vld [vmem:[%s0 + $0x238] sm:$0xff]
    %v97 = vld [vmem:[%s0 + $0x240] sm:$0xff]
    %v98 = vld [vmem:[%s0 + $0x248] sm:$0xff]
    %v99 = vld [vmem:[%s0 + $0x250] sm:$0xff]
    %v100 = vld [vmem:[%s0 + $0x258] sm:$0xff]
    %v101 = vld [vmem:[%s0 + $0x260] sm:$0xff]
    %v102 = vld [vmem:[%s0 + $0x268] sm:$0xff]
    %v103 = vld [vmem:[%s0 + $0x270] sm:$0xff]
    %v104 = vld [vmem:[%s0 + $0x278] sm:$0xff]
    %v105 = vld [vmem:[%s0 + $0x280] sm:$0xff]
    %v106 = vld [vmem:[%s0 + $0x288] sm:$0xff]
    %v107 = vld [vmem:[%s0 + $0x290] sm:$0xff]
    %v108 = vld [vmem:[%s0 + $0x298] sm:$0xff]
    %v109 = vld [vmem:[%s0 + $0x2a0] sm:$0xff]
    %v110 = vld [vmem:[%s0 + $0x2a8] sm:$0xff]
    %v111 = vld [vmem:[%s0 + $0x2b0] sm:$0xff]
    %v112 = vld [vmem:[%s0 + $0x2b8] sm:$0xff]
    %v113 = vld [vmem:[%s0 + $0x2c0] sm:$0xff]
    %v114 = vld [vmem:[%s0 + $0x2c8] sm:$0xff]
    %v115 = vld [vmem:[%s0 + $0x2d0] sm:$0xff]
    %v116 = vld [vmem:[%s0 + $0x2d8] sm:$0xff]
    %v117 = vld [vmem:[%s0 + $0x2e0] sm:$0xff]
    %v118 = vld [vmem:[%s0 + $0x2e8] sm:$0xff]
    %v119 = vld [vmem:[%s0 + $0x2f0] sm:$0xff]
    %v120 = vld [vmem:[%s0 + $0x2f8] sm:$0xff]
    %v121 = vld [vmem:[%s0 + $0x300] sm:$0xff]
    %v122 = vld [vmem:[%s0 + $0x308] sm:$0xff]
    %v123 = vld [vmem:[%s0 + $0x310] sm:$0xff]
    %v124 = vld [vmem:[%s0 + $0x318] sm:$0xff]
    %v125 = vld [vmem:[%s0 + $0x320] sm:$0xff]
    %v126 = vld [vmem:[%s0 + $0x328] sm:$0xff]
    %v127 = vld [vmem:[%s0 + $0x330] sm:$0xff]
    %v128 = vld [vmem:[%s0 + $0x338] sm:$0xff]
    %v129 = vld [vmem:[%s0 + $0x340] sm:$0xff]
    %v130 = vld [vmem:[%s0 + $0x348] sm:$0xff]
    %v131 = vld [vmem:[%s0 + $0x350] sm:$0xff]
    %v132 = vld [vmem:[%s0 + $0x358] sm:$0xff]
    %v133 = vld [vmem:[%s0 + $0x360] sm:$0xff]
    %v134 = vld [vmem:[%s0 + $0x368] sm:$0xff]
    %v135 = vld [vmem:[%s0 + $0x370] sm:$0xff]
    %v136 = vld [vmem:[%s0 + $0x378] sm:$0xff]
    %v137 = vld [vmem:[%s0 + $0x380] sm:$0xff]
    %v138 = vld [vmem:[%s0 + $0x388] sm:$0xff]
    %v139 = vld [vmem:[%s0 + $0x390] sm:$0xff]
    %v140 = vld [vmem:[%s0 + $0x398] sm:$0xff]
    %v141 = vld [vmem:[%s0 + $0x3a0] sm:$0xff]
    %v142 = vld [vmem:[%s0 + $0x3a8] sm:$0xff]
    %v143 = vld [vmem:[%s0 + $0x3b0] sm:$0xff]
    %v144 = vld [vmem:[%s0 + $0x3b8] sm:$0xff]
    %v145 = vld [vmem:[%s0 + $0x3c0] sm:$0xff]
    %v146 = vld [vmem:[%s0 + $0x3c8] sm:$0xff]
    %v147 = vld [vmem:[%s0 + $0x3d0] sm:$0xff]
    %v148 = vld [vmem:[%s0 + $0x3d8] sm:$0xff]
    %v149 = vld [vmem:[%s0 + $0x3e0] sm:$0xff]
    %v150 = vld [vmem:[%s0 + $0x3e8] sm:$0xff]
    %v151 = vld [vmem:[%s0 + $0x3f0] sm:$0xff]
    %v152 = vld [vmem:[%s0 + $0x3f8] sm:$0xff]
    %v153 = vld [vmem:[%s0 + $0x400] sm:$0xff]
    %v154 = vld [vmem:[%s0 + $0x408] sm:$0xff]
    %v155 = vld [vmem:[%s0 + $0x410] sm:$0xff]
    %v156 = vld [vmem:[%s0 + $0x418] sm:$0xff]
    %v157 = vld [vmem:[%s0 + $0x420] sm:$0xff]
    %v158 = vld [vmem:[%s0 + $0x428] sm:$0xff]
    %v159 = vld [vmem:[%s0 + $0x430] sm:$0xff]
    %v160 = vld [vmem:[%s0 + $0x438] sm:$0xff]
    %v161 = vld [vmem:[%s0 + $0x440] sm:$0xff]
    %v162 = vld [vmem:[%s0 + $0x448] sm:$0xff]
    %v163 = vld [vmem:[%s0 + $0x450] sm:$0xff]
    %v164 = vld [vmem:[%s0 + $0x458] sm:$0xff]
    %v165 = vld [vmem:[%s0 + $0x460] sm:$0xff]
    %v166 = vld [vmem:[%s0 + $0x468] sm:$0xff]
    %v167 = vld [vmem:[%s0 + $0x470] sm:$0xff]
    %v168 = vld [vmem:[%s0 + $0x478] sm:$0xff]
    %v169 = vld [vmem:[%s0 + $0x480] sm:$0xff]
    %v170 = vld [vmem:[%s0 + $0x488] sm:$0xff]
    %v171 = vld [vmem:[%s0 + $0x490] sm:$0xff]
    %v172 = vld [vmem:[%s0 + $0x498] sm:$0xff]
    %v173 = vld [vmem:[%s0 + $0x4a0] sm:$0xff]
    %v174 = vld [vmem:[%s0 + $0x4a8] sm:$0xff]
    %v175 = vld [vmem:[%s0 + $0x4b0] sm:$0xff]
    %v176 = vld [vmem:[%s0 + $0x4b8] sm:$0xff]
    %v177 = vld [vmem:[%s0 + $0x4c0] sm:$0xff]
    %v178 = vld [vmem:[%s0 + $0x4c8] sm:$0xff]
    %v179 = vld [vmem:[%s0 + $0x4d0] sm:$0xff]
    %v180 = vld [vmem:[%s0 + $0x4d8] sm:$0xff]
    %v181 = vld [vmem:[%s0 + $0x4e0] sm:$0xff]
    %v182 = vld [vmem:[%s0 + $0x4e8] sm:$0xff]
    %v183 = vld [vmem:[%s0 + $0x4f0] sm:$0xff]
    %v184 = vld [vmem:[%s0 + $0x4f8] sm:$0xff]
    %v185 = vld [vmem:[%s0 + $0x500] sm:$0xff]
    %v186 = vld [vmem:[%s0 + $0x508] sm:$0xff]
    %v187 = vld [vmem:[%s0 + $0x510] sm:$0xff]
    %v188 = vld [vmem:[%s0 + $0x518] sm:$0xff]
    %v189 = vld [vmem:[%s0 + $0x520] sm:$0xff]
    %v190 = vld [vmem:[%s0 + $0x528] sm:$0xff]
    %v191 = vld [vmem:[%s0 + $0x530] sm:$0xff]
    %v192 = vld [vmem:[%s0 + $0x538] sm:$0xff]
    %v193 = vld [vmem:[%s0 + $0x540] sm:$0xff]
    %v194 = vld [vmem:[%s0 + $0x548] sm:$0xff]
    %v195 = vld [vmem:[%s0 + $0x550] sm:$0xff]
    %v196 = vld [vmem:[%s0 + $0x558] sm:$0xff]
    %v197 = vld [vmem:[%s0 + $0x560] sm:$0xff]
    %v198 = vld [vmem:[%s0 + $0x568] sm:$0xff]
    %v199 = vld [vmem:[%s0 + $0x570] sm:$0xff]
    %v200 = vld [vmem:[%s0 + $0x578] sm:$0xff]
    %v201 = vld [vmem:[%s0 + $0x580] sm:$0xff]
    %v202 = vld [vmem:[%s0 + $0x588] sm:$0xff]
    %v203 = vld [vmem:[%s0 + $0x590] sm:$0xff]
    %v204 = vld [vmem:[%s0 + $0x598] sm:$0xff]
    %v205 = vld [vmem:[%s0 + $0x5a0] sm:$0xff]
    %v206 = vld [vmem:[%s0 + $0x5a8] sm:$0xff]
    %v207 = vld [vmem:[%s0 + $0x5b0] sm:$0xff]
    %v208 = vld [vmem:[%s0 + $0x5b8] sm:$0xff]
    %v209 = vld [vmem:[%s0 + $0x5c0] sm:$0xff]
    %v210 = vld [vmem:[%s0 + $0x5c8] sm:$0xff]
    %v211 = vld [vmem:[%s0 + $0x5d0] sm:$0xff]
    %v212 = vld [vmem:[%s0 + $0x5d8] sm:$0xff]
    %v213 = vld [vmem:[%s0 + $0x5e0] sm:$0xff]
    %v214 = vld [vmem:[%s0 + $0x5e8] sm:$0xff]
    %v215 = vld [vmem:[%s0 + $0x5f0] sm:$0xff]
    %v216 = vld [vmem:[%s0 + $0x5f8] sm:$0xff]
    %v217 = vld [vmem:[%s0 + $0x600] sm:$0xff]
    %v218 = vld [vmem:[%s0 + $0x608] sm:$0xff]
    %v219 = vld [vmem:[%s0 + $0x610] sm:$0xff]
    %v220 = vld [vmem:[%s0 + $0x618] sm:$0xff]
    %v221 = vld [vmem:[%s0 + $0x620] sm:$0xff]
    %v222 = vld [vmem:[%s0 + $0x628] sm:$0xff]
    %v223 = vld [vmem:[%s0 + $0x630] sm:$0xff]
    %v224 = vld [vmem:[%s0 + $0x638] sm:$0xff]
    %v225 = vld [vmem:[%s0 + $0x640] sm:$0xff]
    %v226 = vld [vmem:[%s0 + $0x648] sm:$0xff]
    %v227 = vld [vmem:[%s0 + $0x650] sm:$0xff]
    %v228 = vld [vmem:[%s0 + $0x658] sm:$0xff]
    %v229 = vld [vmem:[%s0 + $0x660] sm:$0xff]
    %v230 = vld [vmem:[%s0 + $0x668] sm:$0xff]
    %v231 = vld [vmem:[%s0 + $0x670] sm:$0xff]
    %v232 = vld [vmem:[%s0 + $0x678] sm:$0xff]
    %v233 = vld [vmem:[%s0 + $0x680] sm:$0xff]
    %v234 = vld [vmem:[%s0 + $0x688] sm:$0xff]
    %v235 = vld [vmem:[%s0 + $0x690] sm:$0xff]
    %v236 = vld [vmem:[%s0 + $0x698] sm:$0xff]
    %v237 = vld [vmem:[%s0 + $0x6a0] sm:$0xff]
    %v238 = vld [vmem:[%s0 + $0x6a8] sm:$0xff]
    %v239 = vld [vmem:[%s0 + $0x6b0] sm:$0xff]
    %v240 = vld [vmem:[%s0 + $0x6b8] sm:$0xff]
    %v241 = vld [vmem:[%s0 + $0x6c0] sm:$0xff]
    %v242 = vld [vmem:[%s0 + $0x6c8] sm:$0xff]
    %v243 = vld [vmem:[%s0 + $0x6d0] sm:$0xff]
    %v244 = vld [vmem:[%s0 + $0x6d8] sm:$0xff]
    %v245 = vld [vmem:[%s0 + $0x6e0] sm:$0xff]
    %v246 = vld [vmem:[%s0 + $0x6e8] sm:$0xff]
    %v247 = vld [vmem:[%s0 + $0x6f0] sm:$0xff]
    %v248 = vld [vmem:[%s0 + $0x6f8] sm:$0xff]
    %v249 = vld [vmem:[%s0 + $0x700] sm:$0xff]
    %v250 = vld [vmem:[%s0 + $0x708] sm:$0xff]
    %v251 = vld [vmem:[%s0 + $0x710] sm:$0xff]
    %v252 = vld [vmem:[%s0 + $0x718] sm:$0xff]
    %v253 = vld [vmem:[%s0 + $0x720] sm:$0xff]
    %v254 = vld [vmem:[%s0 + $0x728] sm:$0xff]
    %v255 = vld [vmem:[%s0 + $0x730] sm:$0xff]
    %v256 = vld [vmem:[%s0 + $0x738] sm:$0xff]
    %v257 = vld [vmem:[%s0 + $0x740] sm:$0xff]
    %v258 = vld [vmem:[%s0 + $0x748] sm:$0xff]
    %v259 = vld [vmem:[%s0 + $0x750] sm:$0xff]
    %v260 = vld [vmem:[%s0 + $0x758] sm:$0xff]
    %v261 = vld [vmem:[%s0 + $0x760] sm:$0xff]
    %v262 = vld [vmem:[%s0 + $0x768] sm:$0xff]
    %v263 = vld [vmem:[%s0 + $0x770] sm:$0xff]
    %v264 = vld [vmem:[%s0 + $0x778] sm:$0xff]
    %v265 = vld [vmem:[#allocation2] sm:$0xff]
    %v266 = vld [vmem:[#allocation2 + $0x8] sm:$0xff]
    %vm267 = vcmask 523264
    %v268 = vsel %vm267, %v25, 0.0
    %269 = vadd.xlane.f32.xlu0 %v268
    %v270 = vpop.xlane.xlu0 %269
    %v271 = vsel %vm267, %v26, 0.0
    %272 = vadd.xlane.f32.xlu0 %v271
    %v273 = vpop.xlane.xlu0 %272
    %v274 = vsel %vm267, %v27, 0.0
    %275 = vadd.xlane.f32.xlu0 %v274
    %v276 = vpop.xlane.xlu0 %275
    %v277 = vsel %vm267, %v28, 0.0
    %278 = vadd.xlane.f32.xlu0 %v277
    %v279 = vpop.xlane.xlu0 %278
    %v280 = vsel %vm267, %v29, 0.0
    %281 = vadd.xlane.f32.xlu0 %v280
    %v282 = vpop.xlane.xlu0 %281
    %v283 = vsel %vm267, %v30, 0.0
    %284 = vadd.xlane.f32.xlu0 %v283
    %v285 = vpop.xlane.xlu0 %284
    %v286 = vsel %vm267, %v31, 0.0
    %287 = vadd.xlane.f32.xlu0 %v286
    %v288 = vpop.xlane.xlu0 %287
    %v289 = vsel %vm267, %v32, 0.0
    %290 = vadd.xlane.f32.xlu0 %v289
    %v291 = vpop.xlane.xlu0 %290
    %v292 = vsel %vm267, %v33, 0.0
    %293 = vadd.xlane.f32.xlu0 %v292
    %v294 = vpop.xlane.xlu0 %293
    %v295 = vsel %vm267, %v34, 0.0
    %296 = vadd.xlane.f32.xlu0 %v295
    %v297 = vpop.xlane.xlu0 %296
    %v298 = vsel %vm267, %v35, 0.0
    %299 = vadd.xlane.f32.xlu0 %v298
    %v300 = vpop.xlane.xlu0 %299
    %v301 = vsel %vm267, %v36, 0.0
    %302 = vadd.xlane.f32.xlu0 %v301
    %v303 = vpop.xlane.xlu0 %302
    %v304 = vsel %vm267, %v37, 0.0
    %305 = vadd.xlane.f32.xlu0 %v304
    %v306 = vpop.xlane.xlu0 %305
    %v307 = vsel %vm267, %v38, 0.0
    %308 = vadd.xlane.f32.xlu0 %v307
    %v309 = vpop.xlane.xlu0 %308
    %v310 = vsel %vm267, %v39, 0.0
    %311 = vadd.xlane.f32.xlu0 %v310
    %v312 = vpop.xlane.xlu0 %311
    %v313 = vsel %vm267, %v40, 0.0
    %314 = vadd.xlane.f32.xlu0 %v313
    %v315 = vpop.xlane.xlu0 %314
    %v316 = vsel %vm267, %v41, 0.0
    %317 = vadd.xlane.f32.xlu0 %v316
    %v318 = vpop.xlane.xlu0 %317
    %v319 = vsel %vm267, %v42, 0.0
    %320 = vadd.xlane.f32.xlu0 %v319
    %v321 = vpop.xlane.xlu0 %320
    %v322 = vsel %vm267, %v43, 0.0
    %323 = vadd.xlane.f32.xlu0 %v322
    %v324 = vpop.xlane.xlu0 %323
    %v325 = vsel %vm267, %v44, 0.0
    %326 = vadd.xlane.f32.xlu0 %v325
    %v327 = vpop.xlane.xlu0 %326
    %v328 = vsel %vm267, %v45, 0.0
    %329 = vadd.xlane.f32.xlu0 %v328
    %v330 = vpop.xlane.xlu0 %329
    %v331 = vsel %vm267, %v46, 0.0
    %332 = vadd.xlane.f32.xlu0 %v331
    %v333 = vpop.xlane.xlu0 %332
    %v334 = vsel %vm267, %v47, 0.0
    %335 = vadd.xlane.f32.xlu0 %v334
    %v336 = vpop.xlane.xlu0 %335
    %v337 = vsel %vm267, %v48, 0.0
    %338 = vadd.xlane.f32.xlu0 %v337
    %v339 = vpop.xlane.xlu0 %338
    %v340 = vsel %vm267, %v49, 0.0
    %341 = vadd.xlane.f32.xlu0 %v340
    %v342 = vpop.xlane.xlu0 %341
    %v343 = vsel %vm267, %v50, 0.0
    %344 = vadd.xlane.f32.xlu0 %v343
    %v345 = vpop.xlane.xlu0 %344
    %v346 = vsel %vm267, %v51, 0.0
    %347 = vadd.xlane.f32.xlu0 %v346
    %v348 = vpop.xlane.xlu0 %347
    %v349 = vsel %vm267, %v52, 0.0
    %350 = vadd.xlane.f32.xlu0 %v349
    %v351 = vpop.xlane.xlu0 %350
    %v352 = vsel %vm267, %v53, 0.0
    %353 = vadd.xlane.f32.xlu0 %v352
    %v354 = vpop.xlane.xlu0 %353
    %v355 = vsel %vm267, %v54, 0.0
    %356 = vadd.xlane.f32.xlu0 %v355
    %v357 = vpop.xlane.xlu0 %356
    %v358 = vsel %vm267, %v55, 0.0
    %359 = vadd.xlane.f32.xlu0 %v358
    %v360 = vpop.xlane.xlu0 %359
    %v361 = vsel %vm267, %v56, 0.0
    %362 = vadd.xlane.f32.xlu0 %v361
    %v363 = vpop.xlane.xlu0 %362
    %v364 = vsel %vm267, %v57, 0.0
    %365 = vadd.xlane.f32.xlu0 %v364
    %v366 = vpop.xlane.xlu0 %365
    %v367 = vsel %vm267, %v58, 0.0
    %368 = vadd.xlane.f32.xlu0 %v367
    %v369 = vpop.xlane.xlu0 %368
    %v370 = vsel %vm267, %v59, 0.0
    %371 = vadd.xlane.f32.xlu0 %v370
    %v372 = vpop.xlane.xlu0 %371
    %v373 = vsel %vm267, %v60, 0.0
    %374 = vadd.xlane.f32.xlu0 %v373
    %v375 = vpop.xlane.xlu0 %374
    %v376 = vsel %vm267, %v61, 0.0
    %377 = vadd.xlane.f32.xlu0 %v376
    %v378 = vpop.xlane.xlu0 %377
    %v379 = vsel %vm267, %v62, 0.0
    %380 = vadd.xlane.f32.xlu0 %v379
    %v381 = vpop.xlane.xlu0 %380
    %v382 = vsel %vm267, %v63, 0.0
    %383 = vadd.xlane.f32.xlu0 %v382
    %v384 = vpop.xlane.xlu0 %383
    %v385 = vsel %vm267, %v64, 0.0
    %386 = vadd.xlane.f32.xlu0 %v385
    %v387 = vpop.xlane.xlu0 %386
    %v388 = vsel %vm267, %v65, 0.0
    %389 = vadd.xlane.f32.xlu0 %v388
    %v390 = vpop.xlane.xlu0 %389
    %v391 = vsel %vm267, %v66, 0.0
    %392 = vadd.xlane.f32.xlu0 %v391
    %v393 = vpop.xlane.xlu0 %392
    %v394 = vsel %vm267, %v67, 0.0
    %395 = vadd.xlane.f32.xlu0 %v394
    %v396 = vpop.xlane.xlu0 %395
    %v397 = vsel %vm267, %v68, 0.0
    %398 = vadd.xlane.f32.xlu0 %v397
    %v399 = vpop.xlane.xlu0 %398
    %v400 = vsel %vm267, %v69, 0.0
    %401 = vadd.xlane.f32.xlu0 %v400
    %v402 = vpop.xlane.xlu0 %401
    %v403 = vsel %vm267, %v70, 0.0
    %404 = vadd.xlane.f32.xlu0 %v403
    %v405 = vpop.xlane.xlu0 %404
    %v406 = vsel %vm267, %v71, 0.0
    %407 = vadd.xlane.f32.xlu0 %v406
    %v408 = vpop.xlane.xlu0 %407
    %v409 = vsel %vm267, %v72, 0.0
    %410 = vadd.xlane.f32.xlu0 %v409
    %v411 = vpop.xlane.xlu0 %410
    %v412 = vsel %vm267, %v73, 0.0
    %413 = vadd.xlane.f32.xlu0 %v412
    %v414 = vpop.xlane.xlu0 %413
    %v415 = vsel %vm267, %v74, 0.0
    %416 = vadd.xlane.f32.xlu0 %v415
    %v417 = vpop.xlane.xlu0 %416
    %v418 = vsel %vm267, %v75, 0.0
    %419 = vadd.xlane.f32.xlu0 %v418
    %v420 = vpop.xlane.xlu0 %419
    %v421 = vsel %vm267, %v76, 0.0
    %422 = vadd.xlane.f32.xlu0 %v421
    %v423 = vpop.xlane.xlu0 %422
    %v424 = vsel %vm267, %v77, 0.0
    %425 = vadd.xlane.f32.xlu0 %v424
    %v426 = vpop.xlane.xlu0 %425
    %v427 = vsel %vm267, %v78, 0.0
    %428 = vadd.xlane.f32.xlu0 %v427
    %v429 = vpop.xlane.xlu0 %428
    %v430 = vsel %vm267, %v79, 0.0
    %431 = vadd.xlane.f32.xlu0 %v430
    %v432 = vpop.xlane.xlu0 %431
    %v433 = vsel %vm267, %v80, 0.0
    %434 = vadd.xlane.f32.xlu0 %v433
    %v435 = vpop.xlane.xlu0 %434
    %v436 = vsel %vm267, %v81, 0.0
    %437 = vadd.xlane.f32.xlu0 %v436
    %v438 = vpop.xlane.xlu0 %437
    %v439 = vsel %vm267, %v82, 0.0
    %440 = vadd.xlane.f32.xlu0 %v439
    %v441 = vpop.xlane.xlu0 %440
    %v442 = vsel %vm267, %v83, 0.0
    %443 = vadd.xlane.f32.xlu0 %v442
    %v444 = vpop.xlane.xlu0 %443
    %v445 = vsel %vm267, %v84, 0.0
    %446 = vadd.xlane.f32.xlu0 %v445
    %v447 = vpop.xlane.xlu0 %446
    %v448 = vsel %vm267, %v85, 0.0
    %449 = vadd.xlane.f32.xlu0 %v448
    %v450 = vpop.xlane.xlu0 %449
    %v451 = vsel %vm267, %v86, 0.0
    %452 = vadd.xlane.f32.xlu0 %v451
    %v453 = vpop.xlane.xlu0 %452
    %v454 = vsel %vm267, %v87, 0.0
    %455 = vadd.xlane.f32.xlu0 %v454
    %v456 = vpop.xlane.xlu0 %455
    %v457 = vsel %vm267, %v88, 0.0
    %458 = vadd.xlane.f32.xlu0 %v457
    %v459 = vpop.xlane.xlu0 %458
    %v460 = vsel %vm267, %v89, 0.0
    %461 = vadd.xlane.f32.xlu0 %v460
    %v462 = vpop.xlane.xlu0 %461
    %v463 = vsel %vm267, %v90, 0.0
    %464 = vadd.xlane.f32.xlu0 %v463
    %v465 = vpop.xlane.xlu0 %464
    %v466 = vsel %vm267, %v91, 0.0
    %467 = vadd.xlane.f32.xlu0 %v466
    %v468 = vpop.xlane.xlu0 %467
    %v469 = vsel %vm267, %v92, 0.0
    %470 = vadd.xlane.f32.xlu0 %v469
    %v471 = vpop.xlane.xlu0 %470
    %v472 = vsel %vm267, %v93, 0.0
    %473 = vadd.xlane.f32.xlu0 %v472
    %v474 = vpop.xlane.xlu0 %473
    %v475 = vsel %vm267, %v94, 0.0
    %476 = vadd.xlane.f32.xlu0 %v475
    %v477 = vpop.xlane.xlu0 %476
    %v478 = vsel %vm267, %v95, 0.0
    %479 = vadd.xlane.f32.xlu0 %v478
    %v480 = vpop.xlane.xlu0 %479
    %v481 = vsel %vm267, %v96, 0.0
    %482 = vadd.xlane.f32.xlu0 %v481
    %v483 = vpop.xlane.xlu0 %482
    %v484 = vsel %vm267, %v97, 0.0
    %485 = vadd.xlane.f32.xlu0 %v484
    %v486 = vpop.xlane.xlu0 %485
    %v487 = vsel %vm267, %v98, 0.0
    %488 = vadd.xlane.f32.xlu0 %v487
    %v489 = vpop.xlane.xlu0 %488
    %v490 = vsel %vm267, %v99, 0.0
    %491 = vadd.xlane.f32.xlu0 %v490
    %v492 = vpop.xlane.xlu0 %491
    %v493 = vsel %vm267, %v100, 0.0
    %494 = vadd.xlane.f32.xlu0 %v493
    %v495 = vpop.xlane.xlu0 %494
    %v496 = vsel %vm267, %v101, 0.0
    %497 = vadd.xlane.f32.xlu0 %v496
    %v498 = vpop.xlane.xlu0 %497
    %v499 = vsel %vm267, %v102, 0.0
    %500 = vadd.xlane.f32.xlu0 %v499
    %v501 = vpop.xlane.xlu0 %500
    %v502 = vsel %vm267, %v103, 0.0
    %503 = vadd.xlane.f32.xlu0 %v502
    %v504 = vpop.xlane.xlu0 %503
    %v505 = vsel %vm267, %v104, 0.0
    %506 = vadd.xlane.f32.xlu0 %v505
    %v507 = vpop.xlane.xlu0 %506
    %v508 = vsel %vm267, %v105, 0.0
    %509 = vadd.xlane.f32.xlu0 %v508
    %v510 = vpop.xlane.xlu0 %509
    %v511 = vsel %vm267, %v106, 0.0
    %512 = vadd.xlane.f32.xlu0 %v511
    %v513 = vpop.xlane.xlu0 %512
    %v514 = vsel %vm267, %v107, 0.0
    %515 = vadd.xlane.f32.xlu0 %v514
    %v516 = vpop.xlane.xlu0 %515
    %v517 = vsel %vm267, %v108, 0.0
    %518 = vadd.xlane.f32.xlu0 %v517
    %v519 = vpop.xlane.xlu0 %518
    %v520 = vsel %vm267, %v109, 0.0
    %521 = vadd.xlane.f32.xlu0 %v520
    %v522 = vpop.xlane.xlu0 %521
    %v523 = vsel %vm267, %v110, 0.0
    %524 = vadd.xlane.f32.xlu0 %v523
    %v525 = vpop.xlane.xlu0 %524
    %v526 = vsel %vm267, %v111, 0.0
    %527 = vadd.xlane.f32.xlu0 %v526
    %v528 = vpop.xlane.xlu0 %527
    %v529 = vsel %vm267, %v112, 0.0
    %530 = vadd.xlane.f32.xlu0 %v529
    %v531 = vpop.xlane.xlu0 %530
    %v532 = vsel %vm267, %v113, 0.0
    %533 = vadd.xlane.f32.xlu0 %v532
    %v534 = vpop.xlane.xlu0 %533
    %v535 = vsel %vm267, %v114, 0.0
    %536 = vadd.xlane.f32.xlu0 %v535
    %v537 = vpop.xlane.xlu0 %536
    %v538 = vsel %vm267, %v115, 0.0
    %539 = vadd.xlane.f32.xlu0 %v538
    %v540 = vpop.xlane.xlu0 %539
    %v541 = vsel %vm267, %v116, 0.0
    %542 = vadd.xlane.f32.xlu0 %v541
    %v543 = vpop.xlane.xlu0 %542
    %v544 = vsel %vm267, %v117, 0.0
    %545 = vadd.xlane.f32.xlu0 %v544
    %v546 = vpop.xlane.xlu0 %545
    %v547 = vsel %vm267, %v118, 0.0
    %548 = vadd.xlane.f32.xlu0 %v547
    %v549 = vpop.xlane.xlu0 %548
    %v550 = vsel %vm267, %v119, 0.0
    %551 = vadd.xlane.f32.xlu0 %v550
    %v552 = vpop.xlane.xlu0 %551
    %v553 = vsel %vm267, %v120, 0.0
    %554 = vadd.xlane.f32.xlu0 %v553
    %v555 = vpop.xlane.xlu0 %554
    %v556 = vsel %vm267, %v121, 0.0
    %557 = vadd.xlane.f32.xlu0 %v556
    %v558 = vpop.xlane.xlu0 %557
    %v559 = vsel %vm267, %v122, 0.0
    %560 = vadd.xlane.f32.xlu0 %v559
    %v561 = vpop.xlane.xlu0 %560
    %v562 = vsel %vm267, %v123, 0.0
    %563 = vadd.xlane.f32.xlu0 %v562
    %v564 = vpop.xlane.xlu0 %563
    %v565 = vsel %vm267, %v124, 0.0
    %566 = vadd.xlane.f32.xlu0 %v565
    %v567 = vpop.xlane.xlu0 %566
    %v568 = vsel %vm267, %v125, 0.0
    %569 = vadd.xlane.f32.xlu0 %v568
    %v570 = vpop.xlane.xlu0 %569
    %v571 = vsel %vm267, %v126, 0.0
    %572 = vadd.xlane.f32.xlu0 %v571
    %v573 = vpop.xlane.xlu0 %572
    %v574 = vsel %vm267, %v127, 0.0
    %575 = vadd.xlane.f32.xlu0 %v574
    %v576 = vpop.xlane.xlu0 %575
    %v577 = vsel %vm267, %v128, 0.0
    %578 = vadd.xlane.f32.xlu0 %v577
    %v579 = vpop.xlane.xlu0 %578
    %v580 = vsel %vm267, %v129, 0.0
    %581 = vadd.xlane.f32.xlu0 %v580
    %v582 = vpop.xlane.xlu0 %581
    %v583 = vsel %vm267, %v130, 0.0
    %584 = vadd.xlane.f32.xlu0 %v583
    %v585 = vpop.xlane.xlu0 %584
    %v586 = vsel %vm267, %v131, 0.0
    %587 = vadd.xlane.f32.xlu0 %v586
    %v588 = vpop.xlane.xlu0 %587
    %v589 = vsel %vm267, %v132, 0.0
    %590 = vadd.xlane.f32.xlu0 %v589
    %v591 = vpop.xlane.xlu0 %590
    %v592 = vsel %vm267, %v133, 0.0
    %593 = vadd.xlane.f32.xlu0 %v592
    %v594 = vpop.xlane.xlu0 %593
    %v595 = vsel %vm267, %v134, 0.0
    %596 = vadd.xlane.f32.xlu0 %v595
    %v597 = vpop.xlane.xlu0 %596
    %v598 = vsel %vm267, %v135, 0.0
    %599 = vadd.xlane.f32.xlu0 %v598
    %v600 = vpop.xlane.xlu0 %599
    %v601 = vsel %vm267, %v136, 0.0
    %602 = vadd.xlane.f32.xlu0 %v601
    %v603 = vpop.xlane.xlu0 %602
    %v604 = vsel %vm267, %v137, 0.0
    %605 = vadd.xlane.f32.xlu0 %v604
    %v606 = vpop.xlane.xlu0 %605
    %v607 = vsel %vm267, %v138, 0.0
    %608 = vadd.xlane.f32.xlu0 %v607
    %v609 = vpop.xlane.xlu0 %608
    %v610 = vsel %vm267, %v139, 0.0
    %611 = vadd.xlane.f32.xlu0 %v610
    %v612 = vpop.xlane.xlu0 %611
    %v613 = vsel %vm267, %v140, 0.0
    %614 = vadd.xlane.f32.xlu0 %v613
    %v615 = vpop.xlane.xlu0 %614
    %v616 = vsel %vm267, %v141, 0.0
    %617 = vadd.xlane.f32.xlu0 %v616
    %v618 = vpop.xlane.xlu0 %617
    %v619 = vsel %vm267, %v142, 0.0
    %620 = vadd.xlane.f32.xlu0 %v619
    %v621 = vpop.xlane.xlu0 %620
    %v622 = vsel %vm267, %v143, 0.0
    %623 = vadd.xlane.f32.xlu0 %v622
    %v624 = vpop.xlane.xlu0 %623
    %v625 = vsel %vm267, %v144, 0.0
    %626 = vadd.xlane.f32.xlu0 %v625
    %v627 = vpop.xlane.xlu0 %626
    %v628 = vsel %vm267, %v145, 0.0
    %629 = vadd.xlane.f32.xlu0 %v628
    %v630 = vpop.xlane.xlu0 %629
    %v631 = vsel %vm267, %v146, 0.0
    %632 = vadd.xlane.f32.xlu0 %v631
    %v633 = vpop.xlane.xlu0 %632
    %v634 = vsel %vm267, %v147, 0.0
    %635 = vadd.xlane.f32.xlu0 %v634
    %v636 = vpop.xlane.xlu0 %635
    %v637 = vsel %vm267, %v148, 0.0
    %638 = vadd.xlane.f32.xlu0 %v637
    %v639 = vpop.xlane.xlu0 %638
    %v640 = vsel %vm267, %v149, 0.0
    %641 = vadd.xlane.f32.xlu0 %v640
    %v642 = vpop.xlane.xlu0 %641
    %v643 = vsel %vm267, %v150, 0.0
    %644 = vadd.xlane.f32.xlu0 %v643
    %v645 = vpop.xlane.xlu0 %644
    %v646 = vsel %vm267, %v151, 0.0
    %647 = vadd.xlane.f32.xlu0 %v646
    %v648 = vpop.xlane.xlu0 %647
    %v649 = vsel %vm267, %v152, 0.0
    %650 = vadd.xlane.f32.xlu0 %v649
    %v651 = vpop.xlane.xlu0 %650
    %v652 = vsel %vm267, %v153, 0.0
    %653 = vadd.xlane.f32.xlu0 %v652
    %v654 = vpop.xlane.xlu0 %653
    %v655 = vsel %vm267, %v154, 0.0
    %656 = vadd.xlane.f32.xlu0 %v655
    %v657 = vpop.xlane.xlu0 %656
    %v658 = vsel %vm267, %v155, 0.0
    %659 = vadd.xlane.f32.xlu0 %v658
    %v660 = vpop.xlane.xlu0 %659
    %v661 = vsel %vm267, %v156, 0.0
    %662 = vadd.xlane.f32.xlu0 %v661
    %v663 = vpop.xlane.xlu0 %662
    %v664 = vsel %vm267, %v157, 0.0
    %665 = vadd.xlane.f32.xlu0 %v664
    %v666 = vpop.xlane.xlu0 %665
    %v667 = vsel %vm267, %v158, 0.0
    %668 = vadd.xlane.f32.xlu0 %v667
    %v669 = vpop.xlane.xlu0 %668
    %v670 = vsel %vm267, %v159, 0.0
    %671 = vadd.xlane.f32.xlu0 %v670
    %v672 = vpop.xlane.xlu0 %671
    %v673 = vsel %vm267, %v160, 0.0
    %674 = vadd.xlane.f32.xlu0 %v673
    %v675 = vpop.xlane.xlu0 %674
    %v676 = vsel %vm267, %v161, 0.0
    %677 = vadd.xlane.f32.xlu0 %v676
    %v678 = vpop.xlane.xlu0 %677
    %v679 = vsel %vm267, %v162, 0.0
    %680 = vadd.xlane.f32.xlu0 %v679
    %v681 = vpop.xlane.xlu0 %680
    %v682 = vsel %vm267, %v163, 0.0
    %683 = vadd.xlane.f32.xlu0 %v682
    %v684 = vpop.xlane.xlu0 %683
    %v685 = vsel %vm267, %v164, 0.0
    %686 = vadd.xlane.f32.xlu0 %v685
    %v687 = vpop.xlane.xlu0 %686
    %v688 = vsel %vm267, %v165, 0.0
    %689 = vadd.xlane.f32.xlu0 %v688
    %v690 = vpop.xlane.xlu0 %689
    %v691 = vsel %vm267, %v166, 0.0
    %692 = vadd.xlane.f32.xlu0 %v691
    %v693 = vpop.xlane.xlu0 %692
    %v694 = vsel %vm267, %v167, 0.0
    %695 = vadd.xlane.f32.xlu0 %v694
    %v696 = vpop.xlane.xlu0 %695
    %v697 = vsel %vm267, %v168, 0.0
    %698 = vadd.xlane.f32.xlu0 %v697
    %v699 = vpop.xlane.xlu0 %698
    %v700 = vsel %vm267, %v169, 0.0
    %701 = vadd.xlane.f32.xlu0 %v700
    %v702 = vpop.xlane.xlu0 %701
    %v703 = vsel %vm267, %v170, 0.0
    %704 = vadd.xlane.f32.xlu0 %v703
    %v705 = vpop.xlane.xlu0 %704
    %v706 = vsel %vm267, %v171, 0.0
    %707 = vadd.xlane.f32.xlu0 %v706
    %v708 = vpop.xlane.xlu0 %707
    %v709 = vsel %vm267, %v172, 0.0
    %710 = vadd.xlane.f32.xlu0 %v709
    %v711 = vpop.xlane.xlu0 %710
    %v712 = vsel %vm267, %v173, 0.0
    %713 = vadd.xlane.f32.xlu0 %v712
    %v714 = vpop.xlane.xlu0 %713
    %v715 = vsel %vm267, %v174, 0.0
    %716 = vadd.xlane.f32.xlu0 %v715
    %v717 = vpop.xlane.xlu0 %716
    %v718 = vsel %vm267, %v175, 0.0
    %719 = vadd.xlane.f32.xlu0 %v718
    %v720 = vpop.xlane.xlu0 %719
    %v721 = vsel %vm267, %v176, 0.0
    %722 = vadd.xlane.f32.xlu0 %v721
    %v723 = vpop.xlane.xlu0 %722
    %v724 = vsel %vm267, %v177, 0.0
    %725 = vadd.xlane.f32.xlu0 %v724
    %v726 = vpop.xlane.xlu0 %725
    %v727 = vsel %vm267, %v178, 0.0
    %728 = vadd.xlane.f32.xlu0 %v727
    %v729 = vpop.xlane.xlu0 %728
    %v730 = vsel %vm267, %v179, 0.0
    %731 = vadd.xlane.f32.xlu0 %v730
    %v732 = vpop.xlane.xlu0 %731
    %v733 = vsel %vm267, %v180, 0.0
    %734 = vadd.xlane.f32.xlu0 %v733
    %v735 = vpop.xlane.xlu0 %734
    %v736 = vsel %vm267, %v181, 0.0
    %737 = vadd.xlane.f32.xlu0 %v736
    %v738 = vpop.xlane.xlu0 %737
    %v739 = vsel %vm267, %v182, 0.0
    %740 = vadd.xlane.f32.xlu0 %v739
    %v741 = vpop.xlane.xlu0 %740
    %v742 = vsel %vm267, %v183, 0.0
    %743 = vadd.xlane.f32.xlu0 %v742
    %v744 = vpop.xlane.xlu0 %743
    %v745 = vsel %vm267, %v184, 0.0
    %746 = vadd.xlane.f32.xlu0 %v745
    %v747 = vpop.xlane.xlu0 %746
    %v748 = vsel %vm267, %v185, 0.0
    %749 = vadd.xlane.f32.xlu0 %v748
    %v750 = vpop.xlane.xlu0 %749
    %v751 = vsel %vm267, %v186, 0.0
    %752 = vadd.xlane.f32.xlu0 %v751
    %v753 = vpop.xlane.xlu0 %752
    %v754 = vsel %vm267, %v187, 0.0
    %755 = vadd.xlane.f32.xlu0 %v754
    %v756 = vpop.xlane.xlu0 %755
    %v757 = vsel %vm267, %v188, 0.0
    %758 = vadd.xlane.f32.xlu0 %v757
    %v759 = vpop.xlane.xlu0 %758
    %v760 = vsel %vm267, %v189, 0.0
    %761 = vadd.xlane.f32.xlu0 %v760
    %v762 = vpop.xlane.xlu0 %761
    %v763 = vsel %vm267, %v190, 0.0
    %764 = vadd.xlane.f32.xlu0 %v763
    %v765 = vpop.xlane.xlu0 %764
    %v766 = vsel %vm267, %v191, 0.0
    %767 = vadd.xlane.f32.xlu0 %v766
    %v768 = vpop.xlane.xlu0 %767
    %v769 = vsel %vm267, %v192, 0.0
    %770 = vadd.xlane.f32.xlu0 %v769
    %v771 = vpop.xlane.xlu0 %770
    %v772 = vsel %vm267, %v193, 0.0
    %773 = vadd.xlane.f32.xlu0 %v772
    %v774 = vpop.xlane.xlu0 %773
    %v775 = vsel %vm267, %v194, 0.0
    %776 = vadd.xlane.f32.xlu0 %v775
    %v777 = vpop.xlane.xlu0 %776
    %v778 = vsel %vm267, %v195, 0.0
    %779 = vadd.xlane.f32.xlu0 %v778
    %v780 = vpop.xlane.xlu0 %779
    %v781 = vsel %vm267, %v196, 0.0
    %782 = vadd.xlane.f32.xlu0 %v781
    %v783 = vpop.xlane.xlu0 %782
    %v784 = vsel %vm267, %v197, 0.0
    %785 = vadd.xlane.f32.xlu0 %v784
    %v786 = vpop.xlane.xlu0 %785
    %v787 = vsel %vm267, %v198, 0.0
    %788 = vadd.xlane.f32.xlu0 %v787
    %v789 = vpop.xlane.xlu0 %788
    %v790 = vsel %vm267, %v199, 0.0
    %791 = vadd.xlane.f32.xlu0 %v790
    %v792 = vpop.xlane.xlu0 %791
    %v793 = vsel %vm267, %v200, 0.0
    %794 = vadd.xlane.f32.xlu0 %v793
    %v795 = vpop.xlane.xlu0 %794
    %v796 = vsel %vm267, %v201, 0.0
    %797 = vadd.xlane.f32.xlu0 %v796
    %v798 = vpop.xlane.xlu0 %797
    %v799 = vsel %vm267, %v202, 0.0
    %800 = vadd.xlane.f32.xlu0 %v799
    %v801 = vpop.xlane.xlu0 %800
    %v802 = vsel %vm267, %v203, 0.0
    %803 = vadd.xlane.f32.xlu0 %v802
    %v804 = vpop.xlane.xlu0 %803
    %v805 = vsel %vm267, %v204, 0.0
    %806 = vadd.xlane.f32.xlu0 %v805
    %v807 = vpop.xlane.xlu0 %806
    %v808 = vsel %vm267, %v205, 0.0
    %809 = vadd.xlane.f32.xlu0 %v808
    %v810 = vpop.xlane.xlu0 %809
    %v811 = vsel %vm267, %v206, 0.0
    %812 = vadd.xlane.f32.xlu0 %v811
    %v813 = vpop.xlane.xlu0 %812
    %v814 = vsel %vm267, %v207, 0.0
    %815 = vadd.xlane.f32.xlu0 %v814
    %v816 = vpop.xlane.xlu0 %815
    %v817 = vsel %vm267, %v208, 0.0
    %818 = vadd.xlane.f32.xlu0 %v817
    %v819 = vpop.xlane.xlu0 %818
    %v820 = vsel %vm267, %v209, 0.0
    %821 = vadd.xlane.f32.xlu0 %v820
    %v822 = vpop.xlane.xlu0 %821
    %v823 = vsel %vm267, %v210, 0.0
    %824 = vadd.xlane.f32.xlu0 %v823
    %v825 = vpop.xlane.xlu0 %824
    %v826 = vsel %vm267, %v211, 0.0
    %827 = vadd.xlane.f32.xlu0 %v826
    %v828 = vpop.xlane.xlu0 %827
    %v829 = vsel %vm267, %v212, 0.0
    %830 = vadd.xlane.f32.xlu0 %v829
    %v831 = vpop.xlane.xlu0 %830
    %v832 = vsel %vm267, %v213, 0.0
    %833 = vadd.xlane.f32.xlu0 %v832
    %v834 = vpop.xlane.xlu0 %833
    %v835 = vsel %vm267, %v214, 0.0
    %836 = vadd.xlane.f32.xlu0 %v835
    %v837 = vpop.xlane.xlu0 %836
    %v838 = vsel %vm267, %v215, 0.0
    %839 = vadd.xlane.f32.xlu0 %v838
    %v840 = vpop.xlane.xlu0 %839
    %v841 = vsel %vm267, %v216, 0.0
    %842 = vadd.xlane.f32.xlu0 %v841
    %v843 = vpop.xlane.xlu0 %842
    %v844 = vsel %vm267, %v217, 0.0
    %845 = vadd.xlane.f32.xlu0 %v844
    %v846 = vpop.xlane.xlu0 %845
    %v847 = vsel %vm267, %v218, 0.0
    %848 = vadd.xlane.f32.xlu0 %v847
    %v849 = vpop.xlane.xlu0 %848
    %v850 = vsel %vm267, %v219, 0.0
    %851 = vadd.xlane.f32.xlu0 %v850
    %v852 = vpop.xlane.xlu0 %851
    %v853 = vsel %vm267, %v220, 0.0
    %854 = vadd.xlane.f32.xlu0 %v853
    %v855 = vpop.xlane.xlu0 %854
    %v856 = vsel %vm267, %v221, 0.0
    %857 = vadd.xlane.f32.xlu0 %v856
    %v858 = vpop.xlane.xlu0 %857
    %v859 = vsel %vm267, %v222, 0.0
    %860 = vadd.xlane.f32.xlu0 %v859
    %v861 = vpop.xlane.xlu0 %860
    %v862 = vsel %vm267, %v223, 0.0
    %863 = vadd.xlane.f32.xlu0 %v862
    %v864 = vpop.xlane.xlu0 %863
    %v865 = vsel %vm267, %v224, 0.0
    %866 = vadd.xlane.f32.xlu0 %v865
    %v867 = vpop.xlane.xlu0 %866
    %v868 = vsel %vm267, %v225, 0.0
    %869 = vadd.xlane.f32.xlu0 %v868
    %v870 = vpop.xlane.xlu0 %869
    %v871 = vsel %vm267, %v226, 0.0
    %872 = vadd.xlane.f32.xlu0 %v871
    %v873 = vpop.xlane.xlu0 %872
    %v874 = vsel %vm267, %v227, 0.0
    %875 = vadd.xlane.f32.xlu0 %v874
    %v876 = vpop.xlane.xlu0 %875
    %v877 = vsel %vm267, %v228, 0.0
    %878 = vadd.xlane.f32.xlu0 %v877
    %v879 = vpop.xlane.xlu0 %878
    %v880 = vsel %vm267, %v229, 0.0
    %881 = vadd.xlane.f32.xlu0 %v880
    %v882 = vpop.xlane.xlu0 %881
    %v883 = vsel %vm267, %v230, 0.0
    %884 = vadd.xlane.f32.xlu0 %v883
    %v885 = vpop.xlane.xlu0 %884
    %v886 = vsel %vm267, %v231, 0.0
    %887 = vadd.xlane.f32.xlu0 %v886
    %v888 = vpop.xlane.xlu0 %887
    %v889 = vsel %vm267, %v232, 0.0
    %890 = vadd.xlane.f32.xlu0 %v889
    %v891 = vpop.xlane.xlu0 %890
    %v892 = vsel %vm267, %v233, 0.0
    %893 = vadd.xlane.f32.xlu0 %v892
    %v894 = vpop.xlane.xlu0 %893
    %v895 = vsel %vm267, %v234, 0.0
    %896 = vadd.xlane.f32.xlu0 %v895
    %v897 = vpop.xlane.xlu0 %896
    %v898 = vsel %vm267, %v235, 0.0
    %899 = vadd.xlane.f32.xlu0 %v898
    %v900 = vpop.xlane.xlu0 %899
    %v901 = vsel %vm267, %v236, 0.0
    %902 = vadd.xlane.f32.xlu0 %v901
    %v903 = vpop.xlane.xlu0 %902
    %v904 = vsel %vm267, %v237, 0.0
    %905 = vadd.xlane.f32.xlu0 %v904
    %v906 = vpop.xlane.xlu0 %905
    %v907 = vsel %vm267, %v238, 0.0
    %908 = vadd.xlane.f32.xlu0 %v907
    %v909 = vpop.xlane.xlu0 %908
    %v910 = vsel %vm267, %v239, 0.0
    %911 = vadd.xlane.f32.xlu0 %v910
    %v912 = vpop.xlane.xlu0 %911
    %v913 = vsel %vm267, %v240, 0.0
    %914 = vadd.xlane.f32.xlu0 %v913
    %v915 = vpop.xlane.xlu0 %914
    %v916 = vsel %vm267, %v241, 0.0
    %917 = vadd.xlane.f32.xlu0 %v916
    %v918 = vpop.xlane.xlu0 %917
    %v919 = vsel %vm267, %v242, 0.0
    %920 = vadd.xlane.f32.xlu0 %v919
    %v921 = vpop.xlane.xlu0 %920
    %v922 = vsel %vm267, %v243, 0.0
    %923 = vadd.xlane.f32.xlu0 %v922
    %v924 = vpop.xlane.xlu0 %923
    %v925 = vsel %vm267, %v244, 0.0
    %926 = vadd.xlane.f32.xlu0 %v925
    %v927 = vpop.xlane.xlu0 %926
    %v928 = vsel %vm267, %v245, 0.0
    %929 = vadd.xlane.f32.xlu0 %v928
    %v930 = vpop.xlane.xlu0 %929
    %v931 = vsel %vm267, %v246, 0.0
    %932 = vadd.xlane.f32.xlu0 %v931
    %v933 = vpop.xlane.xlu0 %932
    %v934 = vsel %vm267, %v247, 0.0
    %935 = vadd.xlane.f32.xlu0 %v934
    %v936 = vpop.xlane.xlu0 %935
    %v937 = vsel %vm267, %v248, 0.0
    %938 = vadd.xlane.f32.xlu0 %v937
    %v939 = vpop.xlane.xlu0 %938
    %v940 = vsel %vm267, %v249, 0.0
    %941 = vadd.xlane.f32.xlu0 %v940
    %v942 = vpop.xlane.xlu0 %941
    %v943 = vsel %vm267, %v250, 0.0
    %944 = vadd.xlane.f32.xlu0 %v943
    %v945 = vpop.xlane.xlu0 %944
    %v946 = vsel %vm267, %v251, 0.0
    %947 = vadd.xlane.f32.xlu0 %v946
    %v948 = vpop.xlane.xlu0 %947
    %v949 = vsel %vm267, %v252, 0.0
    %950 = vadd.xlane.f32.xlu0 %v949
    %v951 = vpop.xlane.xlu0 %950
    %v952 = vsel %vm267, %v253, 0.0
    %953 = vadd.xlane.f32.xlu0 %v952
    %v954 = vpop.xlane.xlu0 %953
    %v955 = vsel %vm267, %v254, 0.0
    %956 = vadd.xlane.f32.xlu0 %v955
    %v957 = vpop.xlane.xlu0 %956
    %v958 = vsel %vm267, %v255, 0.0
    %959 = vadd.xlane.f32.xlu0 %v958
    %v960 = vpop.xlane.xlu0 %959
    %v961 = vsel %vm267, %v256, 0.0
    %962 = vadd.xlane.f32.xlu0 %v961
    %v963 = vpop.xlane.xlu0 %962
    %v964 = vsel %vm267, %v257, 0.0
    %965 = vadd.xlane.f32.xlu0 %v964
    %v966 = vpop.xlane.xlu0 %965
    %v967 = vsel %vm267, %v258, 0.0
    %968 = vadd.xlane.f32.xlu0 %v967
    %v969 = vpop.xlane.xlu0 %968
    %v970 = vsel %vm267, %v259, 0.0
    %971 = vadd.xlane.f32.xlu0 %v970
    %v972 = vpop.xlane.xlu0 %971
    %v973 = vsel %vm267, %v260, 0.0
    %974 = vadd.xlane.f32.xlu0 %v973
    %v975 = vpop.xlane.xlu0 %974
    %v976 = vsel %vm267, %v261, 0.0
    %977 = vadd.xlane.f32.xlu0 %v976
    %v978 = vpop.xlane.xlu0 %977
    %v979 = vsel %vm267, %v262, 0.0
    %980 = vadd.xlane.f32.xlu0 %v979
    %v981 = vpop.xlane.xlu0 %980
    %v982 = vsel %vm267, %v263, 0.0
    %983 = vadd.xlane.f32.xlu0 %v982
    %v984 = vpop.xlane.xlu0 %983
    %v985 = vsel %vm267, %v264, 0.0
    %986 = vadd.xlane.f32.xlu0 %v985
    %v987 = vpop.xlane.xlu0 %986
    %v1229 = vunpack.c.l.s4 269488144
    %v1230 = vunpack.c.0.s8 %v1229
    %v1231 = vlaneseq
    %v1232 = vshrl.u32 %v1231, 7
    %v1233 = vsub.s32 %v1230, %v1232
    %v1234 = vrot.slane %v270, %v1233
    %v1236 = vunpack.c.l.s4 842150450
    %v1237 = vunpack.c.0.s8 %v1236
    %v1238 = vlaneseq
    %v1239 = vshrl.u32 %v1238, 7
    %v1240 = vsub.s32 %v1237, %v1239
    %v1241 = vrot.slane %v270, %v1240
    %v1243 = vunpack.c.l.s4 1414812756
    %v1244 = vunpack.c.0.s8 %v1243
    %v1245 = vlaneseq
    %v1246 = vshrl.u32 %v1245, 7
    %v1247 = vsub.s32 %v1244, %v1246
    %v1248 = vrot.slane %v270, %v1247
    %v1250 = vunpack.c.l.s4 1987475062
    %v1251 = vunpack.c.0.s8 %v1250
    %v1252 = vlaneseq
    %v1253 = vshrl.u32 %v1252, 7
    %v1254 = vsub.s32 %v1251, %v1253
    %v1255 = vrot.slane %v270, %v1254
    %v1257 = vunpack.c.l.s4 269488144
    %v1258 = vunpack.c.0.s8 %v1257
    %v1259 = vlaneseq
    %v1260 = vshrl.u32 %v1259, 7
    %v1261 = vsub.s32 %v1258, %v1260
    %v1262 = vrot.slane %v273, %v1261
    %v1264 = vunpack.c.l.s4 842150450
    %v1265 = vunpack.c.0.s8 %v1264
    %v1266 = vlaneseq
    %v1267 = vshrl.u32 %v1266, 7
    %v1268 = vsub.s32 %v1265, %v1267
    %v1269 = vrot.slane %v273, %v1268
    %v1271 = vunpack.c.l.s4 1414812756
    %v1272 = vunpack.c.0.s8 %v1271
    %v1273 = vlaneseq
    %v1274 = vshrl.u32 %v1273, 7
    %v1275 = vsub.s32 %v1272, %v1274
    %v1276 = vrot.slane %v273, %v1275
    %v1278 = vunpack.c.l.s4 1987475062
    %v1279 = vunpack.c.0.s8 %v1278
    %v1280 = vlaneseq
    %v1281 = vshrl.u32 %v1280, 7
    %v1282 = vsub.s32 %v1279, %v1281
    %v1283 = vrot.slane %v273, %v1282
    %v1285 = vunpack.c.l.s4 269488144
    %v1286 = vunpack.c.0.s8 %v1285
    %v1287 = vlaneseq
    %v1288 = vshrl.u32 %v1287, 7
    %v1289 = vsub.s32 %v1286, %v1288
    %v1290 = vrot.slane %v276, %v1289
    %v1292 = vunpack.c.l.s4 842150450
    %v1293 = vunpack.c.0.s8 %v1292
    %v1294 = vlaneseq
    %v1295 = vshrl.u32 %v1294, 7
    %v1296 = vsub.s32 %v1293, %v1295
    %v1297 = vrot.slane %v276, %v1296
    %v1299 = vunpack.c.l.s4 1414812756
    %v1300 = vunpack.c.0.s8 %v1299
    %v1301 = vlaneseq
    %v1302 = vshrl.u32 %v1301, 7
    %v1303 = vsub.s32 %v1300, %v1302
    %v1304 = vrot.slane %v276, %v1303
    %v1306 = vunpack.c.l.s4 1987475062
    %v1307 = vunpack.c.0.s8 %v1306
    %v1308 = vlaneseq
    %v1309 = vshrl.u32 %v1308, 7
    %v1310 = vsub.s32 %v1307, %v1309
    %v1311 = vrot.slane %v276, %v1310
    %v1313 = vunpack.c.l.s4 269488144
    %v1314 = vunpack.c.0.s8 %v1313
    %v1315 = vlaneseq
    %v1316 = vshrl.u32 %v1315, 7
    %v1317 = vsub.s32 %v1314, %v1316
    %v1318 = vrot.slane %v279, %v1317
    %v1320 = vunpack.c.l.s4 842150450
    %v1321 = vunpack.c.0.s8 %v1320
    %v1322 = vlaneseq
    %v1323 = vshrl.u32 %v1322, 7
    %v1324 = vsub.s32 %v1321, %v1323
    %v1325 = vrot.slane %v279, %v1324
    %v1327 = vunpack.c.l.s4 1414812756
    %v1328 = vunpack.c.0.s8 %v1327
    %v1329 = vlaneseq
    %v1330 = vshrl.u32 %v1329, 7
    %v1331 = vsub.s32 %v1328, %v1330
    %v1332 = vrot.slane %v279, %v1331
    %v1334 = vunpack.c.l.s4 1987475062
    %v1335 = vunpack.c.0.s8 %v1334
    %v1336 = vlaneseq
    %v1337 = vshrl.u32 %v1336, 7
    %v1338 = vsub.s32 %v1335, %v1337
    %v1339 = vrot.slane %v279, %v1338
    %v1341 = vunpack.c.l.s4 269488144
    %v1342 = vunpack.c.0.s8 %v1341
    %v1343 = vlaneseq
    %v1344 = vshrl.u32 %v1343, 7
    %v1345 = vsub.s32 %v1342, %v1344
    %v1346 = vrot.slane %v282, %v1345
    %v1348 = vunpack.c.l.s4 842150450
    %v1349 = vunpack.c.0.s8 %v1348
    %v1350 = vlaneseq
    %v1351 = vshrl.u32 %v1350, 7
    %v1352 = vsub.s32 %v1349, %v1351
    %v1353 = vrot.slane %v282, %v1352
    %v1355 = vunpack.c.l.s4 1414812756
    %v1356 = vunpack.c.0.s8 %v1355
    %v1357 = vlaneseq
    %v1358 = vshrl.u32 %v1357, 7
    %v1359 = vsub.s32 %v1356, %v1358
    %v1360 = vrot.slane %v282, %v1359
    %v1362 = vunpack.c.l.s4 1987475062
    %v1363 = vunpack.c.0.s8 %v1362
    %v1364 = vlaneseq
    %v1365 = vshrl.u32 %v1364, 7
    %v1366 = vsub.s32 %v1363, %v1365
    %v1367 = vrot.slane %v282, %v1366
    %v1369 = vunpack.c.l.s4 269488144
    %v1370 = vunpack.c.0.s8 %v1369
    %v1371 = vlaneseq
    %v1372 = vshrl.u32 %v1371, 7
    %v1373 = vsub.s32 %v1370, %v1372
    %v1374 = vrot.slane %v285, %v1373
    %v1376 = vunpack.c.l.s4 842150450
    %v1377 = vunpack.c.0.s8 %v1376
    %v1378 = vlaneseq
    %v1379 = vshrl.u32 %v1378, 7
    %v1380 = vsub.s32 %v1377, %v1379
    %v1381 = vrot.slane %v285, %v1380
    %v1383 = vunpack.c.l.s4 1414812756
    %v1384 = vunpack.c.0.s8 %v1383
    %v1385 = vlaneseq
    %v1386 = vshrl.u32 %v1385, 7
    %v1387 = vsub.s32 %v1384, %v1386
    %v1388 = vrot.slane %v285, %v1387
    %v1390 = vunpack.c.l.s4 1987475062
    %v1391 = vunpack.c.0.s8 %v1390
    %v1392 = vlaneseq
    %v1393 = vshrl.u32 %v1392, 7
    %v1394 = vsub.s32 %v1391, %v1393
    %v1395 = vrot.slane %v285, %v1394
    %v1397 = vunpack.c.l.s4 269488144
    %v1398 = vunpack.c.0.s8 %v1397
    %v1399 = vlaneseq
    %v1400 = vshrl.u32 %v1399, 7
    %v1401 = vsub.s32 %v1398, %v1400
    %v1402 = vrot.slane %v288, %v1401
    %v1404 = vunpack.c.l.s4 842150450
    %v1405 = vunpack.c.0.s8 %v1404
    %v1406 = vlaneseq
    %v1407 = vshrl.u32 %v1406, 7
    %v1408 = vsub.s32 %v1405, %v1407
    %v1409 = vrot.slane %v288, %v1408
    %v1411 = vunpack.c.l.s4 1414812756
    %v1412 = vunpack.c.0.s8 %v1411
    %v1413 = vlaneseq
    %v1414 = vshrl.u32 %v1413, 7
    %v1415 = vsub.s32 %v1412, %v1414
    %v1416 = vrot.slane %v288, %v1415
    %v1418 = vunpack.c.l.s4 1987475062
    %v1419 = vunpack.c.0.s8 %v1418
    %v1420 = vlaneseq
    %v1421 = vshrl.u32 %v1420, 7
    %v1422 = vsub.s32 %v1419, %v1421
    %v1423 = vrot.slane %v288, %v1422
    %v1425 = vunpack.c.l.s4 269488144
    %v1426 = vunpack.c.0.s8 %v1425
    %v1427 = vlaneseq
    %v1428 = vshrl.u32 %v1427, 7
    %v1429 = vsub.s32 %v1426, %v1428
    %v1430 = vrot.slane %v291, %v1429
    %v1432 = vunpack.c.l.s4 842150450
    %v1433 = vunpack.c.0.s8 %v1432
    %v1434 = vlaneseq
    %v1435 = vshrl.u32 %v1434, 7
    %v1436 = vsub.s32 %v1433, %v1435
    %v1437 = vrot.slane %v291, %v1436
    %v1439 = vunpack.c.l.s4 1414812756
    %v1440 = vunpack.c.0.s8 %v1439
    %v1441 = vlaneseq
    %v1442 = vshrl.u32 %v1441, 7
    %v1443 = vsub.s32 %v1440, %v1442
    %v1444 = vrot.slane %v291, %v1443
    %v1446 = vunpack.c.l.s4 1987475062
    %v1447 = vunpack.c.0.s8 %v1446
    %v1448 = vlaneseq
    %v1449 = vshrl.u32 %v1448, 7
    %v1450 = vsub.s32 %v1447, %v1449
    %v1451 = vrot.slane %v291, %v1450
    %v1453 = vunpack.c.l.s4 269488144
    %v1454 = vunpack.c.0.s8 %v1453
    %v1455 = vlaneseq
    %v1456 = vshrl.u32 %v1455, 7
    %v1457 = vsub.s32 %v1454, %v1456
    %v1458 = vrot.slane %v294, %v1457
    %v1460 = vunpack.c.l.s4 842150450
    %v1461 = vunpack.c.0.s8 %v1460
    %v1462 = vlaneseq
    %v1463 = vshrl.u32 %v1462, 7
    %v1464 = vsub.s32 %v1461, %v1463
    %v1465 = vrot.slane %v294, %v1464
    %v1467 = vunpack.c.l.s4 1414812756
    %v1468 = vunpack.c.0.s8 %v1467
    %v1469 = vlaneseq
    %v1470 = vshrl.u32 %v1469, 7
    %v1471 = vsub.s32 %v1468, %v1470
    %v1472 = vrot.slane %v294, %v1471
    %v1474 = vunpack.c.l.s4 1987475062
    %v1475 = vunpack.c.0.s8 %v1474
    %v1476 = vlaneseq
    %v1477 = vshrl.u32 %v1476, 7
    %v1478 = vsub.s32 %v1475, %v1477
    %v1479 = vrot.slane %v294, %v1478
    %v1481 = vunpack.c.l.s4 269488144
    %v1482 = vunpack.c.0.s8 %v1481
    %v1483 = vlaneseq
    %v1484 = vshrl.u32 %v1483, 7
    %v1485 = vsub.s32 %v1482, %v1484
    %v1486 = vrot.slane %v297, %v1485
    %v1488 = vunpack.c.l.s4 842150450
    %v1489 = vunpack.c.0.s8 %v1488
    %v1490 = vlaneseq
    %v1491 = vshrl.u32 %v1490, 7
    %v1492 = vsub.s32 %v1489, %v1491
    %v1493 = vrot.slane %v297, %v1492
    %v1495 = vunpack.c.l.s4 1414812756
    %v1496 = vunpack.c.0.s8 %v1495
    %v1497 = vlaneseq
    %v1498 = vshrl.u32 %v1497, 7
    %v1499 = vsub.s32 %v1496, %v1498
    %v1500 = vrot.slane %v297, %v1499
    %v1502 = vunpack.c.l.s4 1987475062
    %v1503 = vunpack.c.0.s8 %v1502
    %v1504 = vlaneseq
    %v1505 = vshrl.u32 %v1504, 7
    %v1506 = vsub.s32 %v1503, %v1505
    %v1507 = vrot.slane %v297, %v1506
    %v1509 = vunpack.c.l.s4 269488144
    %v1510 = vunpack.c.0.s8 %v1509
    %v1511 = vlaneseq
    %v1512 = vshrl.u32 %v1511, 7
    %v1513 = vsub.s32 %v1510, %v1512
    %v1514 = vrot.slane %v300, %v1513
    %v1516 = vunpack.c.l.s4 842150450
    %v1517 = vunpack.c.0.s8 %v1516
    %v1518 = vlaneseq
    %v1519 = vshrl.u32 %v1518, 7
    %v1520 = vsub.s32 %v1517, %v1519
    %v1521 = vrot.slane %v300, %v1520
    %v1523 = vunpack.c.l.s4 1414812756
    %v1524 = vunpack.c.0.s8 %v1523
    %v1525 = vlaneseq
    %v1526 = vshrl.u32 %v1525, 7
    %v1527 = vsub.s32 %v1524, %v1526
    %v1528 = vrot.slane %v300, %v1527
    %v1530 = vunpack.c.l.s4 1987475062
    %v1531 = vunpack.c.0.s8 %v1530
    %v1532 = vlaneseq
    %v1533 = vshrl.u32 %v1532, 7
    %v1534 = vsub.s32 %v1531, %v1533
    %v1535 = vrot.slane %v300, %v1534
    %v1537 = vunpack.c.l.s4 269488144
    %v1538 = vunpack.c.0.s8 %v1537
    %v1539 = vlaneseq
    %v1540 = vshrl.u32 %v1539, 7
    %v1541 = vsub.s32 %v1538, %v1540
    %v1542 = vrot.slane %v303, %v1541
    %v1544 = vunpack.c.l.s4 842150450
    %v1545 = vunpack.c.0.s8 %v1544
    %v1546 = vlaneseq
    %v1547 = vshrl.u32 %v1546, 7
    %v1548 = vsub.s32 %v1545, %v1547
    %v1549 = vrot.slane %v303, %v1548
    %v1551 = vunpack.c.l.s4 1414812756
    %v1552 = vunpack.c.0.s8 %v1551
    %v1553 = vlaneseq
    %v1554 = vshrl.u32 %v1553, 7
    %v1555 = vsub.s32 %v1552, %v1554
    %v1556 = vrot.slane %v303, %v1555
    %v1558 = vunpack.c.l.s4 1987475062
    %v1559 = vunpack.c.0.s8 %v1558
    %v1560 = vlaneseq
    %v1561 = vshrl.u32 %v1560, 7
    %v1562 = vsub.s32 %v1559, %v1561
    %v1563 = vrot.slane %v303, %v1562
    %v1565 = vunpack.c.l.s4 269488144
    %v1566 = vunpack.c.0.s8 %v1565
    %v1567 = vlaneseq
    %v1568 = vshrl.u32 %v1567, 7
    %v1569 = vsub.s32 %v1566, %v1568
    %v1570 = vrot.slane %v306, %v1569
    %v1572 = vunpack.c.l.s4 842150450
    %v1573 = vunpack.c.0.s8 %v1572
    %v1574 = vlaneseq
    %v1575 = vshrl.u32 %v1574, 7
    %v1576 = vsub.s32 %v1573, %v1575
    %v1577 = vrot.slane %v306, %v1576
    %v1579 = vunpack.c.l.s4 1414812756
    %v1580 = vunpack.c.0.s8 %v1579
    %v1581 = vlaneseq
    %v1582 = vshrl.u32 %v1581, 7
    %v1583 = vsub.s32 %v1580, %v1582
    %v1584 = vrot.slane %v306, %v1583
    %v1586 = vunpack.c.l.s4 1987475062
    %v1587 = vunpack.c.0.s8 %v1586
    %v1588 = vlaneseq
    %v1589 = vshrl.u32 %v1588, 7
    %v1590 = vsub.s32 %v1587, %v1589
    %v1591 = vrot.slane %v306, %v1590
    %v1593 = vunpack.c.l.s4 269488144
    %v1594 = vunpack.c.0.s8 %v1593
    %v1595 = vlaneseq
    %v1596 = vshrl.u32 %v1595, 7
    %v1597 = vsub.s32 %v1594, %v1596
    %v1598 = vrot.slane %v309, %v1597
    %v1600 = vunpack.c.l.s4 842150450
    %v1601 = vunpack.c.0.s8 %v1600
    %v1602 = vlaneseq
    %v1603 = vshrl.u32 %v1602, 7
    %v1604 = vsub.s32 %v1601, %v1603
    %v1605 = vrot.slane %v309, %v1604
    %v1607 = vunpack.c.l.s4 1414812756
    %v1608 = vunpack.c.0.s8 %v1607
    %v1609 = vlaneseq
    %v1610 = vshrl.u32 %v1609, 7
    %v1611 = vsub.s32 %v1608, %v1610
    %v1612 = vrot.slane %v309, %v1611
    %v1614 = vunpack.c.l.s4 1987475062
    %v1615 = vunpack.c.0.s8 %v1614
    %v1616 = vlaneseq
    %v1617 = vshrl.u32 %v1616, 7
    %v1618 = vsub.s32 %v1615, %v1617
    %v1619 = vrot.slane %v309, %v1618
    %v1621 = vunpack.c.l.s4 269488144
    %v1622 = vunpack.c.0.s8 %v1621
    %v1623 = vlaneseq
    %v1624 = vshrl.u32 %v1623, 7
    %v1625 = vsub.s32 %v1622, %v1624
    %v1626 = vrot.slane %v312, %v1625
    %v1628 = vunpack.c.l.s4 842150450
    %v1629 = vunpack.c.0.s8 %v1628
    %v1630 = vlaneseq
    %v1631 = vshrl.u32 %v1630, 7
    %v1632 = vsub.s32 %v1629, %v1631
    %v1633 = vrot.slane %v312, %v1632
    %v1635 = vunpack.c.l.s4 1414812756
    %v1636 = vunpack.c.0.s8 %v1635
    %v1637 = vlaneseq
    %v1638 = vshrl.u32 %v1637, 7
    %v1639 = vsub.s32 %v1636, %v1638
    %v1640 = vrot.slane %v312, %v1639
    %v1642 = vunpack.c.l.s4 1987475062
    %v1643 = vunpack.c.0.s8 %v1642
    %v1644 = vlaneseq
    %v1645 = vshrl.u32 %v1644, 7
    %v1646 = vsub.s32 %v1643, %v1645
    %v1647 = vrot.slane %v312, %v1646
    %v1649 = vunpack.c.l.s4 269488144
    %v1650 = vunpack.c.0.s8 %v1649
    %v1651 = vlaneseq
    %v1652 = vshrl.u32 %v1651, 7
    %v1653 = vsub.s32 %v1650, %v1652
    %v1654 = vrot.slane %v315, %v1653
    %v1656 = vunpack.c.l.s4 842150450
    %v1657 = vunpack.c.0.s8 %v1656
    %v1658 = vlaneseq
    %v1659 = vshrl.u32 %v1658, 7
    %v1660 = vsub.s32 %v1657, %v1659
    %v1661 = vrot.slane %v315, %v1660
    %v1663 = vunpack.c.l.s4 1414812756
    %v1664 = vunpack.c.0.s8 %v1663
    %v1665 = vlaneseq
    %v1666 = vshrl.u32 %v1665, 7
    %v1667 = vsub.s32 %v1664, %v1666
    %v1668 = vrot.slane %v315, %v1667
    %v1670 = vunpack.c.l.s4 1987475062
    %v1671 = vunpack.c.0.s8 %v1670
    %v1672 = vlaneseq
    %v1673 = vshrl.u32 %v1672, 7
    %v1674 = vsub.s32 %v1671, %v1673
    %v1675 = vrot.slane %v315, %v1674
    %v1677 = vunpack.c.l.s4 269488144
    %v1678 = vunpack.c.0.s8 %v1677
    %v1679 = vlaneseq
    %v1680 = vshrl.u32 %v1679, 7
    %v1681 = vsub.s32 %v1678, %v1680
    %v1682 = vrot.slane %v318, %v1681
    %v1684 = vunpack.c.l.s4 842150450
    %v1685 = vunpack.c.0.s8 %v1684
    %v1686 = vlaneseq
    %v1687 = vshrl.u32 %v1686, 7
    %v1688 = vsub.s32 %v1685, %v1687
    %v1689 = vrot.slane %v318, %v1688
    %v1691 = vunpack.c.l.s4 1414812756
    %v1692 = vunpack.c.0.s8 %v1691
    %v1693 = vlaneseq
    %v1694 = vshrl.u32 %v1693, 7
    %v1695 = vsub.s32 %v1692, %v1694
    %v1696 = vrot.slane %v318, %v1695
    %v1698 = vunpack.c.l.s4 1987475062
    %v1699 = vunpack.c.0.s8 %v1698
    %v1700 = vlaneseq
    %v1701 = vshrl.u32 %v1700, 7
    %v1702 = vsub.s32 %v1699, %v1701
    %v1703 = vrot.slane %v318, %v1702
    %v1705 = vunpack.c.l.s4 269488144
    %v1706 = vunpack.c.0.s8 %v1705
    %v1707 = vlaneseq
    %v1708 = vshrl.u32 %v1707, 7
    %v1709 = vsub.s32 %v1706, %v1708
    %v1710 = vrot.slane %v321, %v1709
    %v1712 = vunpack.c.l.s4 842150450
    %v1713 = vunpack.c.0.s8 %v1712
    %v1714 = vlaneseq
    %v1715 = vshrl.u32 %v1714, 7
    %v1716 = vsub.s32 %v1713, %v1715
    %v1717 = vrot.slane %v321, %v1716
    %v1719 = vunpack.c.l.s4 1414812756
    %v1720 = vunpack.c.0.s8 %v1719
    %v1721 = vlaneseq
    %v1722 = vshrl.u32 %v1721, 7
    %v1723 = vsub.s32 %v1720, %v1722
    %v1724 = vrot.slane %v321, %v1723
    %v1726 = vunpack.c.l.s4 1987475062
    %v1727 = vunpack.c.0.s8 %v1726
    %v1728 = vlaneseq
    %v1729 = vshrl.u32 %v1728, 7
    %v1730 = vsub.s32 %v1727, %v1729
    %v1731 = vrot.slane %v321, %v1730
    %v1733 = vunpack.c.l.s4 269488144
    %v1734 = vunpack.c.0.s8 %v1733
    %v1735 = vlaneseq
    %v1736 = vshrl.u32 %v1735, 7
    %v1737 = vsub.s32 %v1734, %v1736
    %v1738 = vrot.slane %v324, %v1737
    %v1740 = vunpack.c.l.s4 842150450
    %v1741 = vunpack.c.0.s8 %v1740
    %v1742 = vlaneseq
    %v1743 = vshrl.u32 %v1742, 7
    %v1744 = vsub.s32 %v1741, %v1743
    %v1745 = vrot.slane %v324, %v1744
    %v1747 = vunpack.c.l.s4 1414812756
    %v1748 = vunpack.c.0.s8 %v1747
    %v1749 = vlaneseq
    %v1750 = vshrl.u32 %v1749, 7
    %v1751 = vsub.s32 %v1748, %v1750
    %v1752 = vrot.slane %v324, %v1751
    %v1754 = vunpack.c.l.s4 1987475062
    %v1755 = vunpack.c.0.s8 %v1754
    %v1756 = vlaneseq
    %v1757 = vshrl.u32 %v1756, 7
    %v1758 = vsub.s32 %v1755, %v1757
    %v1759 = vrot.slane %v324, %v1758
    %v1761 = vunpack.c.l.s4 269488144
    %v1762 = vunpack.c.0.s8 %v1761
    %v1763 = vlaneseq
    %v1764 = vshrl.u32 %v1763, 7
    %v1765 = vsub.s32 %v1762, %v1764
    %v1766 = vrot.slane %v327, %v1765
    %v1768 = vunpack.c.l.s4 842150450
    %v1769 = vunpack.c.0.s8 %v1768
    %v1770 = vlaneseq
    %v1771 = vshrl.u32 %v1770, 7
    %v1772 = vsub.s32 %v1769, %v1771
    %v1773 = vrot.slane %v327, %v1772
    %v1775 = vunpack.c.l.s4 1414812756
    %v1776 = vunpack.c.0.s8 %v1775
    %v1777 = vlaneseq
    %v1778 = vshrl.u32 %v1777, 7
    %v1779 = vsub.s32 %v1776, %v1778
    %v1780 = vrot.slane %v327, %v1779
    %v1782 = vunpack.c.l.s4 1987475062
    %v1783 = vunpack.c.0.s8 %v1782
    %v1784 = vlaneseq
    %v1785 = vshrl.u32 %v1784, 7
    %v1786 = vsub.s32 %v1783, %v1785
    %v1787 = vrot.slane %v327, %v1786
    %v1789 = vunpack.c.l.s4 269488144
    %v1790 = vunpack.c.0.s8 %v1789
    %v1791 = vlaneseq
    %v1792 = vshrl.u32 %v1791, 7
    %v1793 = vsub.s32 %v1790, %v1792
    %v1794 = vrot.slane %v330, %v1793
    %v1796 = vunpack.c.l.s4 842150450
    %v1797 = vunpack.c.0.s8 %v1796
    %v1798 = vlaneseq
    %v1799 = vshrl.u32 %v1798, 7
    %v1800 = vsub.s32 %v1797, %v1799
    %v1801 = vrot.slane %v330, %v1800
    %v1803 = vunpack.c.l.s4 1414812756
    %v1804 = vunpack.c.0.s8 %v1803
    %v1805 = vlaneseq
    %v1806 = vshrl.u32 %v1805, 7
    %v1807 = vsub.s32 %v1804, %v1806
    %v1808 = vrot.slane %v330, %v1807
    %v1810 = vunpack.c.l.s4 1987475062
    %v1811 = vunpack.c.0.s8 %v1810
    %v1812 = vlaneseq
    %v1813 = vshrl.u32 %v1812, 7
    %v1814 = vsub.s32 %v1811, %v1813
    %v1815 = vrot.slane %v330, %v1814
    %v1817 = vunpack.c.l.s4 269488144
    %v1818 = vunpack.c.0.s8 %v1817
    %v1819 = vlaneseq
    %v1820 = vshrl.u32 %v1819, 7
    %v1821 = vsub.s32 %v1818, %v1820
    %v1822 = vrot.slane %v333, %v1821
    %v1824 = vunpack.c.l.s4 842150450
    %v1825 = vunpack.c.0.s8 %v1824
    %v1826 = vlaneseq
    %v1827 = vshrl.u32 %v1826, 7
    %v1828 = vsub.s32 %v1825, %v1827
    %v1829 = vrot.slane %v333, %v1828
    %v1831 = vunpack.c.l.s4 1414812756
    %v1832 = vunpack.c.0.s8 %v1831
    %v1833 = vlaneseq
    %v1834 = vshrl.u32 %v1833, 7
    %v1835 = vsub.s32 %v1832, %v1834
    %v1836 = vrot.slane %v333, %v1835
    %v1838 = vunpack.c.l.s4 1987475062
    %v1839 = vunpack.c.0.s8 %v1838
    %v1840 = vlaneseq
    %v1841 = vshrl.u32 %v1840, 7
    %v1842 = vsub.s32 %v1839, %v1841
    %v1843 = vrot.slane %v333, %v1842
    %v1845 = vunpack.c.l.s4 269488144
    %v1846 = vunpack.c.0.s8 %v1845
    %v1847 = vlaneseq
    %v1848 = vshrl.u32 %v1847, 7
    %v1849 = vsub.s32 %v1846, %v1848
    %v1850 = vrot.slane %v336, %v1849
    %v1852 = vunpack.c.l.s4 842150450
    %v1853 = vunpack.c.0.s8 %v1852
    %v1854 = vlaneseq
    %v1855 = vshrl.u32 %v1854, 7
    %v1856 = vsub.s32 %v1853, %v1855
    %v1857 = vrot.slane %v336, %v1856
    %v1859 = vunpack.c.l.s4 1414812756
    %v1860 = vunpack.c.0.s8 %v1859
    %v1861 = vlaneseq
    %v1862 = vshrl.u32 %v1861, 7
    %v1863 = vsub.s32 %v1860, %v1862
    %v1864 = vrot.slane %v336, %v1863
    %v1866 = vunpack.c.l.s4 1987475062
    %v1867 = vunpack.c.0.s8 %v1866
    %v1868 = vlaneseq
    %v1869 = vshrl.u32 %v1868, 7
    %v1870 = vsub.s32 %v1867, %v1869
    %v1871 = vrot.slane %v336, %v1870
    %v1873 = vunpack.c.l.s4 269488144
    %v1874 = vunpack.c.0.s8 %v1873
    %v1875 = vlaneseq
    %v1876 = vshrl.u32 %v1875, 7
    %v1877 = vsub.s32 %v1874, %v1876
    %v1878 = vrot.slane %v339, %v1877
    %v1880 = vunpack.c.l.s4 842150450
    %v1881 = vunpack.c.0.s8 %v1880
    %v1882 = vlaneseq
    %v1883 = vshrl.u32 %v1882, 7
    %v1884 = vsub.s32 %v1881, %v1883
    %v1885 = vrot.slane %v339, %v1884
    %v1887 = vunpack.c.l.s4 1414812756
    %v1888 = vunpack.c.0.s8 %v1887
    %v1889 = vlaneseq
    %v1890 = vshrl.u32 %v1889, 7
    %v1891 = vsub.s32 %v1888, %v1890
    %v1892 = vrot.slane %v339, %v1891
    %v1894 = vunpack.c.l.s4 1987475062
    %v1895 = vunpack.c.0.s8 %v1894
    %v1896 = vlaneseq
    %v1897 = vshrl.u32 %v1896, 7
    %v1898 = vsub.s32 %v1895, %v1897
    %v1899 = vrot.slane %v339, %v1898
    %v1901 = vunpack.c.l.s4 269488144
    %v1902 = vunpack.c.0.s8 %v1901
    %v1903 = vlaneseq
    %v1904 = vshrl.u32 %v1903, 7
    %v1905 = vsub.s32 %v1902, %v1904
    %v1906 = vrot.slane %v342, %v1905
    %v1908 = vunpack.c.l.s4 842150450
    %v1909 = vunpack.c.0.s8 %v1908
    %v1910 = vlaneseq
    %v1911 = vshrl.u32 %v1910, 7
    %v1912 = vsub.s32 %v1909, %v1911
    %v1913 = vrot.slane %v342, %v1912
    %v1915 = vunpack.c.l.s4 1414812756
    %v1916 = vunpack.c.0.s8 %v1915
    %v1917 = vlaneseq
    %v1918 = vshrl.u32 %v1917, 7
    %v1919 = vsub.s32 %v1916, %v1918
    %v1920 = vrot.slane %v342, %v1919
    %v1922 = vunpack.c.l.s4 1987475062
    %v1923 = vunpack.c.0.s8 %v1922
    %v1924 = vlaneseq
    %v1925 = vshrl.u32 %v1924, 7
    %v1926 = vsub.s32 %v1923, %v1925
    %v1927 = vrot.slane %v342, %v1926
    %v1929 = vunpack.c.l.s4 269488144
    %v1930 = vunpack.c.0.s8 %v1929
    %v1931 = vlaneseq
    %v1932 = vshrl.u32 %v1931, 7
    %v1933 = vsub.s32 %v1930, %v1932
    %v1934 = vrot.slane %v345, %v1933
    %v1936 = vunpack.c.l.s4 842150450
    %v1937 = vunpack.c.0.s8 %v1936
    %v1938 = vlaneseq
    %v1939 = vshrl.u32 %v1938, 7
    %v1940 = vsub.s32 %v1937, %v1939
    %v1941 = vrot.slane %v345, %v1940
    %v1943 = vunpack.c.l.s4 1414812756
    %v1944 = vunpack.c.0.s8 %v1943
    %v1945 = vlaneseq
    %v1946 = vshrl.u32 %v1945, 7
    %v1947 = vsub.s32 %v1944, %v1946
    %v1948 = vrot.slane %v345, %v1947
    %v1950 = vunpack.c.l.s4 1987475062
    %v1951 = vunpack.c.0.s8 %v1950
    %v1952 = vlaneseq
    %v1953 = vshrl.u32 %v1952, 7
    %v1954 = vsub.s32 %v1951, %v1953
    %v1955 = vrot.slane %v345, %v1954
    %v1957 = vunpack.c.l.s4 269488144
    %v1958 = vunpack.c.0.s8 %v1957
    %v1959 = vlaneseq
    %v1960 = vshrl.u32 %v1959, 7
    %v1961 = vsub.s32 %v1958, %v1960
    %v1962 = vrot.slane %v348, %v1961
    %v1964 = vunpack.c.l.s4 842150450
    %v1965 = vunpack.c.0.s8 %v1964
    %v1966 = vlaneseq
    %v1967 = vshrl.u32 %v1966, 7
    %v1968 = vsub.s32 %v1965, %v1967
    %v1969 = vrot.slane %v348, %v1968
    %v1971 = vunpack.c.l.s4 1414812756
    %v1972 = vunpack.c.0.s8 %v1971
    %v1973 = vlaneseq
    %v1974 = vshrl.u32 %v1973, 7
    %v1975 = vsub.s32 %v1972, %v1974
    %v1976 = vrot.slane %v348, %v1975
    %v1978 = vunpack.c.l.s4 1987475062
    %v1979 = vunpack.c.0.s8 %v1978
    %v1980 = vlaneseq
    %v1981 = vshrl.u32 %v1980, 7
    %v1982 = vsub.s32 %v1979, %v1981
    %v1983 = vrot.slane %v348, %v1982
    %v1985 = vunpack.c.l.s4 269488144
    %v1986 = vunpack.c.0.s8 %v1985
    %v1987 = vlaneseq
    %v1988 = vshrl.u32 %v1987, 7
    %v1989 = vsub.s32 %v1986, %v1988
    %v1990 = vrot.slane %v351, %v1989
    %v1992 = vunpack.c.l.s4 842150450
    %v1993 = vunpack.c.0.s8 %v1992
    %v1994 = vlaneseq
    %v1995 = vshrl.u32 %v1994, 7
    %v1996 = vsub.s32 %v1993, %v1995
    %v1997 = vrot.slane %v351, %v1996
    %v1999 = vunpack.c.l.s4 1414812756
    %v2000 = vunpack.c.0.s8 %v1999
    %v2001 = vlaneseq
    %v2002 = vshrl.u32 %v2001, 7
    %v2003 = vsub.s32 %v2000, %v2002
    %v2004 = vrot.slane %v351, %v2003
    %v2006 = vunpack.c.l.s4 1987475062
    %v2007 = vunpack.c.0.s8 %v2006
    %v2008 = vlaneseq
    %v2009 = vshrl.u32 %v2008, 7
    %v2010 = vsub.s32 %v2007, %v2009
    %v2011 = vrot.slane %v351, %v2010
    %v2013 = vunpack.c.l.s4 269488144
    %v2014 = vunpack.c.0.s8 %v2013
    %v2015 = vlaneseq
    %v2016 = vshrl.u32 %v2015, 7
    %v2017 = vsub.s32 %v2014, %v2016
    %v2018 = vrot.slane %v354, %v2017
    %v2020 = vunpack.c.l.s4 842150450
    %v2021 = vunpack.c.0.s8 %v2020
    %v2022 = vlaneseq
    %v2023 = vshrl.u32 %v2022, 7
    %v2024 = vsub.s32 %v2021, %v2023
    %v2025 = vrot.slane %v354, %v2024
    %v2027 = vunpack.c.l.s4 1414812756
    %v2028 = vunpack.c.0.s8 %v2027
    %v2029 = vlaneseq
    %v2030 = vshrl.u32 %v2029, 7
    %v2031 = vsub.s32 %v2028, %v2030
    %v2032 = vrot.slane %v354, %v2031
    %v2034 = vunpack.c.l.s4 1987475062
    %v2035 = vunpack.c.0.s8 %v2034
    %v2036 = vlaneseq
    %v2037 = vshrl.u32 %v2036, 7
    %v2038 = vsub.s32 %v2035, %v2037
    %v2039 = vrot.slane %v354, %v2038
    %v2041 = vunpack.c.l.s4 269488144
    %v2042 = vunpack.c.0.s8 %v2041
    %v2043 = vlaneseq
    %v2044 = vshrl.u32 %v2043, 7
    %v2045 = vsub.s32 %v2042, %v2044
    %v2046 = vrot.slane %v357, %v2045
    %v2048 = vunpack.c.l.s4 842150450
    %v2049 = vunpack.c.0.s8 %v2048
    %v2050 = vlaneseq
    %v2051 = vshrl.u32 %v2050, 7
    %v2052 = vsub.s32 %v2049, %v2051
    %v2053 = vrot.slane %v357, %v2052
    %v2055 = vunpack.c.l.s4 1414812756
    %v2056 = vunpack.c.0.s8 %v2055
    %v2057 = vlaneseq
    %v2058 = vshrl.u32 %v2057, 7
    %v2059 = vsub.s32 %v2056, %v2058
    %v2060 = vrot.slane %v357, %v2059
    %v2062 = vunpack.c.l.s4 1987475062
    %v2063 = vunpack.c.0.s8 %v2062
    %v2064 = vlaneseq
    %v2065 = vshrl.u32 %v2064, 7
    %v2066 = vsub.s32 %v2063, %v2065
    %v2067 = vrot.slane %v357, %v2066
    %v2069 = vunpack.c.l.s4 269488144
    %v2070 = vunpack.c.0.s8 %v2069
    %v2071 = vlaneseq
    %v2072 = vshrl.u32 %v2071, 7
    %v2073 = vsub.s32 %v2070, %v2072
    %v2074 = vrot.slane %v360, %v2073
    %v2076 = vunpack.c.l.s4 842150450
    %v2077 = vunpack.c.0.s8 %v2076
    %v2078 = vlaneseq
    %v2079 = vshrl.u32 %v2078, 7
    %v2080 = vsub.s32 %v2077, %v2079
    %v2081 = vrot.slane %v360, %v2080
    %v2083 = vunpack.c.l.s4 1414812756
    %v2084 = vunpack.c.0.s8 %v2083
    %v2085 = vlaneseq
    %v2086 = vshrl.u32 %v2085, 7
    %v2087 = vsub.s32 %v2084, %v2086
    %v2088 = vrot.slane %v360, %v2087
    %v2090 = vunpack.c.l.s4 1987475062
    %v2091 = vunpack.c.0.s8 %v2090
    %v2092 = vlaneseq
    %v2093 = vshrl.u32 %v2092, 7
    %v2094 = vsub.s32 %v2091, %v2093
    %v2095 = vrot.slane %v360, %v2094
    %v2097 = vunpack.c.l.s4 269488144
    %v2098 = vunpack.c.0.s8 %v2097
    %v2099 = vlaneseq
    %v2100 = vshrl.u32 %v2099, 7
    %v2101 = vsub.s32 %v2098, %v2100
    %v2102 = vrot.slane %v363, %v2101
    %v2104 = vunpack.c.l.s4 842150450
    %v2105 = vunpack.c.0.s8 %v2104
    %v2106 = vlaneseq
    %v2107 = vshrl.u32 %v2106, 7
    %v2108 = vsub.s32 %v2105, %v2107
    %v2109 = vrot.slane %v363, %v2108
    %v2111 = vunpack.c.l.s4 1414812756
    %v2112 = vunpack.c.0.s8 %v2111
    %v2113 = vlaneseq
    %v2114 = vshrl.u32 %v2113, 7
    %v2115 = vsub.s32 %v2112, %v2114
    %v2116 = vrot.slane %v363, %v2115
    %v2118 = vunpack.c.l.s4 1987475062
    %v2119 = vunpack.c.0.s8 %v2118
    %v2120 = vlaneseq
    %v2121 = vshrl.u32 %v2120, 7
    %v2122 = vsub.s32 %v2119, %v2121
    %v2123 = vrot.slane %v363, %v2122
    %v2125 = vunpack.c.l.s4 269488144
    %v2126 = vunpack.c.0.s8 %v2125
    %v2127 = vlaneseq
    %v2128 = vshrl.u32 %v2127, 7
    %v2129 = vsub.s32 %v2126, %v2128
    %v2130 = vrot.slane %v366, %v2129
    %v2132 = vunpack.c.l.s4 842150450
    %v2133 = vunpack.c.0.s8 %v2132
    %v2134 = vlaneseq
    %v2135 = vshrl.u32 %v2134, 7
    %v2136 = vsub.s32 %v2133, %v2135
    %v2137 = vrot.slane %v366, %v2136
    %v2139 = vunpack.c.l.s4 1414812756
    %v2140 = vunpack.c.0.s8 %v2139
    %v2141 = vlaneseq
    %v2142 = vshrl.u32 %v2141, 7
    %v2143 = vsub.s32 %v2140, %v2142
    %v2144 = vrot.slane %v366, %v2143
    %v2146 = vunpack.c.l.s4 1987475062
    %v2147 = vunpack.c.0.s8 %v2146
    %v2148 = vlaneseq
    %v2149 = vshrl.u32 %v2148, 7
    %v2150 = vsub.s32 %v2147, %v2149
    %v2151 = vrot.slane %v366, %v2150
    %v2153 = vunpack.c.l.s4 269488144
    %v2154 = vunpack.c.0.s8 %v2153
    %v2155 = vlaneseq
    %v2156 = vshrl.u32 %v2155, 7
    %v2157 = vsub.s32 %v2154, %v2156
    %v2158 = vrot.slane %v369, %v2157
    %v2160 = vunpack.c.l.s4 842150450
    %v2161 = vunpack.c.0.s8 %v2160
    %v2162 = vlaneseq
    %v2163 = vshrl.u32 %v2162, 7
    %v2164 = vsub.s32 %v2161, %v2163
    %v2165 = vrot.slane %v369, %v2164
    %v2167 = vunpack.c.l.s4 1414812756
    %v2168 = vunpack.c.0.s8 %v2167
    %v2169 = vlaneseq
    %v2170 = vshrl.u32 %v2169, 7
    %v2171 = vsub.s32 %v2168, %v2170
    %v2172 = vrot.slane %v369, %v2171
    %v2174 = vunpack.c.l.s4 1987475062
    %v2175 = vunpack.c.0.s8 %v2174
    %v2176 = vlaneseq
    %v2177 = vshrl.u32 %v2176, 7
    %v2178 = vsub.s32 %v2175, %v2177
    %v2179 = vrot.slane %v369, %v2178
    %v2181 = vunpack.c.l.s4 269488144
    %v2182 = vunpack.c.0.s8 %v2181
    %v2183 = vlaneseq
    %v2184 = vshrl.u32 %v2183, 7
    %v2185 = vsub.s32 %v2182, %v2184
    %v2186 = vrot.slane %v372, %v2185
    %v2188 = vunpack.c.l.s4 842150450
    %v2189 = vunpack.c.0.s8 %v2188
    %v2190 = vlaneseq
    %v2191 = vshrl.u32 %v2190, 7
    %v2192 = vsub.s32 %v2189, %v2191
    %v2193 = vrot.slane %v372, %v2192
    %v2195 = vunpack.c.l.s4 1414812756
    %v2196 = vunpack.c.0.s8 %v2195
    %v2197 = vlaneseq
    %v2198 = vshrl.u32 %v2197, 7
    %v2199 = vsub.s32 %v2196, %v2198
    %v2200 = vrot.slane %v372, %v2199
    %v2202 = vunpack.c.l.s4 1987475062
    %v2203 = vunpack.c.0.s8 %v2202
    %v2204 = vlaneseq
    %v2205 = vshrl.u32 %v2204, 7
    %v2206 = vsub.s32 %v2203, %v2205
    %v2207 = vrot.slane %v372, %v2206
    %v2209 = vunpack.c.l.s4 269488144
    %v2210 = vunpack.c.0.s8 %v2209
    %v2211 = vlaneseq
    %v2212 = vshrl.u32 %v2211, 7
    %v2213 = vsub.s32 %v2210, %v2212
    %v2214 = vrot.slane %v375, %v2213
    %v2216 = vunpack.c.l.s4 842150450
    %v2217 = vunpack.c.0.s8 %v2216
    %v2218 = vlaneseq
    %v2219 = vshrl.u32 %v2218, 7
    %v2220 = vsub.s32 %v2217, %v2219
    %v2221 = vrot.slane %v375, %v2220
    %v2223 = vunpack.c.l.s4 1414812756
    %v2224 = vunpack.c.0.s8 %v2223
    %v2225 = vlaneseq
    %v2226 = vshrl.u32 %v2225, 7
    %v2227 = vsub.s32 %v2224, %v2226
    %v2228 = vrot.slane %v375, %v2227
    %v2230 = vunpack.c.l.s4 1987475062
    %v2231 = vunpack.c.0.s8 %v2230
    %v2232 = vlaneseq
    %v2233 = vshrl.u32 %v2232, 7
    %v2234 = vsub.s32 %v2231, %v2233
    %v2235 = vrot.slane %v375, %v2234
    %v2237 = vunpack.c.l.s4 269488144
    %v2238 = vunpack.c.0.s8 %v2237
    %v2239 = vlaneseq
    %v2240 = vshrl.u32 %v2239, 7
    %v2241 = vsub.s32 %v2238, %v2240
    %v2242 = vrot.slane %v378, %v2241
    %v2244 = vunpack.c.l.s4 842150450
    %v2245 = vunpack.c.0.s8 %v2244
    %v2246 = vlaneseq
    %v2247 = vshrl.u32 %v2246, 7
    %v2248 = vsub.s32 %v2245, %v2247
    %v2249 = vrot.slane %v378, %v2248
    %v2251 = vunpack.c.l.s4 1414812756
    %v2252 = vunpack.c.0.s8 %v2251
    %v2253 = vlaneseq
    %v2254 = vshrl.u32 %v2253, 7
    %v2255 = vsub.s32 %v2252, %v2254
    %v2256 = vrot.slane %v378, %v2255
    %v2258 = vunpack.c.l.s4 1987475062
    %v2259 = vunpack.c.0.s8 %v2258
    %v2260 = vlaneseq
    %v2261 = vshrl.u32 %v2260, 7
    %v2262 = vsub.s32 %v2259, %v2261
    %v2263 = vrot.slane %v378, %v2262
    %v2265 = vunpack.c.l.s4 269488144
    %v2266 = vunpack.c.0.s8 %v2265
    %v2267 = vlaneseq
    %v2268 = vshrl.u32 %v2267, 7
    %v2269 = vsub.s32 %v2266, %v2268
    %v2270 = vrot.slane %v381, %v2269
    %v2272 = vunpack.c.l.s4 842150450
    %v2273 = vunpack.c.0.s8 %v2272
    %v2274 = vlaneseq
    %v2275 = vshrl.u32 %v2274, 7
    %v2276 = vsub.s32 %v2273, %v2275
    %v2277 = vrot.slane %v381, %v2276
    %v2279 = vunpack.c.l.s4 1414812756
    %v2280 = vunpack.c.0.s8 %v2279
    %v2281 = vlaneseq
    %v2282 = vshrl.u32 %v2281, 7
    %v2283 = vsub.s32 %v2280, %v2282
    %v2284 = vrot.slane %v381, %v2283
    %v2286 = vunpack.c.l.s4 1987475062
    %v2287 = vunpack.c.0.s8 %v2286
    %v2288 = vlaneseq
    %v2289 = vshrl.u32 %v2288, 7
    %v2290 = vsub.s32 %v2287, %v2289
    %v2291 = vrot.slane %v381, %v2290
    %v2293 = vunpack.c.l.s4 269488144
    %v2294 = vunpack.c.0.s8 %v2293
    %v2295 = vlaneseq
    %v2296 = vshrl.u32 %v2295, 7
    %v2297 = vsub.s32 %v2294, %v2296
    %v2298 = vrot.slane %v384, %v2297
    %v2300 = vunpack.c.l.s4 842150450
    %v2301 = vunpack.c.0.s8 %v2300
    %v2302 = vlaneseq
    %v2303 = vshrl.u32 %v2302, 7
    %v2304 = vsub.s32 %v2301, %v2303
    %v2305 = vrot.slane %v384, %v2304
    %v2307 = vunpack.c.l.s4 1414812756
    %v2308 = vunpack.c.0.s8 %v2307
    %v2309 = vlaneseq
    %v2310 = vshrl.u32 %v2309, 7
    %v2311 = vsub.s32 %v2308, %v2310
    %v2312 = vrot.slane %v384, %v2311
    %v2314 = vunpack.c.l.s4 1987475062
    %v2315 = vunpack.c.0.s8 %v2314
    %v2316 = vlaneseq
    %v2317 = vshrl.u32 %v2316, 7
    %v2318 = vsub.s32 %v2315, %v2317
    %v2319 = vrot.slane %v384, %v2318
    %v2321 = vunpack.c.l.s4 269488144
    %v2322 = vunpack.c.0.s8 %v2321
    %v2323 = vlaneseq
    %v2324 = vshrl.u32 %v2323, 7
    %v2325 = vsub.s32 %v2322, %v2324
    %v2326 = vrot.slane %v387, %v2325
    %v2328 = vunpack.c.l.s4 842150450
    %v2329 = vunpack.c.0.s8 %v2328
    %v2330 = vlaneseq
    %v2331 = vshrl.u32 %v2330, 7
    %v2332 = vsub.s32 %v2329, %v2331
    %v2333 = vrot.slane %v387, %v2332
    %v2335 = vunpack.c.l.s4 1414812756
    %v2336 = vunpack.c.0.s8 %v2335
    %v2337 = vlaneseq
    %v2338 = vshrl.u32 %v2337, 7
    %v2339 = vsub.s32 %v2336, %v2338
    %v2340 = vrot.slane %v387, %v2339
    %v2342 = vunpack.c.l.s4 1987475062
    %v2343 = vunpack.c.0.s8 %v2342
    %v2344 = vlaneseq
    %v2345 = vshrl.u32 %v2344, 7
    %v2346 = vsub.s32 %v2343, %v2345
    %v2347 = vrot.slane %v387, %v2346
    %v2349 = vunpack.c.l.s4 269488144
    %v2350 = vunpack.c.0.s8 %v2349
    %v2351 = vlaneseq
    %v2352 = vshrl.u32 %v2351, 7
    %v2353 = vsub.s32 %v2350, %v2352
    %v2354 = vrot.slane %v390, %v2353
    %v2356 = vunpack.c.l.s4 842150450
    %v2357 = vunpack.c.0.s8 %v2356
    %v2358 = vlaneseq
    %v2359 = vshrl.u32 %v2358, 7
    %v2360 = vsub.s32 %v2357, %v2359
    %v2361 = vrot.slane %v390, %v2360
    %v2363 = vunpack.c.l.s4 1414812756
    %v2364 = vunpack.c.0.s8 %v2363
    %v2365 = vlaneseq
    %v2366 = vshrl.u32 %v2365, 7
    %v2367 = vsub.s32 %v2364, %v2366
    %v2368 = vrot.slane %v390, %v2367
    %v2370 = vunpack.c.l.s4 1987475062
    %v2371 = vunpack.c.0.s8 %v2370
    %v2372 = vlaneseq
    %v2373 = vshrl.u32 %v2372, 7
    %v2374 = vsub.s32 %v2371, %v2373
    %v2375 = vrot.slane %v390, %v2374
    %v2377 = vunpack.c.l.s4 269488144
    %v2378 = vunpack.c.0.s8 %v2377
    %v2379 = vlaneseq
    %v2380 = vshrl.u32 %v2379, 7
    %v2381 = vsub.s32 %v2378, %v2380
    %v2382 = vrot.slane %v393, %v2381
    %v2384 = vunpack.c.l.s4 842150450
    %v2385 = vunpack.c.0.s8 %v2384
    %v2386 = vlaneseq
    %v2387 = vshrl.u32 %v2386, 7
    %v2388 = vsub.s32 %v2385, %v2387
    %v2389 = vrot.slane %v393, %v2388
    %v2391 = vunpack.c.l.s4 1414812756
    %v2392 = vunpack.c.0.s8 %v2391
    %v2393 = vlaneseq
    %v2394 = vshrl.u32 %v2393, 7
    %v2395 = vsub.s32 %v2392, %v2394
    %v2396 = vrot.slane %v393, %v2395
    %v2398 = vunpack.c.l.s4 1987475062
    %v2399 = vunpack.c.0.s8 %v2398
    %v2400 = vlaneseq
    %v2401 = vshrl.u32 %v2400, 7
    %v2402 = vsub.s32 %v2399, %v2401
    %v2403 = vrot.slane %v393, %v2402
    %v2405 = vunpack.c.l.s4 269488144
    %v2406 = vunpack.c.0.s8 %v2405
    %v2407 = vlaneseq
    %v2408 = vshrl.u32 %v2407, 7
    %v2409 = vsub.s32 %v2406, %v2408
    %v2410 = vrot.slane %v396, %v2409
    %v2412 = vunpack.c.l.s4 842150450
    %v2413 = vunpack.c.0.s8 %v2412
    %v2414 = vlaneseq
    %v2415 = vshrl.u32 %v2414, 7
    %v2416 = vsub.s32 %v2413, %v2415
    %v2417 = vrot.slane %v396, %v2416
    %v2419 = vunpack.c.l.s4 1414812756
    %v2420 = vunpack.c.0.s8 %v2419
    %v2421 = vlaneseq
    %v2422 = vshrl.u32 %v2421, 7
    %v2423 = vsub.s32 %v2420, %v2422
    %v2424 = vrot.slane %v396, %v2423
    %v2426 = vunpack.c.l.s4 1987475062
    %v2427 = vunpack.c.0.s8 %v2426
    %v2428 = vlaneseq
    %v2429 = vshrl.u32 %v2428, 7
    %v2430 = vsub.s32 %v2427, %v2429
    %v2431 = vrot.slane %v396, %v2430
    %v2433 = vunpack.c.l.s4 269488144
    %v2434 = vunpack.c.0.s8 %v2433
    %v2435 = vlaneseq
    %v2436 = vshrl.u32 %v2435, 7
    %v2437 = vsub.s32 %v2434, %v2436
    %v2438 = vrot.slane %v399, %v2437
    %v2440 = vunpack.c.l.s4 842150450
    %v2441 = vunpack.c.0.s8 %v2440
    %v2442 = vlaneseq
    %v2443 = vshrl.u32 %v2442, 7
    %v2444 = vsub.s32 %v2441, %v2443
    %v2445 = vrot.slane %v399, %v2444
    %v2447 = vunpack.c.l.s4 1414812756
    %v2448 = vunpack.c.0.s8 %v2447
    %v2449 = vlaneseq
    %v2450 = vshrl.u32 %v2449, 7
    %v2451 = vsub.s32 %v2448, %v2450
    %v2452 = vrot.slane %v399, %v2451
    %v2454 = vunpack.c.l.s4 1987475062
    %v2455 = vunpack.c.0.s8 %v2454
    %v2456 = vlaneseq
    %v2457 = vshrl.u32 %v2456, 7
    %v2458 = vsub.s32 %v2455, %v2457
    %v2459 = vrot.slane %v399, %v2458
    %v2461 = vunpack.c.l.s4 269488144
    %v2462 = vunpack.c.0.s8 %v2461
    %v2463 = vlaneseq
    %v2464 = vshrl.u32 %v2463, 7
    %v2465 = vsub.s32 %v2462, %v2464
    %v2466 = vrot.slane %v402, %v2465
    %v2468 = vunpack.c.l.s4 842150450
    %v2469 = vunpack.c.0.s8 %v2468
    %v2470 = vlaneseq
    %v2471 = vshrl.u32 %v2470, 7
    %v2472 = vsub.s32 %v2469, %v2471
    %v2473 = vrot.slane %v402, %v2472
    %v2475 = vunpack.c.l.s4 1414812756
    %v2476 = vunpack.c.0.s8 %v2475
    %v2477 = vlaneseq
    %v2478 = vshrl.u32 %v2477, 7
    %v2479 = vsub.s32 %v2476, %v2478
    %v2480 = vrot.slane %v402, %v2479
    %v2482 = vunpack.c.l.s4 1987475062
    %v2483 = vunpack.c.0.s8 %v2482
    %v2484 = vlaneseq
    %v2485 = vshrl.u32 %v2484, 7
    %v2486 = vsub.s32 %v2483, %v2485
    %v2487 = vrot.slane %v402, %v2486
    %v2489 = vunpack.c.l.s4 269488144
    %v2490 = vunpack.c.0.s8 %v2489
    %v2491 = vlaneseq
    %v2492 = vshrl.u32 %v2491, 7
    %v2493 = vsub.s32 %v2490, %v2492
    %v2494 = vrot.slane %v405, %v2493
    %v2496 = vunpack.c.l.s4 842150450
    %v2497 = vunpack.c.0.s8 %v2496
    %v2498 = vlaneseq
    %v2499 = vshrl.u32 %v2498, 7
    %v2500 = vsub.s32 %v2497, %v2499
    %v2501 = vrot.slane %v405, %v2500
    %v2503 = vunpack.c.l.s4 1414812756
    %v2504 = vunpack.c.0.s8 %v2503
    %v2505 = vlaneseq
    %v2506 = vshrl.u32 %v2505, 7
    %v2507 = vsub.s32 %v2504, %v2506
    %v2508 = vrot.slane %v405, %v2507
    %v2510 = vunpack.c.l.s4 1987475062
    %v2511 = vunpack.c.0.s8 %v2510
    %v2512 = vlaneseq
    %v2513 = vshrl.u32 %v2512, 7
    %v2514 = vsub.s32 %v2511, %v2513
    %v2515 = vrot.slane %v405, %v2514
    %v2517 = vunpack.c.l.s4 269488144
    %v2518 = vunpack.c.0.s8 %v2517
    %v2519 = vlaneseq
    %v2520 = vshrl.u32 %v2519, 7
    %v2521 = vsub.s32 %v2518, %v2520
    %v2522 = vrot.slane %v408, %v2521
    %v2524 = vunpack.c.l.s4 842150450
    %v2525 = vunpack.c.0.s8 %v2524
    %v2526 = vlaneseq
    %v2527 = vshrl.u32 %v2526, 7
    %v2528 = vsub.s32 %v2525, %v2527
    %v2529 = vrot.slane %v408, %v2528
    %v2531 = vunpack.c.l.s4 1414812756
    %v2532 = vunpack.c.0.s8 %v2531
    %v2533 = vlaneseq
    %v2534 = vshrl.u32 %v2533, 7
    %v2535 = vsub.s32 %v2532, %v2534
    %v2536 = vrot.slane %v408, %v2535
    %v2538 = vunpack.c.l.s4 1987475062
    %v2539 = vunpack.c.0.s8 %v2538
    %v2540 = vlaneseq
    %v2541 = vshrl.u32 %v2540, 7
    %v2542 = vsub.s32 %v2539, %v2541
    %v2543 = vrot.slane %v408, %v2542
    %v2545 = vunpack.c.l.s4 269488144
    %v2546 = vunpack.c.0.s8 %v2545
    %v2547 = vlaneseq
    %v2548 = vshrl.u32 %v2547, 7
    %v2549 = vsub.s32 %v2546, %v2548
    %v2550 = vrot.slane %v411, %v2549
    %v2552 = vunpack.c.l.s4 842150450
    %v2553 = vunpack.c.0.s8 %v2552
    %v2554 = vlaneseq
    %v2555 = vshrl.u32 %v2554, 7
    %v2556 = vsub.s32 %v2553, %v2555
    %v2557 = vrot.slane %v411, %v2556
    %v2559 = vunpack.c.l.s4 1414812756
    %v2560 = vunpack.c.0.s8 %v2559
    %v2561 = vlaneseq
    %v2562 = vshrl.u32 %v2561, 7
    %v2563 = vsub.s32 %v2560, %v2562
    %v2564 = vrot.slane %v411, %v2563
    %v2566 = vunpack.c.l.s4 1987475062
    %v2567 = vunpack.c.0.s8 %v2566
    %v2568 = vlaneseq
    %v2569 = vshrl.u32 %v2568, 7
    %v2570 = vsub.s32 %v2567, %v2569
    %v2571 = vrot.slane %v411, %v2570
    %v2573 = vunpack.c.l.s4 269488144
    %v2574 = vunpack.c.0.s8 %v2573
    %v2575 = vlaneseq
    %v2576 = vshrl.u32 %v2575, 7
    %v2577 = vsub.s32 %v2574, %v2576
    %v2578 = vrot.slane %v414, %v2577
    %v2580 = vunpack.c.l.s4 842150450
    %v2581 = vunpack.c.0.s8 %v2580
    %v2582 = vlaneseq
    %v2583 = vshrl.u32 %v2582, 7
    %v2584 = vsub.s32 %v2581, %v2583
    %v2585 = vrot.slane %v414, %v2584
    %v2587 = vunpack.c.l.s4 1414812756
    %v2588 = vunpack.c.0.s8 %v2587
    %v2589 = vlaneseq
    %v2590 = vshrl.u32 %v2589, 7
    %v2591 = vsub.s32 %v2588, %v2590
    %v2592 = vrot.slane %v414, %v2591
    %v2594 = vunpack.c.l.s4 1987475062
    %v2595 = vunpack.c.0.s8 %v2594
    %v2596 = vlaneseq
    %v2597 = vshrl.u32 %v2596, 7
    %v2598 = vsub.s32 %v2595, %v2597
    %v2599 = vrot.slane %v414, %v2598
    %v2601 = vunpack.c.l.s4 269488144
    %v2602 = vunpack.c.0.s8 %v2601
    %v2603 = vlaneseq
    %v2604 = vshrl.u32 %v2603, 7
    %v2605 = vsub.s32 %v2602, %v2604
    %v2606 = vrot.slane %v417, %v2605
    %v2608 = vunpack.c.l.s4 842150450
    %v2609 = vunpack.c.0.s8 %v2608
    %v2610 = vlaneseq
    %v2611 = vshrl.u32 %v2610, 7
    %v2612 = vsub.s32 %v2609, %v2611
    %v2613 = vrot.slane %v417, %v2612
    %v2615 = vunpack.c.l.s4 1414812756
    %v2616 = vunpack.c.0.s8 %v2615
    %v2617 = vlaneseq
    %v2618 = vshrl.u32 %v2617, 7
    %v2619 = vsub.s32 %v2616, %v2618
    %v2620 = vrot.slane %v417, %v2619
    %v2622 = vunpack.c.l.s4 1987475062
    %v2623 = vunpack.c.0.s8 %v2622
    %v2624 = vlaneseq
    %v2625 = vshrl.u32 %v2624, 7
    %v2626 = vsub.s32 %v2623, %v2625
    %v2627 = vrot.slane %v417, %v2626
    %v2629 = vunpack.c.l.s4 269488144
    %v2630 = vunpack.c.0.s8 %v2629
    %v2631 = vlaneseq
    %v2632 = vshrl.u32 %v2631, 7
    %v2633 = vsub.s32 %v2630, %v2632
    %v2634 = vrot.slane %v420, %v2633
    %v2636 = vunpack.c.l.s4 842150450
    %v2637 = vunpack.c.0.s8 %v2636
    %v2638 = vlaneseq
    %v2639 = vshrl.u32 %v2638, 7
    %v2640 = vsub.s32 %v2637, %v2639
    %v2641 = vrot.slane %v420, %v2640
    %v2643 = vunpack.c.l.s4 1414812756
    %v2644 = vunpack.c.0.s8 %v2643
    %v2645 = vlaneseq
    %v2646 = vshrl.u32 %v2645, 7
    %v2647 = vsub.s32 %v2644, %v2646
    %v2648 = vrot.slane %v420, %v2647
    %v2650 = vunpack.c.l.s4 1987475062
    %v2651 = vunpack.c.0.s8 %v2650
    %v2652 = vlaneseq
    %v2653 = vshrl.u32 %v2652, 7
    %v2654 = vsub.s32 %v2651, %v2653
    %v2655 = vrot.slane %v420, %v2654
    %v2657 = vunpack.c.l.s4 269488144
    %v2658 = vunpack.c.0.s8 %v2657
    %v2659 = vlaneseq
    %v2660 = vshrl.u32 %v2659, 7
    %v2661 = vsub.s32 %v2658, %v2660
    %v2662 = vrot.slane %v423, %v2661
    %v2664 = vunpack.c.l.s4 842150450
    %v2665 = vunpack.c.0.s8 %v2664
    %v2666 = vlaneseq
    %v2667 = vshrl.u32 %v2666, 7
    %v2668 = vsub.s32 %v2665, %v2667
    %v2669 = vrot.slane %v423, %v2668
    %v2671 = vunpack.c.l.s4 1414812756
    %v2672 = vunpack.c.0.s8 %v2671
    %v2673 = vlaneseq
    %v2674 = vshrl.u32 %v2673, 7
    %v2675 = vsub.s32 %v2672, %v2674
    %v2676 = vrot.slane %v423, %v2675
    %v2678 = vunpack.c.l.s4 1987475062
    %v2679 = vunpack.c.0.s8 %v2678
    %v2680 = vlaneseq
    %v2681 = vshrl.u32 %v2680, 7
    %v2682 = vsub.s32 %v2679, %v2681
    %v2683 = vrot.slane %v423, %v2682
    %v2685 = vunpack.c.l.s4 269488144
    %v2686 = vunpack.c.0.s8 %v2685
    %v2687 = vlaneseq
    %v2688 = vshrl.u32 %v2687, 7
    %v2689 = vsub.s32 %v2686, %v2688
    %v2690 = vrot.slane %v426, %v2689
    %v2692 = vunpack.c.l.s4 842150450
    %v2693 = vunpack.c.0.s8 %v2692
    %v2694 = vlaneseq
    %v2695 = vshrl.u32 %v2694, 7
    %v2696 = vsub.s32 %v2693, %v2695
    %v2697 = vrot.slane %v426, %v2696
    %v2699 = vunpack.c.l.s4 1414812756
    %v2700 = vunpack.c.0.s8 %v2699
    %v2701 = vlaneseq
    %v2702 = vshrl.u32 %v2701, 7
    %v2703 = vsub.s32 %v2700, %v2702
    %v2704 = vrot.slane %v426, %v2703
    %v2706 = vunpack.c.l.s4 1987475062
    %v2707 = vunpack.c.0.s8 %v2706
    %v2708 = vlaneseq
    %v2709 = vshrl.u32 %v2708, 7
    %v2710 = vsub.s32 %v2707, %v2709
    %v2711 = vrot.slane %v426, %v2710
    %v2713 = vunpack.c.l.s4 269488144
    %v2714 = vunpack.c.0.s8 %v2713
    %v2715 = vlaneseq
    %v2716 = vshrl.u32 %v2715, 7
    %v2717 = vsub.s32 %v2714, %v2716
    %v2718 = vrot.slane %v429, %v2717
    %v2720 = vunpack.c.l.s4 842150450
    %v2721 = vunpack.c.0.s8 %v2720
    %v2722 = vlaneseq
    %v2723 = vshrl.u32 %v2722, 7
    %v2724 = vsub.s32 %v2721, %v2723
    %v2725 = vrot.slane %v429, %v2724
    %v2727 = vunpack.c.l.s4 1414812756
    %v2728 = vunpack.c.0.s8 %v2727
    %v2729 = vlaneseq
    %v2730 = vshrl.u32 %v2729, 7
    %v2731 = vsub.s32 %v2728, %v2730
    %v2732 = vrot.slane %v429, %v2731
    %v2734 = vunpack.c.l.s4 1987475062
    %v2735 = vunpack.c.0.s8 %v2734
    %v2736 = vlaneseq
    %v2737 = vshrl.u32 %v2736, 7
    %v2738 = vsub.s32 %v2735, %v2737
    %v2739 = vrot.slane %v429, %v2738
    %v2741 = vunpack.c.l.s4 269488144
    %v2742 = vunpack.c.0.s8 %v2741
    %v2743 = vlaneseq
    %v2744 = vshrl.u32 %v2743, 7
    %v2745 = vsub.s32 %v2742, %v2744
    %v2746 = vrot.slane %v432, %v2745
    %v2748 = vunpack.c.l.s4 842150450
    %v2749 = vunpack.c.0.s8 %v2748
    %v2750 = vlaneseq
    %v2751 = vshrl.u32 %v2750, 7
    %v2752 = vsub.s32 %v2749, %v2751
    %v2753 = vrot.slane %v432, %v2752
    %v2755 = vunpack.c.l.s4 1414812756
    %v2756 = vunpack.c.0.s8 %v2755
    %v2757 = vlaneseq
    %v2758 = vshrl.u32 %v2757, 7
    %v2759 = vsub.s32 %v2756, %v2758
    %v2760 = vrot.slane %v432, %v2759
    %v2762 = vunpack.c.l.s4 1987475062
    %v2763 = vunpack.c.0.s8 %v2762
    %v2764 = vlaneseq
    %v2765 = vshrl.u32 %v2764, 7
    %v2766 = vsub.s32 %v2763, %v2765
    %v2767 = vrot.slane %v432, %v2766
    %v2769 = vunpack.c.l.s4 269488144
    %v2770 = vunpack.c.0.s8 %v2769
    %v2771 = vlaneseq
    %v2772 = vshrl.u32 %v2771, 7
    %v2773 = vsub.s32 %v2770, %v2772
    %v2774 = vrot.slane %v435, %v2773
    %v2776 = vunpack.c.l.s4 842150450
    %v2777 = vunpack.c.0.s8 %v2776
    %v2778 = vlaneseq
    %v2779 = vshrl.u32 %v2778, 7
    %v2780 = vsub.s32 %v2777, %v2779
    %v2781 = vrot.slane %v435, %v2780
    %v2783 = vunpack.c.l.s4 1414812756
    %v2784 = vunpack.c.0.s8 %v2783
    %v2785 = vlaneseq
    %v2786 = vshrl.u32 %v2785, 7
    %v2787 = vsub.s32 %v2784, %v2786
    %v2788 = vrot.slane %v435, %v2787
    %v2790 = vunpack.c.l.s4 1987475062
    %v2791 = vunpack.c.0.s8 %v2790
    %v2792 = vlaneseq
    %v2793 = vshrl.u32 %v2792, 7
    %v2794 = vsub.s32 %v2791, %v2793
    %v2795 = vrot.slane %v435, %v2794
    %v2797 = vunpack.c.l.s4 269488144
    %v2798 = vunpack.c.0.s8 %v2797
    %v2799 = vlaneseq
    %v2800 = vshrl.u32 %v2799, 7
    %v2801 = vsub.s32 %v2798, %v2800
    %v2802 = vrot.slane %v438, %v2801
    %v2804 = vunpack.c.l.s4 842150450
    %v2805 = vunpack.c.0.s8 %v2804
    %v2806 = vlaneseq
    %v2807 = vshrl.u32 %v2806, 7
    %v2808 = vsub.s32 %v2805, %v2807
    %v2809 = vrot.slane %v438, %v2808
    %v2811 = vunpack.c.l.s4 1414812756
    %v2812 = vunpack.c.0.s8 %v2811
    %v2813 = vlaneseq
    %v2814 = vshrl.u32 %v2813, 7
    %v2815 = vsub.s32 %v2812, %v2814
    %v2816 = vrot.slane %v438, %v2815
    %v2818 = vunpack.c.l.s4 1987475062
    %v2819 = vunpack.c.0.s8 %v2818
    %v2820 = vlaneseq
    %v2821 = vshrl.u32 %v2820, 7
    %v2822 = vsub.s32 %v2819, %v2821
    %v2823 = vrot.slane %v438, %v2822
    %v2825 = vunpack.c.l.s4 269488144
    %v2826 = vunpack.c.0.s8 %v2825
    %v2827 = vlaneseq
    %v2828 = vshrl.u32 %v2827, 7
    %v2829 = vsub.s32 %v2826, %v2828
    %v2830 = vrot.slane %v441, %v2829
    %v2832 = vunpack.c.l.s4 842150450
    %v2833 = vunpack.c.0.s8 %v2832
    %v2834 = vlaneseq
    %v2835 = vshrl.u32 %v2834, 7
    %v2836 = vsub.s32 %v2833, %v2835
    %v2837 = vrot.slane %v441, %v2836
    %v2839 = vunpack.c.l.s4 1414812756
    %v2840 = vunpack.c.0.s8 %v2839
    %v2841 = vlaneseq
    %v2842 = vshrl.u32 %v2841, 7
    %v2843 = vsub.s32 %v2840, %v2842
    %v2844 = vrot.slane %v441, %v2843
    %v2846 = vunpack.c.l.s4 1987475062
    %v2847 = vunpack.c.0.s8 %v2846
    %v2848 = vlaneseq
    %v2849 = vshrl.u32 %v2848, 7
    %v2850 = vsub.s32 %v2847, %v2849
    %v2851 = vrot.slane %v441, %v2850
    %v2853 = vunpack.c.l.s4 269488144
    %v2854 = vunpack.c.0.s8 %v2853
    %v2855 = vlaneseq
    %v2856 = vshrl.u32 %v2855, 7
    %v2857 = vsub.s32 %v2854, %v2856
    %v2858 = vrot.slane %v444, %v2857
    %v2860 = vunpack.c.l.s4 842150450
    %v2861 = vunpack.c.0.s8 %v2860
    %v2862 = vlaneseq
    %v2863 = vshrl.u32 %v2862, 7
    %v2864 = vsub.s32 %v2861, %v2863
    %v2865 = vrot.slane %v444, %v2864
    %v2867 = vunpack.c.l.s4 1414812756
    %v2868 = vunpack.c.0.s8 %v2867
    %v2869 = vlaneseq
    %v2870 = vshrl.u32 %v2869, 7
    %v2871 = vsub.s32 %v2868, %v2870
    %v2872 = vrot.slane %v444, %v2871
    %v2874 = vunpack.c.l.s4 1987475062
    %v2875 = vunpack.c.0.s8 %v2874
    %v2876 = vlaneseq
    %v2877 = vshrl.u32 %v2876, 7
    %v2878 = vsub.s32 %v2875, %v2877
    %v2879 = vrot.slane %v444, %v2878
    %v2881 = vunpack.c.l.s4 269488144
    %v2882 = vunpack.c.0.s8 %v2881
    %v2883 = vlaneseq
    %v2884 = vshrl.u32 %v2883, 7
    %v2885 = vsub.s32 %v2882, %v2884
    %v2886 = vrot.slane %v447, %v2885
    %v2888 = vunpack.c.l.s4 842150450
    %v2889 = vunpack.c.0.s8 %v2888
    %v2890 = vlaneseq
    %v2891 = vshrl.u32 %v2890, 7
    %v2892 = vsub.s32 %v2889, %v2891
    %v2893 = vrot.slane %v447, %v2892
    %v2895 = vunpack.c.l.s4 1414812756
    %v2896 = vunpack.c.0.s8 %v2895
    %v2897 = vlaneseq
    %v2898 = vshrl.u32 %v2897, 7
    %v2899 = vsub.s32 %v2896, %v2898
    %v2900 = vrot.slane %v447, %v2899
    %v2902 = vunpack.c.l.s4 1987475062
    %v2903 = vunpack.c.0.s8 %v2902
    %v2904 = vlaneseq
    %v2905 = vshrl.u32 %v2904, 7
    %v2906 = vsub.s32 %v2903, %v2905
    %v2907 = vrot.slane %v447, %v2906
    %v2909 = vunpack.c.l.s4 269488144
    %v2910 = vunpack.c.0.s8 %v2909
    %v2911 = vlaneseq
    %v2912 = vshrl.u32 %v2911, 7
    %v2913 = vsub.s32 %v2910, %v2912
    %v2914 = vrot.slane %v450, %v2913
    %v2916 = vunpack.c.l.s4 842150450
    %v2917 = vunpack.c.0.s8 %v2916
    %v2918 = vlaneseq
    %v2919 = vshrl.u32 %v2918, 7
    %v2920 = vsub.s32 %v2917, %v2919
    %v2921 = vrot.slane %v450, %v2920
    %v2923 = vunpack.c.l.s4 1414812756
    %v2924 = vunpack.c.0.s8 %v2923
    %v2925 = vlaneseq
    %v2926 = vshrl.u32 %v2925, 7
    %v2927 = vsub.s32 %v2924, %v2926
    %v2928 = vrot.slane %v450, %v2927
    %v2930 = vunpack.c.l.s4 1987475062
    %v2931 = vunpack.c.0.s8 %v2930
    %v2932 = vlaneseq
    %v2933 = vshrl.u32 %v2932, 7
    %v2934 = vsub.s32 %v2931, %v2933
    %v2935 = vrot.slane %v450, %v2934
    %v2937 = vunpack.c.l.s4 269488144
    %v2938 = vunpack.c.0.s8 %v2937
    %v2939 = vlaneseq
    %v2940 = vshrl.u32 %v2939, 7
    %v2941 = vsub.s32 %v2938, %v2940
    %v2942 = vrot.slane %v453, %v2941
    %v2944 = vunpack.c.l.s4 842150450
    %v2945 = vunpack.c.0.s8 %v2944
    %v2946 = vlaneseq
    %v2947 = vshrl.u32 %v2946, 7
    %v2948 = vsub.s32 %v2945, %v2947
    %v2949 = vrot.slane %v453, %v2948
    %v2951 = vunpack.c.l.s4 1414812756
    %v2952 = vunpack.c.0.s8 %v2951
    %v2953 = vlaneseq
    %v2954 = vshrl.u32 %v2953, 7
    %v2955 = vsub.s32 %v2952, %v2954
    %v2956 = vrot.slane %v453, %v2955
    %v2958 = vunpack.c.l.s4 1987475062
    %v2959 = vunpack.c.0.s8 %v2958
    %v2960 = vlaneseq
    %v2961 = vshrl.u32 %v2960, 7
    %v2962 = vsub.s32 %v2959, %v2961
    %v2963 = vrot.slane %v453, %v2962
    %v2965 = vunpack.c.l.s4 269488144
    %v2966 = vunpack.c.0.s8 %v2965
    %v2967 = vlaneseq
    %v2968 = vshrl.u32 %v2967, 7
    %v2969 = vsub.s32 %v2966, %v2968
    %v2970 = vrot.slane %v456, %v2969
    %v2972 = vunpack.c.l.s4 842150450
    %v2973 = vunpack.c.0.s8 %v2972
    %v2974 = vlaneseq
    %v2975 = vshrl.u32 %v2974, 7
    %v2976 = vsub.s32 %v2973, %v2975
    %v2977 = vrot.slane %v456, %v2976
    %v2979 = vunpack.c.l.s4 1414812756
    %v2980 = vunpack.c.0.s8 %v2979
    %v2981 = vlaneseq
    %v2982 = vshrl.u32 %v2981, 7
    %v2983 = vsub.s32 %v2980, %v2982
    %v2984 = vrot.slane %v456, %v2983
    %v2986 = vunpack.c.l.s4 1987475062
    %v2987 = vunpack.c.0.s8 %v2986
    %v2988 = vlaneseq
    %v2989 = vshrl.u32 %v2988, 7
    %v2990 = vsub.s32 %v2987, %v2989
    %v2991 = vrot.slane %v456, %v2990
    %v2993 = vunpack.c.l.s4 269488144
    %v2994 = vunpack.c.0.s8 %v2993
    %v2995 = vlaneseq
    %v2996 = vshrl.u32 %v2995, 7
    %v2997 = vsub.s32 %v2994, %v2996
    %v2998 = vrot.slane %v459, %v2997
    %v3000 = vunpack.c.l.s4 842150450
    %v3001 = vunpack.c.0.s8 %v3000
    %v3002 = vlaneseq
    %v3003 = vshrl.u32 %v3002, 7
    %v3004 = vsub.s32 %v3001, %v3003
    %v3005 = vrot.slane %v459, %v3004
    %v3007 = vunpack.c.l.s4 1414812756
    %v3008 = vunpack.c.0.s8 %v3007
    %v3009 = vlaneseq
    %v3010 = vshrl.u32 %v3009, 7
    %v3011 = vsub.s32 %v3008, %v3010
    %v3012 = vrot.slane %v459, %v3011
    %v3014 = vunpack.c.l.s4 1987475062
    %v3015 = vunpack.c.0.s8 %v3014
    %v3016 = vlaneseq
    %v3017 = vshrl.u32 %v3016, 7
    %v3018 = vsub.s32 %v3015, %v3017
    %v3019 = vrot.slane %v459, %v3018
    %v3021 = vunpack.c.l.s4 269488144
    %v3022 = vunpack.c.0.s8 %v3021
    %v3023 = vlaneseq
    %v3024 = vshrl.u32 %v3023, 7
    %v3025 = vsub.s32 %v3022, %v3024
    %v3026 = vrot.slane %v462, %v3025
    %v3028 = vunpack.c.l.s4 842150450
    %v3029 = vunpack.c.0.s8 %v3028
    %v3030 = vlaneseq
    %v3031 = vshrl.u32 %v3030, 7
    %v3032 = vsub.s32 %v3029, %v3031
    %v3033 = vrot.slane %v462, %v3032
    %v3035 = vunpack.c.l.s4 1414812756
    %v3036 = vunpack.c.0.s8 %v3035
    %v3037 = vlaneseq
    %v3038 = vshrl.u32 %v3037, 7
    %v3039 = vsub.s32 %v3036, %v3038
    %v3040 = vrot.slane %v462, %v3039
    %v3042 = vunpack.c.l.s4 1987475062
    %v3043 = vunpack.c.0.s8 %v3042
    %v3044 = vlaneseq
    %v3045 = vshrl.u32 %v3044, 7
    %v3046 = vsub.s32 %v3043, %v3045
    %v3047 = vrot.slane %v462, %v3046
    %v3049 = vunpack.c.l.s4 269488144
    %v3050 = vunpack.c.0.s8 %v3049
    %v3051 = vlaneseq
    %v3052 = vshrl.u32 %v3051, 7
    %v3053 = vsub.s32 %v3050, %v3052
    %v3054 = vrot.slane %v465, %v3053
    %v3056 = vunpack.c.l.s4 842150450
    %v3057 = vunpack.c.0.s8 %v3056
    %v3058 = vlaneseq
    %v3059 = vshrl.u32 %v3058, 7
    %v3060 = vsub.s32 %v3057, %v3059
    %v3061 = vrot.slane %v465, %v3060
    %v3063 = vunpack.c.l.s4 1414812756
    %v3064 = vunpack.c.0.s8 %v3063
    %v3065 = vlaneseq
    %v3066 = vshrl.u32 %v3065, 7
    %v3067 = vsub.s32 %v3064, %v3066
    %v3068 = vrot.slane %v465, %v3067
    %v3070 = vunpack.c.l.s4 1987475062
    %v3071 = vunpack.c.0.s8 %v3070
    %v3072 = vlaneseq
    %v3073 = vshrl.u32 %v3072, 7
    %v3074 = vsub.s32 %v3071, %v3073
    %v3075 = vrot.slane %v465, %v3074
    %v3077 = vunpack.c.l.s4 269488144
    %v3078 = vunpack.c.0.s8 %v3077
    %v3079 = vlaneseq
    %v3080 = vshrl.u32 %v3079, 7
    %v3081 = vsub.s32 %v3078, %v3080
    %v3082 = vrot.slane %v468, %v3081
    %v3084 = vunpack.c.l.s4 842150450
    %v3085 = vunpack.c.0.s8 %v3084
    %v3086 = vlaneseq
    %v3087 = vshrl.u32 %v3086, 7
    %v3088 = vsub.s32 %v3085, %v3087
    %v3089 = vrot.slane %v468, %v3088
    %v3091 = vunpack.c.l.s4 1414812756
    %v3092 = vunpack.c.0.s8 %v3091
    %v3093 = vlaneseq
    %v3094 = vshrl.u32 %v3093, 7
    %v3095 = vsub.s32 %v3092, %v3094
    %v3096 = vrot.slane %v468, %v3095
    %v3098 = vunpack.c.l.s4 1987475062
    %v3099 = vunpack.c.0.s8 %v3098
    %v3100 = vlaneseq
    %v3101 = vshrl.u32 %v3100, 7
    %v3102 = vsub.s32 %v3099, %v3101
    %v3103 = vrot.slane %v468, %v3102
    %v3105 = vunpack.c.l.s4 269488144
    %v3106 = vunpack.c.0.s8 %v3105
    %v3107 = vlaneseq
    %v3108 = vshrl.u32 %v3107, 7
    %v3109 = vsub.s32 %v3106, %v3108
    %v3110 = vrot.slane %v471, %v3109
    %v3112 = vunpack.c.l.s4 842150450
    %v3113 = vunpack.c.0.s8 %v3112
    %v3114 = vlaneseq
    %v3115 = vshrl.u32 %v3114, 7
    %v3116 = vsub.s32 %v3113, %v3115
    %v3117 = vrot.slane %v471, %v3116
    %v3119 = vunpack.c.l.s4 1414812756
    %v3120 = vunpack.c.0.s8 %v3119
    %v3121 = vlaneseq
    %v3122 = vshrl.u32 %v3121, 7
    %v3123 = vsub.s32 %v3120, %v3122
    %v3124 = vrot.slane %v471, %v3123
    %v3126 = vunpack.c.l.s4 1987475062
    %v3127 = vunpack.c.0.s8 %v3126
    %v3128 = vlaneseq
    %v3129 = vshrl.u32 %v3128, 7
    %v3130 = vsub.s32 %v3127, %v3129
    %v3131 = vrot.slane %v471, %v3130
    %v3133 = vunpack.c.l.s4 269488144
    %v3134 = vunpack.c.0.s8 %v3133
    %v3135 = vlaneseq
    %v3136 = vshrl.u32 %v3135, 7
    %v3137 = vsub.s32 %v3134, %v3136
    %v3138 = vrot.slane %v474, %v3137
    %v3140 = vunpack.c.l.s4 842150450
    %v3141 = vunpack.c.0.s8 %v3140
    %v3142 = vlaneseq
    %v3143 = vshrl.u32 %v3142, 7
    %v3144 = vsub.s32 %v3141, %v3143
    %v3145 = vrot.slane %v474, %v3144
    %v3147 = vunpack.c.l.s4 1414812756
    %v3148 = vunpack.c.0.s8 %v3147
    %v3149 = vlaneseq
    %v3150 = vshrl.u32 %v3149, 7
    %v3151 = vsub.s32 %v3148, %v3150
    %v3152 = vrot.slane %v474, %v3151
    %v3154 = vunpack.c.l.s4 1987475062
    %v3155 = vunpack.c.0.s8 %v3154
    %v3156 = vlaneseq
    %v3157 = vshrl.u32 %v3156, 7
    %v3158 = vsub.s32 %v3155, %v3157
    %v3159 = vrot.slane %v474, %v3158
    %v3161 = vunpack.c.l.s4 269488144
    %v3162 = vunpack.c.0.s8 %v3161
    %v3163 = vlaneseq
    %v3164 = vshrl.u32 %v3163, 7
    %v3165 = vsub.s32 %v3162, %v3164
    %v3166 = vrot.slane %v477, %v3165
    %v3168 = vunpack.c.l.s4 842150450
    %v3169 = vunpack.c.0.s8 %v3168
    %v3170 = vlaneseq
    %v3171 = vshrl.u32 %v3170, 7
    %v3172 = vsub.s32 %v3169, %v3171
    %v3173 = vrot.slane %v477, %v3172
    %v3175 = vunpack.c.l.s4 1414812756
    %v3176 = vunpack.c.0.s8 %v3175
    %v3177 = vlaneseq
    %v3178 = vshrl.u32 %v3177, 7
    %v3179 = vsub.s32 %v3176, %v3178
    %v3180 = vrot.slane %v477, %v3179
    %v3182 = vunpack.c.l.s4 1987475062
    %v3183 = vunpack.c.0.s8 %v3182
    %v3184 = vlaneseq
    %v3185 = vshrl.u32 %v3184, 7
    %v3186 = vsub.s32 %v3183, %v3185
    %v3187 = vrot.slane %v477, %v3186
    %v3189 = vunpack.c.l.s4 269488144
    %v3190 = vunpack.c.0.s8 %v3189
    %v3191 = vlaneseq
    %v3192 = vshrl.u32 %v3191, 7
    %v3193 = vsub.s32 %v3190, %v3192
    %v3194 = vrot.slane %v480, %v3193
    %v3196 = vunpack.c.l.s4 842150450
    %v3197 = vunpack.c.0.s8 %v3196
    %v3198 = vlaneseq
    %v3199 = vshrl.u32 %v3198, 7
    %v3200 = vsub.s32 %v3197, %v3199
    %v3201 = vrot.slane %v480, %v3200
    %v3203 = vunpack.c.l.s4 1414812756
    %v3204 = vunpack.c.0.s8 %v3203
    %v3205 = vlaneseq
    %v3206 = vshrl.u32 %v3205, 7
    %v3207 = vsub.s32 %v3204, %v3206
    %v3208 = vrot.slane %v480, %v3207
    %v3210 = vunpack.c.l.s4 1987475062
    %v3211 = vunpack.c.0.s8 %v3210
    %v3212 = vlaneseq
    %v3213 = vshrl.u32 %v3212, 7
    %v3214 = vsub.s32 %v3211, %v3213
    %v3215 = vrot.slane %v480, %v3214
    %v3217 = vunpack.c.l.s4 269488144
    %v3218 = vunpack.c.0.s8 %v3217
    %v3219 = vlaneseq
    %v3220 = vshrl.u32 %v3219, 7
    %v3221 = vsub.s32 %v3218, %v3220
    %v3222 = vrot.slane %v483, %v3221
    %v3224 = vunpack.c.l.s4 842150450
    %v3225 = vunpack.c.0.s8 %v3224
    %v3226 = vlaneseq
    %v3227 = vshrl.u32 %v3226, 7
    %v3228 = vsub.s32 %v3225, %v3227
    %v3229 = vrot.slane %v483, %v3228
    %v3231 = vunpack.c.l.s4 1414812756
    %v3232 = vunpack.c.0.s8 %v3231
    %v3233 = vlaneseq
    %v3234 = vshrl.u32 %v3233, 7
    %v3235 = vsub.s32 %v3232, %v3234
    %v3236 = vrot.slane %v483, %v3235
    %v3238 = vunpack.c.l.s4 1987475062
    %v3239 = vunpack.c.0.s8 %v3238
    %v3240 = vlaneseq
    %v3241 = vshrl.u32 %v3240, 7
    %v3242 = vsub.s32 %v3239, %v3241
    %v3243 = vrot.slane %v483, %v3242
    %v3245 = vunpack.c.l.s4 269488144
    %v3246 = vunpack.c.0.s8 %v3245
    %v3247 = vlaneseq
    %v3248 = vshrl.u32 %v3247, 7
    %v3249 = vsub.s32 %v3246, %v3248
    %v3250 = vrot.slane %v486, %v3249
    %v3252 = vunpack.c.l.s4 842150450
    %v3253 = vunpack.c.0.s8 %v3252
    %v3254 = vlaneseq
    %v3255 = vshrl.u32 %v3254, 7
    %v3256 = vsub.s32 %v3253, %v3255
    %v3257 = vrot.slane %v486, %v3256
    %v3259 = vunpack.c.l.s4 1414812756
    %v3260 = vunpack.c.0.s8 %v3259
    %v3261 = vlaneseq
    %v3262 = vshrl.u32 %v3261, 7
    %v3263 = vsub.s32 %v3260, %v3262
    %v3264 = vrot.slane %v486, %v3263
    %v3266 = vunpack.c.l.s4 1987475062
    %v3267 = vunpack.c.0.s8 %v3266
    %v3268 = vlaneseq
    %v3269 = vshrl.u32 %v3268, 7
    %v3270 = vsub.s32 %v3267, %v3269
    %v3271 = vrot.slane %v486, %v3270
    %v3273 = vunpack.c.l.s4 269488144
    %v3274 = vunpack.c.0.s8 %v3273
    %v3275 = vlaneseq
    %v3276 = vshrl.u32 %v3275, 7
    %v3277 = vsub.s32 %v3274, %v3276
    %v3278 = vrot.slane %v489, %v3277
    %v3280 = vunpack.c.l.s4 842150450
    %v3281 = vunpack.c.0.s8 %v3280
    %v3282 = vlaneseq
    %v3283 = vshrl.u32 %v3282, 7
    %v3284 = vsub.s32 %v3281, %v3283
    %v3285 = vrot.slane %v489, %v3284
    %v3287 = vunpack.c.l.s4 1414812756
    %v3288 = vunpack.c.0.s8 %v3287
    %v3289 = vlaneseq
    %v3290 = vshrl.u32 %v3289, 7
    %v3291 = vsub.s32 %v3288, %v3290
    %v3292 = vrot.slane %v489, %v3291
    %v3294 = vunpack.c.l.s4 1987475062
    %v3295 = vunpack.c.0.s8 %v3294
    %v3296 = vlaneseq
    %v3297 = vshrl.u32 %v3296, 7
    %v3298 = vsub.s32 %v3295, %v3297
    %v3299 = vrot.slane %v489, %v3298
    %v3301 = vunpack.c.l.s4 269488144
    %v3302 = vunpack.c.0.s8 %v3301
    %v3303 = vlaneseq
    %v3304 = vshrl.u32 %v3303, 7
    %v3305 = vsub.s32 %v3302, %v3304
    %v3306 = vrot.slane %v492, %v3305
    %v3308 = vunpack.c.l.s4 842150450
    %v3309 = vunpack.c.0.s8 %v3308
    %v3310 = vlaneseq
    %v3311 = vshrl.u32 %v3310, 7
    %v3312 = vsub.s32 %v3309, %v3311
    %v3313 = vrot.slane %v492, %v3312
    %v3315 = vunpack.c.l.s4 1414812756
    %v3316 = vunpack.c.0.s8 %v3315
    %v3317 = vlaneseq
    %v3318 = vshrl.u32 %v3317, 7
    %v3319 = vsub.s32 %v3316, %v3318
    %v3320 = vrot.slane %v492, %v3319
    %v3322 = vunpack.c.l.s4 1987475062
    %v3323 = vunpack.c.0.s8 %v3322
    %v3324 = vlaneseq
    %v3325 = vshrl.u32 %v3324, 7
    %v3326 = vsub.s32 %v3323, %v3325
    %v3327 = vrot.slane %v492, %v3326
    %v3329 = vunpack.c.l.s4 269488144
    %v3330 = vunpack.c.0.s8 %v3329
    %v3331 = vlaneseq
    %v3332 = vshrl.u32 %v3331, 7
    %v3333 = vsub.s32 %v3330, %v3332
    %v3334 = vrot.slane %v495, %v3333
    %v3336 = vunpack.c.l.s4 842150450
    %v3337 = vunpack.c.0.s8 %v3336
    %v3338 = vlaneseq
    %v3339 = vshrl.u32 %v3338, 7
    %v3340 = vsub.s32 %v3337, %v3339
    %v3341 = vrot.slane %v495, %v3340
    %v3343 = vunpack.c.l.s4 1414812756
    %v3344 = vunpack.c.0.s8 %v3343
    %v3345 = vlaneseq
    %v3346 = vshrl.u32 %v3345, 7
    %v3347 = vsub.s32 %v3344, %v3346
    %v3348 = vrot.slane %v495, %v3347
    %v3350 = vunpack.c.l.s4 1987475062
    %v3351 = vunpack.c.0.s8 %v3350
    %v3352 = vlaneseq
    %v3353 = vshrl.u32 %v3352, 7
    %v3354 = vsub.s32 %v3351, %v3353
    %v3355 = vrot.slane %v495, %v3354
    %v3357 = vunpack.c.l.s4 269488144
    %v3358 = vunpack.c.0.s8 %v3357
    %v3359 = vlaneseq
    %v3360 = vshrl.u32 %v3359, 7
    %v3361 = vsub.s32 %v3358, %v3360
    %v3362 = vrot.slane %v498, %v3361
    %v3364 = vunpack.c.l.s4 842150450
    %v3365 = vunpack.c.0.s8 %v3364
    %v3366 = vlaneseq
    %v3367 = vshrl.u32 %v3366, 7
    %v3368 = vsub.s32 %v3365, %v3367
    %v3369 = vrot.slane %v498, %v3368
    %v3371 = vunpack.c.l.s4 1414812756
    %v3372 = vunpack.c.0.s8 %v3371
    %v3373 = vlaneseq
    %v3374 = vshrl.u32 %v3373, 7
    %v3375 = vsub.s32 %v3372, %v3374
    %v3376 = vrot.slane %v498, %v3375
    %v3378 = vunpack.c.l.s4 1987475062
    %v3379 = vunpack.c.0.s8 %v3378
    %v3380 = vlaneseq
    %v3381 = vshrl.u32 %v3380, 7
    %v3382 = vsub.s32 %v3379, %v3381
    %v3383 = vrot.slane %v498, %v3382
    %v3385 = vunpack.c.l.s4 269488144
    %v3386 = vunpack.c.0.s8 %v3385
    %v3387 = vlaneseq
    %v3388 = vshrl.u32 %v3387, 7
    %v3389 = vsub.s32 %v3386, %v3388
    %v3390 = vrot.slane %v501, %v3389
    %v3392 = vunpack.c.l.s4 842150450
    %v3393 = vunpack.c.0.s8 %v3392
    %v3394 = vlaneseq
    %v3395 = vshrl.u32 %v3394, 7
    %v3396 = vsub.s32 %v3393, %v3395
    %v3397 = vrot.slane %v501, %v3396
    %v3399 = vunpack.c.l.s4 1414812756
    %v3400 = vunpack.c.0.s8 %v3399
    %v3401 = vlaneseq
    %v3402 = vshrl.u32 %v3401, 7
    %v3403 = vsub.s32 %v3400, %v3402
    %v3404 = vrot.slane %v501, %v3403
    %v3406 = vunpack.c.l.s4 1987475062
    %v3407 = vunpack.c.0.s8 %v3406
    %v3408 = vlaneseq
    %v3409 = vshrl.u32 %v3408, 7
    %v3410 = vsub.s32 %v3407, %v3409
    %v3411 = vrot.slane %v501, %v3410
    %v3413 = vunpack.c.l.s4 269488144
    %v3414 = vunpack.c.0.s8 %v3413
    %v3415 = vlaneseq
    %v3416 = vshrl.u32 %v3415, 7
    %v3417 = vsub.s32 %v3414, %v3416
    %v3418 = vrot.slane %v504, %v3417
    %v3420 = vunpack.c.l.s4 842150450
    %v3421 = vunpack.c.0.s8 %v3420
    %v3422 = vlaneseq
    %v3423 = vshrl.u32 %v3422, 7
    %v3424 = vsub.s32 %v3421, %v3423
    %v3425 = vrot.slane %v504, %v3424
    %v3427 = vunpack.c.l.s4 1414812756
    %v3428 = vunpack.c.0.s8 %v3427
    %v3429 = vlaneseq
    %v3430 = vshrl.u32 %v3429, 7
    %v3431 = vsub.s32 %v3428, %v3430
    %v3432 = vrot.slane %v504, %v3431
    %v3434 = vunpack.c.l.s4 1987475062
    %v3435 = vunpack.c.0.s8 %v3434
    %v3436 = vlaneseq
    %v3437 = vshrl.u32 %v3436, 7
    %v3438 = vsub.s32 %v3435, %v3437
    %v3439 = vrot.slane %v504, %v3438
    %v3441 = vunpack.c.l.s4 269488144
    %v3442 = vunpack.c.0.s8 %v3441
    %v3443 = vlaneseq
    %v3444 = vshrl.u32 %v3443, 7
    %v3445 = vsub.s32 %v3442, %v3444
    %v3446 = vrot.slane %v507, %v3445
    %v3448 = vunpack.c.l.s4 842150450
    %v3449 = vunpack.c.0.s8 %v3448
    %v3450 = vlaneseq
    %v3451 = vshrl.u32 %v3450, 7
    %v3452 = vsub.s32 %v3449, %v3451
    %v3453 = vrot.slane %v507, %v3452
    %v3455 = vunpack.c.l.s4 1414812756
    %v3456 = vunpack.c.0.s8 %v3455
    %v3457 = vlaneseq
    %v3458 = vshrl.u32 %v3457, 7
    %v3459 = vsub.s32 %v3456, %v3458
    %v3460 = vrot.slane %v507, %v3459
    %v3462 = vunpack.c.l.s4 1987475062
    %v3463 = vunpack.c.0.s8 %v3462
    %v3464 = vlaneseq
    %v3465 = vshrl.u32 %v3464, 7
    %v3466 = vsub.s32 %v3463, %v3465
    %v3467 = vrot.slane %v507, %v3466
    %v3469 = vunpack.c.l.s4 269488144
    %v3470 = vunpack.c.0.s8 %v3469
    %v3471 = vlaneseq
    %v3472 = vshrl.u32 %v3471, 7
    %v3473 = vsub.s32 %v3470, %v3472
    %v3474 = vrot.slane %v510, %v3473
    %v3476 = vunpack.c.l.s4 842150450
    %v3477 = vunpack.c.0.s8 %v3476
    %v3478 = vlaneseq
    %v3479 = vshrl.u32 %v3478, 7
    %v3480 = vsub.s32 %v3477, %v3479
    %v3481 = vrot.slane %v510, %v3480
    %v3483 = vunpack.c.l.s4 1414812756
    %v3484 = vunpack.c.0.s8 %v3483
    %v3485 = vlaneseq
    %v3486 = vshrl.u32 %v3485, 7
    %v3487 = vsub.s32 %v3484, %v3486
    %v3488 = vrot.slane %v510, %v3487
    %v3490 = vunpack.c.l.s4 1987475062
    %v3491 = vunpack.c.0.s8 %v3490
    %v3492 = vlaneseq
    %v3493 = vshrl.u32 %v3492, 7
    %v3494 = vsub.s32 %v3491, %v3493
    %v3495 = vrot.slane %v510, %v3494
    %v3497 = vunpack.c.l.s4 269488144
    %v3498 = vunpack.c.0.s8 %v3497
    %v3499 = vlaneseq
    %v3500 = vshrl.u32 %v3499, 7
    %v3501 = vsub.s32 %v3498, %v3500
    %v3502 = vrot.slane %v513, %v3501
    %v3504 = vunpack.c.l.s4 842150450
    %v3505 = vunpack.c.0.s8 %v3504
    %v3506 = vlaneseq
    %v3507 = vshrl.u32 %v3506, 7
    %v3508 = vsub.s32 %v3505, %v3507
    %v3509 = vrot.slane %v513, %v3508
    %v3511 = vunpack.c.l.s4 1414812756
    %v3512 = vunpack.c.0.s8 %v3511
    %v3513 = vlaneseq
    %v3514 = vshrl.u32 %v3513, 7
    %v3515 = vsub.s32 %v3512, %v3514
    %v3516 = vrot.slane %v513, %v3515
    %v3518 = vunpack.c.l.s4 1987475062
    %v3519 = vunpack.c.0.s8 %v3518
    %v3520 = vlaneseq
    %v3521 = vshrl.u32 %v3520, 7
    %v3522 = vsub.s32 %v3519, %v3521
    %v3523 = vrot.slane %v513, %v3522
    %v3525 = vunpack.c.l.s4 269488144
    %v3526 = vunpack.c.0.s8 %v3525
    %v3527 = vlaneseq
    %v3528 = vshrl.u32 %v3527, 7
    %v3529 = vsub.s32 %v3526, %v3528
    %v3530 = vrot.slane %v516, %v3529
    %v3532 = vunpack.c.l.s4 842150450
    %v3533 = vunpack.c.0.s8 %v3532
    %v3534 = vlaneseq
    %v3535 = vshrl.u32 %v3534, 7
    %v3536 = vsub.s32 %v3533, %v3535
    %v3537 = vrot.slane %v516, %v3536
    %v3539 = vunpack.c.l.s4 1414812756
    %v3540 = vunpack.c.0.s8 %v3539
    %v3541 = vlaneseq
    %v3542 = vshrl.u32 %v3541, 7
    %v3543 = vsub.s32 %v3540, %v3542
    %v3544 = vrot.slane %v516, %v3543
    %v3546 = vunpack.c.l.s4 1987475062
    %v3547 = vunpack.c.0.s8 %v3546
    %v3548 = vlaneseq
    %v3549 = vshrl.u32 %v3548, 7
    %v3550 = vsub.s32 %v3547, %v3549
    %v3551 = vrot.slane %v516, %v3550
    %v3553 = vunpack.c.l.s4 269488144
    %v3554 = vunpack.c.0.s8 %v3553
    %v3555 = vlaneseq
    %v3556 = vshrl.u32 %v3555, 7
    %v3557 = vsub.s32 %v3554, %v3556
    %v3558 = vrot.slane %v519, %v3557
    %v3560 = vunpack.c.l.s4 842150450
    %v3561 = vunpack.c.0.s8 %v3560
    %v3562 = vlaneseq
    %v3563 = vshrl.u32 %v3562, 7
    %v3564 = vsub.s32 %v3561, %v3563
    %v3565 = vrot.slane %v519, %v3564
    %v3567 = vunpack.c.l.s4 1414812756
    %v3568 = vunpack.c.0.s8 %v3567
    %v3569 = vlaneseq
    %v3570 = vshrl.u32 %v3569, 7
    %v3571 = vsub.s32 %v3568, %v3570
    %v3572 = vrot.slane %v519, %v3571
    %v3574 = vunpack.c.l.s4 1987475062
    %v3575 = vunpack.c.0.s8 %v3574
    %v3576 = vlaneseq
    %v3577 = vshrl.u32 %v3576, 7
    %v3578 = vsub.s32 %v3575, %v3577
    %v3579 = vrot.slane %v519, %v3578
    %v3581 = vunpack.c.l.s4 269488144
    %v3582 = vunpack.c.0.s8 %v3581
    %v3583 = vlaneseq
    %v3584 = vshrl.u32 %v3583, 7
    %v3585 = vsub.s32 %v3582, %v3584
    %v3586 = vrot.slane %v522, %v3585
    %v3588 = vunpack.c.l.s4 842150450
    %v3589 = vunpack.c.0.s8 %v3588
    %v3590 = vlaneseq
    %v3591 = vshrl.u32 %v3590, 7
    %v3592 = vsub.s32 %v3589, %v3591
    %v3593 = vrot.slane %v522, %v3592
    %v3595 = vunpack.c.l.s4 1414812756
    %v3596 = vunpack.c.0.s8 %v3595
    %v3597 = vlaneseq
    %v3598 = vshrl.u32 %v3597, 7
    %v3599 = vsub.s32 %v3596, %v3598
    %v3600 = vrot.slane %v522, %v3599
    %v3602 = vunpack.c.l.s4 1987475062
    %v3603 = vunpack.c.0.s8 %v3602
    %v3604 = vlaneseq
    %v3605 = vshrl.u32 %v3604, 7
    %v3606 = vsub.s32 %v3603, %v3605
    %v3607 = vrot.slane %v522, %v3606
    %v3609 = vunpack.c.l.s4 269488144
    %v3610 = vunpack.c.0.s8 %v3609
    %v3611 = vlaneseq
    %v3612 = vshrl.u32 %v3611, 7
    %v3613 = vsub.s32 %v3610, %v3612
    %v3614 = vrot.slane %v525, %v3613
    %v3616 = vunpack.c.l.s4 842150450
    %v3617 = vunpack.c.0.s8 %v3616
    %v3618 = vlaneseq
    %v3619 = vshrl.u32 %v3618, 7
    %v3620 = vsub.s32 %v3617, %v3619
    %v3621 = vrot.slane %v525, %v3620
    %v3623 = vunpack.c.l.s4 1414812756
    %v3624 = vunpack.c.0.s8 %v3623
    %v3625 = vlaneseq
    %v3626 = vshrl.u32 %v3625, 7
    %v3627 = vsub.s32 %v3624, %v3626
    %v3628 = vrot.slane %v525, %v3627
    %v3630 = vunpack.c.l.s4 1987475062
    %v3631 = vunpack.c.0.s8 %v3630
    %v3632 = vlaneseq
    %v3633 = vshrl.u32 %v3632, 7
    %v3634 = vsub.s32 %v3631, %v3633
    %v3635 = vrot.slane %v525, %v3634
    %v3637 = vunpack.c.l.s4 269488144
    %v3638 = vunpack.c.0.s8 %v3637
    %v3639 = vlaneseq
    %v3640 = vshrl.u32 %v3639, 7
    %v3641 = vsub.s32 %v3638, %v3640
    %v3642 = vrot.slane %v528, %v3641
    %v3644 = vunpack.c.l.s4 842150450
    %v3645 = vunpack.c.0.s8 %v3644
    %v3646 = vlaneseq
    %v3647 = vshrl.u32 %v3646, 7
    %v3648 = vsub.s32 %v3645, %v3647
    %v3649 = vrot.slane %v528, %v3648
    %v3651 = vunpack.c.l.s4 1414812756
    %v3652 = vunpack.c.0.s8 %v3651
    %v3653 = vlaneseq
    %v3654 = vshrl.u32 %v3653, 7
    %v3655 = vsub.s32 %v3652, %v3654
    %v3656 = vrot.slane %v528, %v3655
    %v3658 = vunpack.c.l.s4 1987475062
    %v3659 = vunpack.c.0.s8 %v3658
    %v3660 = vlaneseq
    %v3661 = vshrl.u32 %v3660, 7
    %v3662 = vsub.s32 %v3659, %v3661
    %v3663 = vrot.slane %v528, %v3662
    %v3665 = vunpack.c.l.s4 269488144
    %v3666 = vunpack.c.0.s8 %v3665
    %v3667 = vlaneseq
    %v3668 = vshrl.u32 %v3667, 7
    %v3669 = vsub.s32 %v3666, %v3668
    %v3670 = vrot.slane %v531, %v3669
    %v3672 = vunpack.c.l.s4 842150450
    %v3673 = vunpack.c.0.s8 %v3672
    %v3674 = vlaneseq
    %v3675 = vshrl.u32 %v3674, 7
    %v3676 = vsub.s32 %v3673, %v3675
    %v3677 = vrot.slane %v531, %v3676
    %v3679 = vunpack.c.l.s4 1414812756
    %v3680 = vunpack.c.0.s8 %v3679
    %v3681 = vlaneseq
    %v3682 = vshrl.u32 %v3681, 7
    %v3683 = vsub.s32 %v3680, %v3682
    %v3684 = vrot.slane %v531, %v3683
    %v3686 = vunpack.c.l.s4 1987475062
    %v3687 = vunpack.c.0.s8 %v3686
    %v3688 = vlaneseq
    %v3689 = vshrl.u32 %v3688, 7
    %v3690 = vsub.s32 %v3687, %v3689
    %v3691 = vrot.slane %v531, %v3690
    %v3693 = vunpack.c.l.s4 269488144
    %v3694 = vunpack.c.0.s8 %v3693
    %v3695 = vlaneseq
    %v3696 = vshrl.u32 %v3695, 7
    %v3697 = vsub.s32 %v3694, %v3696
    %v3698 = vrot.slane %v534, %v3697
    %v3700 = vunpack.c.l.s4 842150450
    %v3701 = vunpack.c.0.s8 %v3700
    %v3702 = vlaneseq
    %v3703 = vshrl.u32 %v3702, 7
    %v3704 = vsub.s32 %v3701, %v3703
    %v3705 = vrot.slane %v534, %v3704
    %v3707 = vunpack.c.l.s4 1414812756
    %v3708 = vunpack.c.0.s8 %v3707
    %v3709 = vlaneseq
    %v3710 = vshrl.u32 %v3709, 7
    %v3711 = vsub.s32 %v3708, %v3710
    %v3712 = vrot.slane %v534, %v3711
    %v3714 = vunpack.c.l.s4 1987475062
    %v3715 = vunpack.c.0.s8 %v3714
    %v3716 = vlaneseq
    %v3717 = vshrl.u32 %v3716, 7
    %v3718 = vsub.s32 %v3715, %v3717
    %v3719 = vrot.slane %v534, %v3718
    %v3721 = vunpack.c.l.s4 269488144
    %v3722 = vunpack.c.0.s8 %v3721
    %v3723 = vlaneseq
    %v3724 = vshrl.u32 %v3723, 7
    %v3725 = vsub.s32 %v3722, %v3724
    %v3726 = vrot.slane %v537, %v3725
    %v3728 = vunpack.c.l.s4 842150450
    %v3729 = vunpack.c.0.s8 %v3728
    %v3730 = vlaneseq
    %v3731 = vshrl.u32 %v3730, 7
    %v3732 = vsub.s32 %v3729, %v3731
    %v3733 = vrot.slane %v537, %v3732
    %v3735 = vunpack.c.l.s4 1414812756
    %v3736 = vunpack.c.0.s8 %v3735
    %v3737 = vlaneseq
    %v3738 = vshrl.u32 %v3737, 7
    %v3739 = vsub.s32 %v3736, %v3738
    %v3740 = vrot.slane %v537, %v3739
    %v3742 = vunpack.c.l.s4 1987475062
    %v3743 = vunpack.c.0.s8 %v3742
    %v3744 = vlaneseq
    %v3745 = vshrl.u32 %v3744, 7
    %v3746 = vsub.s32 %v3743, %v3745
    %v3747 = vrot.slane %v537, %v3746
    %v3749 = vunpack.c.l.s4 269488144
    %v3750 = vunpack.c.0.s8 %v3749
    %v3751 = vlaneseq
    %v3752 = vshrl.u32 %v3751, 7
    %v3753 = vsub.s32 %v3750, %v3752
    %v3754 = vrot.slane %v540, %v3753
    %v3756 = vunpack.c.l.s4 842150450
    %v3757 = vunpack.c.0.s8 %v3756
    %v3758 = vlaneseq
    %v3759 = vshrl.u32 %v3758, 7
    %v3760 = vsub.s32 %v3757, %v3759
    %v3761 = vrot.slane %v540, %v3760
    %v3763 = vunpack.c.l.s4 1414812756
    %v3764 = vunpack.c.0.s8 %v3763
    %v3765 = vlaneseq
    %v3766 = vshrl.u32 %v3765, 7
    %v3767 = vsub.s32 %v3764, %v3766
    %v3768 = vrot.slane %v540, %v3767
    %v3770 = vunpack.c.l.s4 1987475062
    %v3771 = vunpack.c.0.s8 %v3770
    %v3772 = vlaneseq
    %v3773 = vshrl.u32 %v3772, 7
    %v3774 = vsub.s32 %v3771, %v3773
    %v3775 = vrot.slane %v540, %v3774
    %v3777 = vunpack.c.l.s4 269488144
    %v3778 = vunpack.c.0.s8 %v3777
    %v3779 = vlaneseq
    %v3780 = vshrl.u32 %v3779, 7
    %v3781 = vsub.s32 %v3778, %v3780
    %v3782 = vrot.slane %v543, %v3781
    %v3784 = vunpack.c.l.s4 842150450
    %v3785 = vunpack.c.0.s8 %v3784
    %v3786 = vlaneseq
    %v3787 = vshrl.u32 %v3786, 7
    %v3788 = vsub.s32 %v3785, %v3787
    %v3789 = vrot.slane %v543, %v3788
    %v3791 = vunpack.c.l.s4 1414812756
    %v3792 = vunpack.c.0.s8 %v3791
    %v3793 = vlaneseq
    %v3794 = vshrl.u32 %v3793, 7
    %v3795 = vsub.s32 %v3792, %v3794
    %v3796 = vrot.slane %v543, %v3795
    %v3798 = vunpack.c.l.s4 1987475062
    %v3799 = vunpack.c.0.s8 %v3798
    %v3800 = vlaneseq
    %v3801 = vshrl.u32 %v3800, 7
    %v3802 = vsub.s32 %v3799, %v3801
    %v3803 = vrot.slane %v543, %v3802
    %v3805 = vunpack.c.l.s4 269488144
    %v3806 = vunpack.c.0.s8 %v3805
    %v3807 = vlaneseq
    %v3808 = vshrl.u32 %v3807, 7
    %v3809 = vsub.s32 %v3806, %v3808
    %v3810 = vrot.slane %v546, %v3809
    %v3812 = vunpack.c.l.s4 842150450
    %v3813 = vunpack.c.0.s8 %v3812
    %v3814 = vlaneseq
    %v3815 = vshrl.u32 %v3814, 7
    %v3816 = vsub.s32 %v3813, %v3815
    %v3817 = vrot.slane %v546, %v3816
    %v3819 = vunpack.c.l.s4 1414812756
    %v3820 = vunpack.c.0.s8 %v3819
    %v3821 = vlaneseq
    %v3822 = vshrl.u32 %v3821, 7
    %v3823 = vsub.s32 %v3820, %v3822
    %v3824 = vrot.slane %v546, %v3823
    %v3826 = vunpack.c.l.s4 1987475062
    %v3827 = vunpack.c.0.s8 %v3826
    %v3828 = vlaneseq
    %v3829 = vshrl.u32 %v3828, 7
    %v3830 = vsub.s32 %v3827, %v3829
    %v3831 = vrot.slane %v546, %v3830
    %v3833 = vunpack.c.l.s4 269488144
    %v3834 = vunpack.c.0.s8 %v3833
    %v3835 = vlaneseq
    %v3836 = vshrl.u32 %v3835, 7
    %v3837 = vsub.s32 %v3834, %v3836
    %v3838 = vrot.slane %v549, %v3837
    %v3840 = vunpack.c.l.s4 842150450
    %v3841 = vunpack.c.0.s8 %v3840
    %v3842 = vlaneseq
    %v3843 = vshrl.u32 %v3842, 7
    %v3844 = vsub.s32 %v3841, %v3843
    %v3845 = vrot.slane %v549, %v3844
    %v3847 = vunpack.c.l.s4 1414812756
    %v3848 = vunpack.c.0.s8 %v3847
    %v3849 = vlaneseq
    %v3850 = vshrl.u32 %v3849, 7
    %v3851 = vsub.s32 %v3848, %v3850
    %v3852 = vrot.slane %v549, %v3851
    %v3854 = vunpack.c.l.s4 1987475062
    %v3855 = vunpack.c.0.s8 %v3854
    %v3856 = vlaneseq
    %v3857 = vshrl.u32 %v3856, 7
    %v3858 = vsub.s32 %v3855, %v3857
    %v3859 = vrot.slane %v549, %v3858
    %v3861 = vunpack.c.l.s4 269488144
    %v3862 = vunpack.c.0.s8 %v3861
    %v3863 = vlaneseq
    %v3864 = vshrl.u32 %v3863, 7
    %v3865 = vsub.s32 %v3862, %v3864
    %v3866 = vrot.slane %v552, %v3865
    %v3868 = vunpack.c.l.s4 842150450
    %v3869 = vunpack.c.0.s8 %v3868
    %v3870 = vlaneseq
    %v3871 = vshrl.u32 %v3870, 7
    %v3872 = vsub.s32 %v3869, %v3871
    %v3873 = vrot.slane %v552, %v3872
    %v3875 = vunpack.c.l.s4 1414812756
    %v3876 = vunpack.c.0.s8 %v3875
    %v3877 = vlaneseq
    %v3878 = vshrl.u32 %v3877, 7
    %v3879 = vsub.s32 %v3876, %v3878
    %v3880 = vrot.slane %v552, %v3879
    %v3882 = vunpack.c.l.s4 1987475062
    %v3883 = vunpack.c.0.s8 %v3882
    %v3884 = vlaneseq
    %v3885 = vshrl.u32 %v3884, 7
    %v3886 = vsub.s32 %v3883, %v3885
    %v3887 = vrot.slane %v552, %v3886
    %v3889 = vunpack.c.l.s4 269488144
    %v3890 = vunpack.c.0.s8 %v3889
    %v3891 = vlaneseq
    %v3892 = vshrl.u32 %v3891, 7
    %v3893 = vsub.s32 %v3890, %v3892
    %v3894 = vrot.slane %v555, %v3893
    %v3896 = vunpack.c.l.s4 842150450
    %v3897 = vunpack.c.0.s8 %v3896
    %v3898 = vlaneseq
    %v3899 = vshrl.u32 %v3898, 7
    %v3900 = vsub.s32 %v3897, %v3899
    %v3901 = vrot.slane %v555, %v3900
    %v3903 = vunpack.c.l.s4 1414812756
    %v3904 = vunpack.c.0.s8 %v3903
    %v3905 = vlaneseq
    %v3906 = vshrl.u32 %v3905, 7
    %v3907 = vsub.s32 %v3904, %v3906
    %v3908 = vrot.slane %v555, %v3907
    %v3910 = vunpack.c.l.s4 1987475062
    %v3911 = vunpack.c.0.s8 %v3910
    %v3912 = vlaneseq
    %v3913 = vshrl.u32 %v3912, 7
    %v3914 = vsub.s32 %v3911, %v3913
    %v3915 = vrot.slane %v555, %v3914
    %v3917 = vunpack.c.l.s4 269488144
    %v3918 = vunpack.c.0.s8 %v3917
    %v3919 = vlaneseq
    %v3920 = vshrl.u32 %v3919, 7
    %v3921 = vsub.s32 %v3918, %v3920
    %v3922 = vrot.slane %v558, %v3921
    %v3924 = vunpack.c.l.s4 842150450
    %v3925 = vunpack.c.0.s8 %v3924
    %v3926 = vlaneseq
    %v3927 = vshrl.u32 %v3926, 7
    %v3928 = vsub.s32 %v3925, %v3927
    %v3929 = vrot.slane %v558, %v3928
    %v3931 = vunpack.c.l.s4 1414812756
    %v3932 = vunpack.c.0.s8 %v3931
    %v3933 = vlaneseq
    %v3934 = vshrl.u32 %v3933, 7
    %v3935 = vsub.s32 %v3932, %v3934
    %v3936 = vrot.slane %v558, %v3935
    %v3938 = vunpack.c.l.s4 1987475062
    %v3939 = vunpack.c.0.s8 %v3938
    %v3940 = vlaneseq
    %v3941 = vshrl.u32 %v3940, 7
    %v3942 = vsub.s32 %v3939, %v3941
    %v3943 = vrot.slane %v558, %v3942
    %v3945 = vunpack.c.l.s4 269488144
    %v3946 = vunpack.c.0.s8 %v3945
    %v3947 = vlaneseq
    %v3948 = vshrl.u32 %v3947, 7
    %v3949 = vsub.s32 %v3946, %v3948
    %v3950 = vrot.slane %v561, %v3949
    %v3952 = vunpack.c.l.s4 842150450
    %v3953 = vunpack.c.0.s8 %v3952
    %v3954 = vlaneseq
    %v3955 = vshrl.u32 %v3954, 7
    %v3956 = vsub.s32 %v3953, %v3955
    %v3957 = vrot.slane %v561, %v3956
    %v3959 = vunpack.c.l.s4 1414812756
    %v3960 = vunpack.c.0.s8 %v3959
    %v3961 = vlaneseq
    %v3962 = vshrl.u32 %v3961, 7
    %v3963 = vsub.s32 %v3960, %v3962
    %v3964 = vrot.slane %v561, %v3963
    %v3966 = vunpack.c.l.s4 1987475062
    %v3967 = vunpack.c.0.s8 %v3966
    %v3968 = vlaneseq
    %v3969 = vshrl.u32 %v3968, 7
    %v3970 = vsub.s32 %v3967, %v3969
    %v3971 = vrot.slane %v561, %v3970
    %v3973 = vunpack.c.l.s4 269488144
    %v3974 = vunpack.c.0.s8 %v3973
    %v3975 = vlaneseq
    %v3976 = vshrl.u32 %v3975, 7
    %v3977 = vsub.s32 %v3974, %v3976
    %v3978 = vrot.slane %v564, %v3977
    %v3980 = vunpack.c.l.s4 842150450
    %v3981 = vunpack.c.0.s8 %v3980
    %v3982 = vlaneseq
    %v3983 = vshrl.u32 %v3982, 7
    %v3984 = vsub.s32 %v3981, %v3983
    %v3985 = vrot.slane %v564, %v3984
    %v3987 = vunpack.c.l.s4 1414812756
    %v3988 = vunpack.c.0.s8 %v3987
    %v3989 = vlaneseq
    %v3990 = vshrl.u32 %v3989, 7
    %v3991 = vsub.s32 %v3988, %v3990
    %v3992 = vrot.slane %v564, %v3991
    %v3994 = vunpack.c.l.s4 1987475062
    %v3995 = vunpack.c.0.s8 %v3994
    %v3996 = vlaneseq
    %v3997 = vshrl.u32 %v3996, 7
    %v3998 = vsub.s32 %v3995, %v3997
    %v3999 = vrot.slane %v564, %v3998
    %v4001 = vunpack.c.l.s4 269488144
    %v4002 = vunpack.c.0.s8 %v4001
    %v4003 = vlaneseq
    %v4004 = vshrl.u32 %v4003, 7
    %v4005 = vsub.s32 %v4002, %v4004
    %v4006 = vrot.slane %v567, %v4005
    %v4008 = vunpack.c.l.s4 842150450
    %v4009 = vunpack.c.0.s8 %v4008
    %v4010 = vlaneseq
    %v4011 = vshrl.u32 %v4010, 7
    %v4012 = vsub.s32 %v4009, %v4011
    %v4013 = vrot.slane %v567, %v4012
    %v4015 = vunpack.c.l.s4 1414812756
    %v4016 = vunpack.c.0.s8 %v4015
    %v4017 = vlaneseq
    %v4018 = vshrl.u32 %v4017, 7
    %v4019 = vsub.s32 %v4016, %v4018
    %v4020 = vrot.slane %v567, %v4019
    %v4022 = vunpack.c.l.s4 1987475062
    %v4023 = vunpack.c.0.s8 %v4022
    %v4024 = vlaneseq
    %v4025 = vshrl.u32 %v4024, 7
    %v4026 = vsub.s32 %v4023, %v4025
    %v4027 = vrot.slane %v567, %v4026
    %v4029 = vunpack.c.l.s4 269488144
    %v4030 = vunpack.c.0.s8 %v4029
    %v4031 = vlaneseq
    %v4032 = vshrl.u32 %v4031, 7
    %v4033 = vsub.s32 %v4030, %v4032
    %v4034 = vrot.slane %v570, %v4033
    %v4036 = vunpack.c.l.s4 842150450
    %v4037 = vunpack.c.0.s8 %v4036
    %v4038 = vlaneseq
    %v4039 = vshrl.u32 %v4038, 7
    %v4040 = vsub.s32 %v4037, %v4039
    %v4041 = vrot.slane %v570, %v4040
    %v4043 = vunpack.c.l.s4 1414812756
    %v4044 = vunpack.c.0.s8 %v4043
    %v4045 = vlaneseq
    %v4046 = vshrl.u32 %v4045, 7
    %v4047 = vsub.s32 %v4044, %v4046
    %v4048 = vrot.slane %v570, %v4047
    %v4050 = vunpack.c.l.s4 1987475062
    %v4051 = vunpack.c.0.s8 %v4050
    %v4052 = vlaneseq
    %v4053 = vshrl.u32 %v4052, 7
    %v4054 = vsub.s32 %v4051, %v4053
    %v4055 = vrot.slane %v570, %v4054
    %v4057 = vunpack.c.l.s4 269488144
    %v4058 = vunpack.c.0.s8 %v4057
    %v4059 = vlaneseq
    %v4060 = vshrl.u32 %v4059, 7
    %v4061 = vsub.s32 %v4058, %v4060
    %v4062 = vrot.slane %v573, %v4061
    %v4064 = vunpack.c.l.s4 842150450
    %v4065 = vunpack.c.0.s8 %v4064
    %v4066 = vlaneseq
    %v4067 = vshrl.u32 %v4066, 7
    %v4068 = vsub.s32 %v4065, %v4067
    %v4069 = vrot.slane %v573, %v4068
    %v4071 = vunpack.c.l.s4 1414812756
    %v4072 = vunpack.c.0.s8 %v4071
    %v4073 = vlaneseq
    %v4074 = vshrl.u32 %v4073, 7
    %v4075 = vsub.s32 %v4072, %v4074
    %v4076 = vrot.slane %v573, %v4075
    %v4078 = vunpack.c.l.s4 1987475062
    %v4079 = vunpack.c.0.s8 %v4078
    %v4080 = vlaneseq
    %v4081 = vshrl.u32 %v4080, 7
    %v4082 = vsub.s32 %v4079, %v4081
    %v4083 = vrot.slane %v573, %v4082
    %v4085 = vunpack.c.l.s4 269488144
    %v4086 = vunpack.c.0.s8 %v4085
    %v4087 = vlaneseq
    %v4088 = vshrl.u32 %v4087, 7
    %v4089 = vsub.s32 %v4086, %v4088
    %v4090 = vrot.slane %v576, %v4089
    %v4092 = vunpack.c.l.s4 842150450
    %v4093 = vunpack.c.0.s8 %v4092
    %v4094 = vlaneseq
    %v4095 = vshrl.u32 %v4094, 7
    %v4096 = vsub.s32 %v4093, %v4095
    %v4097 = vrot.slane %v576, %v4096
    %v4099 = vunpack.c.l.s4 1414812756
    %v4100 = vunpack.c.0.s8 %v4099
    %v4101 = vlaneseq
    %v4102 = vshrl.u32 %v4101, 7
    %v4103 = vsub.s32 %v4100, %v4102
    %v4104 = vrot.slane %v576, %v4103
    %v4106 = vunpack.c.l.s4 1987475062
    %v4107 = vunpack.c.0.s8 %v4106
    %v4108 = vlaneseq
    %v4109 = vshrl.u32 %v4108, 7
    %v4110 = vsub.s32 %v4107, %v4109
    %v4111 = vrot.slane %v576, %v4110
    %v4113 = vunpack.c.l.s4 269488144
    %v4114 = vunpack.c.0.s8 %v4113
    %v4115 = vlaneseq
    %v4116 = vshrl.u32 %v4115, 7
    %v4117 = vsub.s32 %v4114, %v4116
    %v4118 = vrot.slane %v579, %v4117
    %v4120 = vunpack.c.l.s4 842150450
    %v4121 = vunpack.c.0.s8 %v4120
    %v4122 = vlaneseq
    %v4123 = vshrl.u32 %v4122, 7
    %v4124 = vsub.s32 %v4121, %v4123
    %v4125 = vrot.slane %v579, %v4124
    %v4127 = vunpack.c.l.s4 1414812756
    %v4128 = vunpack.c.0.s8 %v4127
    %v4129 = vlaneseq
    %v4130 = vshrl.u32 %v4129, 7
    %v4131 = vsub.s32 %v4128, %v4130
    %v4132 = vrot.slane %v579, %v4131
    %v4134 = vunpack.c.l.s4 1987475062
    %v4135 = vunpack.c.0.s8 %v4134
    %v4136 = vlaneseq
    %v4137 = vshrl.u32 %v4136, 7
    %v4138 = vsub.s32 %v4135, %v4137
    %v4139 = vrot.slane %v579, %v4138
    %v4141 = vunpack.c.l.s4 269488144
    %v4142 = vunpack.c.0.s8 %v4141
    %v4143 = vlaneseq
    %v4144 = vshrl.u32 %v4143, 7
    %v4145 = vsub.s32 %v4142, %v4144
    %v4146 = vrot.slane %v582, %v4145
    %v4148 = vunpack.c.l.s4 842150450
    %v4149 = vunpack.c.0.s8 %v4148
    %v4150 = vlaneseq
    %v4151 = vshrl.u32 %v4150, 7
    %v4152 = vsub.s32 %v4149, %v4151
    %v4153 = vrot.slane %v582, %v4152
    %v4155 = vunpack.c.l.s4 1414812756
    %v4156 = vunpack.c.0.s8 %v4155
    %v4157 = vlaneseq
    %v4158 = vshrl.u32 %v4157, 7
    %v4159 = vsub.s32 %v4156, %v4158
    %v4160 = vrot.slane %v582, %v4159
    %v4162 = vunpack.c.l.s4 1987475062
    %v4163 = vunpack.c.0.s8 %v4162
    %v4164 = vlaneseq
    %v4165 = vshrl.u32 %v4164, 7
    %v4166 = vsub.s32 %v4163, %v4165
    %v4167 = vrot.slane %v582, %v4166
    %v4169 = vunpack.c.l.s4 269488144
    %v4170 = vunpack.c.0.s8 %v4169
    %v4171 = vlaneseq
    %v4172 = vshrl.u32 %v4171, 7
    %v4173 = vsub.s32 %v4170, %v4172
    %v4174 = vrot.slane %v585, %v4173
    %v4176 = vunpack.c.l.s4 842150450
    %v4177 = vunpack.c.0.s8 %v4176
    %v4178 = vlaneseq
    %v4179 = vshrl.u32 %v4178, 7
    %v4180 = vsub.s32 %v4177, %v4179
    %v4181 = vrot.slane %v585, %v4180
    %v4183 = vunpack.c.l.s4 1414812756
    %v4184 = vunpack.c.0.s8 %v4183
    %v4185 = vlaneseq
    %v4186 = vshrl.u32 %v4185, 7
    %v4187 = vsub.s32 %v4184, %v4186
    %v4188 = vrot.slane %v585, %v4187
    %v4190 = vunpack.c.l.s4 1987475062
    %v4191 = vunpack.c.0.s8 %v4190
    %v4192 = vlaneseq
    %v4193 = vshrl.u32 %v4192, 7
    %v4194 = vsub.s32 %v4191, %v4193
    %v4195 = vrot.slane %v585, %v4194
    %v4197 = vunpack.c.l.s4 269488144
    %v4198 = vunpack.c.0.s8 %v4197
    %v4199 = vlaneseq
    %v4200 = vshrl.u32 %v4199, 7
    %v4201 = vsub.s32 %v4198, %v4200
    %v4202 = vrot.slane %v588, %v4201
    %v4204 = vunpack.c.l.s4 842150450
    %v4205 = vunpack.c.0.s8 %v4204
    %v4206 = vlaneseq
    %v4207 = vshrl.u32 %v4206, 7
    %v4208 = vsub.s32 %v4205, %v4207
    %v4209 = vrot.slane %v588, %v4208
    %v4211 = vunpack.c.l.s4 1414812756
    %v4212 = vunpack.c.0.s8 %v4211
    %v4213 = vlaneseq
    %v4214 = vshrl.u32 %v4213, 7
    %v4215 = vsub.s32 %v4212, %v4214
    %v4216 = vrot.slane %v588, %v4215
    %v4218 = vunpack.c.l.s4 1987475062
    %v4219 = vunpack.c.0.s8 %v4218
    %v4220 = vlaneseq
    %v4221 = vshrl.u32 %v4220, 7
    %v4222 = vsub.s32 %v4219, %v4221
    %v4223 = vrot.slane %v588, %v4222
    %v4225 = vunpack.c.l.s4 269488144
    %v4226 = vunpack.c.0.s8 %v4225
    %v4227 = vlaneseq
    %v4228 = vshrl.u32 %v4227, 7
    %v4229 = vsub.s32 %v4226, %v4228
    %v4230 = vrot.slane %v591, %v4229
    %v4232 = vunpack.c.l.s4 842150450
    %v4233 = vunpack.c.0.s8 %v4232
    %v4234 = vlaneseq
    %v4235 = vshrl.u32 %v4234, 7
    %v4236 = vsub.s32 %v4233, %v4235
    %v4237 = vrot.slane %v591, %v4236
    %v4239 = vunpack.c.l.s4 1414812756
    %v4240 = vunpack.c.0.s8 %v4239
    %v4241 = vlaneseq
    %v4242 = vshrl.u32 %v4241, 7
    %v4243 = vsub.s32 %v4240, %v4242
    %v4244 = vrot.slane %v591, %v4243
    %v4246 = vunpack.c.l.s4 1987475062
    %v4247 = vunpack.c.0.s8 %v4246
    %v4248 = vlaneseq
    %v4249 = vshrl.u32 %v4248, 7
    %v4250 = vsub.s32 %v4247, %v4249
    %v4251 = vrot.slane %v591, %v4250
    %v4253 = vunpack.c.l.s4 269488144
    %v4254 = vunpack.c.0.s8 %v4253
    %v4255 = vlaneseq
    %v4256 = vshrl.u32 %v4255, 7
    %v4257 = vsub.s32 %v4254, %v4256
    %v4258 = vrot.slane %v594, %v4257
    %v4260 = vunpack.c.l.s4 842150450
    %v4261 = vunpack.c.0.s8 %v4260
    %v4262 = vlaneseq
    %v4263 = vshrl.u32 %v4262, 7
    %v4264 = vsub.s32 %v4261, %v4263
    %v4265 = vrot.slane %v594, %v4264
    %v4267 = vunpack.c.l.s4 1414812756
    %v4268 = vunpack.c.0.s8 %v4267
    %v4269 = vlaneseq
    %v4270 = vshrl.u32 %v4269, 7
    %v4271 = vsub.s32 %v4268, %v4270
    %v4272 = vrot.slane %v594, %v4271
    %v4274 = vunpack.c.l.s4 1987475062
    %v4275 = vunpack.c.0.s8 %v4274
    %v4276 = vlaneseq
    %v4277 = vshrl.u32 %v4276, 7
    %v4278 = vsub.s32 %v4275, %v4277
    %v4279 = vrot.slane %v594, %v4278
    %v4281 = vunpack.c.l.s4 269488144
    %v4282 = vunpack.c.0.s8 %v4281
    %v4283 = vlaneseq
    %v4284 = vshrl.u32 %v4283, 7
    %v4285 = vsub.s32 %v4282, %v4284
    %v4286 = vrot.slane %v597, %v4285
    %v4288 = vunpack.c.l.s4 842150450
    %v4289 = vunpack.c.0.s8 %v4288
    %v4290 = vlaneseq
    %v4291 = vshrl.u32 %v4290, 7
    %v4292 = vsub.s32 %v4289, %v4291
    %v4293 = vrot.slane %v597, %v4292
    %v4295 = vunpack.c.l.s4 1414812756
    %v4296 = vunpack.c.0.s8 %v4295
    %v4297 = vlaneseq
    %v4298 = vshrl.u32 %v4297, 7
    %v4299 = vsub.s32 %v4296, %v4298
    %v4300 = vrot.slane %v597, %v4299
    %v4302 = vunpack.c.l.s4 1987475062
    %v4303 = vunpack.c.0.s8 %v4302
    %v4304 = vlaneseq
    %v4305 = vshrl.u32 %v4304, 7
    %v4306 = vsub.s32 %v4303, %v4305
    %v4307 = vrot.slane %v597, %v4306
    %v4309 = vunpack.c.l.s4 269488144
    %v4310 = vunpack.c.0.s8 %v4309
    %v4311 = vlaneseq
    %v4312 = vshrl.u32 %v4311, 7
    %v4313 = vsub.s32 %v4310, %v4312
    %v4314 = vrot.slane %v600, %v4313
    %v4316 = vunpack.c.l.s4 842150450
    %v4317 = vunpack.c.0.s8 %v4316
    %v4318 = vlaneseq
    %v4319 = vshrl.u32 %v4318, 7
    %v4320 = vsub.s32 %v4317, %v4319
    %v4321 = vrot.slane %v600, %v4320
    %v4323 = vunpack.c.l.s4 1414812756
    %v4324 = vunpack.c.0.s8 %v4323
    %v4325 = vlaneseq
    %v4326 = vshrl.u32 %v4325, 7
    %v4327 = vsub.s32 %v4324, %v4326
    %v4328 = vrot.slane %v600, %v4327
    %v4330 = vunpack.c.l.s4 1987475062
    %v4331 = vunpack.c.0.s8 %v4330
    %v4332 = vlaneseq
    %v4333 = vshrl.u32 %v4332, 7
    %v4334 = vsub.s32 %v4331, %v4333
    %v4335 = vrot.slane %v600, %v4334
    %v4337 = vunpack.c.l.s4 269488144
    %v4338 = vunpack.c.0.s8 %v4337
    %v4339 = vlaneseq
    %v4340 = vshrl.u32 %v4339, 7
    %v4341 = vsub.s32 %v4338, %v4340
    %v4342 = vrot.slane %v603, %v4341
    %v4344 = vunpack.c.l.s4 842150450
    %v4345 = vunpack.c.0.s8 %v4344
    %v4346 = vlaneseq
    %v4347 = vshrl.u32 %v4346, 7
    %v4348 = vsub.s32 %v4345, %v4347
    %v4349 = vrot.slane %v603, %v4348
    %v4351 = vunpack.c.l.s4 1414812756
    %v4352 = vunpack.c.0.s8 %v4351
    %v4353 = vlaneseq
    %v4354 = vshrl.u32 %v4353, 7
    %v4355 = vsub.s32 %v4352, %v4354
    %v4356 = vrot.slane %v603, %v4355
    %v4358 = vunpack.c.l.s4 1987475062
    %v4359 = vunpack.c.0.s8 %v4358
    %v4360 = vlaneseq
    %v4361 = vshrl.u32 %v4360, 7
    %v4362 = vsub.s32 %v4359, %v4361
    %v4363 = vrot.slane %v603, %v4362
    %v4365 = vunpack.c.l.s4 269488144
    %v4366 = vunpack.c.0.s8 %v4365
    %v4367 = vlaneseq
    %v4368 = vshrl.u32 %v4367, 7
    %v4369 = vsub.s32 %v4366, %v4368
    %v4370 = vrot.slane %v606, %v4369
    %v4372 = vunpack.c.l.s4 842150450
    %v4373 = vunpack.c.0.s8 %v4372
    %v4374 = vlaneseq
    %v4375 = vshrl.u32 %v4374, 7
    %v4376 = vsub.s32 %v4373, %v4375
    %v4377 = vrot.slane %v606, %v4376
    %v4379 = vunpack.c.l.s4 1414812756
    %v4380 = vunpack.c.0.s8 %v4379
    %v4381 = vlaneseq
    %v4382 = vshrl.u32 %v4381, 7
    %v4383 = vsub.s32 %v4380, %v4382
    %v4384 = vrot.slane %v606, %v4383
    %v4386 = vunpack.c.l.s4 1987475062
    %v4387 = vunpack.c.0.s8 %v4386
    %v4388 = vlaneseq
    %v4389 = vshrl.u32 %v4388, 7
    %v4390 = vsub.s32 %v4387, %v4389
    %v4391 = vrot.slane %v606, %v4390
    %v4393 = vunpack.c.l.s4 269488144
    %v4394 = vunpack.c.0.s8 %v4393
    %v4395 = vlaneseq
    %v4396 = vshrl.u32 %v4395, 7
    %v4397 = vsub.s32 %v4394, %v4396
    %v4398 = vrot.slane %v609, %v4397
    %v4400 = vunpack.c.l.s4 842150450
    %v4401 = vunpack.c.0.s8 %v4400
    %v4402 = vlaneseq
    %v4403 = vshrl.u32 %v4402, 7
    %v4404 = vsub.s32 %v4401, %v4403
    %v4405 = vrot.slane %v609, %v4404
    %v4407 = vunpack.c.l.s4 1414812756
    %v4408 = vunpack.c.0.s8 %v4407
    %v4409 = vlaneseq
    %v4410 = vshrl.u32 %v4409, 7
    %v4411 = vsub.s32 %v4408, %v4410
    %v4412 = vrot.slane %v609, %v4411
    %v4414 = vunpack.c.l.s4 1987475062
    %v4415 = vunpack.c.0.s8 %v4414
    %v4416 = vlaneseq
    %v4417 = vshrl.u32 %v4416, 7
    %v4418 = vsub.s32 %v4415, %v4417
    %v4419 = vrot.slane %v609, %v4418
    %v4421 = vunpack.c.l.s4 269488144
    %v4422 = vunpack.c.0.s8 %v4421
    %v4423 = vlaneseq
    %v4424 = vshrl.u32 %v4423, 7
    %v4425 = vsub.s32 %v4422, %v4424
    %v4426 = vrot.slane %v612, %v4425
    %v4428 = vunpack.c.l.s4 842150450
    %v4429 = vunpack.c.0.s8 %v4428
    %v4430 = vlaneseq
    %v4431 = vshrl.u32 %v4430, 7
    %v4432 = vsub.s32 %v4429, %v4431
    %v4433 = vrot.slane %v612, %v4432
    %v4435 = vunpack.c.l.s4 1414812756
    %v4436 = vunpack.c.0.s8 %v4435
    %v4437 = vlaneseq
    %v4438 = vshrl.u32 %v4437, 7
    %v4439 = vsub.s32 %v4436, %v4438
    %v4440 = vrot.slane %v612, %v4439
    %v4442 = vunpack.c.l.s4 1987475062
    %v4443 = vunpack.c.0.s8 %v4442
    %v4444 = vlaneseq
    %v4445 = vshrl.u32 %v4444, 7
    %v4446 = vsub.s32 %v4443, %v4445
    %v4447 = vrot.slane %v612, %v4446
    %v4449 = vunpack.c.l.s4 269488144
    %v4450 = vunpack.c.0.s8 %v4449
    %v4451 = vlaneseq
    %v4452 = vshrl.u32 %v4451, 7
    %v4453 = vsub.s32 %v4450, %v4452
    %v4454 = vrot.slane %v615, %v4453
    %v4456 = vunpack.c.l.s4 842150450
    %v4457 = vunpack.c.0.s8 %v4456
    %v4458 = vlaneseq
    %v4459 = vshrl.u32 %v4458, 7
    %v4460 = vsub.s32 %v4457, %v4459
    %v4461 = vrot.slane %v615, %v4460
    %v4463 = vunpack.c.l.s4 1414812756
    %v4464 = vunpack.c.0.s8 %v4463
    %v4465 = vlaneseq
    %v4466 = vshrl.u32 %v4465, 7
    %v4467 = vsub.s32 %v4464, %v4466
    %v4468 = vrot.slane %v615, %v4467
    %v4470 = vunpack.c.l.s4 1987475062
    %v4471 = vunpack.c.0.s8 %v4470
    %v4472 = vlaneseq
    %v4473 = vshrl.u32 %v4472, 7
    %v4474 = vsub.s32 %v4471, %v4473
    %v4475 = vrot.slane %v615, %v4474
    %v4477 = vunpack.c.l.s4 269488144
    %v4478 = vunpack.c.0.s8 %v4477
    %v4479 = vlaneseq
    %v4480 = vshrl.u32 %v4479, 7
    %v4481 = vsub.s32 %v4478, %v4480
    %v4482 = vrot.slane %v618, %v4481
    %v4484 = vunpack.c.l.s4 842150450
    %v4485 = vunpack.c.0.s8 %v4484
    %v4486 = vlaneseq
    %v4487 = vshrl.u32 %v4486, 7
    %v4488 = vsub.s32 %v4485, %v4487
    %v4489 = vrot.slane %v618, %v4488
    %v4491 = vunpack.c.l.s4 1414812756
    %v4492 = vunpack.c.0.s8 %v4491
    %v4493 = vlaneseq
    %v4494 = vshrl.u32 %v4493, 7
    %v4495 = vsub.s32 %v4492, %v4494
    %v4496 = vrot.slane %v618, %v4495
    %v4498 = vunpack.c.l.s4 1987475062
    %v4499 = vunpack.c.0.s8 %v4498
    %v4500 = vlaneseq
    %v4501 = vshrl.u32 %v4500, 7
    %v4502 = vsub.s32 %v4499, %v4501
    %v4503 = vrot.slane %v618, %v4502
    %v4505 = vunpack.c.l.s4 269488144
    %v4506 = vunpack.c.0.s8 %v4505
    %v4507 = vlaneseq
    %v4508 = vshrl.u32 %v4507, 7
    %v4509 = vsub.s32 %v4506, %v4508
    %v4510 = vrot.slane %v621, %v4509
    %v4512 = vunpack.c.l.s4 842150450
    %v4513 = vunpack.c.0.s8 %v4512
    %v4514 = vlaneseq
    %v4515 = vshrl.u32 %v4514, 7
    %v4516 = vsub.s32 %v4513, %v4515
    %v4517 = vrot.slane %v621, %v4516
    %v4519 = vunpack.c.l.s4 1414812756
    %v4520 = vunpack.c.0.s8 %v4519
    %v4521 = vlaneseq
    %v4522 = vshrl.u32 %v4521, 7
    %v4523 = vsub.s32 %v4520, %v4522
    %v4524 = vrot.slane %v621, %v4523
    %v4526 = vunpack.c.l.s4 1987475062
    %v4527 = vunpack.c.0.s8 %v4526
    %v4528 = vlaneseq
    %v4529 = vshrl.u32 %v4528, 7
    %v4530 = vsub.s32 %v4527, %v4529
    %v4531 = vrot.slane %v621, %v4530
    %v4533 = vunpack.c.l.s4 269488144
    %v4534 = vunpack.c.0.s8 %v4533
    %v4535 = vlaneseq
    %v4536 = vshrl.u32 %v4535, 7
    %v4537 = vsub.s32 %v4534, %v4536
    %v4538 = vrot.slane %v624, %v4537
    %v4540 = vunpack.c.l.s4 842150450
    %v4541 = vunpack.c.0.s8 %v4540
    %v4542 = vlaneseq
    %v4543 = vshrl.u32 %v4542, 7
    %v4544 = vsub.s32 %v4541, %v4543
    %v4545 = vrot.slane %v624, %v4544
    %v4547 = vunpack.c.l.s4 1414812756
    %v4548 = vunpack.c.0.s8 %v4547
    %v4549 = vlaneseq
    %v4550 = vshrl.u32 %v4549, 7
    %v4551 = vsub.s32 %v4548, %v4550
    %v4552 = vrot.slane %v624, %v4551
    %v4554 = vunpack.c.l.s4 1987475062
    %v4555 = vunpack.c.0.s8 %v4554
    %v4556 = vlaneseq
    %v4557 = vshrl.u32 %v4556, 7
    %v4558 = vsub.s32 %v4555, %v4557
    %v4559 = vrot.slane %v624, %v4558
    %v4561 = vunpack.c.l.s4 269488144
    %v4562 = vunpack.c.0.s8 %v4561
    %v4563 = vlaneseq
    %v4564 = vshrl.u32 %v4563, 7
    %v4565 = vsub.s32 %v4562, %v4564
    %v4566 = vrot.slane %v627, %v4565
    %v4568 = vunpack.c.l.s4 842150450
    %v4569 = vunpack.c.0.s8 %v4568
    %v4570 = vlaneseq
    %v4571 = vshrl.u32 %v4570, 7
    %v4572 = vsub.s32 %v4569, %v4571
    %v4573 = vrot.slane %v627, %v4572
    %v4575 = vunpack.c.l.s4 1414812756
    %v4576 = vunpack.c.0.s8 %v4575
    %v4577 = vlaneseq
    %v4578 = vshrl.u32 %v4577, 7
    %v4579 = vsub.s32 %v4576, %v4578
    %v4580 = vrot.slane %v627, %v4579
    %v4582 = vunpack.c.l.s4 1987475062
    %v4583 = vunpack.c.0.s8 %v4582
    %v4584 = vlaneseq
    %v4585 = vshrl.u32 %v4584, 7
    %v4586 = vsub.s32 %v4583, %v4585
    %v4587 = vrot.slane %v627, %v4586
    %v4589 = vunpack.c.l.s4 269488144
    %v4590 = vunpack.c.0.s8 %v4589
    %v4591 = vlaneseq
    %v4592 = vshrl.u32 %v4591, 7
    %v4593 = vsub.s32 %v4590, %v4592
    %v4594 = vrot.slane %v630, %v4593
    %v4596 = vunpack.c.l.s4 842150450
    %v4597 = vunpack.c.0.s8 %v4596
    %v4598 = vlaneseq
    %v4599 = vshrl.u32 %v4598, 7
    %v4600 = vsub.s32 %v4597, %v4599
    %v4601 = vrot.slane %v630, %v4600
    %v4603 = vunpack.c.l.s4 1414812756
    %v4604 = vunpack.c.0.s8 %v4603
    %v4605 = vlaneseq
    %v4606 = vshrl.u32 %v4605, 7
    %v4607 = vsub.s32 %v4604, %v4606
    %v4608 = vrot.slane %v630, %v4607
    %v4610 = vunpack.c.l.s4 1987475062
    %v4611 = vunpack.c.0.s8 %v4610
    %v4612 = vlaneseq
    %v4613 = vshrl.u32 %v4612, 7
    %v4614 = vsub.s32 %v4611, %v4613
    %v4615 = vrot.slane %v630, %v4614
    %v4617 = vunpack.c.l.s4 269488144
    %v4618 = vunpack.c.0.s8 %v4617
    %v4619 = vlaneseq
    %v4620 = vshrl.u32 %v4619, 7
    %v4621 = vsub.s32 %v4618, %v4620
    %v4622 = vrot.slane %v633, %v4621
    %v4624 = vunpack.c.l.s4 842150450
    %v4625 = vunpack.c.0.s8 %v4624
    %v4626 = vlaneseq
    %v4627 = vshrl.u32 %v4626, 7
    %v4628 = vsub.s32 %v4625, %v4627
    %v4629 = vrot.slane %v633, %v4628
    %v4631 = vunpack.c.l.s4 1414812756
    %v4632 = vunpack.c.0.s8 %v4631
    %v4633 = vlaneseq
    %v4634 = vshrl.u32 %v4633, 7
    %v4635 = vsub.s32 %v4632, %v4634
    %v4636 = vrot.slane %v633, %v4635
    %v4638 = vunpack.c.l.s4 1987475062
    %v4639 = vunpack.c.0.s8 %v4638
    %v4640 = vlaneseq
    %v4641 = vshrl.u32 %v4640, 7
    %v4642 = vsub.s32 %v4639, %v4641
    %v4643 = vrot.slane %v633, %v4642
    %v4645 = vunpack.c.l.s4 269488144
    %v4646 = vunpack.c.0.s8 %v4645
    %v4647 = vlaneseq
    %v4648 = vshrl.u32 %v4647, 7
    %v4649 = vsub.s32 %v4646, %v4648
    %v4650 = vrot.slane %v636, %v4649
    %v4652 = vunpack.c.l.s4 842150450
    %v4653 = vunpack.c.0.s8 %v4652
    %v4654 = vlaneseq
    %v4655 = vshrl.u32 %v4654, 7
    %v4656 = vsub.s32 %v4653, %v4655
    %v4657 = vrot.slane %v636, %v4656
    %v4659 = vunpack.c.l.s4 1414812756
    %v4660 = vunpack.c.0.s8 %v4659
    %v4661 = vlaneseq
    %v4662 = vshrl.u32 %v4661, 7
    %v4663 = vsub.s32 %v4660, %v4662
    %v4664 = vrot.slane %v636, %v4663
    %v4666 = vunpack.c.l.s4 1987475062
    %v4667 = vunpack.c.0.s8 %v4666
    %v4668 = vlaneseq
    %v4669 = vshrl.u32 %v4668, 7
    %v4670 = vsub.s32 %v4667, %v4669
    %v4671 = vrot.slane %v636, %v4670
    %v4673 = vunpack.c.l.s4 269488144
    %v4674 = vunpack.c.0.s8 %v4673
    %v4675 = vlaneseq
    %v4676 = vshrl.u32 %v4675, 7
    %v4677 = vsub.s32 %v4674, %v4676
    %v4678 = vrot.slane %v639, %v4677
    %v4680 = vunpack.c.l.s4 842150450
    %v4681 = vunpack.c.0.s8 %v4680
    %v4682 = vlaneseq
    %v4683 = vshrl.u32 %v4682, 7
    %v4684 = vsub.s32 %v4681, %v4683
    %v4685 = vrot.slane %v639, %v4684
    %v4687 = vunpack.c.l.s4 1414812756
    %v4688 = vunpack.c.0.s8 %v4687
    %v4689 = vlaneseq
    %v4690 = vshrl.u32 %v4689, 7
    %v4691 = vsub.s32 %v4688, %v4690
    %v4692 = vrot.slane %v639, %v4691
    %v4694 = vunpack.c.l.s4 1987475062
    %v4695 = vunpack.c.0.s8 %v4694
    %v4696 = vlaneseq
    %v4697 = vshrl.u32 %v4696, 7
    %v4698 = vsub.s32 %v4695, %v4697
    %v4699 = vrot.slane %v639, %v4698
    %v4701 = vunpack.c.l.s4 269488144
    %v4702 = vunpack.c.0.s8 %v4701
    %v4703 = vlaneseq
    %v4704 = vshrl.u32 %v4703, 7
    %v4705 = vsub.s32 %v4702, %v4704
    %v4706 = vrot.slane %v642, %v4705
    %v4708 = vunpack.c.l.s4 842150450
    %v4709 = vunpack.c.0.s8 %v4708
    %v4710 = vlaneseq
    %v4711 = vshrl.u32 %v4710, 7
    %v4712 = vsub.s32 %v4709, %v4711
    %v4713 = vrot.slane %v642, %v4712
    %v4715 = vunpack.c.l.s4 1414812756
    %v4716 = vunpack.c.0.s8 %v4715
    %v4717 = vlaneseq
    %v4718 = vshrl.u32 %v4717, 7
    %v4719 = vsub.s32 %v4716, %v4718
    %v4720 = vrot.slane %v642, %v4719
    %v4722 = vunpack.c.l.s4 1987475062
    %v4723 = vunpack.c.0.s8 %v4722
    %v4724 = vlaneseq
    %v4725 = vshrl.u32 %v4724, 7
    %v4726 = vsub.s32 %v4723, %v4725
    %v4727 = vrot.slane %v642, %v4726
    %v4729 = vunpack.c.l.s4 269488144
    %v4730 = vunpack.c.0.s8 %v4729
    %v4731 = vlaneseq
    %v4732 = vshrl.u32 %v4731, 7
    %v4733 = vsub.s32 %v4730, %v4732
    %v4734 = vrot.slane %v645, %v4733
    %v4736 = vunpack.c.l.s4 842150450
    %v4737 = vunpack.c.0.s8 %v4736
    %v4738 = vlaneseq
    %v4739 = vshrl.u32 %v4738, 7
    %v4740 = vsub.s32 %v4737, %v4739
    %v4741 = vrot.slane %v645, %v4740
    %v4743 = vunpack.c.l.s4 1414812756
    %v4744 = vunpack.c.0.s8 %v4743
    %v4745 = vlaneseq
    %v4746 = vshrl.u32 %v4745, 7
    %v4747 = vsub.s32 %v4744, %v4746
    %v4748 = vrot.slane %v645, %v4747
    %v4750 = vunpack.c.l.s4 1987475062
    %v4751 = vunpack.c.0.s8 %v4750
    %v4752 = vlaneseq
    %v4753 = vshrl.u32 %v4752, 7
    %v4754 = vsub.s32 %v4751, %v4753
    %v4755 = vrot.slane %v645, %v4754
    %v4757 = vunpack.c.l.s4 269488144
    %v4758 = vunpack.c.0.s8 %v4757
    %v4759 = vlaneseq
    %v4760 = vshrl.u32 %v4759, 7
    %v4761 = vsub.s32 %v4758, %v4760
    %v4762 = vrot.slane %v648, %v4761
    %v4764 = vunpack.c.l.s4 842150450
    %v4765 = vunpack.c.0.s8 %v4764
    %v4766 = vlaneseq
    %v4767 = vshrl.u32 %v4766, 7
    %v4768 = vsub.s32 %v4765, %v4767
    %v4769 = vrot.slane %v648, %v4768
    %v4771 = vunpack.c.l.s4 1414812756
    %v4772 = vunpack.c.0.s8 %v4771
    %v4773 = vlaneseq
    %v4774 = vshrl.u32 %v4773, 7
    %v4775 = vsub.s32 %v4772, %v4774
    %v4776 = vrot.slane %v648, %v4775
    %v4778 = vunpack.c.l.s4 1987475062
    %v4779 = vunpack.c.0.s8 %v4778
    %v4780 = vlaneseq
    %v4781 = vshrl.u32 %v4780, 7
    %v4782 = vsub.s32 %v4779, %v4781
    %v4783 = vrot.slane %v648, %v4782
    %v4785 = vunpack.c.l.s4 269488144
    %v4786 = vunpack.c.0.s8 %v4785
    %v4787 = vlaneseq
    %v4788 = vshrl.u32 %v4787, 7
    %v4789 = vsub.s32 %v4786, %v4788
    %v4790 = vrot.slane %v651, %v4789
    %v4792 = vunpack.c.l.s4 842150450
    %v4793 = vunpack.c.0.s8 %v4792
    %v4794 = vlaneseq
    %v4795 = vshrl.u32 %v4794, 7
    %v4796 = vsub.s32 %v4793, %v4795
    %v4797 = vrot.slane %v651, %v4796
    %v4799 = vunpack.c.l.s4 1414812756
    %v4800 = vunpack.c.0.s8 %v4799
    %v4801 = vlaneseq
    %v4802 = vshrl.u32 %v4801, 7
    %v4803 = vsub.s32 %v4800, %v4802
    %v4804 = vrot.slane %v651, %v4803
    %v4806 = vunpack.c.l.s4 1987475062
    %v4807 = vunpack.c.0.s8 %v4806
    %v4808 = vlaneseq
    %v4809 = vshrl.u32 %v4808, 7
    %v4810 = vsub.s32 %v4807, %v4809
    %v4811 = vrot.slane %v651, %v4810
    %v4813 = vunpack.c.l.s4 269488144
    %v4814 = vunpack.c.0.s8 %v4813
    %v4815 = vlaneseq
    %v4816 = vshrl.u32 %v4815, 7
    %v4817 = vsub.s32 %v4814, %v4816
    %v4818 = vrot.slane %v654, %v4817
    %v4820 = vunpack.c.l.s4 842150450
    %v4821 = vunpack.c.0.s8 %v4820
    %v4822 = vlaneseq
    %v4823 = vshrl.u32 %v4822, 7
    %v4824 = vsub.s32 %v4821, %v4823
    %v4825 = vrot.slane %v654, %v4824
    %v4827 = vunpack.c.l.s4 1414812756
    %v4828 = vunpack.c.0.s8 %v4827
    %v4829 = vlaneseq
    %v4830 = vshrl.u32 %v4829, 7
    %v4831 = vsub.s32 %v4828, %v4830
    %v4832 = vrot.slane %v654, %v4831
    %v4834 = vunpack.c.l.s4 1987475062
    %v4835 = vunpack.c.0.s8 %v4834
    %v4836 = vlaneseq
    %v4837 = vshrl.u32 %v4836, 7
    %v4838 = vsub.s32 %v4835, %v4837
    %v4839 = vrot.slane %v654, %v4838
    %v4841 = vunpack.c.l.s4 269488144
    %v4842 = vunpack.c.0.s8 %v4841
    %v4843 = vlaneseq
    %v4844 = vshrl.u32 %v4843, 7
    %v4845 = vsub.s32 %v4842, %v4844
    %v4846 = vrot.slane %v657, %v4845
    %v4848 = vunpack.c.l.s4 842150450
    %v4849 = vunpack.c.0.s8 %v4848
    %v4850 = vlaneseq
    %v4851 = vshrl.u32 %v4850, 7
    %v4852 = vsub.s32 %v4849, %v4851
    %v4853 = vrot.slane %v657, %v4852
    %v4855 = vunpack.c.l.s4 1414812756
    %v4856 = vunpack.c.0.s8 %v4855
    %v4857 = vlaneseq
    %v4858 = vshrl.u32 %v4857, 7
    %v4859 = vsub.s32 %v4856, %v4858
    %v4860 = vrot.slane %v657, %v4859
    %v4862 = vunpack.c.l.s4 1987475062
    %v4863 = vunpack.c.0.s8 %v4862
    %v4864 = vlaneseq
    %v4865 = vshrl.u32 %v4864, 7
    %v4866 = vsub.s32 %v4863, %v4865
    %v4867 = vrot.slane %v657, %v4866
    %v4869 = vunpack.c.l.s4 269488144
    %v4870 = vunpack.c.0.s8 %v4869
    %v4871 = vlaneseq
    %v4872 = vshrl.u32 %v4871, 7
    %v4873 = vsub.s32 %v4870, %v4872
    %v4874 = vrot.slane %v660, %v4873
    %v4876 = vunpack.c.l.s4 842150450
    %v4877 = vunpack.c.0.s8 %v4876
    %v4878 = vlaneseq
    %v4879 = vshrl.u32 %v4878, 7
    %v4880 = vsub.s32 %v4877, %v4879
    %v4881 = vrot.slane %v660, %v4880
    %v4883 = vunpack.c.l.s4 1414812756
    %v4884 = vunpack.c.0.s8 %v4883
    %v4885 = vlaneseq
    %v4886 = vshrl.u32 %v4885, 7
    %v4887 = vsub.s32 %v4884, %v4886
    %v4888 = vrot.slane %v660, %v4887
    %v4890 = vunpack.c.l.s4 1987475062
    %v4891 = vunpack.c.0.s8 %v4890
    %v4892 = vlaneseq
    %v4893 = vshrl.u32 %v4892, 7
    %v4894 = vsub.s32 %v4891, %v4893
    %v4895 = vrot.slane %v660, %v4894
    %v4897 = vunpack.c.l.s4 269488144
    %v4898 = vunpack.c.0.s8 %v4897
    %v4899 = vlaneseq
    %v4900 = vshrl.u32 %v4899, 7
    %v4901 = vsub.s32 %v4898, %v4900
    %v4902 = vrot.slane %v663, %v4901
    %v4904 = vunpack.c.l.s4 842150450
    %v4905 = vunpack.c.0.s8 %v4904
    %v4906 = vlaneseq
    %v4907 = vshrl.u32 %v4906, 7
    %v4908 = vsub.s32 %v4905, %v4907
    %v4909 = vrot.slane %v663, %v4908
    %v4911 = vunpack.c.l.s4 1414812756
    %v4912 = vunpack.c.0.s8 %v4911
    %v4913 = vlaneseq
    %v4914 = vshrl.u32 %v4913, 7
    %v4915 = vsub.s32 %v4912, %v4914
    %v4916 = vrot.slane %v663, %v4915
    %v4918 = vunpack.c.l.s4 1987475062
    %v4919 = vunpack.c.0.s8 %v4918
    %v4920 = vlaneseq
    %v4921 = vshrl.u32 %v4920, 7
    %v4922 = vsub.s32 %v4919, %v4921
    %v4923 = vrot.slane %v663, %v4922
    %v4925 = vunpack.c.l.s4 269488144
    %v4926 = vunpack.c.0.s8 %v4925
    %v4927 = vlaneseq
    %v4928 = vshrl.u32 %v4927, 7
    %v4929 = vsub.s32 %v4926, %v4928
    %v4930 = vrot.slane %v666, %v4929
    %v4932 = vunpack.c.l.s4 842150450
    %v4933 = vunpack.c.0.s8 %v4932
    %v4934 = vlaneseq
    %v4935 = vshrl.u32 %v4934, 7
    %v4936 = vsub.s32 %v4933, %v4935
    %v4937 = vrot.slane %v666, %v4936
    %v4939 = vunpack.c.l.s4 1414812756
    %v4940 = vunpack.c.0.s8 %v4939
    %v4941 = vlaneseq
    %v4942 = vshrl.u32 %v4941, 7
    %v4943 = vsub.s32 %v4940, %v4942
    %v4944 = vrot.slane %v666, %v4943
    %v4946 = vunpack.c.l.s4 1987475062
    %v4947 = vunpack.c.0.s8 %v4946
    %v4948 = vlaneseq
    %v4949 = vshrl.u32 %v4948, 7
    %v4950 = vsub.s32 %v4947, %v4949
    %v4951 = vrot.slane %v666, %v4950
    %v4953 = vunpack.c.l.s4 269488144
    %v4954 = vunpack.c.0.s8 %v4953
    %v4955 = vlaneseq
    %v4956 = vshrl.u32 %v4955, 7
    %v4957 = vsub.s32 %v4954, %v4956
    %v4958 = vrot.slane %v669, %v4957
    %v4960 = vunpack.c.l.s4 842150450
    %v4961 = vunpack.c.0.s8 %v4960
    %v4962 = vlaneseq
    %v4963 = vshrl.u32 %v4962, 7
    %v4964 = vsub.s32 %v4961, %v4963
    %v4965 = vrot.slane %v669, %v4964
    %v4967 = vunpack.c.l.s4 1414812756
    %v4968 = vunpack.c.0.s8 %v4967
    %v4969 = vlaneseq
    %v4970 = vshrl.u32 %v4969, 7
    %v4971 = vsub.s32 %v4968, %v4970
    %v4972 = vrot.slane %v669, %v4971
    %v4974 = vunpack.c.l.s4 1987475062
    %v4975 = vunpack.c.0.s8 %v4974
    %v4976 = vlaneseq
    %v4977 = vshrl.u32 %v4976, 7
    %v4978 = vsub.s32 %v4975, %v4977
    %v4979 = vrot.slane %v669, %v4978
    %v4981 = vunpack.c.l.s4 269488144
    %v4982 = vunpack.c.0.s8 %v4981
    %v4983 = vlaneseq
    %v4984 = vshrl.u32 %v4983, 7
    %v4985 = vsub.s32 %v4982, %v4984
    %v4986 = vrot.slane %v672, %v4985
    %v4988 = vunpack.c.l.s4 842150450
    %v4989 = vunpack.c.0.s8 %v4988
    %v4990 = vlaneseq
    %v4991 = vshrl.u32 %v4990, 7
    %v4992 = vsub.s32 %v4989, %v4991
    %v4993 = vrot.slane %v672, %v4992
    %v4995 = vunpack.c.l.s4 1414812756
    %v4996 = vunpack.c.0.s8 %v4995
    %v4997 = vlaneseq
    %v4998 = vshrl.u32 %v4997, 7
    %v4999 = vsub.s32 %v4996, %v4998
    %v5000 = vrot.slane %v672, %v4999
    %v5002 = vunpack.c.l.s4 1987475062
    %v5003 = vunpack.c.0.s8 %v5002
    %v5004 = vlaneseq
    %v5005 = vshrl.u32 %v5004, 7
    %v5006 = vsub.s32 %v5003, %v5005
    %v5007 = vrot.slane %v672, %v5006
    %v5009 = vunpack.c.l.s4 269488144
    %v5010 = vunpack.c.0.s8 %v5009
    %v5011 = vlaneseq
    %v5012 = vshrl.u32 %v5011, 7
    %v5013 = vsub.s32 %v5010, %v5012
    %v5014 = vrot.slane %v675, %v5013
    %v5016 = vunpack.c.l.s4 842150450
    %v5017 = vunpack.c.0.s8 %v5016
    %v5018 = vlaneseq
    %v5019 = vshrl.u32 %v5018, 7
    %v5020 = vsub.s32 %v5017, %v5019
    %v5021 = vrot.slane %v675, %v5020
    %v5023 = vunpack.c.l.s4 1414812756
    %v5024 = vunpack.c.0.s8 %v5023
    %v5025 = vlaneseq
    %v5026 = vshrl.u32 %v5025, 7
    %v5027 = vsub.s32 %v5024, %v5026
    %v5028 = vrot.slane %v675, %v5027
    %v5030 = vunpack.c.l.s4 1987475062
    %v5031 = vunpack.c.0.s8 %v5030
    %v5032 = vlaneseq
    %v5033 = vshrl.u32 %v5032, 7
    %v5034 = vsub.s32 %v5031, %v5033
    %v5035 = vrot.slane %v675, %v5034
    %v5037 = vunpack.c.l.s4 269488144
    %v5038 = vunpack.c.0.s8 %v5037
    %v5039 = vlaneseq
    %v5040 = vshrl.u32 %v5039, 7
    %v5041 = vsub.s32 %v5038, %v5040
    %v5042 = vrot.slane %v678, %v5041
    %v5044 = vunpack.c.l.s4 842150450
    %v5045 = vunpack.c.0.s8 %v5044
    %v5046 = vlaneseq
    %v5047 = vshrl.u32 %v5046, 7
    %v5048 = vsub.s32 %v5045, %v5047
    %v5049 = vrot.slane %v678, %v5048
    %v5051 = vunpack.c.l.s4 1414812756
    %v5052 = vunpack.c.0.s8 %v5051
    %v5053 = vlaneseq
    %v5054 = vshrl.u32 %v5053, 7
    %v5055 = vsub.s32 %v5052, %v5054
    %v5056 = vrot.slane %v678, %v5055
    %v5058 = vunpack.c.l.s4 1987475062
    %v5059 = vunpack.c.0.s8 %v5058
    %v5060 = vlaneseq
    %v5061 = vshrl.u32 %v5060, 7
    %v5062 = vsub.s32 %v5059, %v5061
    %v5063 = vrot.slane %v678, %v5062
    %v5065 = vunpack.c.l.s4 269488144
    %v5066 = vunpack.c.0.s8 %v5065
    %v5067 = vlaneseq
    %v5068 = vshrl.u32 %v5067, 7
    %v5069 = vsub.s32 %v5066, %v5068
    %v5070 = vrot.slane %v681, %v5069
    %v5072 = vunpack.c.l.s4 842150450
    %v5073 = vunpack.c.0.s8 %v5072
    %v5074 = vlaneseq
    %v5075 = vshrl.u32 %v5074, 7
    %v5076 = vsub.s32 %v5073, %v5075
    %v5077 = vrot.slane %v681, %v5076
    %v5079 = vunpack.c.l.s4 1414812756
    %v5080 = vunpack.c.0.s8 %v5079
    %v5081 = vlaneseq
    %v5082 = vshrl.u32 %v5081, 7
    %v5083 = vsub.s32 %v5080, %v5082
    %v5084 = vrot.slane %v681, %v5083
    %v5086 = vunpack.c.l.s4 1987475062
    %v5087 = vunpack.c.0.s8 %v5086
    %v5088 = vlaneseq
    %v5089 = vshrl.u32 %v5088, 7
    %v5090 = vsub.s32 %v5087, %v5089
    %v5091 = vrot.slane %v681, %v5090
    %v5093 = vunpack.c.l.s4 269488144
    %v5094 = vunpack.c.0.s8 %v5093
    %v5095 = vlaneseq
    %v5096 = vshrl.u32 %v5095, 7
    %v5097 = vsub.s32 %v5094, %v5096
    %v5098 = vrot.slane %v684, %v5097
    %v5100 = vunpack.c.l.s4 842150450
    %v5101 = vunpack.c.0.s8 %v5100
    %v5102 = vlaneseq
    %v5103 = vshrl.u32 %v5102, 7
    %v5104 = vsub.s32 %v5101, %v5103
    %v5105 = vrot.slane %v684, %v5104
    %v5107 = vunpack.c.l.s4 1414812756
    %v5108 = vunpack.c.0.s8 %v5107
    %v5109 = vlaneseq
    %v5110 = vshrl.u32 %v5109, 7
    %v5111 = vsub.s32 %v5108, %v5110
    %v5112 = vrot.slane %v684, %v5111
    %v5114 = vunpack.c.l.s4 1987475062
    %v5115 = vunpack.c.0.s8 %v5114
    %v5116 = vlaneseq
    %v5117 = vshrl.u32 %v5116, 7
    %v5118 = vsub.s32 %v5115, %v5117
    %v5119 = vrot.slane %v684, %v5118
    %v5121 = vunpack.c.l.s4 269488144
    %v5122 = vunpack.c.0.s8 %v5121
    %v5123 = vlaneseq
    %v5124 = vshrl.u32 %v5123, 7
    %v5125 = vsub.s32 %v5122, %v5124
    %v5126 = vrot.slane %v687, %v5125
    %v5128 = vunpack.c.l.s4 842150450
    %v5129 = vunpack.c.0.s8 %v5128
    %v5130 = vlaneseq
    %v5131 = vshrl.u32 %v5130, 7
    %v5132 = vsub.s32 %v5129, %v5131
    %v5133 = vrot.slane %v687, %v5132
    %v5135 = vunpack.c.l.s4 1414812756
    %v5136 = vunpack.c.0.s8 %v5135
    %v5137 = vlaneseq
    %v5138 = vshrl.u32 %v5137, 7
    %v5139 = vsub.s32 %v5136, %v5138
    %v5140 = vrot.slane %v687, %v5139
    %v5142 = vunpack.c.l.s4 1987475062
    %v5143 = vunpack.c.0.s8 %v5142
    %v5144 = vlaneseq
    %v5145 = vshrl.u32 %v5144, 7
    %v5146 = vsub.s32 %v5143, %v5145
    %v5147 = vrot.slane %v687, %v5146
    %v5149 = vunpack.c.l.s4 269488144
    %v5150 = vunpack.c.0.s8 %v5149
    %v5151 = vlaneseq
    %v5152 = vshrl.u32 %v5151, 7
    %v5153 = vsub.s32 %v5150, %v5152
    %v5154 = vrot.slane %v690, %v5153
    %v5156 = vunpack.c.l.s4 842150450
    %v5157 = vunpack.c.0.s8 %v5156
    %v5158 = vlaneseq
    %v5159 = vshrl.u32 %v5158, 7
    %v5160 = vsub.s32 %v5157, %v5159
    %v5161 = vrot.slane %v690, %v5160
    %v5163 = vunpack.c.l.s4 1414812756
    %v5164 = vunpack.c.0.s8 %v5163
    %v5165 = vlaneseq
    %v5166 = vshrl.u32 %v5165, 7
    %v5167 = vsub.s32 %v5164, %v5166
    %v5168 = vrot.slane %v690, %v5167
    %v5170 = vunpack.c.l.s4 1987475062
    %v5171 = vunpack.c.0.s8 %v5170
    %v5172 = vlaneseq
    %v5173 = vshrl.u32 %v5172, 7
    %v5174 = vsub.s32 %v5171, %v5173
    %v5175 = vrot.slane %v690, %v5174
    %v5177 = vunpack.c.l.s4 269488144
    %v5178 = vunpack.c.0.s8 %v5177
    %v5179 = vlaneseq
    %v5180 = vshrl.u32 %v5179, 7
    %v5181 = vsub.s32 %v5178, %v5180
    %v5182 = vrot.slane %v693, %v5181
    %v5184 = vunpack.c.l.s4 842150450
    %v5185 = vunpack.c.0.s8 %v5184
    %v5186 = vlaneseq
    %v5187 = vshrl.u32 %v5186, 7
    %v5188 = vsub.s32 %v5185, %v5187
    %v5189 = vrot.slane %v693, %v5188
    %v5191 = vunpack.c.l.s4 1414812756
    %v5192 = vunpack.c.0.s8 %v5191
    %v5193 = vlaneseq
    %v5194 = vshrl.u32 %v5193, 7
    %v5195 = vsub.s32 %v5192, %v5194
    %v5196 = vrot.slane %v693, %v5195
    %v5198 = vunpack.c.l.s4 1987475062
    %v5199 = vunpack.c.0.s8 %v5198
    %v5200 = vlaneseq
    %v5201 = vshrl.u32 %v5200, 7
    %v5202 = vsub.s32 %v5199, %v5201
    %v5203 = vrot.slane %v693, %v5202
    %v5205 = vunpack.c.l.s4 269488144
    %v5206 = vunpack.c.0.s8 %v5205
    %v5207 = vlaneseq
    %v5208 = vshrl.u32 %v5207, 7
    %v5209 = vsub.s32 %v5206, %v5208
    %v5210 = vrot.slane %v696, %v5209
    %v5212 = vunpack.c.l.s4 842150450
    %v5213 = vunpack.c.0.s8 %v5212
    %v5214 = vlaneseq
    %v5215 = vshrl.u32 %v5214, 7
    %v5216 = vsub.s32 %v5213, %v5215
    %v5217 = vrot.slane %v696, %v5216
    %v5219 = vunpack.c.l.s4 1414812756
    %v5220 = vunpack.c.0.s8 %v5219
    %v5221 = vlaneseq
    %v5222 = vshrl.u32 %v5221, 7
    %v5223 = vsub.s32 %v5220, %v5222
    %v5224 = vrot.slane %v696, %v5223
    %v5226 = vunpack.c.l.s4 1987475062
    %v5227 = vunpack.c.0.s8 %v5226
    %v5228 = vlaneseq
    %v5229 = vshrl.u32 %v5228, 7
    %v5230 = vsub.s32 %v5227, %v5229
    %v5231 = vrot.slane %v696, %v5230
    %v5233 = vunpack.c.l.s4 269488144
    %v5234 = vunpack.c.0.s8 %v5233
    %v5235 = vlaneseq
    %v5236 = vshrl.u32 %v5235, 7
    %v5237 = vsub.s32 %v5234, %v5236
    %v5238 = vrot.slane %v699, %v5237
    %v5240 = vunpack.c.l.s4 842150450
    %v5241 = vunpack.c.0.s8 %v5240
    %v5242 = vlaneseq
    %v5243 = vshrl.u32 %v5242, 7
    %v5244 = vsub.s32 %v5241, %v5243
    %v5245 = vrot.slane %v699, %v5244
    %v5247 = vunpack.c.l.s4 1414812756
    %v5248 = vunpack.c.0.s8 %v5247
    %v5249 = vlaneseq
    %v5250 = vshrl.u32 %v5249, 7
    %v5251 = vsub.s32 %v5248, %v5250
    %v5252 = vrot.slane %v699, %v5251
    %v5254 = vunpack.c.l.s4 1987475062
    %v5255 = vunpack.c.0.s8 %v5254
    %v5256 = vlaneseq
    %v5257 = vshrl.u32 %v5256, 7
    %v5258 = vsub.s32 %v5255, %v5257
    %v5259 = vrot.slane %v699, %v5258
    %v5261 = vunpack.c.l.s4 269488144
    %v5262 = vunpack.c.0.s8 %v5261
    %v5263 = vlaneseq
    %v5264 = vshrl.u32 %v5263, 7
    %v5265 = vsub.s32 %v5262, %v5264
    %v5266 = vrot.slane %v702, %v5265
    %v5268 = vunpack.c.l.s4 842150450
    %v5269 = vunpack.c.0.s8 %v5268
    %v5270 = vlaneseq
    %v5271 = vshrl.u32 %v5270, 7
    %v5272 = vsub.s32 %v5269, %v5271
    %v5273 = vrot.slane %v702, %v5272
    %v5275 = vunpack.c.l.s4 1414812756
    %v5276 = vunpack.c.0.s8 %v5275
    %v5277 = vlaneseq
    %v5278 = vshrl.u32 %v5277, 7
    %v5279 = vsub.s32 %v5276, %v5278
    %v5280 = vrot.slane %v702, %v5279
    %v5282 = vunpack.c.l.s4 1987475062
    %v5283 = vunpack.c.0.s8 %v5282
    %v5284 = vlaneseq
    %v5285 = vshrl.u32 %v5284, 7
    %v5286 = vsub.s32 %v5283, %v5285
    %v5287 = vrot.slane %v702, %v5286
    %v5289 = vunpack.c.l.s4 269488144
    %v5290 = vunpack.c.0.s8 %v5289
    %v5291 = vlaneseq
    %v5292 = vshrl.u32 %v5291, 7
    %v5293 = vsub.s32 %v5290, %v5292
    %v5294 = vrot.slane %v705, %v5293
    %v5296 = vunpack.c.l.s4 842150450
    %v5297 = vunpack.c.0.s8 %v5296
    %v5298 = vlaneseq
    %v5299 = vshrl.u32 %v5298, 7
    %v5300 = vsub.s32 %v5297, %v5299
    %v5301 = vrot.slane %v705, %v5300
    %v5303 = vunpack.c.l.s4 1414812756
    %v5304 = vunpack.c.0.s8 %v5303
    %v5305 = vlaneseq
    %v5306 = vshrl.u32 %v5305, 7
    %v5307 = vsub.s32 %v5304, %v5306
    %v5308 = vrot.slane %v705, %v5307
    %v5310 = vunpack.c.l.s4 1987475062
    %v5311 = vunpack.c.0.s8 %v5310
    %v5312 = vlaneseq
    %v5313 = vshrl.u32 %v5312, 7
    %v5314 = vsub.s32 %v5311, %v5313
    %v5315 = vrot.slane %v705, %v5314
    %v5317 = vunpack.c.l.s4 269488144
    %v5318 = vunpack.c.0.s8 %v5317
    %v5319 = vlaneseq
    %v5320 = vshrl.u32 %v5319, 7
    %v5321 = vsub.s32 %v5318, %v5320
    %v5322 = vrot.slane %v708, %v5321
    %v5324 = vunpack.c.l.s4 842150450
    %v5325 = vunpack.c.0.s8 %v5324
    %v5326 = vlaneseq
    %v5327 = vshrl.u32 %v5326, 7
    %v5328 = vsub.s32 %v5325, %v5327
    %v5329 = vrot.slane %v708, %v5328
    %v5331 = vunpack.c.l.s4 1414812756
    %v5332 = vunpack.c.0.s8 %v5331
    %v5333 = vlaneseq
    %v5334 = vshrl.u32 %v5333, 7
    %v5335 = vsub.s32 %v5332, %v5334
    %v5336 = vrot.slane %v708, %v5335
    %v5338 = vunpack.c.l.s4 1987475062
    %v5339 = vunpack.c.0.s8 %v5338
    %v5340 = vlaneseq
    %v5341 = vshrl.u32 %v5340, 7
    %v5342 = vsub.s32 %v5339, %v5341
    %v5343 = vrot.slane %v708, %v5342
    %v5345 = vunpack.c.l.s4 269488144
    %v5346 = vunpack.c.0.s8 %v5345
    %v5347 = vlaneseq
    %v5348 = vshrl.u32 %v5347, 7
    %v5349 = vsub.s32 %v5346, %v5348
    %v5350 = vrot.slane %v711, %v5349
    %v5352 = vunpack.c.l.s4 842150450
    %v5353 = vunpack.c.0.s8 %v5352
    %v5354 = vlaneseq
    %v5355 = vshrl.u32 %v5354, 7
    %v5356 = vsub.s32 %v5353, %v5355
    %v5357 = vrot.slane %v711, %v5356
    %v5359 = vunpack.c.l.s4 1414812756
    %v5360 = vunpack.c.0.s8 %v5359
    %v5361 = vlaneseq
    %v5362 = vshrl.u32 %v5361, 7
    %v5363 = vsub.s32 %v5360, %v5362
    %v5364 = vrot.slane %v711, %v5363
    %v5366 = vunpack.c.l.s4 1987475062
    %v5367 = vunpack.c.0.s8 %v5366
    %v5368 = vlaneseq
    %v5369 = vshrl.u32 %v5368, 7
    %v5370 = vsub.s32 %v5367, %v5369
    %v5371 = vrot.slane %v711, %v5370
    %v5373 = vunpack.c.l.s4 269488144
    %v5374 = vunpack.c.0.s8 %v5373
    %v5375 = vlaneseq
    %v5376 = vshrl.u32 %v5375, 7
    %v5377 = vsub.s32 %v5374, %v5376
    %v5378 = vrot.slane %v714, %v5377
    %v5380 = vunpack.c.l.s4 842150450
    %v5381 = vunpack.c.0.s8 %v5380
    %v5382 = vlaneseq
    %v5383 = vshrl.u32 %v5382, 7
    %v5384 = vsub.s32 %v5381, %v5383
    %v5385 = vrot.slane %v714, %v5384
    %v5387 = vunpack.c.l.s4 1414812756
    %v5388 = vunpack.c.0.s8 %v5387
    %v5389 = vlaneseq
    %v5390 = vshrl.u32 %v5389, 7
    %v5391 = vsub.s32 %v5388, %v5390
    %v5392 = vrot.slane %v714, %v5391
    %v5394 = vunpack.c.l.s4 1987475062
    %v5395 = vunpack.c.0.s8 %v5394
    %v5396 = vlaneseq
    %v5397 = vshrl.u32 %v5396, 7
    %v5398 = vsub.s32 %v5395, %v5397
    %v5399 = vrot.slane %v714, %v5398
    %v5401 = vunpack.c.l.s4 269488144
    %v5402 = vunpack.c.0.s8 %v5401
    %v5403 = vlaneseq
    %v5404 = vshrl.u32 %v5403, 7
    %v5405 = vsub.s32 %v5402, %v5404
    %v5406 = vrot.slane %v717, %v5405
    %v5408 = vunpack.c.l.s4 842150450
    %v5409 = vunpack.c.0.s8 %v5408
    %v5410 = vlaneseq
    %v5411 = vshrl.u32 %v5410, 7
    %v5412 = vsub.s32 %v5409, %v5411
    %v5413 = vrot.slane %v717, %v5412
    %v5415 = vunpack.c.l.s4 1414812756
    %v5416 = vunpack.c.0.s8 %v5415
    %v5417 = vlaneseq
    %v5418 = vshrl.u32 %v5417, 7
    %v5419 = vsub.s32 %v5416, %v5418
    %v5420 = vrot.slane %v717, %v5419
    %v5422 = vunpack.c.l.s4 1987475062
    %v5423 = vunpack.c.0.s8 %v5422
    %v5424 = vlaneseq
    %v5425 = vshrl.u32 %v5424, 7
    %v5426 = vsub.s32 %v5423, %v5425
    %v5427 = vrot.slane %v717, %v5426
    %v5429 = vunpack.c.l.s4 269488144
    %v5430 = vunpack.c.0.s8 %v5429
    %v5431 = vlaneseq
    %v5432 = vshrl.u32 %v5431, 7
    %v5433 = vsub.s32 %v5430, %v5432
    %v5434 = vrot.slane %v720, %v5433
    %v5436 = vunpack.c.l.s4 842150450
    %v5437 = vunpack.c.0.s8 %v5436
    %v5438 = vlaneseq
    %v5439 = vshrl.u32 %v5438, 7
    %v5440 = vsub.s32 %v5437, %v5439
    %v5441 = vrot.slane %v720, %v5440
    %v5443 = vunpack.c.l.s4 1414812756
    %v5444 = vunpack.c.0.s8 %v5443
    %v5445 = vlaneseq
    %v5446 = vshrl.u32 %v5445, 7
    %v5447 = vsub.s32 %v5444, %v5446
    %v5448 = vrot.slane %v720, %v5447
    %v5450 = vunpack.c.l.s4 1987475062
    %v5451 = vunpack.c.0.s8 %v5450
    %v5452 = vlaneseq
    %v5453 = vshrl.u32 %v5452, 7
    %v5454 = vsub.s32 %v5451, %v5453
    %v5455 = vrot.slane %v720, %v5454
    %v5457 = vunpack.c.l.s4 269488144
    %v5458 = vunpack.c.0.s8 %v5457
    %v5459 = vlaneseq
    %v5460 = vshrl.u32 %v5459, 7
    %v5461 = vsub.s32 %v5458, %v5460
    %v5462 = vrot.slane %v723, %v5461
    %v5464 = vunpack.c.l.s4 842150450
    %v5465 = vunpack.c.0.s8 %v5464
    %v5466 = vlaneseq
    %v5467 = vshrl.u32 %v5466, 7
    %v5468 = vsub.s32 %v5465, %v5467
    %v5469 = vrot.slane %v723, %v5468
    %v5471 = vunpack.c.l.s4 1414812756
    %v5472 = vunpack.c.0.s8 %v5471
    %v5473 = vlaneseq
    %v5474 = vshrl.u32 %v5473, 7
    %v5475 = vsub.s32 %v5472, %v5474
    %v5476 = vrot.slane %v723, %v5475
    %v5478 = vunpack.c.l.s4 1987475062
    %v5479 = vunpack.c.0.s8 %v5478
    %v5480 = vlaneseq
    %v5481 = vshrl.u32 %v5480, 7
    %v5482 = vsub.s32 %v5479, %v5481
    %v5483 = vrot.slane %v723, %v5482
    %v5485 = vunpack.c.l.s4 269488144
    %v5486 = vunpack.c.0.s8 %v5485
    %v5487 = vlaneseq
    %v5488 = vshrl.u32 %v5487, 7
    %v5489 = vsub.s32 %v5486, %v5488
    %v5490 = vrot.slane %v726, %v5489
    %v5492 = vunpack.c.l.s4 842150450
    %v5493 = vunpack.c.0.s8 %v5492
    %v5494 = vlaneseq
    %v5495 = vshrl.u32 %v5494, 7
    %v5496 = vsub.s32 %v5493, %v5495
    %v5497 = vrot.slane %v726, %v5496
    %v5499 = vunpack.c.l.s4 1414812756
    %v5500 = vunpack.c.0.s8 %v5499
    %v5501 = vlaneseq
    %v5502 = vshrl.u32 %v5501, 7
    %v5503 = vsub.s32 %v5500, %v5502
    %v5504 = vrot.slane %v726, %v5503
    %v5506 = vunpack.c.l.s4 1987475062
    %v5507 = vunpack.c.0.s8 %v5506
    %v5508 = vlaneseq
    %v5509 = vshrl.u32 %v5508, 7
    %v5510 = vsub.s32 %v5507, %v5509
    %v5511 = vrot.slane %v726, %v5510
    %v5513 = vunpack.c.l.s4 269488144
    %v5514 = vunpack.c.0.s8 %v5513
    %v5515 = vlaneseq
    %v5516 = vshrl.u32 %v5515, 7
    %v5517 = vsub.s32 %v5514, %v5516
    %v5518 = vrot.slane %v729, %v5517
    %v5520 = vunpack.c.l.s4 842150450
    %v5521 = vunpack.c.0.s8 %v5520
    %v5522 = vlaneseq
    %v5523 = vshrl.u32 %v5522, 7
    %v5524 = vsub.s32 %v5521, %v5523
    %v5525 = vrot.slane %v729, %v5524
    %v5527 = vunpack.c.l.s4 1414812756
    %v5528 = vunpack.c.0.s8 %v5527
    %v5529 = vlaneseq
    %v5530 = vshrl.u32 %v5529, 7
    %v5531 = vsub.s32 %v5528, %v5530
    %v5532 = vrot.slane %v729, %v5531
    %v5534 = vunpack.c.l.s4 1987475062
    %v5535 = vunpack.c.0.s8 %v5534
    %v5536 = vlaneseq
    %v5537 = vshrl.u32 %v5536, 7
    %v5538 = vsub.s32 %v5535, %v5537
    %v5539 = vrot.slane %v729, %v5538
    %v5541 = vunpack.c.l.s4 269488144
    %v5542 = vunpack.c.0.s8 %v5541
    %v5543 = vlaneseq
    %v5544 = vshrl.u32 %v5543, 7
    %v5545 = vsub.s32 %v5542, %v5544
    %v5546 = vrot.slane %v732, %v5545
    %v5548 = vunpack.c.l.s4 842150450
    %v5549 = vunpack.c.0.s8 %v5548
    %v5550 = vlaneseq
    %v5551 = vshrl.u32 %v5550, 7
    %v5552 = vsub.s32 %v5549, %v5551
    %v5553 = vrot.slane %v732, %v5552
    %v5555 = vunpack.c.l.s4 1414812756
    %v5556 = vunpack.c.0.s8 %v5555
    %v5557 = vlaneseq
    %v5558 = vshrl.u32 %v5557, 7
    %v5559 = vsub.s32 %v5556, %v5558
    %v5560 = vrot.slane %v732, %v5559
    %v5562 = vunpack.c.l.s4 1987475062
    %v5563 = vunpack.c.0.s8 %v5562
    %v5564 = vlaneseq
    %v5565 = vshrl.u32 %v5564, 7
    %v5566 = vsub.s32 %v5563, %v5565
    %v5567 = vrot.slane %v732, %v5566
    %v5569 = vunpack.c.l.s4 269488144
    %v5570 = vunpack.c.0.s8 %v5569
    %v5571 = vlaneseq
    %v5572 = vshrl.u32 %v5571, 7
    %v5573 = vsub.s32 %v5570, %v5572
    %v5574 = vrot.slane %v735, %v5573
    %v5576 = vunpack.c.l.s4 842150450
    %v5577 = vunpack.c.0.s8 %v5576
    %v5578 = vlaneseq
    %v5579 = vshrl.u32 %v5578, 7
    %v5580 = vsub.s32 %v5577, %v5579
    %v5581 = vrot.slane %v735, %v5580
    %v5583 = vunpack.c.l.s4 1414812756
    %v5584 = vunpack.c.0.s8 %v5583
    %v5585 = vlaneseq
    %v5586 = vshrl.u32 %v5585, 7
    %v5587 = vsub.s32 %v5584, %v5586
    %v5588 = vrot.slane %v735, %v5587
    %v5590 = vunpack.c.l.s4 1987475062
    %v5591 = vunpack.c.0.s8 %v5590
    %v5592 = vlaneseq
    %v5593 = vshrl.u32 %v5592, 7
    %v5594 = vsub.s32 %v5591, %v5593
    %v5595 = vrot.slane %v735, %v5594
    %v5597 = vunpack.c.l.s4 269488144
    %v5598 = vunpack.c.0.s8 %v5597
    %v5599 = vlaneseq
    %v5600 = vshrl.u32 %v5599, 7
    %v5601 = vsub.s32 %v5598, %v5600
    %v5602 = vrot.slane %v738, %v5601
    %v5604 = vunpack.c.l.s4 842150450
    %v5605 = vunpack.c.0.s8 %v5604
    %v5606 = vlaneseq
    %v5607 = vshrl.u32 %v5606, 7
    %v5608 = vsub.s32 %v5605, %v5607
    %v5609 = vrot.slane %v738, %v5608
    %v5611 = vunpack.c.l.s4 1414812756
    %v5612 = vunpack.c.0.s8 %v5611
    %v5613 = vlaneseq
    %v5614 = vshrl.u32 %v5613, 7
    %v5615 = vsub.s32 %v5612, %v5614
    %v5616 = vrot.slane %v738, %v5615
    %v5618 = vunpack.c.l.s4 1987475062
    %v5619 = vunpack.c.0.s8 %v5618
    %v5620 = vlaneseq
    %v5621 = vshrl.u32 %v5620, 7
    %v5622 = vsub.s32 %v5619, %v5621
    %v5623 = vrot.slane %v738, %v5622
    %v5625 = vunpack.c.l.s4 269488144
    %v5626 = vunpack.c.0.s8 %v5625
    %v5627 = vlaneseq
    %v5628 = vshrl.u32 %v5627, 7
    %v5629 = vsub.s32 %v5626, %v5628
    %v5630 = vrot.slane %v741, %v5629
    %v5632 = vunpack.c.l.s4 842150450
    %v5633 = vunpack.c.0.s8 %v5632
    %v5634 = vlaneseq
    %v5635 = vshrl.u32 %v5634, 7
    %v5636 = vsub.s32 %v5633, %v5635
    %v5637 = vrot.slane %v741, %v5636
    %v5639 = vunpack.c.l.s4 1414812756
    %v5640 = vunpack.c.0.s8 %v5639
    %v5641 = vlaneseq
    %v5642 = vshrl.u32 %v5641, 7
    %v5643 = vsub.s32 %v5640, %v5642
    %v5644 = vrot.slane %v741, %v5643
    %v5646 = vunpack.c.l.s4 1987475062
    %v5647 = vunpack.c.0.s8 %v5646
    %v5648 = vlaneseq
    %v5649 = vshrl.u32 %v5648, 7
    %v5650 = vsub.s32 %v5647, %v5649
    %v5651 = vrot.slane %v741, %v5650
    %v5653 = vunpack.c.l.s4 269488144
    %v5654 = vunpack.c.0.s8 %v5653
    %v5655 = vlaneseq
    %v5656 = vshrl.u32 %v5655, 7
    %v5657 = vsub.s32 %v5654, %v5656
    %v5658 = vrot.slane %v744, %v5657
    %v5660 = vunpack.c.l.s4 842150450
    %v5661 = vunpack.c.0.s8 %v5660
    %v5662 = vlaneseq
    %v5663 = vshrl.u32 %v5662, 7
    %v5664 = vsub.s32 %v5661, %v5663
    %v5665 = vrot.slane %v744, %v5664
    %v5667 = vunpack.c.l.s4 1414812756
    %v5668 = vunpack.c.0.s8 %v5667
    %v5669 = vlaneseq
    %v5670 = vshrl.u32 %v5669, 7
    %v5671 = vsub.s32 %v5668, %v5670
    %v5672 = vrot.slane %v744, %v5671
    %v5674 = vunpack.c.l.s4 1987475062
    %v5675 = vunpack.c.0.s8 %v5674
    %v5676 = vlaneseq
    %v5677 = vshrl.u32 %v5676, 7
    %v5678 = vsub.s32 %v5675, %v5677
    %v5679 = vrot.slane %v744, %v5678
    %v5681 = vunpack.c.l.s4 269488144
    %v5682 = vunpack.c.0.s8 %v5681
    %v5683 = vlaneseq
    %v5684 = vshrl.u32 %v5683, 7
    %v5685 = vsub.s32 %v5682, %v5684
    %v5686 = vrot.slane %v747, %v5685
    %v5688 = vunpack.c.l.s4 842150450
    %v5689 = vunpack.c.0.s8 %v5688
    %v5690 = vlaneseq
    %v5691 = vshrl.u32 %v5690, 7
    %v5692 = vsub.s32 %v5689, %v5691
    %v5693 = vrot.slane %v747, %v5692
    %v5695 = vunpack.c.l.s4 1414812756
    %v5696 = vunpack.c.0.s8 %v5695
    %v5697 = vlaneseq
    %v5698 = vshrl.u32 %v5697, 7
    %v5699 = vsub.s32 %v5696, %v5698
    %v5700 = vrot.slane %v747, %v5699
    %v5702 = vunpack.c.l.s4 1987475062
    %v5703 = vunpack.c.0.s8 %v5702
    %v5704 = vlaneseq
    %v5705 = vshrl.u32 %v5704, 7
    %v5706 = vsub.s32 %v5703, %v5705
    %v5707 = vrot.slane %v747, %v5706
    %v5709 = vunpack.c.l.s4 269488144
    %v5710 = vunpack.c.0.s8 %v5709
    %v5711 = vlaneseq
    %v5712 = vshrl.u32 %v5711, 7
    %v5713 = vsub.s32 %v5710, %v5712
    %v5714 = vrot.slane %v750, %v5713
    %v5716 = vunpack.c.l.s4 842150450
    %v5717 = vunpack.c.0.s8 %v5716
    %v5718 = vlaneseq
    %v5719 = vshrl.u32 %v5718, 7
    %v5720 = vsub.s32 %v5717, %v5719
    %v5721 = vrot.slane %v750, %v5720
    %v5723 = vunpack.c.l.s4 1414812756
    %v5724 = vunpack.c.0.s8 %v5723
    %v5725 = vlaneseq
    %v5726 = vshrl.u32 %v5725, 7
    %v5727 = vsub.s32 %v5724, %v5726
    %v5728 = vrot.slane %v750, %v5727
    %v5730 = vunpack.c.l.s4 1987475062
    %v5731 = vunpack.c.0.s8 %v5730
    %v5732 = vlaneseq
    %v5733 = vshrl.u32 %v5732, 7
    %v5734 = vsub.s32 %v5731, %v5733
    %v5735 = vrot.slane %v750, %v5734
    %v5737 = vunpack.c.l.s4 269488144
    %v5738 = vunpack.c.0.s8 %v5737
    %v5739 = vlaneseq
    %v5740 = vshrl.u32 %v5739, 7
    %v5741 = vsub.s32 %v5738, %v5740
    %v5742 = vrot.slane %v753, %v5741
    %v5744 = vunpack.c.l.s4 842150450
    %v5745 = vunpack.c.0.s8 %v5744
    %v5746 = vlaneseq
    %v5747 = vshrl.u32 %v5746, 7
    %v5748 = vsub.s32 %v5745, %v5747
    %v5749 = vrot.slane %v753, %v5748
    %v5751 = vunpack.c.l.s4 1414812756
    %v5752 = vunpack.c.0.s8 %v5751
    %v5753 = vlaneseq
    %v5754 = vshrl.u32 %v5753, 7
    %v5755 = vsub.s32 %v5752, %v5754
    %v5756 = vrot.slane %v753, %v5755
    %v5758 = vunpack.c.l.s4 1987475062
    %v5759 = vunpack.c.0.s8 %v5758
    %v5760 = vlaneseq
    %v5761 = vshrl.u32 %v5760, 7
    %v5762 = vsub.s32 %v5759, %v5761
    %v5763 = vrot.slane %v753, %v5762
    %v5765 = vunpack.c.l.s4 269488144
    %v5766 = vunpack.c.0.s8 %v5765
    %v5767 = vlaneseq
    %v5768 = vshrl.u32 %v5767, 7
    %v5769 = vsub.s32 %v5766, %v5768
    %v5770 = vrot.slane %v756, %v5769
    %v5772 = vunpack.c.l.s4 842150450
    %v5773 = vunpack.c.0.s8 %v5772
    %v5774 = vlaneseq
    %v5775 = vshrl.u32 %v5774, 7
    %v5776 = vsub.s32 %v5773, %v5775
    %v5777 = vrot.slane %v756, %v5776
    %v5779 = vunpack.c.l.s4 1414812756
    %v5780 = vunpack.c.0.s8 %v5779
    %v5781 = vlaneseq
    %v5782 = vshrl.u32 %v5781, 7
    %v5783 = vsub.s32 %v5780, %v5782
    %v5784 = vrot.slane %v756, %v5783
    %v5786 = vunpack.c.l.s4 1987475062
    %v5787 = vunpack.c.0.s8 %v5786
    %v5788 = vlaneseq
    %v5789 = vshrl.u32 %v5788, 7
    %v5790 = vsub.s32 %v5787, %v5789
    %v5791 = vrot.slane %v756, %v5790
    %v5793 = vunpack.c.l.s4 269488144
    %v5794 = vunpack.c.0.s8 %v5793
    %v5795 = vlaneseq
    %v5796 = vshrl.u32 %v5795, 7
    %v5797 = vsub.s32 %v5794, %v5796
    %v5798 = vrot.slane %v759, %v5797
    %v5800 = vunpack.c.l.s4 842150450
    %v5801 = vunpack.c.0.s8 %v5800
    %v5802 = vlaneseq
    %v5803 = vshrl.u32 %v5802, 7
    %v5804 = vsub.s32 %v5801, %v5803
    %v5805 = vrot.slane %v759, %v5804
    %v5807 = vunpack.c.l.s4 1414812756
    %v5808 = vunpack.c.0.s8 %v5807
    %v5809 = vlaneseq
    %v5810 = vshrl.u32 %v5809, 7
    %v5811 = vsub.s32 %v5808, %v5810
    %v5812 = vrot.slane %v759, %v5811
    %v5814 = vunpack.c.l.s4 1987475062
    %v5815 = vunpack.c.0.s8 %v5814
    %v5816 = vlaneseq
    %v5817 = vshrl.u32 %v5816, 7
    %v5818 = vsub.s32 %v5815, %v5817
    %v5819 = vrot.slane %v759, %v5818
    %v5821 = vunpack.c.l.s4 269488144
    %v5822 = vunpack.c.0.s8 %v5821
    %v5823 = vlaneseq
    %v5824 = vshrl.u32 %v5823, 7
    %v5825 = vsub.s32 %v5822, %v5824
    %v5826 = vrot.slane %v762, %v5825
    %v5828 = vunpack.c.l.s4 842150450
    %v5829 = vunpack.c.0.s8 %v5828
    %v5830 = vlaneseq
    %v5831 = vshrl.u32 %v5830, 7
    %v5832 = vsub.s32 %v5829, %v5831
    %v5833 = vrot.slane %v762, %v5832
    %v5835 = vunpack.c.l.s4 1414812756
    %v5836 = vunpack.c.0.s8 %v5835
    %v5837 = vlaneseq
    %v5838 = vshrl.u32 %v5837, 7
    %v5839 = vsub.s32 %v5836, %v5838
    %v5840 = vrot.slane %v762, %v5839
    %v5842 = vunpack.c.l.s4 1987475062
    %v5843 = vunpack.c.0.s8 %v5842
    %v5844 = vlaneseq
    %v5845 = vshrl.u32 %v5844, 7
    %v5846 = vsub.s32 %v5843, %v5845
    %v5847 = vrot.slane %v762, %v5846
    %v5849 = vunpack.c.l.s4 269488144
    %v5850 = vunpack.c.0.s8 %v5849
    %v5851 = vlaneseq
    %v5852 = vshrl.u32 %v5851, 7
    %v5853 = vsub.s32 %v5850, %v5852
    %v5854 = vrot.slane %v765, %v5853
    %v5856 = vunpack.c.l.s4 842150450
    %v5857 = vunpack.c.0.s8 %v5856
    %v5858 = vlaneseq
    %v5859 = vshrl.u32 %v5858, 7
    %v5860 = vsub.s32 %v5857, %v5859
    %v5861 = vrot.slane %v765, %v5860
    %v5863 = vunpack.c.l.s4 1414812756
    %v5864 = vunpack.c.0.s8 %v5863
    %v5865 = vlaneseq
    %v5866 = vshrl.u32 %v5865, 7
    %v5867 = vsub.s32 %v5864, %v5866
    %v5868 = vrot.slane %v765, %v5867
    %v5870 = vunpack.c.l.s4 1987475062
    %v5871 = vunpack.c.0.s8 %v5870
    %v5872 = vlaneseq
    %v5873 = vshrl.u32 %v5872, 7
    %v5874 = vsub.s32 %v5871, %v5873
    %v5875 = vrot.slane %v765, %v5874
    %v5877 = vunpack.c.l.s4 269488144
    %v5878 = vunpack.c.0.s8 %v5877
    %v5879 = vlaneseq
    %v5880 = vshrl.u32 %v5879, 7
    %v5881 = vsub.s32 %v5878, %v5880
    %v5882 = vrot.slane %v768, %v5881
    %v5884 = vunpack.c.l.s4 842150450
    %v5885 = vunpack.c.0.s8 %v5884
    %v5886 = vlaneseq
    %v5887 = vshrl.u32 %v5886, 7
    %v5888 = vsub.s32 %v5885, %v5887
    %v5889 = vrot.slane %v768, %v5888
    %v5891 = vunpack.c.l.s4 1414812756
    %v5892 = vunpack.c.0.s8 %v5891
    %v5893 = vlaneseq
    %v5894 = vshrl.u32 %v5893, 7
    %v5895 = vsub.s32 %v5892, %v5894
    %v5896 = vrot.slane %v768, %v5895
    %v5898 = vunpack.c.l.s4 1987475062
    %v5899 = vunpack.c.0.s8 %v5898
    %v5900 = vlaneseq
    %v5901 = vshrl.u32 %v5900, 7
    %v5902 = vsub.s32 %v5899, %v5901
    %v5903 = vrot.slane %v768, %v5902
    %v5905 = vunpack.c.l.s4 269488144
    %v5906 = vunpack.c.0.s8 %v5905
    %v5907 = vlaneseq
    %v5908 = vshrl.u32 %v5907, 7
    %v5909 = vsub.s32 %v5906, %v5908
    %v5910 = vrot.slane %v771, %v5909
    %v5912 = vunpack.c.l.s4 842150450
    %v5913 = vunpack.c.0.s8 %v5912
    %v5914 = vlaneseq
    %v5915 = vshrl.u32 %v5914, 7
    %v5916 = vsub.s32 %v5913, %v5915
    %v5917 = vrot.slane %v771, %v5916
    %v5919 = vunpack.c.l.s4 1414812756
    %v5920 = vunpack.c.0.s8 %v5919
    %v5921 = vlaneseq
    %v5922 = vshrl.u32 %v5921, 7
    %v5923 = vsub.s32 %v5920, %v5922
    %v5924 = vrot.slane %v771, %v5923
    %v5926 = vunpack.c.l.s4 1987475062
    %v5927 = vunpack.c.0.s8 %v5926
    %v5928 = vlaneseq
    %v5929 = vshrl.u32 %v5928, 7
    %v5930 = vsub.s32 %v5927, %v5929
    %v5931 = vrot.slane %v771, %v5930
    %v5933 = vunpack.c.l.s4 269488144
    %v5934 = vunpack.c.0.s8 %v5933
    %v5935 = vlaneseq
    %v5936 = vshrl.u32 %v5935, 7
    %v5937 = vsub.s32 %v5934, %v5936
    %v5938 = vrot.slane %v774, %v5937
    %v5940 = vunpack.c.l.s4 842150450
    %v5941 = vunpack.c.0.s8 %v5940
    %v5942 = vlaneseq
    %v5943 = vshrl.u32 %v5942, 7
    %v5944 = vsub.s32 %v5941, %v5943
    %v5945 = vrot.slane %v774, %v5944
    %v5947 = vunpack.c.l.s4 1414812756
    %v5948 = vunpack.c.0.s8 %v5947
    %v5949 = vlaneseq
    %v5950 = vshrl.u32 %v5949, 7
    %v5951 = vsub.s32 %v5948, %v5950
    %v5952 = vrot.slane %v774, %v5951
    %v5954 = vunpack.c.l.s4 1987475062
    %v5955 = vunpack.c.0.s8 %v5954
    %v5956 = vlaneseq
    %v5957 = vshrl.u32 %v5956, 7
    %v5958 = vsub.s32 %v5955, %v5957
    %v5959 = vrot.slane %v774, %v5958
    %v5961 = vunpack.c.l.s4 269488144
    %v5962 = vunpack.c.0.s8 %v5961
    %v5963 = vlaneseq
    %v5964 = vshrl.u32 %v5963, 7
    %v5965 = vsub.s32 %v5962, %v5964
    %v5966 = vrot.slane %v777, %v5965
    %v5968 = vunpack.c.l.s4 842150450
    %v5969 = vunpack.c.0.s8 %v5968
    %v5970 = vlaneseq
    %v5971 = vshrl.u32 %v5970, 7
    %v5972 = vsub.s32 %v5969, %v5971
    %v5973 = vrot.slane %v777, %v5972
    %v5975 = vunpack.c.l.s4 1414812756
    %v5976 = vunpack.c.0.s8 %v5975
    %v5977 = vlaneseq
    %v5978 = vshrl.u32 %v5977, 7
    %v5979 = vsub.s32 %v5976, %v5978
    %v5980 = vrot.slane %v777, %v5979
    %v5982 = vunpack.c.l.s4 1987475062
    %v5983 = vunpack.c.0.s8 %v5982
    %v5984 = vlaneseq
    %v5985 = vshrl.u32 %v5984, 7
    %v5986 = vsub.s32 %v5983, %v5985
    %v5987 = vrot.slane %v777, %v5986
    %v5989 = vunpack.c.l.s4 269488144
    %v5990 = vunpack.c.0.s8 %v5989
    %v5991 = vlaneseq
    %v5992 = vshrl.u32 %v5991, 7
    %v5993 = vsub.s32 %v5990, %v5992
    %v5994 = vrot.slane %v780, %v5993
    %v5996 = vunpack.c.l.s4 842150450
    %v5997 = vunpack.c.0.s8 %v5996
    %v5998 = vlaneseq
    %v5999 = vshrl.u32 %v5998, 7
    %v6000 = vsub.s32 %v5997, %v5999
    %v6001 = vrot.slane %v780, %v6000
    %v6003 = vunpack.c.l.s4 1414812756
    %v6004 = vunpack.c.0.s8 %v6003
    %v6005 = vlaneseq
    %v6006 = vshrl.u32 %v6005, 7
    %v6007 = vsub.s32 %v6004, %v6006
    %v6008 = vrot.slane %v780, %v6007
    %v6010 = vunpack.c.l.s4 1987475062
    %v6011 = vunpack.c.0.s8 %v6010
    %v6012 = vlaneseq
    %v6013 = vshrl.u32 %v6012, 7
    %v6014 = vsub.s32 %v6011, %v6013
    %v6015 = vrot.slane %v780, %v6014
    %v6017 = vunpack.c.l.s4 269488144
    %v6018 = vunpack.c.0.s8 %v6017
    %v6019 = vlaneseq
    %v6020 = vshrl.u32 %v6019, 7
    %v6021 = vsub.s32 %v6018, %v6020
    %v6022 = vrot.slane %v783, %v6021
    %v6024 = vunpack.c.l.s4 842150450
    %v6025 = vunpack.c.0.s8 %v6024
    %v6026 = vlaneseq
    %v6027 = vshrl.u32 %v6026, 7
    %v6028 = vsub.s32 %v6025, %v6027
    %v6029 = vrot.slane %v783, %v6028
    %v6031 = vunpack.c.l.s4 1414812756
    %v6032 = vunpack.c.0.s8 %v6031
    %v6033 = vlaneseq
    %v6034 = vshrl.u32 %v6033, 7
    %v6035 = vsub.s32 %v6032, %v6034
    %v6036 = vrot.slane %v783, %v6035
    %v6038 = vunpack.c.l.s4 1987475062
    %v6039 = vunpack.c.0.s8 %v6038
    %v6040 = vlaneseq
    %v6041 = vshrl.u32 %v6040, 7
    %v6042 = vsub.s32 %v6039, %v6041
    %v6043 = vrot.slane %v783, %v6042
    %v6045 = vunpack.c.l.s4 269488144
    %v6046 = vunpack.c.0.s8 %v6045
    %v6047 = vlaneseq
    %v6048 = vshrl.u32 %v6047, 7
    %v6049 = vsub.s32 %v6046, %v6048
    %v6050 = vrot.slane %v786, %v6049
    %v6052 = vunpack.c.l.s4 842150450
    %v6053 = vunpack.c.0.s8 %v6052
    %v6054 = vlaneseq
    %v6055 = vshrl.u32 %v6054, 7
    %v6056 = vsub.s32 %v6053, %v6055
    %v6057 = vrot.slane %v786, %v6056
    %v6059 = vunpack.c.l.s4 1414812756
    %v6060 = vunpack.c.0.s8 %v6059
    %v6061 = vlaneseq
    %v6062 = vshrl.u32 %v6061, 7
    %v6063 = vsub.s32 %v6060, %v6062
    %v6064 = vrot.slane %v786, %v6063
    %v6066 = vunpack.c.l.s4 1987475062
    %v6067 = vunpack.c.0.s8 %v6066
    %v6068 = vlaneseq
    %v6069 = vshrl.u32 %v6068, 7
    %v6070 = vsub.s32 %v6067, %v6069
    %v6071 = vrot.slane %v786, %v6070
    %v6073 = vunpack.c.l.s4 269488144
    %v6074 = vunpack.c.0.s8 %v6073
    %v6075 = vlaneseq
    %v6076 = vshrl.u32 %v6075, 7
    %v6077 = vsub.s32 %v6074, %v6076
    %v6078 = vrot.slane %v789, %v6077
    %v6080 = vunpack.c.l.s4 842150450
    %v6081 = vunpack.c.0.s8 %v6080
    %v6082 = vlaneseq
    %v6083 = vshrl.u32 %v6082, 7
    %v6084 = vsub.s32 %v6081, %v6083
    %v6085 = vrot.slane %v789, %v6084
    %v6087 = vunpack.c.l.s4 1414812756
    %v6088 = vunpack.c.0.s8 %v6087
    %v6089 = vlaneseq
    %v6090 = vshrl.u32 %v6089, 7
    %v6091 = vsub.s32 %v6088, %v6090
    %v6092 = vrot.slane %v789, %v6091
    %v6094 = vunpack.c.l.s4 1987475062
    %v6095 = vunpack.c.0.s8 %v6094
    %v6096 = vlaneseq
    %v6097 = vshrl.u32 %v6096, 7
    %v6098 = vsub.s32 %v6095, %v6097
    %v6099 = vrot.slane %v789, %v6098
    %v6101 = vunpack.c.l.s4 269488144
    %v6102 = vunpack.c.0.s8 %v6101
    %v6103 = vlaneseq
    %v6104 = vshrl.u32 %v6103, 7
    %v6105 = vsub.s32 %v6102, %v6104
    %v6106 = vrot.slane %v792, %v6105
    %v6108 = vunpack.c.l.s4 842150450
    %v6109 = vunpack.c.0.s8 %v6108
    %v6110 = vlaneseq
    %v6111 = vshrl.u32 %v6110, 7
    %v6112 = vsub.s32 %v6109, %v6111
    %v6113 = vrot.slane %v792, %v6112
    %v6115 = vunpack.c.l.s4 1414812756
    %v6116 = vunpack.c.0.s8 %v6115
    %v6117 = vlaneseq
    %v6118 = vshrl.u32 %v6117, 7
    %v6119 = vsub.s32 %v6116, %v6118
    %v6120 = vrot.slane %v792, %v6119
    %v6122 = vunpack.c.l.s4 1987475062
    %v6123 = vunpack.c.0.s8 %v6122
    %v6124 = vlaneseq
    %v6125 = vshrl.u32 %v6124, 7
    %v6126 = vsub.s32 %v6123, %v6125
    %v6127 = vrot.slane %v792, %v6126
    %v6129 = vunpack.c.l.s4 269488144
    %v6130 = vunpack.c.0.s8 %v6129
    %v6131 = vlaneseq
    %v6132 = vshrl.u32 %v6131, 7
    %v6133 = vsub.s32 %v6130, %v6132
    %v6134 = vrot.slane %v795, %v6133
    %v6136 = vunpack.c.l.s4 842150450
    %v6137 = vunpack.c.0.s8 %v6136
    %v6138 = vlaneseq
    %v6139 = vshrl.u32 %v6138, 7
    %v6140 = vsub.s32 %v6137, %v6139
    %v6141 = vrot.slane %v795, %v6140
    %v6143 = vunpack.c.l.s4 1414812756
    %v6144 = vunpack.c.0.s8 %v6143
    %v6145 = vlaneseq
    %v6146 = vshrl.u32 %v6145, 7
    %v6147 = vsub.s32 %v6144, %v6146
    %v6148 = vrot.slane %v795, %v6147
    %v6150 = vunpack.c.l.s4 1987475062
    %v6151 = vunpack.c.0.s8 %v6150
    %v6152 = vlaneseq
    %v6153 = vshrl.u32 %v6152, 7
    %v6154 = vsub.s32 %v6151, %v6153
    %v6155 = vrot.slane %v795, %v6154
    %v6157 = vunpack.c.l.s4 269488144
    %v6158 = vunpack.c.0.s8 %v6157
    %v6159 = vlaneseq
    %v6160 = vshrl.u32 %v6159, 7
    %v6161 = vsub.s32 %v6158, %v6160
    %v6162 = vrot.slane %v798, %v6161
    %v6164 = vunpack.c.l.s4 842150450
    %v6165 = vunpack.c.0.s8 %v6164
    %v6166 = vlaneseq
    %v6167 = vshrl.u32 %v6166, 7
    %v6168 = vsub.s32 %v6165, %v6167
    %v6169 = vrot.slane %v798, %v6168
    %v6171 = vunpack.c.l.s4 1414812756
    %v6172 = vunpack.c.0.s8 %v6171
    %v6173 = vlaneseq
    %v6174 = vshrl.u32 %v6173, 7
    %v6175 = vsub.s32 %v6172, %v6174
    %v6176 = vrot.slane %v798, %v6175
    %v6178 = vunpack.c.l.s4 1987475062
    %v6179 = vunpack.c.0.s8 %v6178
    %v6180 = vlaneseq
    %v6181 = vshrl.u32 %v6180, 7
    %v6182 = vsub.s32 %v6179, %v6181
    %v6183 = vrot.slane %v798, %v6182
    %v6185 = vunpack.c.l.s4 269488144
    %v6186 = vunpack.c.0.s8 %v6185
    %v6187 = vlaneseq
    %v6188 = vshrl.u32 %v6187, 7
    %v6189 = vsub.s32 %v6186, %v6188
    %v6190 = vrot.slane %v801, %v6189
    %v6192 = vunpack.c.l.s4 842150450
    %v6193 = vunpack.c.0.s8 %v6192
    %v6194 = vlaneseq
    %v6195 = vshrl.u32 %v6194, 7
    %v6196 = vsub.s32 %v6193, %v6195
    %v6197 = vrot.slane %v801, %v6196
    %v6199 = vunpack.c.l.s4 1414812756
    %v6200 = vunpack.c.0.s8 %v6199
    %v6201 = vlaneseq
    %v6202 = vshrl.u32 %v6201, 7
    %v6203 = vsub.s32 %v6200, %v6202
    %v6204 = vrot.slane %v801, %v6203
    %v6206 = vunpack.c.l.s4 1987475062
    %v6207 = vunpack.c.0.s8 %v6206
    %v6208 = vlaneseq
    %v6209 = vshrl.u32 %v6208, 7
    %v6210 = vsub.s32 %v6207, %v6209
    %v6211 = vrot.slane %v801, %v6210
    %v6213 = vunpack.c.l.s4 269488144
    %v6214 = vunpack.c.0.s8 %v6213
    %v6215 = vlaneseq
    %v6216 = vshrl.u32 %v6215, 7
    %v6217 = vsub.s32 %v6214, %v6216
    %v6218 = vrot.slane %v804, %v6217
    %v6220 = vunpack.c.l.s4 842150450
    %v6221 = vunpack.c.0.s8 %v6220
    %v6222 = vlaneseq
    %v6223 = vshrl.u32 %v6222, 7
    %v6224 = vsub.s32 %v6221, %v6223
    %v6225 = vrot.slane %v804, %v6224
    %v6227 = vunpack.c.l.s4 1414812756
    %v6228 = vunpack.c.0.s8 %v6227
    %v6229 = vlaneseq
    %v6230 = vshrl.u32 %v6229, 7
    %v6231 = vsub.s32 %v6228, %v6230
    %v6232 = vrot.slane %v804, %v6231
    %v6234 = vunpack.c.l.s4 1987475062
    %v6235 = vunpack.c.0.s8 %v6234
    %v6236 = vlaneseq
    %v6237 = vshrl.u32 %v6236, 7
    %v6238 = vsub.s32 %v6235, %v6237
    %v6239 = vrot.slane %v804, %v6238
    %v6241 = vunpack.c.l.s4 269488144
    %v6242 = vunpack.c.0.s8 %v6241
    %v6243 = vlaneseq
    %v6244 = vshrl.u32 %v6243, 7
    %v6245 = vsub.s32 %v6242, %v6244
    %v6246 = vrot.slane %v807, %v6245
    %v6248 = vunpack.c.l.s4 842150450
    %v6249 = vunpack.c.0.s8 %v6248
    %v6250 = vlaneseq
    %v6251 = vshrl.u32 %v6250, 7
    %v6252 = vsub.s32 %v6249, %v6251
    %v6253 = vrot.slane %v807, %v6252
    %v6255 = vunpack.c.l.s4 1414812756
    %v6256 = vunpack.c.0.s8 %v6255
    %v6257 = vlaneseq
    %v6258 = vshrl.u32 %v6257, 7
    %v6259 = vsub.s32 %v6256, %v6258
    %v6260 = vrot.slane %v807, %v6259
    %v6262 = vunpack.c.l.s4 1987475062
    %v6263 = vunpack.c.0.s8 %v6262
    %v6264 = vlaneseq
    %v6265 = vshrl.u32 %v6264, 7
    %v6266 = vsub.s32 %v6263, %v6265
    %v6267 = vrot.slane %v807, %v6266
    %v6269 = vunpack.c.l.s4 269488144
    %v6270 = vunpack.c.0.s8 %v6269
    %v6271 = vlaneseq
    %v6272 = vshrl.u32 %v6271, 7
    %v6273 = vsub.s32 %v6270, %v6272
    %v6274 = vrot.slane %v810, %v6273
    %v6276 = vunpack.c.l.s4 842150450
    %v6277 = vunpack.c.0.s8 %v6276
    %v6278 = vlaneseq
    %v6279 = vshrl.u32 %v6278, 7
    %v6280 = vsub.s32 %v6277, %v6279
    %v6281 = vrot.slane %v810, %v6280
    %v6283 = vunpack.c.l.s4 1414812756
    %v6284 = vunpack.c.0.s8 %v6283
    %v6285 = vlaneseq
    %v6286 = vshrl.u32 %v6285, 7
    %v6287 = vsub.s32 %v6284, %v6286
    %v6288 = vrot.slane %v810, %v6287
    %v6290 = vunpack.c.l.s4 1987475062
    %v6291 = vunpack.c.0.s8 %v6290
    %v6292 = vlaneseq
    %v6293 = vshrl.u32 %v6292, 7
    %v6294 = vsub.s32 %v6291, %v6293
    %v6295 = vrot.slane %v810, %v6294
    %v6297 = vunpack.c.l.s4 269488144
    %v6298 = vunpack.c.0.s8 %v6297
    %v6299 = vlaneseq
    %v6300 = vshrl.u32 %v6299, 7
    %v6301 = vsub.s32 %v6298, %v6300
    %v6302 = vrot.slane %v813, %v6301
    %v6304 = vunpack.c.l.s4 842150450
    %v6305 = vunpack.c.0.s8 %v6304
    %v6306 = vlaneseq
    %v6307 = vshrl.u32 %v6306, 7
    %v6308 = vsub.s32 %v6305, %v6307
    %v6309 = vrot.slane %v813, %v6308
    %v6311 = vunpack.c.l.s4 1414812756
    %v6312 = vunpack.c.0.s8 %v6311
    %v6313 = vlaneseq
    %v6314 = vshrl.u32 %v6313, 7
    %v6315 = vsub.s32 %v6312, %v6314
    %v6316 = vrot.slane %v813, %v6315
    %v6318 = vunpack.c.l.s4 1987475062
    %v6319 = vunpack.c.0.s8 %v6318
    %v6320 = vlaneseq
    %v6321 = vshrl.u32 %v6320, 7
    %v6322 = vsub.s32 %v6319, %v6321
    %v6323 = vrot.slane %v813, %v6322
    %v6325 = vunpack.c.l.s4 269488144
    %v6326 = vunpack.c.0.s8 %v6325
    %v6327 = vlaneseq
    %v6328 = vshrl.u32 %v6327, 7
    %v6329 = vsub.s32 %v6326, %v6328
    %v6330 = vrot.slane %v816, %v6329
    %v6332 = vunpack.c.l.s4 842150450
    %v6333 = vunpack.c.0.s8 %v6332
    %v6334 = vlaneseq
    %v6335 = vshrl.u32 %v6334, 7
    %v6336 = vsub.s32 %v6333, %v6335
    %v6337 = vrot.slane %v816, %v6336
    %v6339 = vunpack.c.l.s4 1414812756
    %v6340 = vunpack.c.0.s8 %v6339
    %v6341 = vlaneseq
    %v6342 = vshrl.u32 %v6341, 7
    %v6343 = vsub.s32 %v6340, %v6342
    %v6344 = vrot.slane %v816, %v6343
    %v6346 = vunpack.c.l.s4 1987475062
    %v6347 = vunpack.c.0.s8 %v6346
    %v6348 = vlaneseq
    %v6349 = vshrl.u32 %v6348, 7
    %v6350 = vsub.s32 %v6347, %v6349
    %v6351 = vrot.slane %v816, %v6350
    %v6353 = vunpack.c.l.s4 269488144
    %v6354 = vunpack.c.0.s8 %v6353
    %v6355 = vlaneseq
    %v6356 = vshrl.u32 %v6355, 7
    %v6357 = vsub.s32 %v6354, %v6356
    %v6358 = vrot.slane %v819, %v6357
    %v6360 = vunpack.c.l.s4 842150450
    %v6361 = vunpack.c.0.s8 %v6360
    %v6362 = vlaneseq
    %v6363 = vshrl.u32 %v6362, 7
    %v6364 = vsub.s32 %v6361, %v6363
    %v6365 = vrot.slane %v819, %v6364
    %v6367 = vunpack.c.l.s4 1414812756
    %v6368 = vunpack.c.0.s8 %v6367
    %v6369 = vlaneseq
    %v6370 = vshrl.u32 %v6369, 7
    %v6371 = vsub.s32 %v6368, %v6370
    %v6372 = vrot.slane %v819, %v6371
    %v6374 = vunpack.c.l.s4 1987475062
    %v6375 = vunpack.c.0.s8 %v6374
    %v6376 = vlaneseq
    %v6377 = vshrl.u32 %v6376, 7
    %v6378 = vsub.s32 %v6375, %v6377
    %v6379 = vrot.slane %v819, %v6378
    %v6381 = vunpack.c.l.s4 269488144
    %v6382 = vunpack.c.0.s8 %v6381
    %v6383 = vlaneseq
    %v6384 = vshrl.u32 %v6383, 7
    %v6385 = vsub.s32 %v6382, %v6384
    %v6386 = vrot.slane %v822, %v6385
    %v6388 = vunpack.c.l.s4 842150450
    %v6389 = vunpack.c.0.s8 %v6388
    %v6390 = vlaneseq
    %v6391 = vshrl.u32 %v6390, 7
    %v6392 = vsub.s32 %v6389, %v6391
    %v6393 = vrot.slane %v822, %v6392
    %v6395 = vunpack.c.l.s4 1414812756
    %v6396 = vunpack.c.0.s8 %v6395
    %v6397 = vlaneseq
    %v6398 = vshrl.u32 %v6397, 7
    %v6399 = vsub.s32 %v6396, %v6398
    %v6400 = vrot.slane %v822, %v6399
    %v6402 = vunpack.c.l.s4 1987475062
    %v6403 = vunpack.c.0.s8 %v6402
    %v6404 = vlaneseq
    %v6405 = vshrl.u32 %v6404, 7
    %v6406 = vsub.s32 %v6403, %v6405
    %v6407 = vrot.slane %v822, %v6406
    %v6409 = vunpack.c.l.s4 269488144
    %v6410 = vunpack.c.0.s8 %v6409
    %v6411 = vlaneseq
    %v6412 = vshrl.u32 %v6411, 7
    %v6413 = vsub.s32 %v6410, %v6412
    %v6414 = vrot.slane %v825, %v6413
    %v6416 = vunpack.c.l.s4 842150450
    %v6417 = vunpack.c.0.s8 %v6416
    %v6418 = vlaneseq
    %v6419 = vshrl.u32 %v6418, 7
    %v6420 = vsub.s32 %v6417, %v6419
    %v6421 = vrot.slane %v825, %v6420
    %v6423 = vunpack.c.l.s4 1414812756
    %v6424 = vunpack.c.0.s8 %v6423
    %v6425 = vlaneseq
    %v6426 = vshrl.u32 %v6425, 7
    %v6427 = vsub.s32 %v6424, %v6426
    %v6428 = vrot.slane %v825, %v6427
    %v6430 = vunpack.c.l.s4 1987475062
    %v6431 = vunpack.c.0.s8 %v6430
    %v6432 = vlaneseq
    %v6433 = vshrl.u32 %v6432, 7
    %v6434 = vsub.s32 %v6431, %v6433
    %v6435 = vrot.slane %v825, %v6434
    %v6437 = vunpack.c.l.s4 269488144
    %v6438 = vunpack.c.0.s8 %v6437
    %v6439 = vlaneseq
    %v6440 = vshrl.u32 %v6439, 7
    %v6441 = vsub.s32 %v6438, %v6440
    %v6442 = vrot.slane %v828, %v6441
    %v6444 = vunpack.c.l.s4 842150450
    %v6445 = vunpack.c.0.s8 %v6444
    %v6446 = vlaneseq
    %v6447 = vshrl.u32 %v6446, 7
    %v6448 = vsub.s32 %v6445, %v6447
    %v6449 = vrot.slane %v828, %v6448
    %v6451 = vunpack.c.l.s4 1414812756
    %v6452 = vunpack.c.0.s8 %v6451
    %v6453 = vlaneseq
    %v6454 = vshrl.u32 %v6453, 7
    %v6455 = vsub.s32 %v6452, %v6454
    %v6456 = vrot.slane %v828, %v6455
    %v6458 = vunpack.c.l.s4 1987475062
    %v6459 = vunpack.c.0.s8 %v6458
    %v6460 = vlaneseq
    %v6461 = vshrl.u32 %v6460, 7
    %v6462 = vsub.s32 %v6459, %v6461
    %v6463 = vrot.slane %v828, %v6462
    %v6465 = vunpack.c.l.s4 269488144
    %v6466 = vunpack.c.0.s8 %v6465
    %v6467 = vlaneseq
    %v6468 = vshrl.u32 %v6467, 7
    %v6469 = vsub.s32 %v6466, %v6468
    %v6470 = vrot.slane %v831, %v6469
    %v6472 = vunpack.c.l.s4 842150450
    %v6473 = vunpack.c.0.s8 %v6472
    %v6474 = vlaneseq
    %v6475 = vshrl.u32 %v6474, 7
    %v6476 = vsub.s32 %v6473, %v6475
    %v6477 = vrot.slane %v831, %v6476
    %v6479 = vunpack.c.l.s4 1414812756
    %v6480 = vunpack.c.0.s8 %v6479
    %v6481 = vlaneseq
    %v6482 = vshrl.u32 %v6481, 7
    %v6483 = vsub.s32 %v6480, %v6482
    %v6484 = vrot.slane %v831, %v6483
    %v6486 = vunpack.c.l.s4 1987475062
    %v6487 = vunpack.c.0.s8 %v6486
    %v6488 = vlaneseq
    %v6489 = vshrl.u32 %v6488, 7
    %v6490 = vsub.s32 %v6487, %v6489
    %v6491 = vrot.slane %v831, %v6490
    %v6493 = vunpack.c.l.s4 269488144
    %v6494 = vunpack.c.0.s8 %v6493
    %v6495 = vlaneseq
    %v6496 = vshrl.u32 %v6495, 7
    %v6497 = vsub.s32 %v6494, %v6496
    %v6498 = vrot.slane %v834, %v6497
    %v6500 = vunpack.c.l.s4 842150450
    %v6501 = vunpack.c.0.s8 %v6500
    %v6502 = vlaneseq
    %v6503 = vshrl.u32 %v6502, 7
    %v6504 = vsub.s32 %v6501, %v6503
    %v6505 = vrot.slane %v834, %v6504
    %v6507 = vunpack.c.l.s4 1414812756
    %v6508 = vunpack.c.0.s8 %v6507
    %v6509 = vlaneseq
    %v6510 = vshrl.u32 %v6509, 7
    %v6511 = vsub.s32 %v6508, %v6510
    %v6512 = vrot.slane %v834, %v6511
    %v6514 = vunpack.c.l.s4 1987475062
    %v6515 = vunpack.c.0.s8 %v6514
    %v6516 = vlaneseq
    %v6517 = vshrl.u32 %v6516, 7
    %v6518 = vsub.s32 %v6515, %v6517
    %v6519 = vrot.slane %v834, %v6518
    %v6521 = vunpack.c.l.s4 269488144
    %v6522 = vunpack.c.0.s8 %v6521
    %v6523 = vlaneseq
    %v6524 = vshrl.u32 %v6523, 7
    %v6525 = vsub.s32 %v6522, %v6524
    %v6526 = vrot.slane %v837, %v6525
    %v6528 = vunpack.c.l.s4 842150450
    %v6529 = vunpack.c.0.s8 %v6528
    %v6530 = vlaneseq
    %v6531 = vshrl.u32 %v6530, 7
    %v6532 = vsub.s32 %v6529, %v6531
    %v6533 = vrot.slane %v837, %v6532
    %v6535 = vunpack.c.l.s4 1414812756
    %v6536 = vunpack.c.0.s8 %v6535
    %v6537 = vlaneseq
    %v6538 = vshrl.u32 %v6537, 7
    %v6539 = vsub.s32 %v6536, %v6538
    %v6540 = vrot.slane %v837, %v6539
    %v6542 = vunpack.c.l.s4 1987475062
    %v6543 = vunpack.c.0.s8 %v6542
    %v6544 = vlaneseq
    %v6545 = vshrl.u32 %v6544, 7
    %v6546 = vsub.s32 %v6543, %v6545
    %v6547 = vrot.slane %v837, %v6546
    %v6549 = vunpack.c.l.s4 269488144
    %v6550 = vunpack.c.0.s8 %v6549
    %v6551 = vlaneseq
    %v6552 = vshrl.u32 %v6551, 7
    %v6553 = vsub.s32 %v6550, %v6552
    %v6554 = vrot.slane %v840, %v6553
    %v6556 = vunpack.c.l.s4 842150450
    %v6557 = vunpack.c.0.s8 %v6556
    %v6558 = vlaneseq
    %v6559 = vshrl.u32 %v6558, 7
    %v6560 = vsub.s32 %v6557, %v6559
    %v6561 = vrot.slane %v840, %v6560
    %v6563 = vunpack.c.l.s4 1414812756
    %v6564 = vunpack.c.0.s8 %v6563
    %v6565 = vlaneseq
    %v6566 = vshrl.u32 %v6565, 7
    %v6567 = vsub.s32 %v6564, %v6566
    %v6568 = vrot.slane %v840, %v6567
    %v6570 = vunpack.c.l.s4 1987475062
    %v6571 = vunpack.c.0.s8 %v6570
    %v6572 = vlaneseq
    %v6573 = vshrl.u32 %v6572, 7
    %v6574 = vsub.s32 %v6571, %v6573
    %v6575 = vrot.slane %v840, %v6574
    %v6577 = vunpack.c.l.s4 269488144
    %v6578 = vunpack.c.0.s8 %v6577
    %v6579 = vlaneseq
    %v6580 = vshrl.u32 %v6579, 7
    %v6581 = vsub.s32 %v6578, %v6580
    %v6582 = vrot.slane %v843, %v6581
    %v6584 = vunpack.c.l.s4 842150450
    %v6585 = vunpack.c.0.s8 %v6584
    %v6586 = vlaneseq
    %v6587 = vshrl.u32 %v6586, 7
    %v6588 = vsub.s32 %v6585, %v6587
    %v6589 = vrot.slane %v843, %v6588
    %v6591 = vunpack.c.l.s4 1414812756
    %v6592 = vunpack.c.0.s8 %v6591
    %v6593 = vlaneseq
    %v6594 = vshrl.u32 %v6593, 7
    %v6595 = vsub.s32 %v6592, %v6594
    %v6596 = vrot.slane %v843, %v6595
    %v6598 = vunpack.c.l.s4 1987475062
    %v6599 = vunpack.c.0.s8 %v6598
    %v6600 = vlaneseq
    %v6601 = vshrl.u32 %v6600, 7
    %v6602 = vsub.s32 %v6599, %v6601
    %v6603 = vrot.slane %v843, %v6602
    %v6605 = vunpack.c.l.s4 269488144
    %v6606 = vunpack.c.0.s8 %v6605
    %v6607 = vlaneseq
    %v6608 = vshrl.u32 %v6607, 7
    %v6609 = vsub.s32 %v6606, %v6608
    %v6610 = vrot.slane %v846, %v6609
    %v6612 = vunpack.c.l.s4 842150450
    %v6613 = vunpack.c.0.s8 %v6612
    %v6614 = vlaneseq
    %v6615 = vshrl.u32 %v6614, 7
    %v6616 = vsub.s32 %v6613, %v6615
    %v6617 = vrot.slane %v846, %v6616
    %v6619 = vunpack.c.l.s4 1414812756
    %v6620 = vunpack.c.0.s8 %v6619
    %v6621 = vlaneseq
    %v6622 = vshrl.u32 %v6621, 7
    %v6623 = vsub.s32 %v6620, %v6622
    %v6624 = vrot.slane %v846, %v6623
    %v6626 = vunpack.c.l.s4 1987475062
    %v6627 = vunpack.c.0.s8 %v6626
    %v6628 = vlaneseq
    %v6629 = vshrl.u32 %v6628, 7
    %v6630 = vsub.s32 %v6627, %v6629
    %v6631 = vrot.slane %v846, %v6630
    %v6633 = vunpack.c.l.s4 269488144
    %v6634 = vunpack.c.0.s8 %v6633
    %v6635 = vlaneseq
    %v6636 = vshrl.u32 %v6635, 7
    %v6637 = vsub.s32 %v6634, %v6636
    %v6638 = vrot.slane %v849, %v6637
    %v6640 = vunpack.c.l.s4 842150450
    %v6641 = vunpack.c.0.s8 %v6640
    %v6642 = vlaneseq
    %v6643 = vshrl.u32 %v6642, 7
    %v6644 = vsub.s32 %v6641, %v6643
    %v6645 = vrot.slane %v849, %v6644
    %v6647 = vunpack.c.l.s4 1414812756
    %v6648 = vunpack.c.0.s8 %v6647
    %v6649 = vlaneseq
    %v6650 = vshrl.u32 %v6649, 7
    %v6651 = vsub.s32 %v6648, %v6650
    %v6652 = vrot.slane %v849, %v6651
    %v6654 = vunpack.c.l.s4 1987475062
    %v6655 = vunpack.c.0.s8 %v6654
    %v6656 = vlaneseq
    %v6657 = vshrl.u32 %v6656, 7
    %v6658 = vsub.s32 %v6655, %v6657
    %v6659 = vrot.slane %v849, %v6658
    %v6661 = vunpack.c.l.s4 269488144
    %v6662 = vunpack.c.0.s8 %v6661
    %v6663 = vlaneseq
    %v6664 = vshrl.u32 %v6663, 7
    %v6665 = vsub.s32 %v6662, %v6664
    %v6666 = vrot.slane %v852, %v6665
    %v6668 = vunpack.c.l.s4 842150450
    %v6669 = vunpack.c.0.s8 %v6668
    %v6670 = vlaneseq
    %v6671 = vshrl.u32 %v6670, 7
    %v6672 = vsub.s32 %v6669, %v6671
    %v6673 = vrot.slane %v852, %v6672
    %v6675 = vunpack.c.l.s4 1414812756
    %v6676 = vunpack.c.0.s8 %v6675
    %v6677 = vlaneseq
    %v6678 = vshrl.u32 %v6677, 7
    %v6679 = vsub.s32 %v6676, %v6678
    %v6680 = vrot.slane %v852, %v6679
    %v6682 = vunpack.c.l.s4 1987475062
    %v6683 = vunpack.c.0.s8 %v6682
    %v6684 = vlaneseq
    %v6685 = vshrl.u32 %v6684, 7
    %v6686 = vsub.s32 %v6683, %v6685
    %v6687 = vrot.slane %v852, %v6686
    %v6689 = vunpack.c.l.s4 269488144
    %v6690 = vunpack.c.0.s8 %v6689
    %v6691 = vlaneseq
    %v6692 = vshrl.u32 %v6691, 7
    %v6693 = vsub.s32 %v6690, %v6692
    %v6694 = vrot.slane %v855, %v6693
    %v6696 = vunpack.c.l.s4 842150450
    %v6697 = vunpack.c.0.s8 %v6696
    %v6698 = vlaneseq
    %v6699 = vshrl.u32 %v6698, 7
    %v6700 = vsub.s32 %v6697, %v6699
    %v6701 = vrot.slane %v855, %v6700
    %v6703 = vunpack.c.l.s4 1414812756
    %v6704 = vunpack.c.0.s8 %v6703
    %v6705 = vlaneseq
    %v6706 = vshrl.u32 %v6705, 7
    %v6707 = vsub.s32 %v6704, %v6706
    %v6708 = vrot.slane %v855, %v6707
    %v6710 = vunpack.c.l.s4 1987475062
    %v6711 = vunpack.c.0.s8 %v6710
    %v6712 = vlaneseq
    %v6713 = vshrl.u32 %v6712, 7
    %v6714 = vsub.s32 %v6711, %v6713
    %v6715 = vrot.slane %v855, %v6714
    %v6717 = vunpack.c.l.s4 269488144
    %v6718 = vunpack.c.0.s8 %v6717
    %v6719 = vlaneseq
    %v6720 = vshrl.u32 %v6719, 7
    %v6721 = vsub.s32 %v6718, %v6720
    %v6722 = vrot.slane %v858, %v6721
    %v6724 = vunpack.c.l.s4 842150450
    %v6725 = vunpack.c.0.s8 %v6724
    %v6726 = vlaneseq
    %v6727 = vshrl.u32 %v6726, 7
    %v6728 = vsub.s32 %v6725, %v6727
    %v6729 = vrot.slane %v858, %v6728
    %v6731 = vunpack.c.l.s4 1414812756
    %v6732 = vunpack.c.0.s8 %v6731
    %v6733 = vlaneseq
    %v6734 = vshrl.u32 %v6733, 7
    %v6735 = vsub.s32 %v6732, %v6734
    %v6736 = vrot.slane %v858, %v6735
    %v6738 = vunpack.c.l.s4 1987475062
    %v6739 = vunpack.c.0.s8 %v6738
    %v6740 = vlaneseq
    %v6741 = vshrl.u32 %v6740, 7
    %v6742 = vsub.s32 %v6739, %v6741
    %v6743 = vrot.slane %v858, %v6742
    %v6745 = vunpack.c.l.s4 269488144
    %v6746 = vunpack.c.0.s8 %v6745
    %v6747 = vlaneseq
    %v6748 = vshrl.u32 %v6747, 7
    %v6749 = vsub.s32 %v6746, %v6748
    %v6750 = vrot.slane %v861, %v6749
    %v6752 = vunpack.c.l.s4 842150450
    %v6753 = vunpack.c.0.s8 %v6752
    %v6754 = vlaneseq
    %v6755 = vshrl.u32 %v6754, 7
    %v6756 = vsub.s32 %v6753, %v6755
    %v6757 = vrot.slane %v861, %v6756
    %v6759 = vunpack.c.l.s4 1414812756
    %v6760 = vunpack.c.0.s8 %v6759
    %v6761 = vlaneseq
    %v6762 = vshrl.u32 %v6761, 7
    %v6763 = vsub.s32 %v6760, %v6762
    %v6764 = vrot.slane %v861, %v6763
    %v6766 = vunpack.c.l.s4 1987475062
    %v6767 = vunpack.c.0.s8 %v6766
    %v6768 = vlaneseq
    %v6769 = vshrl.u32 %v6768, 7
    %v6770 = vsub.s32 %v6767, %v6769
    %v6771 = vrot.slane %v861, %v6770
    %v6773 = vunpack.c.l.s4 269488144
    %v6774 = vunpack.c.0.s8 %v6773
    %v6775 = vlaneseq
    %v6776 = vshrl.u32 %v6775, 7
    %v6777 = vsub.s32 %v6774, %v6776
    %v6778 = vrot.slane %v864, %v6777
    %v6780 = vunpack.c.l.s4 842150450
    %v6781 = vunpack.c.0.s8 %v6780
    %v6782 = vlaneseq
    %v6783 = vshrl.u32 %v6782, 7
    %v6784 = vsub.s32 %v6781, %v6783
    %v6785 = vrot.slane %v864, %v6784
    %v6787 = vunpack.c.l.s4 1414812756
    %v6788 = vunpack.c.0.s8 %v6787
    %v6789 = vlaneseq
    %v6790 = vshrl.u32 %v6789, 7
    %v6791 = vsub.s32 %v6788, %v6790
    %v6792 = vrot.slane %v864, %v6791
    %v6794 = vunpack.c.l.s4 1987475062
    %v6795 = vunpack.c.0.s8 %v6794
    %v6796 = vlaneseq
    %v6797 = vshrl.u32 %v6796, 7
    %v6798 = vsub.s32 %v6795, %v6797
    %v6799 = vrot.slane %v864, %v6798
    %v6801 = vunpack.c.l.s4 269488144
    %v6802 = vunpack.c.0.s8 %v6801
    %v6803 = vlaneseq
    %v6804 = vshrl.u32 %v6803, 7
    %v6805 = vsub.s32 %v6802, %v6804
    %v6806 = vrot.slane %v867, %v6805
    %v6808 = vunpack.c.l.s4 842150450
    %v6809 = vunpack.c.0.s8 %v6808
    %v6810 = vlaneseq
    %v6811 = vshrl.u32 %v6810, 7
    %v6812 = vsub.s32 %v6809, %v6811
    %v6813 = vrot.slane %v867, %v6812
    %v6815 = vunpack.c.l.s4 1414812756
    %v6816 = vunpack.c.0.s8 %v6815
    %v6817 = vlaneseq
    %v6818 = vshrl.u32 %v6817, 7
    %v6819 = vsub.s32 %v6816, %v6818
    %v6820 = vrot.slane %v867, %v6819
    %v6822 = vunpack.c.l.s4 1987475062
    %v6823 = vunpack.c.0.s8 %v6822
    %v6824 = vlaneseq
    %v6825 = vshrl.u32 %v6824, 7
    %v6826 = vsub.s32 %v6823, %v6825
    %v6827 = vrot.slane %v867, %v6826
    %v6829 = vunpack.c.l.s4 269488144
    %v6830 = vunpack.c.0.s8 %v6829
    %v6831 = vlaneseq
    %v6832 = vshrl.u32 %v6831, 7
    %v6833 = vsub.s32 %v6830, %v6832
    %v6834 = vrot.slane %v870, %v6833
    %v6836 = vunpack.c.l.s4 842150450
    %v6837 = vunpack.c.0.s8 %v6836
    %v6838 = vlaneseq
    %v6839 = vshrl.u32 %v6838, 7
    %v6840 = vsub.s32 %v6837, %v6839
    %v6841 = vrot.slane %v870, %v6840
    %v6843 = vunpack.c.l.s4 1414812756
    %v6844 = vunpack.c.0.s8 %v6843
    %v6845 = vlaneseq
    %v6846 = vshrl.u32 %v6845, 7
    %v6847 = vsub.s32 %v6844, %v6846
    %v6848 = vrot.slane %v870, %v6847
    %v6850 = vunpack.c.l.s4 1987475062
    %v6851 = vunpack.c.0.s8 %v6850
    %v6852 = vlaneseq
    %v6853 = vshrl.u32 %v6852, 7
    %v6854 = vsub.s32 %v6851, %v6853
    %v6855 = vrot.slane %v870, %v6854
    %v6857 = vunpack.c.l.s4 269488144
    %v6858 = vunpack.c.0.s8 %v6857
    %v6859 = vlaneseq
    %v6860 = vshrl.u32 %v6859, 7
    %v6861 = vsub.s32 %v6858, %v6860
    %v6862 = vrot.slane %v873, %v6861
    %v6864 = vunpack.c.l.s4 842150450
    %v6865 = vunpack.c.0.s8 %v6864
    %v6866 = vlaneseq
    %v6867 = vshrl.u32 %v6866, 7
    %v6868 = vsub.s32 %v6865, %v6867
    %v6869 = vrot.slane %v873, %v6868
    %v6871 = vunpack.c.l.s4 1414812756
    %v6872 = vunpack.c.0.s8 %v6871
    %v6873 = vlaneseq
    %v6874 = vshrl.u32 %v6873, 7
    %v6875 = vsub.s32 %v6872, %v6874
    %v6876 = vrot.slane %v873, %v6875
    %v6878 = vunpack.c.l.s4 1987475062
    %v6879 = vunpack.c.0.s8 %v6878
    %v6880 = vlaneseq
    %v6881 = vshrl.u32 %v6880, 7
    %v6882 = vsub.s32 %v6879, %v6881
    %v6883 = vrot.slane %v873, %v6882
    %v6885 = vunpack.c.l.s4 269488144
    %v6886 = vunpack.c.0.s8 %v6885
    %v6887 = vlaneseq
    %v6888 = vshrl.u32 %v6887, 7
    %v6889 = vsub.s32 %v6886, %v6888
    %v6890 = vrot.slane %v876, %v6889
    %v6892 = vunpack.c.l.s4 842150450
    %v6893 = vunpack.c.0.s8 %v6892
    %v6894 = vlaneseq
    %v6895 = vshrl.u32 %v6894, 7
    %v6896 = vsub.s32 %v6893, %v6895
    %v6897 = vrot.slane %v876, %v6896
    %v6899 = vunpack.c.l.s4 1414812756
    %v6900 = vunpack.c.0.s8 %v6899
    %v6901 = vlaneseq
    %v6902 = vshrl.u32 %v6901, 7
    %v6903 = vsub.s32 %v6900, %v6902
    %v6904 = vrot.slane %v876, %v6903
    %v6906 = vunpack.c.l.s4 1987475062
    %v6907 = vunpack.c.0.s8 %v6906
    %v6908 = vlaneseq
    %v6909 = vshrl.u32 %v6908, 7
    %v6910 = vsub.s32 %v6907, %v6909
    %v6911 = vrot.slane %v876, %v6910
    %v6913 = vunpack.c.l.s4 269488144
    %v6914 = vunpack.c.0.s8 %v6913
    %v6915 = vlaneseq
    %v6916 = vshrl.u32 %v6915, 7
    %v6917 = vsub.s32 %v6914, %v6916
    %v6918 = vrot.slane %v879, %v6917
    %v6920 = vunpack.c.l.s4 842150450
    %v6921 = vunpack.c.0.s8 %v6920
    %v6922 = vlaneseq
    %v6923 = vshrl.u32 %v6922, 7
    %v6924 = vsub.s32 %v6921, %v6923
    %v6925 = vrot.slane %v879, %v6924
    %v6927 = vunpack.c.l.s4 1414812756
    %v6928 = vunpack.c.0.s8 %v6927
    %v6929 = vlaneseq
    %v6930 = vshrl.u32 %v6929, 7
    %v6931 = vsub.s32 %v6928, %v6930
    %v6932 = vrot.slane %v879, %v6931
    %v6934 = vunpack.c.l.s4 1987475062
    %v6935 = vunpack.c.0.s8 %v6934
    %v6936 = vlaneseq
    %v6937 = vshrl.u32 %v6936, 7
    %v6938 = vsub.s32 %v6935, %v6937
    %v6939 = vrot.slane %v879, %v6938
    %v6941 = vunpack.c.l.s4 269488144
    %v6942 = vunpack.c.0.s8 %v6941
    %v6943 = vlaneseq
    %v6944 = vshrl.u32 %v6943, 7
    %v6945 = vsub.s32 %v6942, %v6944
    %v6946 = vrot.slane %v882, %v6945
    %v6948 = vunpack.c.l.s4 842150450
    %v6949 = vunpack.c.0.s8 %v6948
    %v6950 = vlaneseq
    %v6951 = vshrl.u32 %v6950, 7
    %v6952 = vsub.s32 %v6949, %v6951
    %v6953 = vrot.slane %v882, %v6952
    %v6955 = vunpack.c.l.s4 1414812756
    %v6956 = vunpack.c.0.s8 %v6955
    %v6957 = vlaneseq
    %v6958 = vshrl.u32 %v6957, 7
    %v6959 = vsub.s32 %v6956, %v6958
    %v6960 = vrot.slane %v882, %v6959
    %v6962 = vunpack.c.l.s4 1987475062
    %v6963 = vunpack.c.0.s8 %v6962
    %v6964 = vlaneseq
    %v6965 = vshrl.u32 %v6964, 7
    %v6966 = vsub.s32 %v6963, %v6965
    %v6967 = vrot.slane %v882, %v6966
    %v6969 = vunpack.c.l.s4 269488144
    %v6970 = vunpack.c.0.s8 %v6969
    %v6971 = vlaneseq
    %v6972 = vshrl.u32 %v6971, 7
    %v6973 = vsub.s32 %v6970, %v6972
    %v6974 = vrot.slane %v885, %v6973
    %v6976 = vunpack.c.l.s4 842150450
    %v6977 = vunpack.c.0.s8 %v6976
    %v6978 = vlaneseq
    %v6979 = vshrl.u32 %v6978, 7
    %v6980 = vsub.s32 %v6977, %v6979
    %v6981 = vrot.slane %v885, %v6980
    %v6983 = vunpack.c.l.s4 1414812756
    %v6984 = vunpack.c.0.s8 %v6983
    %v6985 = vlaneseq
    %v6986 = vshrl.u32 %v6985, 7
    %v6987 = vsub.s32 %v6984, %v6986
    %v6988 = vrot.slane %v885, %v6987
    %v6990 = vunpack.c.l.s4 1987475062
    %v6991 = vunpack.c.0.s8 %v6990
    %v6992 = vlaneseq
    %v6993 = vshrl.u32 %v6992, 7
    %v6994 = vsub.s32 %v6991, %v6993
    %v6995 = vrot.slane %v885, %v6994
    %v6997 = vunpack.c.l.s4 269488144
    %v6998 = vunpack.c.0.s8 %v6997
    %v6999 = vlaneseq
    %v7000 = vshrl.u32 %v6999, 7
    %v7001 = vsub.s32 %v6998, %v7000
    %v7002 = vrot.slane %v888, %v7001
    %v7004 = vunpack.c.l.s4 842150450
    %v7005 = vunpack.c.0.s8 %v7004
    %v7006 = vlaneseq
    %v7007 = vshrl.u32 %v7006, 7
    %v7008 = vsub.s32 %v7005, %v7007
    %v7009 = vrot.slane %v888, %v7008
    %v7011 = vunpack.c.l.s4 1414812756
    %v7012 = vunpack.c.0.s8 %v7011
    %v7013 = vlaneseq
    %v7014 = vshrl.u32 %v7013, 7
    %v7015 = vsub.s32 %v7012, %v7014
    %v7016 = vrot.slane %v888, %v7015
    %v7018 = vunpack.c.l.s4 1987475062
    %v7019 = vunpack.c.0.s8 %v7018
    %v7020 = vlaneseq
    %v7021 = vshrl.u32 %v7020, 7
    %v7022 = vsub.s32 %v7019, %v7021
    %v7023 = vrot.slane %v888, %v7022
    %v7025 = vunpack.c.l.s4 269488144
    %v7026 = vunpack.c.0.s8 %v7025
    %v7027 = vlaneseq
    %v7028 = vshrl.u32 %v7027, 7
    %v7029 = vsub.s32 %v7026, %v7028
    %v7030 = vrot.slane %v891, %v7029
    %v7032 = vunpack.c.l.s4 842150450
    %v7033 = vunpack.c.0.s8 %v7032
    %v7034 = vlaneseq
    %v7035 = vshrl.u32 %v7034, 7
    %v7036 = vsub.s32 %v7033, %v7035
    %v7037 = vrot.slane %v891, %v7036
    %v7039 = vunpack.c.l.s4 1414812756
    %v7040 = vunpack.c.0.s8 %v7039
    %v7041 = vlaneseq
    %v7042 = vshrl.u32 %v7041, 7
    %v7043 = vsub.s32 %v7040, %v7042
    %v7044 = vrot.slane %v891, %v7043
    %v7046 = vunpack.c.l.s4 1987475062
    %v7047 = vunpack.c.0.s8 %v7046
    %v7048 = vlaneseq
    %v7049 = vshrl.u32 %v7048, 7
    %v7050 = vsub.s32 %v7047, %v7049
    %v7051 = vrot.slane %v891, %v7050
    %v7053 = vunpack.c.l.s4 269488144
    %v7054 = vunpack.c.0.s8 %v7053
    %v7055 = vlaneseq
    %v7056 = vshrl.u32 %v7055, 7
    %v7057 = vsub.s32 %v7054, %v7056
    %v7058 = vrot.slane %v894, %v7057
    %v7060 = vunpack.c.l.s4 842150450
    %v7061 = vunpack.c.0.s8 %v7060
    %v7062 = vlaneseq
    %v7063 = vshrl.u32 %v7062, 7
    %v7064 = vsub.s32 %v7061, %v7063
    %v7065 = vrot.slane %v894, %v7064
    %v7067 = vunpack.c.l.s4 1414812756
    %v7068 = vunpack.c.0.s8 %v7067
    %v7069 = vlaneseq
    %v7070 = vshrl.u32 %v7069, 7
    %v7071 = vsub.s32 %v7068, %v7070
    %v7072 = vrot.slane %v894, %v7071
    %v7074 = vunpack.c.l.s4 1987475062
    %v7075 = vunpack.c.0.s8 %v7074
    %v7076 = vlaneseq
    %v7077 = vshrl.u32 %v7076, 7
    %v7078 = vsub.s32 %v7075, %v7077
    %v7079 = vrot.slane %v894, %v7078
    %v7081 = vunpack.c.l.s4 269488144
    %v7082 = vunpack.c.0.s8 %v7081
    %v7083 = vlaneseq
    %v7084 = vshrl.u32 %v7083, 7
    %v7085 = vsub.s32 %v7082, %v7084
    %v7086 = vrot.slane %v897, %v7085
    %v7088 = vunpack.c.l.s4 842150450
    %v7089 = vunpack.c.0.s8 %v7088
    %v7090 = vlaneseq
    %v7091 = vshrl.u32 %v7090, 7
    %v7092 = vsub.s32 %v7089, %v7091
    %v7093 = vrot.slane %v897, %v7092
    %v7095 = vunpack.c.l.s4 1414812756
    %v7096 = vunpack.c.0.s8 %v7095
    %v7097 = vlaneseq
    %v7098 = vshrl.u32 %v7097, 7
    %v7099 = vsub.s32 %v7096, %v7098
    %v7100 = vrot.slane %v897, %v7099
    %v7102 = vunpack.c.l.s4 1987475062
    %v7103 = vunpack.c.0.s8 %v7102
    %v7104 = vlaneseq
    %v7105 = vshrl.u32 %v7104, 7
    %v7106 = vsub.s32 %v7103, %v7105
    %v7107 = vrot.slane %v897, %v7106
    %v7109 = vunpack.c.l.s4 269488144
    %v7110 = vunpack.c.0.s8 %v7109
    %v7111 = vlaneseq
    %v7112 = vshrl.u32 %v7111, 7
    %v7113 = vsub.s32 %v7110, %v7112
    %v7114 = vrot.slane %v900, %v7113
    %v7116 = vunpack.c.l.s4 842150450
    %v7117 = vunpack.c.0.s8 %v7116
    %v7118 = vlaneseq
    %v7119 = vshrl.u32 %v7118, 7
    %v7120 = vsub.s32 %v7117, %v7119
    %v7121 = vrot.slane %v900, %v7120
    %v7123 = vunpack.c.l.s4 1414812756
    %v7124 = vunpack.c.0.s8 %v7123
    %v7125 = vlaneseq
    %v7126 = vshrl.u32 %v7125, 7
    %v7127 = vsub.s32 %v7124, %v7126
    %v7128 = vrot.slane %v900, %v7127
    %v7130 = vunpack.c.l.s4 1987475062
    %v7131 = vunpack.c.0.s8 %v7130
    %v7132 = vlaneseq
    %v7133 = vshrl.u32 %v7132, 7
    %v7134 = vsub.s32 %v7131, %v7133
    %v7135 = vrot.slane %v900, %v7134
    %v7137 = vunpack.c.l.s4 269488144
    %v7138 = vunpack.c.0.s8 %v7137
    %v7139 = vlaneseq
    %v7140 = vshrl.u32 %v7139, 7
    %v7141 = vsub.s32 %v7138, %v7140
    %v7142 = vrot.slane %v903, %v7141
    %v7144 = vunpack.c.l.s4 842150450
    %v7145 = vunpack.c.0.s8 %v7144
    %v7146 = vlaneseq
    %v7147 = vshrl.u32 %v7146, 7
    %v7148 = vsub.s32 %v7145, %v7147
    %v7149 = vrot.slane %v903, %v7148
    %v7151 = vunpack.c.l.s4 1414812756
    %v7152 = vunpack.c.0.s8 %v7151
    %v7153 = vlaneseq
    %v7154 = vshrl.u32 %v7153, 7
    %v7155 = vsub.s32 %v7152, %v7154
    %v7156 = vrot.slane %v903, %v7155
    %v7158 = vunpack.c.l.s4 1987475062
    %v7159 = vunpack.c.0.s8 %v7158
    %v7160 = vlaneseq
    %v7161 = vshrl.u32 %v7160, 7
    %v7162 = vsub.s32 %v7159, %v7161
    %v7163 = vrot.slane %v903, %v7162
    %v7165 = vunpack.c.l.s4 269488144
    %v7166 = vunpack.c.0.s8 %v7165
    %v7167 = vlaneseq
    %v7168 = vshrl.u32 %v7167, 7
    %v7169 = vsub.s32 %v7166, %v7168
    %v7170 = vrot.slane %v906, %v7169
    %v7172 = vunpack.c.l.s4 842150450
    %v7173 = vunpack.c.0.s8 %v7172
    %v7174 = vlaneseq
    %v7175 = vshrl.u32 %v7174, 7
    %v7176 = vsub.s32 %v7173, %v7175
    %v7177 = vrot.slane %v906, %v7176
    %v7179 = vunpack.c.l.s4 1414812756
    %v7180 = vunpack.c.0.s8 %v7179
    %v7181 = vlaneseq
    %v7182 = vshrl.u32 %v7181, 7
    %v7183 = vsub.s32 %v7180, %v7182
    %v7184 = vrot.slane %v906, %v7183
    %v7186 = vunpack.c.l.s4 1987475062
    %v7187 = vunpack.c.0.s8 %v7186
    %v7188 = vlaneseq
    %v7189 = vshrl.u32 %v7188, 7
    %v7190 = vsub.s32 %v7187, %v7189
    %v7191 = vrot.slane %v906, %v7190
    %v7193 = vunpack.c.l.s4 269488144
    %v7194 = vunpack.c.0.s8 %v7193
    %v7195 = vlaneseq
    %v7196 = vshrl.u32 %v7195, 7
    %v7197 = vsub.s32 %v7194, %v7196
    %v7198 = vrot.slane %v909, %v7197
    %v7200 = vunpack.c.l.s4 842150450
    %v7201 = vunpack.c.0.s8 %v7200
    %v7202 = vlaneseq
    %v7203 = vshrl.u32 %v7202, 7
    %v7204 = vsub.s32 %v7201, %v7203
    %v7205 = vrot.slane %v909, %v7204
    %v7207 = vunpack.c.l.s4 1414812756
    %v7208 = vunpack.c.0.s8 %v7207
    %v7209 = vlaneseq
    %v7210 = vshrl.u32 %v7209, 7
    %v7211 = vsub.s32 %v7208, %v7210
    %v7212 = vrot.slane %v909, %v7211
    %v7214 = vunpack.c.l.s4 1987475062
    %v7215 = vunpack.c.0.s8 %v7214
    %v7216 = vlaneseq
    %v7217 = vshrl.u32 %v7216, 7
    %v7218 = vsub.s32 %v7215, %v7217
    %v7219 = vrot.slane %v909, %v7218
    %v7221 = vunpack.c.l.s4 269488144
    %v7222 = vunpack.c.0.s8 %v7221
    %v7223 = vlaneseq
    %v7224 = vshrl.u32 %v7223, 7
    %v7225 = vsub.s32 %v7222, %v7224
    %v7226 = vrot.slane %v912, %v7225
    %v7228 = vunpack.c.l.s4 842150450
    %v7229 = vunpack.c.0.s8 %v7228
    %v7230 = vlaneseq
    %v7231 = vshrl.u32 %v7230, 7
    %v7232 = vsub.s32 %v7229, %v7231
    %v7233 = vrot.slane %v912, %v7232
    %v7235 = vunpack.c.l.s4 1414812756
    %v7236 = vunpack.c.0.s8 %v7235
    %v7237 = vlaneseq
    %v7238 = vshrl.u32 %v7237, 7
    %v7239 = vsub.s32 %v7236, %v7238
    %v7240 = vrot.slane %v912, %v7239
    %v7242 = vunpack.c.l.s4 1987475062
    %v7243 = vunpack.c.0.s8 %v7242
    %v7244 = vlaneseq
    %v7245 = vshrl.u32 %v7244, 7
    %v7246 = vsub.s32 %v7243, %v7245
    %v7247 = vrot.slane %v912, %v7246
    %v7249 = vunpack.c.l.s4 269488144
    %v7250 = vunpack.c.0.s8 %v7249
    %v7251 = vlaneseq
    %v7252 = vshrl.u32 %v7251, 7
    %v7253 = vsub.s32 %v7250, %v7252
    %v7254 = vrot.slane %v915, %v7253
    %v7256 = vunpack.c.l.s4 842150450
    %v7257 = vunpack.c.0.s8 %v7256
    %v7258 = vlaneseq
    %v7259 = vshrl.u32 %v7258, 7
    %v7260 = vsub.s32 %v7257, %v7259
    %v7261 = vrot.slane %v915, %v7260
    %v7263 = vunpack.c.l.s4 1414812756
    %v7264 = vunpack.c.0.s8 %v7263
    %v7265 = vlaneseq
    %v7266 = vshrl.u32 %v7265, 7
    %v7267 = vsub.s32 %v7264, %v7266
    %v7268 = vrot.slane %v915, %v7267
    %v7270 = vunpack.c.l.s4 1987475062
    %v7271 = vunpack.c.0.s8 %v7270
    %v7272 = vlaneseq
    %v7273 = vshrl.u32 %v7272, 7
    %v7274 = vsub.s32 %v7271, %v7273
    %v7275 = vrot.slane %v915, %v7274
    %v7277 = vunpack.c.l.s4 269488144
    %v7278 = vunpack.c.0.s8 %v7277
    %v7279 = vlaneseq
    %v7280 = vshrl.u32 %v7279, 7
    %v7281 = vsub.s32 %v7278, %v7280
    %v7282 = vrot.slane %v918, %v7281
    %v7284 = vunpack.c.l.s4 842150450
    %v7285 = vunpack.c.0.s8 %v7284
    %v7286 = vlaneseq
    %v7287 = vshrl.u32 %v7286, 7
    %v7288 = vsub.s32 %v7285, %v7287
    %v7289 = vrot.slane %v918, %v7288
    %v7291 = vunpack.c.l.s4 1414812756
    %v7292 = vunpack.c.0.s8 %v7291
    %v7293 = vlaneseq
    %v7294 = vshrl.u32 %v7293, 7
    %v7295 = vsub.s32 %v7292, %v7294
    %v7296 = vrot.slane %v918, %v7295
    %v7298 = vunpack.c.l.s4 1987475062
    %v7299 = vunpack.c.0.s8 %v7298
    %v7300 = vlaneseq
    %v7301 = vshrl.u32 %v7300, 7
    %v7302 = vsub.s32 %v7299, %v7301
    %v7303 = vrot.slane %v918, %v7302
    %v7305 = vunpack.c.l.s4 269488144
    %v7306 = vunpack.c.0.s8 %v7305
    %v7307 = vlaneseq
    %v7308 = vshrl.u32 %v7307, 7
    %v7309 = vsub.s32 %v7306, %v7308
    %v7310 = vrot.slane %v921, %v7309
    %v7312 = vunpack.c.l.s4 842150450
    %v7313 = vunpack.c.0.s8 %v7312
    %v7314 = vlaneseq
    %v7315 = vshrl.u32 %v7314, 7
    %v7316 = vsub.s32 %v7313, %v7315
    %v7317 = vrot.slane %v921, %v7316
    %v7319 = vunpack.c.l.s4 1414812756
    %v7320 = vunpack.c.0.s8 %v7319
    %v7321 = vlaneseq
    %v7322 = vshrl.u32 %v7321, 7
    %v7323 = vsub.s32 %v7320, %v7322
    %v7324 = vrot.slane %v921, %v7323
    %v7326 = vunpack.c.l.s4 1987475062
    %v7327 = vunpack.c.0.s8 %v7326
    %v7328 = vlaneseq
    %v7329 = vshrl.u32 %v7328, 7
    %v7330 = vsub.s32 %v7327, %v7329
    %v7331 = vrot.slane %v921, %v7330
    %v7333 = vunpack.c.l.s4 269488144
    %v7334 = vunpack.c.0.s8 %v7333
    %v7335 = vlaneseq
    %v7336 = vshrl.u32 %v7335, 7
    %v7337 = vsub.s32 %v7334, %v7336
    %v7338 = vrot.slane %v924, %v7337
    %v7340 = vunpack.c.l.s4 842150450
    %v7341 = vunpack.c.0.s8 %v7340
    %v7342 = vlaneseq
    %v7343 = vshrl.u32 %v7342, 7
    %v7344 = vsub.s32 %v7341, %v7343
    %v7345 = vrot.slane %v924, %v7344
    %v7347 = vunpack.c.l.s4 1414812756
    %v7348 = vunpack.c.0.s8 %v7347
    %v7349 = vlaneseq
    %v7350 = vshrl.u32 %v7349, 7
    %v7351 = vsub.s32 %v7348, %v7350
    %v7352 = vrot.slane %v924, %v7351
    %v7354 = vunpack.c.l.s4 1987475062
    %v7355 = vunpack.c.0.s8 %v7354
    %v7356 = vlaneseq
    %v7357 = vshrl.u32 %v7356, 7
    %v7358 = vsub.s32 %v7355, %v7357
    %v7359 = vrot.slane %v924, %v7358
    %v7361 = vunpack.c.l.s4 269488144
    %v7362 = vunpack.c.0.s8 %v7361
    %v7363 = vlaneseq
    %v7364 = vshrl.u32 %v7363, 7
    %v7365 = vsub.s32 %v7362, %v7364
    %v7366 = vrot.slane %v927, %v7365
    %v7368 = vunpack.c.l.s4 842150450
    %v7369 = vunpack.c.0.s8 %v7368
    %v7370 = vlaneseq
    %v7371 = vshrl.u32 %v7370, 7
    %v7372 = vsub.s32 %v7369, %v7371
    %v7373 = vrot.slane %v927, %v7372
    %v7375 = vunpack.c.l.s4 1414812756
    %v7376 = vunpack.c.0.s8 %v7375
    %v7377 = vlaneseq
    %v7378 = vshrl.u32 %v7377, 7
    %v7379 = vsub.s32 %v7376, %v7378
    %v7380 = vrot.slane %v927, %v7379
    %v7382 = vunpack.c.l.s4 1987475062
    %v7383 = vunpack.c.0.s8 %v7382
    %v7384 = vlaneseq
    %v7385 = vshrl.u32 %v7384, 7
    %v7386 = vsub.s32 %v7383, %v7385
    %v7387 = vrot.slane %v927, %v7386
    %v7389 = vunpack.c.l.s4 269488144
    %v7390 = vunpack.c.0.s8 %v7389
    %v7391 = vlaneseq
    %v7392 = vshrl.u32 %v7391, 7
    %v7393 = vsub.s32 %v7390, %v7392
    %v7394 = vrot.slane %v930, %v7393
    %v7396 = vunpack.c.l.s4 842150450
    %v7397 = vunpack.c.0.s8 %v7396
    %v7398 = vlaneseq
    %v7399 = vshrl.u32 %v7398, 7
    %v7400 = vsub.s32 %v7397, %v7399
    %v7401 = vrot.slane %v930, %v7400
    %v7403 = vunpack.c.l.s4 1414812756
    %v7404 = vunpack.c.0.s8 %v7403
    %v7405 = vlaneseq
    %v7406 = vshrl.u32 %v7405, 7
    %v7407 = vsub.s32 %v7404, %v7406
    %v7408 = vrot.slane %v930, %v7407
    %v7410 = vunpack.c.l.s4 1987475062
    %v7411 = vunpack.c.0.s8 %v7410
    %v7412 = vlaneseq
    %v7413 = vshrl.u32 %v7412, 7
    %v7414 = vsub.s32 %v7411, %v7413
    %v7415 = vrot.slane %v930, %v7414
    %v7417 = vunpack.c.l.s4 269488144
    %v7418 = vunpack.c.0.s8 %v7417
    %v7419 = vlaneseq
    %v7420 = vshrl.u32 %v7419, 7
    %v7421 = vsub.s32 %v7418, %v7420
    %v7422 = vrot.slane %v933, %v7421
    %v7424 = vunpack.c.l.s4 842150450
    %v7425 = vunpack.c.0.s8 %v7424
    %v7426 = vlaneseq
    %v7427 = vshrl.u32 %v7426, 7
    %v7428 = vsub.s32 %v7425, %v7427
    %v7429 = vrot.slane %v933, %v7428
    %v7431 = vunpack.c.l.s4 1414812756
    %v7432 = vunpack.c.0.s8 %v7431
    %v7433 = vlaneseq
    %v7434 = vshrl.u32 %v7433, 7
    %v7435 = vsub.s32 %v7432, %v7434
    %v7436 = vrot.slane %v933, %v7435
    %v7438 = vunpack.c.l.s4 1987475062
    %v7439 = vunpack.c.0.s8 %v7438
    %v7440 = vlaneseq
    %v7441 = vshrl.u32 %v7440, 7
    %v7442 = vsub.s32 %v7439, %v7441
    %v7443 = vrot.slane %v933, %v7442
    %v7445 = vunpack.c.l.s4 269488144
    %v7446 = vunpack.c.0.s8 %v7445
    %v7447 = vlaneseq
    %v7448 = vshrl.u32 %v7447, 7
    %v7449 = vsub.s32 %v7446, %v7448
    %v7450 = vrot.slane %v936, %v7449
    %v7452 = vunpack.c.l.s4 842150450
    %v7453 = vunpack.c.0.s8 %v7452
    %v7454 = vlaneseq
    %v7455 = vshrl.u32 %v7454, 7
    %v7456 = vsub.s32 %v7453, %v7455
    %v7457 = vrot.slane %v936, %v7456
    %v7459 = vunpack.c.l.s4 1414812756
    %v7460 = vunpack.c.0.s8 %v7459
    %v7461 = vlaneseq
    %v7462 = vshrl.u32 %v7461, 7
    %v7463 = vsub.s32 %v7460, %v7462
    %v7464 = vrot.slane %v936, %v7463
    %v7466 = vunpack.c.l.s4 1987475062
    %v7467 = vunpack.c.0.s8 %v7466
    %v7468 = vlaneseq
    %v7469 = vshrl.u32 %v7468, 7
    %v7470 = vsub.s32 %v7467, %v7469
    %v7471 = vrot.slane %v936, %v7470
    %v7473 = vunpack.c.l.s4 269488144
    %v7474 = vunpack.c.0.s8 %v7473
    %v7475 = vlaneseq
    %v7476 = vshrl.u32 %v7475, 7
    %v7477 = vsub.s32 %v7474, %v7476
    %v7478 = vrot.slane %v939, %v7477
    %v7480 = vunpack.c.l.s4 842150450
    %v7481 = vunpack.c.0.s8 %v7480
    %v7482 = vlaneseq
    %v7483 = vshrl.u32 %v7482, 7
    %v7484 = vsub.s32 %v7481, %v7483
    %v7485 = vrot.slane %v939, %v7484
    %v7487 = vunpack.c.l.s4 1414812756
    %v7488 = vunpack.c.0.s8 %v7487
    %v7489 = vlaneseq
    %v7490 = vshrl.u32 %v7489, 7
    %v7491 = vsub.s32 %v7488, %v7490
    %v7492 = vrot.slane %v939, %v7491
    %v7494 = vunpack.c.l.s4 1987475062
    %v7495 = vunpack.c.0.s8 %v7494
    %v7496 = vlaneseq
    %v7497 = vshrl.u32 %v7496, 7
    %v7498 = vsub.s32 %v7495, %v7497
    %v7499 = vrot.slane %v939, %v7498
    %v7501 = vunpack.c.l.s4 269488144
    %v7502 = vunpack.c.0.s8 %v7501
    %v7503 = vlaneseq
    %v7504 = vshrl.u32 %v7503, 7
    %v7505 = vsub.s32 %v7502, %v7504
    %v7506 = vrot.slane %v942, %v7505
    %v7508 = vunpack.c.l.s4 842150450
    %v7509 = vunpack.c.0.s8 %v7508
    %v7510 = vlaneseq
    %v7511 = vshrl.u32 %v7510, 7
    %v7512 = vsub.s32 %v7509, %v7511
    %v7513 = vrot.slane %v942, %v7512
    %v7515 = vunpack.c.l.s4 1414812756
    %v7516 = vunpack.c.0.s8 %v7515
    %v7517 = vlaneseq
    %v7518 = vshrl.u32 %v7517, 7
    %v7519 = vsub.s32 %v7516, %v7518
    %v7520 = vrot.slane %v942, %v7519
    %v7522 = vunpack.c.l.s4 1987475062
    %v7523 = vunpack.c.0.s8 %v7522
    %v7524 = vlaneseq
    %v7525 = vshrl.u32 %v7524, 7
    %v7526 = vsub.s32 %v7523, %v7525
    %v7527 = vrot.slane %v942, %v7526
    %v7529 = vunpack.c.l.s4 269488144
    %v7530 = vunpack.c.0.s8 %v7529
    %v7531 = vlaneseq
    %v7532 = vshrl.u32 %v7531, 7
    %v7533 = vsub.s32 %v7530, %v7532
    %v7534 = vrot.slane %v945, %v7533
    %v7536 = vunpack.c.l.s4 842150450
    %v7537 = vunpack.c.0.s8 %v7536
    %v7538 = vlaneseq
    %v7539 = vshrl.u32 %v7538, 7
    %v7540 = vsub.s32 %v7537, %v7539
    %v7541 = vrot.slane %v945, %v7540
    %v7543 = vunpack.c.l.s4 1414812756
    %v7544 = vunpack.c.0.s8 %v7543
    %v7545 = vlaneseq
    %v7546 = vshrl.u32 %v7545, 7
    %v7547 = vsub.s32 %v7544, %v7546
    %v7548 = vrot.slane %v945, %v7547
    %v7550 = vunpack.c.l.s4 1987475062
    %v7551 = vunpack.c.0.s8 %v7550
    %v7552 = vlaneseq
    %v7553 = vshrl.u32 %v7552, 7
    %v7554 = vsub.s32 %v7551, %v7553
    %v7555 = vrot.slane %v945, %v7554
    %v7557 = vunpack.c.l.s4 269488144
    %v7558 = vunpack.c.0.s8 %v7557
    %v7559 = vlaneseq
    %v7560 = vshrl.u32 %v7559, 7
    %v7561 = vsub.s32 %v7558, %v7560
    %v7562 = vrot.slane %v948, %v7561
    %v7564 = vunpack.c.l.s4 842150450
    %v7565 = vunpack.c.0.s8 %v7564
    %v7566 = vlaneseq
    %v7567 = vshrl.u32 %v7566, 7
    %v7568 = vsub.s32 %v7565, %v7567
    %v7569 = vrot.slane %v948, %v7568
    %v7571 = vunpack.c.l.s4 1414812756
    %v7572 = vunpack.c.0.s8 %v7571
    %v7573 = vlaneseq
    %v7574 = vshrl.u32 %v7573, 7
    %v7575 = vsub.s32 %v7572, %v7574
    %v7576 = vrot.slane %v948, %v7575
    %v7578 = vunpack.c.l.s4 1987475062
    %v7579 = vunpack.c.0.s8 %v7578
    %v7580 = vlaneseq
    %v7581 = vshrl.u32 %v7580, 7
    %v7582 = vsub.s32 %v7579, %v7581
    %v7583 = vrot.slane %v948, %v7582
    %v7585 = vunpack.c.l.s4 269488144
    %v7586 = vunpack.c.0.s8 %v7585
    %v7587 = vlaneseq
    %v7588 = vshrl.u32 %v7587, 7
    %v7589 = vsub.s32 %v7586, %v7588
    %v7590 = vrot.slane %v951, %v7589
    %v7592 = vunpack.c.l.s4 842150450
    %v7593 = vunpack.c.0.s8 %v7592
    %v7594 = vlaneseq
    %v7595 = vshrl.u32 %v7594, 7
    %v7596 = vsub.s32 %v7593, %v7595
    %v7597 = vrot.slane %v951, %v7596
    %v7599 = vunpack.c.l.s4 1414812756
    %v7600 = vunpack.c.0.s8 %v7599
    %v7601 = vlaneseq
    %v7602 = vshrl.u32 %v7601, 7
    %v7603 = vsub.s32 %v7600, %v7602
    %v7604 = vrot.slane %v951, %v7603
    %v7606 = vunpack.c.l.s4 1987475062
    %v7607 = vunpack.c.0.s8 %v7606
    %v7608 = vlaneseq
    %v7609 = vshrl.u32 %v7608, 7
    %v7610 = vsub.s32 %v7607, %v7609
    %v7611 = vrot.slane %v951, %v7610
    %v7613 = vunpack.c.l.s4 269488144
    %v7614 = vunpack.c.0.s8 %v7613
    %v7615 = vlaneseq
    %v7616 = vshrl.u32 %v7615, 7
    %v7617 = vsub.s32 %v7614, %v7616
    %v7618 = vrot.slane %v954, %v7617
    %v7620 = vunpack.c.l.s4 842150450
    %v7621 = vunpack.c.0.s8 %v7620
    %v7622 = vlaneseq
    %v7623 = vshrl.u32 %v7622, 7
    %v7624 = vsub.s32 %v7621, %v7623
    %v7625 = vrot.slane %v954, %v7624
    %v7627 = vunpack.c.l.s4 1414812756
    %v7628 = vunpack.c.0.s8 %v7627
    %v7629 = vlaneseq
    %v7630 = vshrl.u32 %v7629, 7
    %v7631 = vsub.s32 %v7628, %v7630
    %v7632 = vrot.slane %v954, %v7631
    %v7634 = vunpack.c.l.s4 1987475062
    %v7635 = vunpack.c.0.s8 %v7634
    %v7636 = vlaneseq
    %v7637 = vshrl.u32 %v7636, 7
    %v7638 = vsub.s32 %v7635, %v7637
    %v7639 = vrot.slane %v954, %v7638
    %v7641 = vunpack.c.l.s4 269488144
    %v7642 = vunpack.c.0.s8 %v7641
    %v7643 = vlaneseq
    %v7644 = vshrl.u32 %v7643, 7
    %v7645 = vsub.s32 %v7642, %v7644
    %v7646 = vrot.slane %v957, %v7645
    %v7648 = vunpack.c.l.s4 842150450
    %v7649 = vunpack.c.0.s8 %v7648
    %v7650 = vlaneseq
    %v7651 = vshrl.u32 %v7650, 7
    %v7652 = vsub.s32 %v7649, %v7651
    %v7653 = vrot.slane %v957, %v7652
    %v7655 = vunpack.c.l.s4 1414812756
    %v7656 = vunpack.c.0.s8 %v7655
    %v7657 = vlaneseq
    %v7658 = vshrl.u32 %v7657, 7
    %v7659 = vsub.s32 %v7656, %v7658
    %v7660 = vrot.slane %v957, %v7659
    %v7662 = vunpack.c.l.s4 1987475062
    %v7663 = vunpack.c.0.s8 %v7662
    %v7664 = vlaneseq
    %v7665 = vshrl.u32 %v7664, 7
    %v7666 = vsub.s32 %v7663, %v7665
    %v7667 = vrot.slane %v957, %v7666
    %v7669 = vunpack.c.l.s4 269488144
    %v7670 = vunpack.c.0.s8 %v7669
    %v7671 = vlaneseq
    %v7672 = vshrl.u32 %v7671, 7
    %v7673 = vsub.s32 %v7670, %v7672
    %v7674 = vrot.slane %v960, %v7673
    %v7676 = vunpack.c.l.s4 842150450
    %v7677 = vunpack.c.0.s8 %v7676
    %v7678 = vlaneseq
    %v7679 = vshrl.u32 %v7678, 7
    %v7680 = vsub.s32 %v7677, %v7679
    %v7681 = vrot.slane %v960, %v7680
    %v7683 = vunpack.c.l.s4 1414812756
    %v7684 = vunpack.c.0.s8 %v7683
    %v7685 = vlaneseq
    %v7686 = vshrl.u32 %v7685, 7
    %v7687 = vsub.s32 %v7684, %v7686
    %v7688 = vrot.slane %v960, %v7687
    %v7690 = vunpack.c.l.s4 1987475062
    %v7691 = vunpack.c.0.s8 %v7690
    %v7692 = vlaneseq
    %v7693 = vshrl.u32 %v7692, 7
    %v7694 = vsub.s32 %v7691, %v7693
    %v7695 = vrot.slane %v960, %v7694
    %v7697 = vunpack.c.l.s4 269488144
    %v7698 = vunpack.c.0.s8 %v7697
    %v7699 = vlaneseq
    %v7700 = vshrl.u32 %v7699, 7
    %v7701 = vsub.s32 %v7698, %v7700
    %v7702 = vrot.slane %v963, %v7701
    %v7704 = vunpack.c.l.s4 842150450
    %v7705 = vunpack.c.0.s8 %v7704
    %v7706 = vlaneseq
    %v7707 = vshrl.u32 %v7706, 7
    %v7708 = vsub.s32 %v7705, %v7707
    %v7709 = vrot.slane %v963, %v7708
    %v7711 = vunpack.c.l.s4 1414812756
    %v7712 = vunpack.c.0.s8 %v7711
    %v7713 = vlaneseq
    %v7714 = vshrl.u32 %v7713, 7
    %v7715 = vsub.s32 %v7712, %v7714
    %v7716 = vrot.slane %v963, %v7715
    %v7718 = vunpack.c.l.s4 1987475062
    %v7719 = vunpack.c.0.s8 %v7718
    %v7720 = vlaneseq
    %v7721 = vshrl.u32 %v7720, 7
    %v7722 = vsub.s32 %v7719, %v7721
    %v7723 = vrot.slane %v963, %v7722
    %v7725 = vunpack.c.l.s4 269488144
    %v7726 = vunpack.c.0.s8 %v7725
    %v7727 = vlaneseq
    %v7728 = vshrl.u32 %v7727, 7
    %v7729 = vsub.s32 %v7726, %v7728
    %v7730 = vrot.slane %v966, %v7729
    %v7732 = vunpack.c.l.s4 842150450
    %v7733 = vunpack.c.0.s8 %v7732
    %v7734 = vlaneseq
    %v7735 = vshrl.u32 %v7734, 7
    %v7736 = vsub.s32 %v7733, %v7735
    %v7737 = vrot.slane %v966, %v7736
    %v7739 = vunpack.c.l.s4 1414812756
    %v7740 = vunpack.c.0.s8 %v7739
    %v7741 = vlaneseq
    %v7742 = vshrl.u32 %v7741, 7
    %v7743 = vsub.s32 %v7740, %v7742
    %v7744 = vrot.slane %v966, %v7743
    %v7746 = vunpack.c.l.s4 1987475062
    %v7747 = vunpack.c.0.s8 %v7746
    %v7748 = vlaneseq
    %v7749 = vshrl.u32 %v7748, 7
    %v7750 = vsub.s32 %v7747, %v7749
    %v7751 = vrot.slane %v966, %v7750
    %v7753 = vunpack.c.l.s4 269488144
    %v7754 = vunpack.c.0.s8 %v7753
    %v7755 = vlaneseq
    %v7756 = vshrl.u32 %v7755, 7
    %v7757 = vsub.s32 %v7754, %v7756
    %v7758 = vrot.slane %v969, %v7757
    %v7760 = vunpack.c.l.s4 842150450
    %v7761 = vunpack.c.0.s8 %v7760
    %v7762 = vlaneseq
    %v7763 = vshrl.u32 %v7762, 7
    %v7764 = vsub.s32 %v7761, %v7763
    %v7765 = vrot.slane %v969, %v7764
    %v7767 = vunpack.c.l.s4 1414812756
    %v7768 = vunpack.c.0.s8 %v7767
    %v7769 = vlaneseq
    %v7770 = vshrl.u32 %v7769, 7
    %v7771 = vsub.s32 %v7768, %v7770
    %v7772 = vrot.slane %v969, %v7771
    %v7774 = vunpack.c.l.s4 1987475062
    %v7775 = vunpack.c.0.s8 %v7774
    %v7776 = vlaneseq
    %v7777 = vshrl.u32 %v7776, 7
    %v7778 = vsub.s32 %v7775, %v7777
    %v7779 = vrot.slane %v969, %v7778
    %v7781 = vunpack.c.l.s4 269488144
    %v7782 = vunpack.c.0.s8 %v7781
    %v7783 = vlaneseq
    %v7784 = vshrl.u32 %v7783, 7
    %v7785 = vsub.s32 %v7782, %v7784
    %v7786 = vrot.slane %v972, %v7785
    %v7788 = vunpack.c.l.s4 842150450
    %v7789 = vunpack.c.0.s8 %v7788
    %v7790 = vlaneseq
    %v7791 = vshrl.u32 %v7790, 7
    %v7792 = vsub.s32 %v7789, %v7791
    %v7793 = vrot.slane %v972, %v7792
    %v7795 = vunpack.c.l.s4 1414812756
    %v7796 = vunpack.c.0.s8 %v7795
    %v7797 = vlaneseq
    %v7798 = vshrl.u32 %v7797, 7
    %v7799 = vsub.s32 %v7796, %v7798
    %v7800 = vrot.slane %v972, %v7799
    %v7802 = vunpack.c.l.s4 1987475062
    %v7803 = vunpack.c.0.s8 %v7802
    %v7804 = vlaneseq
    %v7805 = vshrl.u32 %v7804, 7
    %v7806 = vsub.s32 %v7803, %v7805
    %v7807 = vrot.slane %v972, %v7806
    %v7809 = vunpack.c.l.s4 269488144
    %v7810 = vunpack.c.0.s8 %v7809
    %v7811 = vlaneseq
    %v7812 = vshrl.u32 %v7811, 7
    %v7813 = vsub.s32 %v7810, %v7812
    %v7814 = vrot.slane %v975, %v7813
    %v7816 = vunpack.c.l.s4 842150450
    %v7817 = vunpack.c.0.s8 %v7816
    %v7818 = vlaneseq
    %v7819 = vshrl.u32 %v7818, 7
    %v7820 = vsub.s32 %v7817, %v7819
    %v7821 = vrot.slane %v975, %v7820
    %v7823 = vunpack.c.l.s4 1414812756
    %v7824 = vunpack.c.0.s8 %v7823
    %v7825 = vlaneseq
    %v7826 = vshrl.u32 %v7825, 7
    %v7827 = vsub.s32 %v7824, %v7826
    %v7828 = vrot.slane %v975, %v7827
    %v7830 = vunpack.c.l.s4 1987475062
    %v7831 = vunpack.c.0.s8 %v7830
    %v7832 = vlaneseq
    %v7833 = vshrl.u32 %v7832, 7
    %v7834 = vsub.s32 %v7831, %v7833
    %v7835 = vrot.slane %v975, %v7834
    %v7837 = vunpack.c.l.s4 269488144
    %v7838 = vunpack.c.0.s8 %v7837
    %v7839 = vlaneseq
    %v7840 = vshrl.u32 %v7839, 7
    %v7841 = vsub.s32 %v7838, %v7840
    %v7842 = vrot.slane %v978, %v7841
    %v7844 = vunpack.c.l.s4 842150450
    %v7845 = vunpack.c.0.s8 %v7844
    %v7846 = vlaneseq
    %v7847 = vshrl.u32 %v7846, 7
    %v7848 = vsub.s32 %v7845, %v7847
    %v7849 = vrot.slane %v978, %v7848
    %v7851 = vunpack.c.l.s4 1414812756
    %v7852 = vunpack.c.0.s8 %v7851
    %v7853 = vlaneseq
    %v7854 = vshrl.u32 %v7853, 7
    %v7855 = vsub.s32 %v7852, %v7854
    %v7856 = vrot.slane %v978, %v7855
    %v7858 = vunpack.c.l.s4 1987475062
    %v7859 = vunpack.c.0.s8 %v7858
    %v7860 = vlaneseq
    %v7861 = vshrl.u32 %v7860, 7
    %v7862 = vsub.s32 %v7859, %v7861
    %v7863 = vrot.slane %v978, %v7862
    %v7865 = vunpack.c.l.s4 269488144
    %v7866 = vunpack.c.0.s8 %v7865
    %v7867 = vlaneseq
    %v7868 = vshrl.u32 %v7867, 7
    %v7869 = vsub.s32 %v7866, %v7868
    %v7870 = vrot.slane %v981, %v7869
    %v7872 = vunpack.c.l.s4 842150450
    %v7873 = vunpack.c.0.s8 %v7872
    %v7874 = vlaneseq
    %v7875 = vshrl.u32 %v7874, 7
    %v7876 = vsub.s32 %v7873, %v7875
    %v7877 = vrot.slane %v981, %v7876
    %v7879 = vunpack.c.l.s4 1414812756
    %v7880 = vunpack.c.0.s8 %v7879
    %v7881 = vlaneseq
    %v7882 = vshrl.u32 %v7881, 7
    %v7883 = vsub.s32 %v7880, %v7882
    %v7884 = vrot.slane %v981, %v7883
    %v7886 = vunpack.c.l.s4 1987475062
    %v7887 = vunpack.c.0.s8 %v7886
    %v7888 = vlaneseq
    %v7889 = vshrl.u32 %v7888, 7
    %v7890 = vsub.s32 %v7887, %v7889
    %v7891 = vrot.slane %v981, %v7890
    %v7893 = vunpack.c.l.s4 269488144
    %v7894 = vunpack.c.0.s8 %v7893
    %v7895 = vlaneseq
    %v7896 = vshrl.u32 %v7895, 7
    %v7897 = vsub.s32 %v7894, %v7896
    %v7898 = vrot.slane %v984, %v7897
    %v7900 = vunpack.c.l.s4 842150450
    %v7901 = vunpack.c.0.s8 %v7900
    %v7902 = vlaneseq
    %v7903 = vshrl.u32 %v7902, 7
    %v7904 = vsub.s32 %v7901, %v7903
    %v7905 = vrot.slane %v984, %v7904
    %v7907 = vunpack.c.l.s4 1414812756
    %v7908 = vunpack.c.0.s8 %v7907
    %v7909 = vlaneseq
    %v7910 = vshrl.u32 %v7909, 7
    %v7911 = vsub.s32 %v7908, %v7910
    %v7912 = vrot.slane %v984, %v7911
    %v7914 = vunpack.c.l.s4 1987475062
    %v7915 = vunpack.c.0.s8 %v7914
    %v7916 = vlaneseq
    %v7917 = vshrl.u32 %v7916, 7
    %v7918 = vsub.s32 %v7915, %v7917
    %v7919 = vrot.slane %v984, %v7918
    %v7921 = vunpack.c.l.s4 269488144
    %v7922 = vunpack.c.0.s8 %v7921
    %v7923 = vlaneseq
    %v7924 = vshrl.u32 %v7923, 7
    %v7925 = vsub.s32 %v7922, %v7924
    %v7926 = vrot.slane %v987, %v7925
    %v7928 = vunpack.c.l.s4 842150450
    %v7929 = vunpack.c.0.s8 %v7928
    %v7930 = vlaneseq
    %v7931 = vshrl.u32 %v7930, 7
    %v7932 = vsub.s32 %v7929, %v7931
    %v7933 = vrot.slane %v987, %v7932
    %v7935 = vunpack.c.l.s4 1414812756
    %v7936 = vunpack.c.0.s8 %v7935
    %v7937 = vlaneseq
    %v7938 = vshrl.u32 %v7937, 7
    %v7939 = vsub.s32 %v7936, %v7938
    %v7940 = vrot.slane %v987, %v7939
    %v7942 = vunpack.c.l.s4 1987475062
    %v7943 = vunpack.c.0.s8 %v7942
    %v7944 = vlaneseq
    %v7945 = vshrl.u32 %v7944, 7
    %v7946 = vsub.s32 %v7943, %v7945
    %v7947 = vrot.slane %v987, %v7946
    %v7948 = vcombine.low %v1234, %v1241
    %v7949 = vcombine.low %v1248, %v1255
    %v7951 = vunpack.c.l.s4 1983009808
    %v7952 = vunpack.c.0.s8 %v7951
    %v7953 = vlaneseq
    %v7954 = vshrl.u32 %v7953, 7
    %v7955 = vsub.s32 %v7952, %v7954
    %v7956 = vrot.slane %v7948, %v7955
    %v7958 = vunpack.c.l.s4 1983009808
    %v7959 = vunpack.c.0.s8 %v7958
    %v7960 = vlaneseq
    %v7961 = vshrl.u32 %v7960, 7
    %v7962 = vsub.s32 %v7959, %v7961
    %v7963 = vrot.slane %v7949, %v7962
    %v7964 = vcombine.low %v7956, %v7963
    %v7965 = vcombine.low %v1262, %v1269
    %v7966 = vcombine.low %v1276, %v1283
    %v7968 = vunpack.c.l.s4 1983009808
    %v7969 = vunpack.c.0.s8 %v7968
    %v7970 = vlaneseq
    %v7971 = vshrl.u32 %v7970, 7
    %v7972 = vsub.s32 %v7969, %v7971
    %v7973 = vrot.slane %v7965, %v7972
    %v7975 = vunpack.c.l.s4 1983009808
    %v7976 = vunpack.c.0.s8 %v7975
    %v7977 = vlaneseq
    %v7978 = vshrl.u32 %v7977, 7
    %v7979 = vsub.s32 %v7976, %v7978
    %v7980 = vrot.slane %v7966, %v7979
    %v7981 = vcombine.low %v7973, %v7980
    %v7982 = vcombine.low %v1290, %v1297
    %v7983 = vcombine.low %v1304, %v1311
    %v7985 = vunpack.c.l.s4 1983009808
    %v7986 = vunpack.c.0.s8 %v7985
    %v7987 = vlaneseq
    %v7988 = vshrl.u32 %v7987, 7
    %v7989 = vsub.s32 %v7986, %v7988
    %v7990 = vrot.slane %v7982, %v7989
    %v7992 = vunpack.c.l.s4 1983009808
    %v7993 = vunpack.c.0.s8 %v7992
    %v7994 = vlaneseq
    %v7995 = vshrl.u32 %v7994, 7
    %v7996 = vsub.s32 %v7993, %v7995
    %v7997 = vrot.slane %v7983, %v7996
    %v7998 = vcombine.low %v7990, %v7997
    %v7999 = vcombine.low %v1318, %v1325
    %v8000 = vcombine.low %v1332, %v1339
    %v8002 = vunpack.c.l.s4 1983009808
    %v8003 = vunpack.c.0.s8 %v8002
    %v8004 = vlaneseq
    %v8005 = vshrl.u32 %v8004, 7
    %v8006 = vsub.s32 %v8003, %v8005
    %v8007 = vrot.slane %v7999, %v8006
    %v8009 = vunpack.c.l.s4 1983009808
    %v8010 = vunpack.c.0.s8 %v8009
    %v8011 = vlaneseq
    %v8012 = vshrl.u32 %v8011, 7
    %v8013 = vsub.s32 %v8010, %v8012
    %v8014 = vrot.slane %v8000, %v8013
    %v8015 = vcombine.low %v8007, %v8014
    %v8016 = vcombine.low %v1346, %v1353
    %v8017 = vcombine.low %v1360, %v1367
    %v8019 = vunpack.c.l.s4 1983009808
    %v8020 = vunpack.c.0.s8 %v8019
    %v8021 = vlaneseq
    %v8022 = vshrl.u32 %v8021, 7
    %v8023 = vsub.s32 %v8020, %v8022
    %v8024 = vrot.slane %v8016, %v8023
    %v8026 = vunpack.c.l.s4 1983009808
    %v8027 = vunpack.c.0.s8 %v8026
    %v8028 = vlaneseq
    %v8029 = vshrl.u32 %v8028, 7
    %v8030 = vsub.s32 %v8027, %v8029
    %v8031 = vrot.slane %v8017, %v8030
    %v8032 = vcombine.low %v8024, %v8031
    %v8033 = vcombine.low %v1374, %v1381
    %v8034 = vcombine.low %v1388, %v1395
    %v8036 = vunpack.c.l.s4 1983009808
    %v8037 = vunpack.c.0.s8 %v8036
    %v8038 = vlaneseq
    %v8039 = vshrl.u32 %v8038, 7
    %v8040 = vsub.s32 %v8037, %v8039
    %v8041 = vrot.slane %v8033, %v8040
    %v8043 = vunpack.c.l.s4 1983009808
    %v8044 = vunpack.c.0.s8 %v8043
    %v8045 = vlaneseq
    %v8046 = vshrl.u32 %v8045, 7
    %v8047 = vsub.s32 %v8044, %v8046
    %v8048 = vrot.slane %v8034, %v8047
    %v8049 = vcombine.low %v8041, %v8048
    %v8050 = vcombine.low %v1402, %v1409
    %v8051 = vcombine.low %v1416, %v1423
    %v8053 = vunpack.c.l.s4 1983009808
    %v8054 = vunpack.c.0.s8 %v8053
    %v8055 = vlaneseq
    %v8056 = vshrl.u32 %v8055, 7
    %v8057 = vsub.s32 %v8054, %v8056
    %v8058 = vrot.slane %v8050, %v8057
    %v8060 = vunpack.c.l.s4 1983009808
    %v8061 = vunpack.c.0.s8 %v8060
    %v8062 = vlaneseq
    %v8063 = vshrl.u32 %v8062, 7
    %v8064 = vsub.s32 %v8061, %v8063
    %v8065 = vrot.slane %v8051, %v8064
    %v8066 = vcombine.low %v8058, %v8065
    %v8067 = vcombine.low %v1430, %v1437
    %v8068 = vcombine.low %v1444, %v1451
    %v8070 = vunpack.c.l.s4 1983009808
    %v8071 = vunpack.c.0.s8 %v8070
    %v8072 = vlaneseq
    %v8073 = vshrl.u32 %v8072, 7
    %v8074 = vsub.s32 %v8071, %v8073
    %v8075 = vrot.slane %v8067, %v8074
    %v8077 = vunpack.c.l.s4 1983009808
    %v8078 = vunpack.c.0.s8 %v8077
    %v8079 = vlaneseq
    %v8080 = vshrl.u32 %v8079, 7
    %v8081 = vsub.s32 %v8078, %v8080
    %v8082 = vrot.slane %v8068, %v8081
    %v8083 = vcombine.low %v8075, %v8082
    %v8084 = vcombine.low %v1458, %v1465
    %v8085 = vcombine.low %v1472, %v1479
    %v8087 = vunpack.c.l.s4 1983009808
    %v8088 = vunpack.c.0.s8 %v8087
    %v8089 = vlaneseq
    %v8090 = vshrl.u32 %v8089, 7
    %v8091 = vsub.s32 %v8088, %v8090
    %v8092 = vrot.slane %v8084, %v8091
    %v8094 = vunpack.c.l.s4 1983009808
    %v8095 = vunpack.c.0.s8 %v8094
    %v8096 = vlaneseq
    %v8097 = vshrl.u32 %v8096, 7
    %v8098 = vsub.s32 %v8095, %v8097
    %v8099 = vrot.slane %v8085, %v8098
    %v8100 = vcombine.low %v8092, %v8099
    %v8101 = vcombine.low %v1486, %v1493
    %v8102 = vcombine.low %v1500, %v1507
    %v8104 = vunpack.c.l.s4 1983009808
    %v8105 = vunpack.c.0.s8 %v8104
    %v8106 = vlaneseq
    %v8107 = vshrl.u32 %v8106, 7
    %v8108 = vsub.s32 %v8105, %v8107
    %v8109 = vrot.slane %v8101, %v8108
    %v8111 = vunpack.c.l.s4 1983009808
    %v8112 = vunpack.c.0.s8 %v8111
    %v8113 = vlaneseq
    %v8114 = vshrl.u32 %v8113, 7
    %v8115 = vsub.s32 %v8112, %v8114
    %v8116 = vrot.slane %v8102, %v8115
    %v8117 = vcombine.low %v8109, %v8116
    %v8118 = vcombine.low %v1514, %v1521
    %v8119 = vcombine.low %v1528, %v1535
    %v8121 = vunpack.c.l.s4 1983009808
    %v8122 = vunpack.c.0.s8 %v8121
    %v8123 = vlaneseq
    %v8124 = vshrl.u32 %v8123, 7
    %v8125 = vsub.s32 %v8122, %v8124
    %v8126 = vrot.slane %v8118, %v8125
    %v8128 = vunpack.c.l.s4 1983009808
    %v8129 = vunpack.c.0.s8 %v8128
    %v8130 = vlaneseq
    %v8131 = vshrl.u32 %v8130, 7
    %v8132 = vsub.s32 %v8129, %v8131
    %v8133 = vrot.slane %v8119, %v8132
    %v8134 = vcombine.low %v8126, %v8133
    %v8135 = vcombine.low %v1542, %v1549
    %v8136 = vcombine.low %v1556, %v1563
    %v8138 = vunpack.c.l.s4 1983009808
    %v8139 = vunpack.c.0.s8 %v8138
    %v8140 = vlaneseq
    %v8141 = vshrl.u32 %v8140, 7
    %v8142 = vsub.s32 %v8139, %v8141
    %v8143 = vrot.slane %v8135, %v8142
    %v8145 = vunpack.c.l.s4 1983009808
    %v8146 = vunpack.c.0.s8 %v8145
    %v8147 = vlaneseq
    %v8148 = vshrl.u32 %v8147, 7
    %v8149 = vsub.s32 %v8146, %v8148
    %v8150 = vrot.slane %v8136, %v8149
    %v8151 = vcombine.low %v8143, %v8150
    %v8152 = vcombine.low %v1570, %v1577
    %v8153 = vcombine.low %v1584, %v1591
    %v8155 = vunpack.c.l.s4 1983009808
    %v8156 = vunpack.c.0.s8 %v8155
    %v8157 = vlaneseq
    %v8158 = vshrl.u32 %v8157, 7
    %v8159 = vsub.s32 %v8156, %v8158
    %v8160 = vrot.slane %v8152, %v8159
    %v8162 = vunpack.c.l.s4 1983009808
    %v8163 = vunpack.c.0.s8 %v8162
    %v8164 = vlaneseq
    %v8165 = vshrl.u32 %v8164, 7
    %v8166 = vsub.s32 %v8163, %v8165
    %v8167 = vrot.slane %v8153, %v8166
    %v8168 = vcombine.low %v8160, %v8167
    %v8169 = vcombine.low %v1598, %v1605
    %v8170 = vcombine.low %v1612, %v1619
    %v8172 = vunpack.c.l.s4 1983009808
    %v8173 = vunpack.c.0.s8 %v8172
    %v8174 = vlaneseq
    %v8175 = vshrl.u32 %v8174, 7
    %v8176 = vsub.s32 %v8173, %v8175
    %v8177 = vrot.slane %v8169, %v8176
    %v8179 = vunpack.c.l.s4 1983009808
    %v8180 = vunpack.c.0.s8 %v8179
    %v8181 = vlaneseq
    %v8182 = vshrl.u32 %v8181, 7
    %v8183 = vsub.s32 %v8180, %v8182
    %v8184 = vrot.slane %v8170, %v8183
    %v8185 = vcombine.low %v8177, %v8184
    %v8186 = vcombine.low %v1626, %v1633
    %v8187 = vcombine.low %v1640, %v1647
    %v8189 = vunpack.c.l.s4 1983009808
    %v8190 = vunpack.c.0.s8 %v8189
    %v8191 = vlaneseq
    %v8192 = vshrl.u32 %v8191, 7
    %v8193 = vsub.s32 %v8190, %v8192
    %v8194 = vrot.slane %v8186, %v8193
    %v8196 = vunpack.c.l.s4 1983009808
    %v8197 = vunpack.c.0.s8 %v8196
    %v8198 = vlaneseq
    %v8199 = vshrl.u32 %v8198, 7
    %v8200 = vsub.s32 %v8197, %v8199
    %v8201 = vrot.slane %v8187, %v8200
    %v8202 = vcombine.low %v8194, %v8201
    %v8203 = vcombine.low %v1654, %v1661
    %v8204 = vcombine.low %v1668, %v1675
    %v8206 = vunpack.c.l.s4 1983009808
    %v8207 = vunpack.c.0.s8 %v8206
    %v8208 = vlaneseq
    %v8209 = vshrl.u32 %v8208, 7
    %v8210 = vsub.s32 %v8207, %v8209
    %v8211 = vrot.slane %v8203, %v8210
    %v8213 = vunpack.c.l.s4 1983009808
    %v8214 = vunpack.c.0.s8 %v8213
    %v8215 = vlaneseq
    %v8216 = vshrl.u32 %v8215, 7
    %v8217 = vsub.s32 %v8214, %v8216
    %v8218 = vrot.slane %v8204, %v8217
    %v8219 = vcombine.low %v8211, %v8218
    %v8220 = vcombine.low %v1682, %v1689
    %v8221 = vcombine.low %v1696, %v1703
    %v8223 = vunpack.c.l.s4 1983009808
    %v8224 = vunpack.c.0.s8 %v8223
    %v8225 = vlaneseq
    %v8226 = vshrl.u32 %v8225, 7
    %v8227 = vsub.s32 %v8224, %v8226
    %v8228 = vrot.slane %v8220, %v8227
    %v8230 = vunpack.c.l.s4 1983009808
    %v8231 = vunpack.c.0.s8 %v8230
    %v8232 = vlaneseq
    %v8233 = vshrl.u32 %v8232, 7
    %v8234 = vsub.s32 %v8231, %v8233
    %v8235 = vrot.slane %v8221, %v8234
    %v8236 = vcombine.low %v8228, %v8235
    %v8237 = vcombine.low %v1710, %v1717
    %v8238 = vcombine.low %v1724, %v1731
    %v8240 = vunpack.c.l.s4 1983009808
    %v8241 = vunpack.c.0.s8 %v8240
    %v8242 = vlaneseq
    %v8243 = vshrl.u32 %v8242, 7
    %v8244 = vsub.s32 %v8241, %v8243
    %v8245 = vrot.slane %v8237, %v8244
    %v8247 = vunpack.c.l.s4 1983009808
    %v8248 = vunpack.c.0.s8 %v8247
    %v8249 = vlaneseq
    %v8250 = vshrl.u32 %v8249, 7
    %v8251 = vsub.s32 %v8248, %v8250
    %v8252 = vrot.slane %v8238, %v8251
    %v8253 = vcombine.low %v8245, %v8252
    %v8254 = vcombine.low %v1738, %v1745
    %v8255 = vcombine.low %v1752, %v1759
    %v8257 = vunpack.c.l.s4 1983009808
    %v8258 = vunpack.c.0.s8 %v8257
    %v8259 = vlaneseq
    %v8260 = vshrl.u32 %v8259, 7
    %v8261 = vsub.s32 %v8258, %v8260
    %v8262 = vrot.slane %v8254, %v8261
    %v8264 = vunpack.c.l.s4 1983009808
    %v8265 = vunpack.c.0.s8 %v8264
    %v8266 = vlaneseq
    %v8267 = vshrl.u32 %v8266, 7
    %v8268 = vsub.s32 %v8265, %v8267
    %v8269 = vrot.slane %v8255, %v8268
    %v8270 = vcombine.low %v8262, %v8269
    %v8271 = vcombine.low %v1766, %v1773
    %v8272 = vcombine.low %v1780, %v1787
    %v8274 = vunpack.c.l.s4 1983009808
    %v8275 = vunpack.c.0.s8 %v8274
    %v8276 = vlaneseq
    %v8277 = vshrl.u32 %v8276, 7
    %v8278 = vsub.s32 %v8275, %v8277
    %v8279 = vrot.slane %v8271, %v8278
    %v8281 = vunpack.c.l.s4 1983009808
    %v8282 = vunpack.c.0.s8 %v8281
    %v8283 = vlaneseq
    %v8284 = vshrl.u32 %v8283, 7
    %v8285 = vsub.s32 %v8282, %v8284
    %v8286 = vrot.slane %v8272, %v8285
    %v8287 = vcombine.low %v8279, %v8286
    %v8288 = vcombine.low %v1794, %v1801
    %v8289 = vcombine.low %v1808, %v1815
    %v8291 = vunpack.c.l.s4 1983009808
    %v8292 = vunpack.c.0.s8 %v8291
    %v8293 = vlaneseq
    %v8294 = vshrl.u32 %v8293, 7
    %v8295 = vsub.s32 %v8292, %v8294
    %v8296 = vrot.slane %v8288, %v8295
    %v8298 = vunpack.c.l.s4 1983009808
    %v8299 = vunpack.c.0.s8 %v8298
    %v8300 = vlaneseq
    %v8301 = vshrl.u32 %v8300, 7
    %v8302 = vsub.s32 %v8299, %v8301
    %v8303 = vrot.slane %v8289, %v8302
    %v8304 = vcombine.low %v8296, %v8303
    %v8305 = vcombine.low %v1822, %v1829
    %v8306 = vcombine.low %v1836, %v1843
    %v8308 = vunpack.c.l.s4 1983009808
    %v8309 = vunpack.c.0.s8 %v8308
    %v8310 = vlaneseq
    %v8311 = vshrl.u32 %v8310, 7
    %v8312 = vsub.s32 %v8309, %v8311
    %v8313 = vrot.slane %v8305, %v8312
    %v8315 = vunpack.c.l.s4 1983009808
    %v8316 = vunpack.c.0.s8 %v8315
    %v8317 = vlaneseq
    %v8318 = vshrl.u32 %v8317, 7
    %v8319 = vsub.s32 %v8316, %v8318
    %v8320 = vrot.slane %v8306, %v8319
    %v8321 = vcombine.low %v8313, %v8320
    %v8322 = vcombine.low %v1850, %v1857
    %v8323 = vcombine.low %v1864, %v1871
    %v8325 = vunpack.c.l.s4 1983009808
    %v8326 = vunpack.c.0.s8 %v8325
    %v8327 = vlaneseq
    %v8328 = vshrl.u32 %v8327, 7
    %v8329 = vsub.s32 %v8326, %v8328
    %v8330 = vrot.slane %v8322, %v8329
    %v8332 = vunpack.c.l.s4 1983009808
    %v8333 = vunpack.c.0.s8 %v8332
    %v8334 = vlaneseq
    %v8335 = vshrl.u32 %v8334, 7
    %v8336 = vsub.s32 %v8333, %v8335
    %v8337 = vrot.slane %v8323, %v8336
    %v8338 = vcombine.low %v8330, %v8337
    %v8339 = vcombine.low %v1878, %v1885
    %v8340 = vcombine.low %v1892, %v1899
    %v8342 = vunpack.c.l.s4 1983009808
    %v8343 = vunpack.c.0.s8 %v8342
    %v8344 = vlaneseq
    %v8345 = vshrl.u32 %v8344, 7
    %v8346 = vsub.s32 %v8343, %v8345
    %v8347 = vrot.slane %v8339, %v8346
    %v8349 = vunpack.c.l.s4 1983009808
    %v8350 = vunpack.c.0.s8 %v8349
    %v8351 = vlaneseq
    %v8352 = vshrl.u32 %v8351, 7
    %v8353 = vsub.s32 %v8350, %v8352
    %v8354 = vrot.slane %v8340, %v8353
    %v8355 = vcombine.low %v8347, %v8354
    %v8356 = vcombine.low %v1906, %v1913
    %v8357 = vcombine.low %v1920, %v1927
    %v8359 = vunpack.c.l.s4 1983009808
    %v8360 = vunpack.c.0.s8 %v8359
    %v8361 = vlaneseq
    %v8362 = vshrl.u32 %v8361, 7
    %v8363 = vsub.s32 %v8360, %v8362
    %v8364 = vrot.slane %v8356, %v8363
    %v8366 = vunpack.c.l.s4 1983009808
    %v8367 = vunpack.c.0.s8 %v8366
    %v8368 = vlaneseq
    %v8369 = vshrl.u32 %v8368, 7
    %v8370 = vsub.s32 %v8367, %v8369
    %v8371 = vrot.slane %v8357, %v8370
    %v8372 = vcombine.low %v8364, %v8371
    %v8373 = vcombine.low %v1934, %v1941
    %v8374 = vcombine.low %v1948, %v1955
    %v8376 = vunpack.c.l.s4 1983009808
    %v8377 = vunpack.c.0.s8 %v8376
    %v8378 = vlaneseq
    %v8379 = vshrl.u32 %v8378, 7
    %v8380 = vsub.s32 %v8377, %v8379
    %v8381 = vrot.slane %v8373, %v8380
    %v8383 = vunpack.c.l.s4 1983009808
    %v8384 = vunpack.c.0.s8 %v8383
    %v8385 = vlaneseq
    %v8386 = vshrl.u32 %v8385, 7
    %v8387 = vsub.s32 %v8384, %v8386
    %v8388 = vrot.slane %v8374, %v8387
    %v8389 = vcombine.low %v8381, %v8388
    %v8390 = vcombine.low %v1962, %v1969
    %v8391 = vcombine.low %v1976, %v1983
    %v8393 = vunpack.c.l.s4 1983009808
    %v8394 = vunpack.c.0.s8 %v8393
    %v8395 = vlaneseq
    %v8396 = vshrl.u32 %v8395, 7
    %v8397 = vsub.s32 %v8394, %v8396
    %v8398 = vrot.slane %v8390, %v8397
    %v8400 = vunpack.c.l.s4 1983009808
    %v8401 = vunpack.c.0.s8 %v8400
    %v8402 = vlaneseq
    %v8403 = vshrl.u32 %v8402, 7
    %v8404 = vsub.s32 %v8401, %v8403
    %v8405 = vrot.slane %v8391, %v8404
    %v8406 = vcombine.low %v8398, %v8405
    %v8407 = vcombine.low %v1990, %v1997
    %v8408 = vcombine.low %v2004, %v2011
    %v8410 = vunpack.c.l.s4 1983009808
    %v8411 = vunpack.c.0.s8 %v8410
    %v8412 = vlaneseq
    %v8413 = vshrl.u32 %v8412, 7
    %v8414 = vsub.s32 %v8411, %v8413
    %v8415 = vrot.slane %v8407, %v8414
    %v8417 = vunpack.c.l.s4 1983009808
    %v8418 = vunpack.c.0.s8 %v8417
    %v8419 = vlaneseq
    %v8420 = vshrl.u32 %v8419, 7
    %v8421 = vsub.s32 %v8418, %v8420
    %v8422 = vrot.slane %v8408, %v8421
    %v8423 = vcombine.low %v8415, %v8422
    %v8424 = vcombine.low %v2018, %v2025
    %v8425 = vcombine.low %v2032, %v2039
    %v8427 = vunpack.c.l.s4 1983009808
    %v8428 = vunpack.c.0.s8 %v8427
    %v8429 = vlaneseq
    %v8430 = vshrl.u32 %v8429, 7
    %v8431 = vsub.s32 %v8428, %v8430
    %v8432 = vrot.slane %v8424, %v8431
    %v8434 = vunpack.c.l.s4 1983009808
    %v8435 = vunpack.c.0.s8 %v8434
    %v8436 = vlaneseq
    %v8437 = vshrl.u32 %v8436, 7
    %v8438 = vsub.s32 %v8435, %v8437
    %v8439 = vrot.slane %v8425, %v8438
    %v8440 = vcombine.low %v8432, %v8439
    %v8441 = vcombine.low %v2046, %v2053
    %v8442 = vcombine.low %v2060, %v2067
    %v8444 = vunpack.c.l.s4 1983009808
    %v8445 = vunpack.c.0.s8 %v8444
    %v8446 = vlaneseq
    %v8447 = vshrl.u32 %v8446, 7
    %v8448 = vsub.s32 %v8445, %v8447
    %v8449 = vrot.slane %v8441, %v8448
    %v8451 = vunpack.c.l.s4 1983009808
    %v8452 = vunpack.c.0.s8 %v8451
    %v8453 = vlaneseq
    %v8454 = vshrl.u32 %v8453, 7
    %v8455 = vsub.s32 %v8452, %v8454
    %v8456 = vrot.slane %v8442, %v8455
    %v8457 = vcombine.low %v8449, %v8456
    %v8458 = vcombine.low %v2074, %v2081
    %v8459 = vcombine.low %v2088, %v2095
    %v8461 = vunpack.c.l.s4 1983009808
    %v8462 = vunpack.c.0.s8 %v8461
    %v8463 = vlaneseq
    %v8464 = vshrl.u32 %v8463, 7
    %v8465 = vsub.s32 %v8462, %v8464
    %v8466 = vrot.slane %v8458, %v8465
    %v8468 = vunpack.c.l.s4 1983009808
    %v8469 = vunpack.c.0.s8 %v8468
    %v8470 = vlaneseq
    %v8471 = vshrl.u32 %v8470, 7
    %v8472 = vsub.s32 %v8469, %v8471
    %v8473 = vrot.slane %v8459, %v8472
    %v8474 = vcombine.low %v8466, %v8473
    %v8475 = vcombine.low %v2102, %v2109
    %v8476 = vcombine.low %v2116, %v2123
    %v8478 = vunpack.c.l.s4 1983009808
    %v8479 = vunpack.c.0.s8 %v8478
    %v8480 = vlaneseq
    %v8481 = vshrl.u32 %v8480, 7
    %v8482 = vsub.s32 %v8479, %v8481
    %v8483 = vrot.slane %v8475, %v8482
    %v8485 = vunpack.c.l.s4 1983009808
    %v8486 = vunpack.c.0.s8 %v8485
    %v8487 = vlaneseq
    %v8488 = vshrl.u32 %v8487, 7
    %v8489 = vsub.s32 %v8486, %v8488
    %v8490 = vrot.slane %v8476, %v8489
    %v8491 = vcombine.low %v8483, %v8490
    %v8492 = vcombine.low %v2130, %v2137
    %v8493 = vcombine.low %v2144, %v2151
    %v8495 = vunpack.c.l.s4 1983009808
    %v8496 = vunpack.c.0.s8 %v8495
    %v8497 = vlaneseq
    %v8498 = vshrl.u32 %v8497, 7
    %v8499 = vsub.s32 %v8496, %v8498
    %v8500 = vrot.slane %v8492, %v8499
    %v8502 = vunpack.c.l.s4 1983009808
    %v8503 = vunpack.c.0.s8 %v8502
    %v8504 = vlaneseq
    %v8505 = vshrl.u32 %v8504, 7
    %v8506 = vsub.s32 %v8503, %v8505
    %v8507 = vrot.slane %v8493, %v8506
    %v8508 = vcombine.low %v8500, %v8507
    %v8509 = vcombine.low %v2158, %v2165
    %v8510 = vcombine.low %v2172, %v2179
    %v8512 = vunpack.c.l.s4 1983009808
    %v8513 = vunpack.c.0.s8 %v8512
    %v8514 = vlaneseq
    %v8515 = vshrl.u32 %v8514, 7
    %v8516 = vsub.s32 %v8513, %v8515
    %v8517 = vrot.slane %v8509, %v8516
    %v8519 = vunpack.c.l.s4 1983009808
    %v8520 = vunpack.c.0.s8 %v8519
    %v8521 = vlaneseq
    %v8522 = vshrl.u32 %v8521, 7
    %v8523 = vsub.s32 %v8520, %v8522
    %v8524 = vrot.slane %v8510, %v8523
    %v8525 = vcombine.low %v8517, %v8524
    %v8526 = vcombine.low %v2186, %v2193
    %v8527 = vcombine.low %v2200, %v2207
    %v8529 = vunpack.c.l.s4 1983009808
    %v8530 = vunpack.c.0.s8 %v8529
    %v8531 = vlaneseq
    %v8532 = vshrl.u32 %v8531, 7
    %v8533 = vsub.s32 %v8530, %v8532
    %v8534 = vrot.slane %v8526, %v8533
    %v8536 = vunpack.c.l.s4 1983009808
    %v8537 = vunpack.c.0.s8 %v8536
    %v8538 = vlaneseq
    %v8539 = vshrl.u32 %v8538, 7
    %v8540 = vsub.s32 %v8537, %v8539
    %v8541 = vrot.slane %v8527, %v8540
    %v8542 = vcombine.low %v8534, %v8541
    %v8543 = vcombine.low %v2214, %v2221
    %v8544 = vcombine.low %v2228, %v2235
    %v8546 = vunpack.c.l.s4 1983009808
    %v8547 = vunpack.c.0.s8 %v8546
    %v8548 = vlaneseq
    %v8549 = vshrl.u32 %v8548, 7
    %v8550 = vsub.s32 %v8547, %v8549
    %v8551 = vrot.slane %v8543, %v8550
    %v8553 = vunpack.c.l.s4 1983009808
    %v8554 = vunpack.c.0.s8 %v8553
    %v8555 = vlaneseq
    %v8556 = vshrl.u32 %v8555, 7
    %v8557 = vsub.s32 %v8554, %v8556
    %v8558 = vrot.slane %v8544, %v8557
    %v8559 = vcombine.low %v8551, %v8558
    %v8560 = vcombine.low %v2242, %v2249
    %v8561 = vcombine.low %v2256, %v2263
    %v8563 = vunpack.c.l.s4 1983009808
    %v8564 = vunpack.c.0.s8 %v8563
    %v8565 = vlaneseq
    %v8566 = vshrl.u32 %v8565, 7
    %v8567 = vsub.s32 %v8564, %v8566
    %v8568 = vrot.slane %v8560, %v8567
    %v8570 = vunpack.c.l.s4 1983009808
    %v8571 = vunpack.c.0.s8 %v8570
    %v8572 = vlaneseq
    %v8573 = vshrl.u32 %v8572, 7
    %v8574 = vsub.s32 %v8571, %v8573
    %v8575 = vrot.slane %v8561, %v8574
    %v8576 = vcombine.low %v8568, %v8575
    %v8577 = vcombine.low %v2270, %v2277
    %v8578 = vcombine.low %v2284, %v2291
    %v8580 = vunpack.c.l.s4 1983009808
    %v8581 = vunpack.c.0.s8 %v8580
    %v8582 = vlaneseq
    %v8583 = vshrl.u32 %v8582, 7
    %v8584 = vsub.s32 %v8581, %v8583
    %v8585 = vrot.slane %v8577, %v8584
    %v8587 = vunpack.c.l.s4 1983009808
    %v8588 = vunpack.c.0.s8 %v8587
    %v8589 = vlaneseq
    %v8590 = vshrl.u32 %v8589, 7
    %v8591 = vsub.s32 %v8588, %v8590
    %v8592 = vrot.slane %v8578, %v8591
    %v8593 = vcombine.low %v8585, %v8592
    %v8594 = vcombine.low %v2298, %v2305
    %v8595 = vcombine.low %v2312, %v2319
    %v8597 = vunpack.c.l.s4 1983009808
    %v8598 = vunpack.c.0.s8 %v8597
    %v8599 = vlaneseq
    %v8600 = vshrl.u32 %v8599, 7
    %v8601 = vsub.s32 %v8598, %v8600
    %v8602 = vrot.slane %v8594, %v8601
    %v8604 = vunpack.c.l.s4 1983009808
    %v8605 = vunpack.c.0.s8 %v8604
    %v8606 = vlaneseq
    %v8607 = vshrl.u32 %v8606, 7
    %v8608 = vsub.s32 %v8605, %v8607
    %v8609 = vrot.slane %v8595, %v8608
    %v8610 = vcombine.low %v8602, %v8609
    %v8611 = vcombine.low %v2326, %v2333
    %v8612 = vcombine.low %v2340, %v2347
    %v8614 = vunpack.c.l.s4 1983009808
    %v8615 = vunpack.c.0.s8 %v8614
    %v8616 = vlaneseq
    %v8617 = vshrl.u32 %v8616, 7
    %v8618 = vsub.s32 %v8615, %v8617
    %v8619 = vrot.slane %v8611, %v8618
    %v8621 = vunpack.c.l.s4 1983009808
    %v8622 = vunpack.c.0.s8 %v8621
    %v8623 = vlaneseq
    %v8624 = vshrl.u32 %v8623, 7
    %v8625 = vsub.s32 %v8622, %v8624
    %v8626 = vrot.slane %v8612, %v8625
    %v8627 = vcombine.low %v8619, %v8626
    %v8628 = vcombine.low %v2354, %v2361
    %v8629 = vcombine.low %v2368, %v2375
    %v8631 = vunpack.c.l.s4 1983009808
    %v8632 = vunpack.c.0.s8 %v8631
    %v8633 = vlaneseq
    %v8634 = vshrl.u32 %v8633, 7
    %v8635 = vsub.s32 %v8632, %v8634
    %v8636 = vrot.slane %v8628, %v8635
    %v8638 = vunpack.c.l.s4 1983009808
    %v8639 = vunpack.c.0.s8 %v8638
    %v8640 = vlaneseq
    %v8641 = vshrl.u32 %v8640, 7
    %v8642 = vsub.s32 %v8639, %v8641
    %v8643 = vrot.slane %v8629, %v8642
    %v8644 = vcombine.low %v8636, %v8643
    %v8645 = vcombine.low %v2382, %v2389
    %v8646 = vcombine.low %v2396, %v2403
    %v8648 = vunpack.c.l.s4 1983009808
    %v8649 = vunpack.c.0.s8 %v8648
    %v8650 = vlaneseq
    %v8651 = vshrl.u32 %v8650, 7
    %v8652 = vsub.s32 %v8649, %v8651
    %v8653 = vrot.slane %v8645, %v8652
    %v8655 = vunpack.c.l.s4 1983009808
    %v8656 = vunpack.c.0.s8 %v8655
    %v8657 = vlaneseq
    %v8658 = vshrl.u32 %v8657, 7
    %v8659 = vsub.s32 %v8656, %v8658
    %v8660 = vrot.slane %v8646, %v8659
    %v8661 = vcombine.low %v8653, %v8660
    %v8662 = vcombine.low %v2410, %v2417
    %v8663 = vcombine.low %v2424, %v2431
    %v8665 = vunpack.c.l.s4 1983009808
    %v8666 = vunpack.c.0.s8 %v8665
    %v8667 = vlaneseq
    %v8668 = vshrl.u32 %v8667, 7
    %v8669 = vsub.s32 %v8666, %v8668
    %v8670 = vrot.slane %v8662, %v8669
    %v8672 = vunpack.c.l.s4 1983009808
    %v8673 = vunpack.c.0.s8 %v8672
    %v8674 = vlaneseq
    %v8675 = vshrl.u32 %v8674, 7
    %v8676 = vsub.s32 %v8673, %v8675
    %v8677 = vrot.slane %v8663, %v8676
    %v8678 = vcombine.low %v8670, %v8677
    %v8679 = vcombine.low %v2438, %v2445
    %v8680 = vcombine.low %v2452, %v2459
    %v8682 = vunpack.c.l.s4 1983009808
    %v8683 = vunpack.c.0.s8 %v8682
    %v8684 = vlaneseq
    %v8685 = vshrl.u32 %v8684, 7
    %v8686 = vsub.s32 %v8683, %v8685
    %v8687 = vrot.slane %v8679, %v8686
    %v8689 = vunpack.c.l.s4 1983009808
    %v8690 = vunpack.c.0.s8 %v8689
    %v8691 = vlaneseq
    %v8692 = vshrl.u32 %v8691, 7
    %v8693 = vsub.s32 %v8690, %v8692
    %v8694 = vrot.slane %v8680, %v8693
    %v8695 = vcombine.low %v8687, %v8694
    %v8696 = vcombine.low %v2466, %v2473
    %v8697 = vcombine.low %v2480, %v2487
    %v8699 = vunpack.c.l.s4 1983009808
    %v8700 = vunpack.c.0.s8 %v8699
    %v8701 = vlaneseq
    %v8702 = vshrl.u32 %v8701, 7
    %v8703 = vsub.s32 %v8700, %v8702
    %v8704 = vrot.slane %v8696, %v8703
    %v8706 = vunpack.c.l.s4 1983009808
    %v8707 = vunpack.c.0.s8 %v8706
    %v8708 = vlaneseq
    %v8709 = vshrl.u32 %v8708, 7
    %v8710 = vsub.s32 %v8707, %v8709
    %v8711 = vrot.slane %v8697, %v8710
    %v8712 = vcombine.low %v8704, %v8711
    %v8713 = vcombine.low %v2494, %v2501
    %v8714 = vcombine.low %v2508, %v2515
    %v8716 = vunpack.c.l.s4 1983009808
    %v8717 = vunpack.c.0.s8 %v8716
    %v8718 = vlaneseq
    %v8719 = vshrl.u32 %v8718, 7
    %v8720 = vsub.s32 %v8717, %v8719
    %v8721 = vrot.slane %v8713, %v8720
    %v8723 = vunpack.c.l.s4 1983009808
    %v8724 = vunpack.c.0.s8 %v8723
    %v8725 = vlaneseq
    %v8726 = vshrl.u32 %v8725, 7
    %v8727 = vsub.s32 %v8724, %v8726
    %v8728 = vrot.slane %v8714, %v8727
    %v8729 = vcombine.low %v8721, %v8728
    %v8730 = vcombine.low %v2522, %v2529
    %v8731 = vcombine.low %v2536, %v2543
    %v8733 = vunpack.c.l.s4 1983009808
    %v8734 = vunpack.c.0.s8 %v8733
    %v8735 = vlaneseq
    %v8736 = vshrl.u32 %v8735, 7
    %v8737 = vsub.s32 %v8734, %v8736
    %v8738 = vrot.slane %v8730, %v8737
    %v8740 = vunpack.c.l.s4 1983009808
    %v8741 = vunpack.c.0.s8 %v8740
    %v8742 = vlaneseq
    %v8743 = vshrl.u32 %v8742, 7
    %v8744 = vsub.s32 %v8741, %v8743
    %v8745 = vrot.slane %v8731, %v8744
    %v8746 = vcombine.low %v8738, %v8745
    %v8747 = vcombine.low %v2550, %v2557
    %v8748 = vcombine.low %v2564, %v2571
    %v8750 = vunpack.c.l.s4 1983009808
    %v8751 = vunpack.c.0.s8 %v8750
    %v8752 = vlaneseq
    %v8753 = vshrl.u32 %v8752, 7
    %v8754 = vsub.s32 %v8751, %v8753
    %v8755 = vrot.slane %v8747, %v8754
    %v8757 = vunpack.c.l.s4 1983009808
    %v8758 = vunpack.c.0.s8 %v8757
    %v8759 = vlaneseq
    %v8760 = vshrl.u32 %v8759, 7
    %v8761 = vsub.s32 %v8758, %v8760
    %v8762 = vrot.slane %v8748, %v8761
    %v8763 = vcombine.low %v8755, %v8762
    %v8764 = vcombine.low %v2578, %v2585
    %v8765 = vcombine.low %v2592, %v2599
    %v8767 = vunpack.c.l.s4 1983009808
    %v8768 = vunpack.c.0.s8 %v8767
    %v8769 = vlaneseq
    %v8770 = vshrl.u32 %v8769, 7
    %v8771 = vsub.s32 %v8768, %v8770
    %v8772 = vrot.slane %v8764, %v8771
    %v8774 = vunpack.c.l.s4 1983009808
    %v8775 = vunpack.c.0.s8 %v8774
    %v8776 = vlaneseq
    %v8777 = vshrl.u32 %v8776, 7
    %v8778 = vsub.s32 %v8775, %v8777
    %v8779 = vrot.slane %v8765, %v8778
    %v8780 = vcombine.low %v8772, %v8779
    %v8781 = vcombine.low %v2606, %v2613
    %v8782 = vcombine.low %v2620, %v2627
    %v8784 = vunpack.c.l.s4 1983009808
    %v8785 = vunpack.c.0.s8 %v8784
    %v8786 = vlaneseq
    %v8787 = vshrl.u32 %v8786, 7
    %v8788 = vsub.s32 %v8785, %v8787
    %v8789 = vrot.slane %v8781, %v8788
    %v8791 = vunpack.c.l.s4 1983009808
    %v8792 = vunpack.c.0.s8 %v8791
    %v8793 = vlaneseq
    %v8794 = vshrl.u32 %v8793, 7
    %v8795 = vsub.s32 %v8792, %v8794
    %v8796 = vrot.slane %v8782, %v8795
    %v8797 = vcombine.low %v8789, %v8796
    %v8798 = vcombine.low %v2634, %v2641
    %v8799 = vcombine.low %v2648, %v2655
    %v8801 = vunpack.c.l.s4 1983009808
    %v8802 = vunpack.c.0.s8 %v8801
    %v8803 = vlaneseq
    %v8804 = vshrl.u32 %v8803, 7
    %v8805 = vsub.s32 %v8802, %v8804
    %v8806 = vrot.slane %v8798, %v8805
    %v8808 = vunpack.c.l.s4 1983009808
    %v8809 = vunpack.c.0.s8 %v8808
    %v8810 = vlaneseq
    %v8811 = vshrl.u32 %v8810, 7
    %v8812 = vsub.s32 %v8809, %v8811
    %v8813 = vrot.slane %v8799, %v8812
    %v8814 = vcombine.low %v8806, %v8813
    %v8815 = vcombine.low %v2662, %v2669
    %v8816 = vcombine.low %v2676, %v2683
    %v8818 = vunpack.c.l.s4 1983009808
    %v8819 = vunpack.c.0.s8 %v8818
    %v8820 = vlaneseq
    %v8821 = vshrl.u32 %v8820, 7
    %v8822 = vsub.s32 %v8819, %v8821
    %v8823 = vrot.slane %v8815, %v8822
    %v8825 = vunpack.c.l.s4 1983009808
    %v8826 = vunpack.c.0.s8 %v8825
    %v8827 = vlaneseq
    %v8828 = vshrl.u32 %v8827, 7
    %v8829 = vsub.s32 %v8826, %v8828
    %v8830 = vrot.slane %v8816, %v8829
    %v8831 = vcombine.low %v8823, %v8830
    %v8832 = vcombine.low %v2690, %v2697
    %v8833 = vcombine.low %v2704, %v2711
    %v8835 = vunpack.c.l.s4 1983009808
    %v8836 = vunpack.c.0.s8 %v8835
    %v8837 = vlaneseq
    %v8838 = vshrl.u32 %v8837, 7
    %v8839 = vsub.s32 %v8836, %v8838
    %v8840 = vrot.slane %v8832, %v8839
    %v8842 = vunpack.c.l.s4 1983009808
    %v8843 = vunpack.c.0.s8 %v8842
    %v8844 = vlaneseq
    %v8845 = vshrl.u32 %v8844, 7
    %v8846 = vsub.s32 %v8843, %v8845
    %v8847 = vrot.slane %v8833, %v8846
    %v8848 = vcombine.low %v8840, %v8847
    %v8849 = vcombine.low %v2718, %v2725
    %v8850 = vcombine.low %v2732, %v2739
    %v8852 = vunpack.c.l.s4 1983009808
    %v8853 = vunpack.c.0.s8 %v8852
    %v8854 = vlaneseq
    %v8855 = vshrl.u32 %v8854, 7
    %v8856 = vsub.s32 %v8853, %v8855
    %v8857 = vrot.slane %v8849, %v8856
    %v8859 = vunpack.c.l.s4 1983009808
    %v8860 = vunpack.c.0.s8 %v8859
    %v8861 = vlaneseq
    %v8862 = vshrl.u32 %v8861, 7
    %v8863 = vsub.s32 %v8860, %v8862
    %v8864 = vrot.slane %v8850, %v8863
    %v8865 = vcombine.low %v8857, %v8864
    %v8866 = vcombine.low %v2746, %v2753
    %v8867 = vcombine.low %v2760, %v2767
    %v8869 = vunpack.c.l.s4 1983009808
    %v8870 = vunpack.c.0.s8 %v8869
    %v8871 = vlaneseq
    %v8872 = vshrl.u32 %v8871, 7
    %v8873 = vsub.s32 %v8870, %v8872
    %v8874 = vrot.slane %v8866, %v8873
    %v8876 = vunpack.c.l.s4 1983009808
    %v8877 = vunpack.c.0.s8 %v8876
    %v8878 = vlaneseq
    %v8879 = vshrl.u32 %v8878, 7
    %v8880 = vsub.s32 %v8877, %v8879
    %v8881 = vrot.slane %v8867, %v8880
    %v8882 = vcombine.low %v8874, %v8881
    %v8883 = vcombine.low %v2774, %v2781
    %v8884 = vcombine.low %v2788, %v2795
    %v8886 = vunpack.c.l.s4 1983009808
    %v8887 = vunpack.c.0.s8 %v8886
    %v8888 = vlaneseq
    %v8889 = vshrl.u32 %v8888, 7
    %v8890 = vsub.s32 %v8887, %v8889
    %v8891 = vrot.slane %v8883, %v8890
    %v8893 = vunpack.c.l.s4 1983009808
    %v8894 = vunpack.c.0.s8 %v8893
    %v8895 = vlaneseq
    %v8896 = vshrl.u32 %v8895, 7
    %v8897 = vsub.s32 %v8894, %v8896
    %v8898 = vrot.slane %v8884, %v8897
    %v8899 = vcombine.low %v8891, %v8898
    %v8900 = vcombine.low %v2802, %v2809
    %v8901 = vcombine.low %v2816, %v2823
    %v8903 = vunpack.c.l.s4 1983009808
    %v8904 = vunpack.c.0.s8 %v8903
    %v8905 = vlaneseq
    %v8906 = vshrl.u32 %v8905, 7
    %v8907 = vsub.s32 %v8904, %v8906
    %v8908 = vrot.slane %v8900, %v8907
    %v8910 = vunpack.c.l.s4 1983009808
    %v8911 = vunpack.c.0.s8 %v8910
    %v8912 = vlaneseq
    %v8913 = vshrl.u32 %v8912, 7
    %v8914 = vsub.s32 %v8911, %v8913
    %v8915 = vrot.slane %v8901, %v8914
    %v8916 = vcombine.low %v8908, %v8915
    %v8917 = vcombine.low %v2830, %v2837
    %v8918 = vcombine.low %v2844, %v2851
    %v8920 = vunpack.c.l.s4 1983009808
    %v8921 = vunpack.c.0.s8 %v8920
    %v8922 = vlaneseq
    %v8923 = vshrl.u32 %v8922, 7
    %v8924 = vsub.s32 %v8921, %v8923
    %v8925 = vrot.slane %v8917, %v8924
    %v8927 = vunpack.c.l.s4 1983009808
    %v8928 = vunpack.c.0.s8 %v8927
    %v8929 = vlaneseq
    %v8930 = vshrl.u32 %v8929, 7
    %v8931 = vsub.s32 %v8928, %v8930
    %v8932 = vrot.slane %v8918, %v8931
    %v8933 = vcombine.low %v8925, %v8932
    %v8934 = vcombine.low %v2858, %v2865
    %v8935 = vcombine.low %v2872, %v2879
    %v8937 = vunpack.c.l.s4 1983009808
    %v8938 = vunpack.c.0.s8 %v8937
    %v8939 = vlaneseq
    %v8940 = vshrl.u32 %v8939, 7
    %v8941 = vsub.s32 %v8938, %v8940
    %v8942 = vrot.slane %v8934, %v8941
    %v8944 = vunpack.c.l.s4 1983009808
    %v8945 = vunpack.c.0.s8 %v8944
    %v8946 = vlaneseq
    %v8947 = vshrl.u32 %v8946, 7
    %v8948 = vsub.s32 %v8945, %v8947
    %v8949 = vrot.slane %v8935, %v8948
    %v8950 = vcombine.low %v8942, %v8949
    %v8951 = vcombine.low %v2886, %v2893
    %v8952 = vcombine.low %v2900, %v2907
    %v8954 = vunpack.c.l.s4 1983009808
    %v8955 = vunpack.c.0.s8 %v8954
    %v8956 = vlaneseq
    %v8957 = vshrl.u32 %v8956, 7
    %v8958 = vsub.s32 %v8955, %v8957
    %v8959 = vrot.slane %v8951, %v8958
    %v8961 = vunpack.c.l.s4 1983009808
    %v8962 = vunpack.c.0.s8 %v8961
    %v8963 = vlaneseq
    %v8964 = vshrl.u32 %v8963, 7
    %v8965 = vsub.s32 %v8962, %v8964
    %v8966 = vrot.slane %v8952, %v8965
    %v8967 = vcombine.low %v8959, %v8966
    %v8968 = vcombine.low %v2914, %v2921
    %v8969 = vcombine.low %v2928, %v2935
    %v8971 = vunpack.c.l.s4 1983009808
    %v8972 = vunpack.c.0.s8 %v8971
    %v8973 = vlaneseq
    %v8974 = vshrl.u32 %v8973, 7
    %v8975 = vsub.s32 %v8972, %v8974
    %v8976 = vrot.slane %v8968, %v8975
    %v8978 = vunpack.c.l.s4 1983009808
    %v8979 = vunpack.c.0.s8 %v8978
    %v8980 = vlaneseq
    %v8981 = vshrl.u32 %v8980, 7
    %v8982 = vsub.s32 %v8979, %v8981
    %v8983 = vrot.slane %v8969, %v8982
    %v8984 = vcombine.low %v8976, %v8983
    %v8985 = vcombine.low %v2942, %v2949
    %v8986 = vcombine.low %v2956, %v2963
    %v8988 = vunpack.c.l.s4 1983009808
    %v8989 = vunpack.c.0.s8 %v8988
    %v8990 = vlaneseq
    %v8991 = vshrl.u32 %v8990, 7
    %v8992 = vsub.s32 %v8989, %v8991
    %v8993 = vrot.slane %v8985, %v8992
    %v8995 = vunpack.c.l.s4 1983009808
    %v8996 = vunpack.c.0.s8 %v8995
    %v8997 = vlaneseq
    %v8998 = vshrl.u32 %v8997, 7
    %v8999 = vsub.s32 %v8996, %v8998
    %v9000 = vrot.slane %v8986, %v8999
    %v9001 = vcombine.low %v8993, %v9000
    %v9002 = vcombine.low %v2970, %v2977
    %v9003 = vcombine.low %v2984, %v2991
    %v9005 = vunpack.c.l.s4 1983009808
    %v9006 = vunpack.c.0.s8 %v9005
    %v9007 = vlaneseq
    %v9008 = vshrl.u32 %v9007, 7
    %v9009 = vsub.s32 %v9006, %v9008
    %v9010 = vrot.slane %v9002, %v9009
    %v9012 = vunpack.c.l.s4 1983009808
    %v9013 = vunpack.c.0.s8 %v9012
    %v9014 = vlaneseq
    %v9015 = vshrl.u32 %v9014, 7
    %v9016 = vsub.s32 %v9013, %v9015
    %v9017 = vrot.slane %v9003, %v9016
    %v9018 = vcombine.low %v9010, %v9017
    %v9019 = vcombine.low %v2998, %v3005
    %v9020 = vcombine.low %v3012, %v3019
    %v9022 = vunpack.c.l.s4 1983009808
    %v9023 = vunpack.c.0.s8 %v9022
    %v9024 = vlaneseq
    %v9025 = vshrl.u32 %v9024, 7
    %v9026 = vsub.s32 %v9023, %v9025
    %v9027 = vrot.slane %v9019, %v9026
    %v9029 = vunpack.c.l.s4 1983009808
    %v9030 = vunpack.c.0.s8 %v9029
    %v9031 = vlaneseq
    %v9032 = vshrl.u32 %v9031, 7
    %v9033 = vsub.s32 %v9030, %v9032
    %v9034 = vrot.slane %v9020, %v9033
    %v9035 = vcombine.low %v9027, %v9034
    %v9036 = vcombine.low %v3026, %v3033
    %v9037 = vcombine.low %v3040, %v3047
    %v9039 = vunpack.c.l.s4 1983009808
    %v9040 = vunpack.c.0.s8 %v9039
    %v9041 = vlaneseq
    %v9042 = vshrl.u32 %v9041, 7
    %v9043 = vsub.s32 %v9040, %v9042
    %v9044 = vrot.slane %v9036, %v9043
    %v9046 = vunpack.c.l.s4 1983009808
    %v9047 = vunpack.c.0.s8 %v9046
    %v9048 = vlaneseq
    %v9049 = vshrl.u32 %v9048, 7
    %v9050 = vsub.s32 %v9047, %v9049
    %v9051 = vrot.slane %v9037, %v9050
    %v9052 = vcombine.low %v9044, %v9051
    %v9053 = vcombine.low %v3054, %v3061
    %v9054 = vcombine.low %v3068, %v3075
    %v9056 = vunpack.c.l.s4 1983009808
    %v9057 = vunpack.c.0.s8 %v9056
    %v9058 = vlaneseq
    %v9059 = vshrl.u32 %v9058, 7
    %v9060 = vsub.s32 %v9057, %v9059
    %v9061 = vrot.slane %v9053, %v9060
    %v9063 = vunpack.c.l.s4 1983009808
    %v9064 = vunpack.c.0.s8 %v9063
    %v9065 = vlaneseq
    %v9066 = vshrl.u32 %v9065, 7
    %v9067 = vsub.s32 %v9064, %v9066
    %v9068 = vrot.slane %v9054, %v9067
    %v9069 = vcombine.low %v9061, %v9068
    %v9070 = vcombine.low %v3082, %v3089
    %v9071 = vcombine.low %v3096, %v3103
    %v9073 = vunpack.c.l.s4 1983009808
    %v9074 = vunpack.c.0.s8 %v9073
    %v9075 = vlaneseq
    %v9076 = vshrl.u32 %v9075, 7
    %v9077 = vsub.s32 %v9074, %v9076
    %v9078 = vrot.slane %v9070, %v9077
    %v9080 = vunpack.c.l.s4 1983009808
    %v9081 = vunpack.c.0.s8 %v9080
    %v9082 = vlaneseq
    %v9083 = vshrl.u32 %v9082, 7
    %v9084 = vsub.s32 %v9081, %v9083
    %v9085 = vrot.slane %v9071, %v9084
    %v9086 = vcombine.low %v9078, %v9085
    %v9087 = vcombine.low %v3110, %v3117
    %v9088 = vcombine.low %v3124, %v3131
    %v9090 = vunpack.c.l.s4 1983009808
    %v9091 = vunpack.c.0.s8 %v9090
    %v9092 = vlaneseq
    %v9093 = vshrl.u32 %v9092, 7
    %v9094 = vsub.s32 %v9091, %v9093
    %v9095 = vrot.slane %v9087, %v9094
    %v9097 = vunpack.c.l.s4 1983009808
    %v9098 = vunpack.c.0.s8 %v9097
    %v9099 = vlaneseq
    %v9100 = vshrl.u32 %v9099, 7
    %v9101 = vsub.s32 %v9098, %v9100
    %v9102 = vrot.slane %v9088, %v9101
    %v9103 = vcombine.low %v9095, %v9102
    %v9104 = vcombine.low %v3138, %v3145
    %v9105 = vcombine.low %v3152, %v3159
    %v9107 = vunpack.c.l.s4 1983009808
    %v9108 = vunpack.c.0.s8 %v9107
    %v9109 = vlaneseq
    %v9110 = vshrl.u32 %v9109, 7
    %v9111 = vsub.s32 %v9108, %v9110
    %v9112 = vrot.slane %v9104, %v9111
    %v9114 = vunpack.c.l.s4 1983009808
    %v9115 = vunpack.c.0.s8 %v9114
    %v9116 = vlaneseq
    %v9117 = vshrl.u32 %v9116, 7
    %v9118 = vsub.s32 %v9115, %v9117
    %v9119 = vrot.slane %v9105, %v9118
    %v9120 = vcombine.low %v9112, %v9119
    %v9121 = vcombine.low %v3166, %v3173
    %v9122 = vcombine.low %v3180, %v3187
    %v9124 = vunpack.c.l.s4 1983009808
    %v9125 = vunpack.c.0.s8 %v9124
    %v9126 = vlaneseq
    %v9127 = vshrl.u32 %v9126, 7
    %v9128 = vsub.s32 %v9125, %v9127
    %v9129 = vrot.slane %v9121, %v9128
    %v9131 = vunpack.c.l.s4 1983009808
    %v9132 = vunpack.c.0.s8 %v9131
    %v9133 = vlaneseq
    %v9134 = vshrl.u32 %v9133, 7
    %v9135 = vsub.s32 %v9132, %v9134
    %v9136 = vrot.slane %v9122, %v9135
    %v9137 = vcombine.low %v9129, %v9136
    %v9138 = vcombine.low %v3194, %v3201
    %v9139 = vcombine.low %v3208, %v3215
    %v9141 = vunpack.c.l.s4 1983009808
    %v9142 = vunpack.c.0.s8 %v9141
    %v9143 = vlaneseq
    %v9144 = vshrl.u32 %v9143, 7
    %v9145 = vsub.s32 %v9142, %v9144
    %v9146 = vrot.slane %v9138, %v9145
    %v9148 = vunpack.c.l.s4 1983009808
    %v9149 = vunpack.c.0.s8 %v9148
    %v9150 = vlaneseq
    %v9151 = vshrl.u32 %v9150, 7
    %v9152 = vsub.s32 %v9149, %v9151
    %v9153 = vrot.slane %v9139, %v9152
    %v9154 = vcombine.low %v9146, %v9153
    %v9155 = vcombine.low %v3222, %v3229
    %v9156 = vcombine.low %v3236, %v3243
    %v9158 = vunpack.c.l.s4 1983009808
    %v9159 = vunpack.c.0.s8 %v9158
    %v9160 = vlaneseq
    %v9161 = vshrl.u32 %v9160, 7
    %v9162 = vsub.s32 %v9159, %v9161
    %v9163 = vrot.slane %v9155, %v9162
    %v9165 = vunpack.c.l.s4 1983009808
    %v9166 = vunpack.c.0.s8 %v9165
    %v9167 = vlaneseq
    %v9168 = vshrl.u32 %v9167, 7
    %v9169 = vsub.s32 %v9166, %v9168
    %v9170 = vrot.slane %v9156, %v9169
    %v9171 = vcombine.low %v9163, %v9170
    %v9172 = vcombine.low %v3250, %v3257
    %v9173 = vcombine.low %v3264, %v3271
    %v9175 = vunpack.c.l.s4 1983009808
    %v9176 = vunpack.c.0.s8 %v9175
    %v9177 = vlaneseq
    %v9178 = vshrl.u32 %v9177, 7
    %v9179 = vsub.s32 %v9176, %v9178
    %v9180 = vrot.slane %v9172, %v9179
    %v9182 = vunpack.c.l.s4 1983009808
    %v9183 = vunpack.c.0.s8 %v9182
    %v9184 = vlaneseq
    %v9185 = vshrl.u32 %v9184, 7
    %v9186 = vsub.s32 %v9183, %v9185
    %v9187 = vrot.slane %v9173, %v9186
    %v9188 = vcombine.low %v9180, %v9187
    %v9189 = vcombine.low %v3278, %v3285
    %v9190 = vcombine.low %v3292, %v3299
    %v9192 = vunpack.c.l.s4 1983009808
    %v9193 = vunpack.c.0.s8 %v9192
    %v9194 = vlaneseq
    %v9195 = vshrl.u32 %v9194, 7
    %v9196 = vsub.s32 %v9193, %v9195
    %v9197 = vrot.slane %v9189, %v9196
    %v9199 = vunpack.c.l.s4 1983009808
    %v9200 = vunpack.c.0.s8 %v9199
    %v9201 = vlaneseq
    %v9202 = vshrl.u32 %v9201, 7
    %v9203 = vsub.s32 %v9200, %v9202
    %v9204 = vrot.slane %v9190, %v9203
    %v9205 = vcombine.low %v9197, %v9204
    %v9206 = vcombine.low %v3306, %v3313
    %v9207 = vcombine.low %v3320, %v3327
    %v9209 = vunpack.c.l.s4 1983009808
    %v9210 = vunpack.c.0.s8 %v9209
    %v9211 = vlaneseq
    %v9212 = vshrl.u32 %v9211, 7
    %v9213 = vsub.s32 %v9210, %v9212
    %v9214 = vrot.slane %v9206, %v9213
    %v9216 = vunpack.c.l.s4 1983009808
    %v9217 = vunpack.c.0.s8 %v9216
    %v9218 = vlaneseq
    %v9219 = vshrl.u32 %v9218, 7
    %v9220 = vsub.s32 %v9217, %v9219
    %v9221 = vrot.slane %v9207, %v9220
    %v9222 = vcombine.low %v9214, %v9221
    %v9223 = vcombine.low %v3334, %v3341
    %v9224 = vcombine.low %v3348, %v3355
    %v9226 = vunpack.c.l.s4 1983009808
    %v9227 = vunpack.c.0.s8 %v9226
    %v9228 = vlaneseq
    %v9229 = vshrl.u32 %v9228, 7
    %v9230 = vsub.s32 %v9227, %v9229
    %v9231 = vrot.slane %v9223, %v9230
    %v9233 = vunpack.c.l.s4 1983009808
    %v9234 = vunpack.c.0.s8 %v9233
    %v9235 = vlaneseq
    %v9236 = vshrl.u32 %v9235, 7
    %v9237 = vsub.s32 %v9234, %v9236
    %v9238 = vrot.slane %v9224, %v9237
    %v9239 = vcombine.low %v9231, %v9238
    %v9240 = vcombine.low %v3362, %v3369
    %v9241 = vcombine.low %v3376, %v3383
    %v9243 = vunpack.c.l.s4 1983009808
    %v9244 = vunpack.c.0.s8 %v9243
    %v9245 = vlaneseq
    %v9246 = vshrl.u32 %v9245, 7
    %v9247 = vsub.s32 %v9244, %v9246
    %v9248 = vrot.slane %v9240, %v9247
    %v9250 = vunpack.c.l.s4 1983009808
    %v9251 = vunpack.c.0.s8 %v9250
    %v9252 = vlaneseq
    %v9253 = vshrl.u32 %v9252, 7
    %v9254 = vsub.s32 %v9251, %v9253
    %v9255 = vrot.slane %v9241, %v9254
    %v9256 = vcombine.low %v9248, %v9255
    %v9257 = vcombine.low %v3390, %v3397
    %v9258 = vcombine.low %v3404, %v3411
    %v9260 = vunpack.c.l.s4 1983009808
    %v9261 = vunpack.c.0.s8 %v9260
    %v9262 = vlaneseq
    %v9263 = vshrl.u32 %v9262, 7
    %v9264 = vsub.s32 %v9261, %v9263
    %v9265 = vrot.slane %v9257, %v9264
    %v9267 = vunpack.c.l.s4 1983009808
    %v9268 = vunpack.c.0.s8 %v9267
    %v9269 = vlaneseq
    %v9270 = vshrl.u32 %v9269, 7
    %v9271 = vsub.s32 %v9268, %v9270
    %v9272 = vrot.slane %v9258, %v9271
    %v9273 = vcombine.low %v9265, %v9272
    %v9274 = vcombine.low %v3418, %v3425
    %v9275 = vcombine.low %v3432, %v3439
    %v9277 = vunpack.c.l.s4 1983009808
    %v9278 = vunpack.c.0.s8 %v9277
    %v9279 = vlaneseq
    %v9280 = vshrl.u32 %v9279, 7
    %v9281 = vsub.s32 %v9278, %v9280
    %v9282 = vrot.slane %v9274, %v9281
    %v9284 = vunpack.c.l.s4 1983009808
    %v9285 = vunpack.c.0.s8 %v9284
    %v9286 = vlaneseq
    %v9287 = vshrl.u32 %v9286, 7
    %v9288 = vsub.s32 %v9285, %v9287
    %v9289 = vrot.slane %v9275, %v9288
    %v9290 = vcombine.low %v9282, %v9289
    %v9291 = vcombine.low %v3446, %v3453
    %v9292 = vcombine.low %v3460, %v3467
    %v9294 = vunpack.c.l.s4 1983009808
    %v9295 = vunpack.c.0.s8 %v9294
    %v9296 = vlaneseq
    %v9297 = vshrl.u32 %v9296, 7
    %v9298 = vsub.s32 %v9295, %v9297
    %v9299 = vrot.slane %v9291, %v9298
    %v9301 = vunpack.c.l.s4 1983009808
    %v9302 = vunpack.c.0.s8 %v9301
    %v9303 = vlaneseq
    %v9304 = vshrl.u32 %v9303, 7
    %v9305 = vsub.s32 %v9302, %v9304
    %v9306 = vrot.slane %v9292, %v9305
    %v9307 = vcombine.low %v9299, %v9306
    %v9308 = vcombine.low %v3474, %v3481
    %v9309 = vcombine.low %v3488, %v3495
    %v9311 = vunpack.c.l.s4 1983009808
    %v9312 = vunpack.c.0.s8 %v9311
    %v9313 = vlaneseq
    %v9314 = vshrl.u32 %v9313, 7
    %v9315 = vsub.s32 %v9312, %v9314
    %v9316 = vrot.slane %v9308, %v9315
    %v9318 = vunpack.c.l.s4 1983009808
    %v9319 = vunpack.c.0.s8 %v9318
    %v9320 = vlaneseq
    %v9321 = vshrl.u32 %v9320, 7
    %v9322 = vsub.s32 %v9319, %v9321
    %v9323 = vrot.slane %v9309, %v9322
    %v9324 = vcombine.low %v9316, %v9323
    %v9325 = vcombine.low %v3502, %v3509
    %v9326 = vcombine.low %v3516, %v3523
    %v9328 = vunpack.c.l.s4 1983009808
    %v9329 = vunpack.c.0.s8 %v9328
    %v9330 = vlaneseq
    %v9331 = vshrl.u32 %v9330, 7
    %v9332 = vsub.s32 %v9329, %v9331
    %v9333 = vrot.slane %v9325, %v9332
    %v9335 = vunpack.c.l.s4 1983009808
    %v9336 = vunpack.c.0.s8 %v9335
    %v9337 = vlaneseq
    %v9338 = vshrl.u32 %v9337, 7
    %v9339 = vsub.s32 %v9336, %v9338
    %v9340 = vrot.slane %v9326, %v9339
    %v9341 = vcombine.low %v9333, %v9340
    %v9342 = vcombine.low %v3530, %v3537
    %v9343 = vcombine.low %v3544, %v3551
    %v9345 = vunpack.c.l.s4 1983009808
    %v9346 = vunpack.c.0.s8 %v9345
    %v9347 = vlaneseq
    %v9348 = vshrl.u32 %v9347, 7
    %v9349 = vsub.s32 %v9346, %v9348
    %v9350 = vrot.slane %v9342, %v9349
    %v9352 = vunpack.c.l.s4 1983009808
    %v9353 = vunpack.c.0.s8 %v9352
    %v9354 = vlaneseq
    %v9355 = vshrl.u32 %v9354, 7
    %v9356 = vsub.s32 %v9353, %v9355
    %v9357 = vrot.slane %v9343, %v9356
    %v9358 = vcombine.low %v9350, %v9357
    %v9359 = vcombine.low %v3558, %v3565
    %v9360 = vcombine.low %v3572, %v3579
    %v9362 = vunpack.c.l.s4 1983009808
    %v9363 = vunpack.c.0.s8 %v9362
    %v9364 = vlaneseq
    %v9365 = vshrl.u32 %v9364, 7
    %v9366 = vsub.s32 %v9363, %v9365
    %v9367 = vrot.slane %v9359, %v9366
    %v9369 = vunpack.c.l.s4 1983009808
    %v9370 = vunpack.c.0.s8 %v9369
    %v9371 = vlaneseq
    %v9372 = vshrl.u32 %v9371, 7
    %v9373 = vsub.s32 %v9370, %v9372
    %v9374 = vrot.slane %v9360, %v9373
    %v9375 = vcombine.low %v9367, %v9374
    %v9376 = vcombine.low %v3586, %v3593
    %v9377 = vcombine.low %v3600, %v3607
    %v9379 = vunpack.c.l.s4 1983009808
    %v9380 = vunpack.c.0.s8 %v9379
    %v9381 = vlaneseq
    %v9382 = vshrl.u32 %v9381, 7
    %v9383 = vsub.s32 %v9380, %v9382
    %v9384 = vrot.slane %v9376, %v9383
    %v9386 = vunpack.c.l.s4 1983009808
    %v9387 = vunpack.c.0.s8 %v9386
    %v9388 = vlaneseq
    %v9389 = vshrl.u32 %v9388, 7
    %v9390 = vsub.s32 %v9387, %v9389
    %v9391 = vrot.slane %v9377, %v9390
    %v9392 = vcombine.low %v9384, %v9391
    %v9393 = vcombine.low %v3614, %v3621
    %v9394 = vcombine.low %v3628, %v3635
    %v9396 = vunpack.c.l.s4 1983009808
    %v9397 = vunpack.c.0.s8 %v9396
    %v9398 = vlaneseq
    %v9399 = vshrl.u32 %v9398, 7
    %v9400 = vsub.s32 %v9397, %v9399
    %v9401 = vrot.slane %v9393, %v9400
    %v9403 = vunpack.c.l.s4 1983009808
    %v9404 = vunpack.c.0.s8 %v9403
    %v9405 = vlaneseq
    %v9406 = vshrl.u32 %v9405, 7
    %v9407 = vsub.s32 %v9404, %v9406
    %v9408 = vrot.slane %v9394, %v9407
    %v9409 = vcombine.low %v9401, %v9408
    %v9410 = vcombine.low %v3642, %v3649
    %v9411 = vcombine.low %v3656, %v3663
    %v9413 = vunpack.c.l.s4 1983009808
    %v9414 = vunpack.c.0.s8 %v9413
    %v9415 = vlaneseq
    %v9416 = vshrl.u32 %v9415, 7
    %v9417 = vsub.s32 %v9414, %v9416
    %v9418 = vrot.slane %v9410, %v9417
    %v9420 = vunpack.c.l.s4 1983009808
    %v9421 = vunpack.c.0.s8 %v9420
    %v9422 = vlaneseq
    %v9423 = vshrl.u32 %v9422, 7
    %v9424 = vsub.s32 %v9421, %v9423
    %v9425 = vrot.slane %v9411, %v9424
    %v9426 = vcombine.low %v9418, %v9425
    %v9427 = vcombine.low %v3670, %v3677
    %v9428 = vcombine.low %v3684, %v3691
    %v9430 = vunpack.c.l.s4 1983009808
    %v9431 = vunpack.c.0.s8 %v9430
    %v9432 = vlaneseq
    %v9433 = vshrl.u32 %v9432, 7
    %v9434 = vsub.s32 %v9431, %v9433
    %v9435 = vrot.slane %v9427, %v9434
    %v9437 = vunpack.c.l.s4 1983009808
    %v9438 = vunpack.c.0.s8 %v9437
    %v9439 = vlaneseq
    %v9440 = vshrl.u32 %v9439, 7
    %v9441 = vsub.s32 %v9438, %v9440
    %v9442 = vrot.slane %v9428, %v9441
    %v9443 = vcombine.low %v9435, %v9442
    %v9444 = vcombine.low %v3698, %v3705
    %v9445 = vcombine.low %v3712, %v3719
    %v9447 = vunpack.c.l.s4 1983009808
    %v9448 = vunpack.c.0.s8 %v9447
    %v9449 = vlaneseq
    %v9450 = vshrl.u32 %v9449, 7
    %v9451 = vsub.s32 %v9448, %v9450
    %v9452 = vrot.slane %v9444, %v9451
    %v9454 = vunpack.c.l.s4 1983009808
    %v9455 = vunpack.c.0.s8 %v9454
    %v9456 = vlaneseq
    %v9457 = vshrl.u32 %v9456, 7
    %v9458 = vsub.s32 %v9455, %v9457
    %v9459 = vrot.slane %v9445, %v9458
    %v9460 = vcombine.low %v9452, %v9459
    %v9461 = vcombine.low %v3726, %v3733
    %v9462 = vcombine.low %v3740, %v3747
    %v9464 = vunpack.c.l.s4 1983009808
    %v9465 = vunpack.c.0.s8 %v9464
    %v9466 = vlaneseq
    %v9467 = vshrl.u32 %v9466, 7
    %v9468 = vsub.s32 %v9465, %v9467
    %v9469 = vrot.slane %v9461, %v9468
    %v9471 = vunpack.c.l.s4 1983009808
    %v9472 = vunpack.c.0.s8 %v9471
    %v9473 = vlaneseq
    %v9474 = vshrl.u32 %v9473, 7
    %v9475 = vsub.s32 %v9472, %v9474
    %v9476 = vrot.slane %v9462, %v9475
    %v9477 = vcombine.low %v9469, %v9476
    %v9478 = vcombine.low %v3754, %v3761
    %v9479 = vcombine.low %v3768, %v3775
    %v9481 = vunpack.c.l.s4 1983009808
    %v9482 = vunpack.c.0.s8 %v9481
    %v9483 = vlaneseq
    %v9484 = vshrl.u32 %v9483, 7
    %v9485 = vsub.s32 %v9482, %v9484
    %v9486 = vrot.slane %v9478, %v9485
    %v9488 = vunpack.c.l.s4 1983009808
    %v9489 = vunpack.c.0.s8 %v9488
    %v9490 = vlaneseq
    %v9491 = vshrl.u32 %v9490, 7
    %v9492 = vsub.s32 %v9489, %v9491
    %v9493 = vrot.slane %v9479, %v9492
    %v9494 = vcombine.low %v9486, %v9493
    %v9495 = vcombine.low %v3782, %v3789
    %v9496 = vcombine.low %v3796, %v3803
    %v9498 = vunpack.c.l.s4 1983009808
    %v9499 = vunpack.c.0.s8 %v9498
    %v9500 = vlaneseq
    %v9501 = vshrl.u32 %v9500, 7
    %v9502 = vsub.s32 %v9499, %v9501
    %v9503 = vrot.slane %v9495, %v9502
    %v9505 = vunpack.c.l.s4 1983009808
    %v9506 = vunpack.c.0.s8 %v9505
    %v9507 = vlaneseq
    %v9508 = vshrl.u32 %v9507, 7
    %v9509 = vsub.s32 %v9506, %v9508
    %v9510 = vrot.slane %v9496, %v9509
    %v9511 = vcombine.low %v9503, %v9510
    %v9512 = vcombine.low %v3810, %v3817
    %v9513 = vcombine.low %v3824, %v3831
    %v9515 = vunpack.c.l.s4 1983009808
    %v9516 = vunpack.c.0.s8 %v9515
    %v9517 = vlaneseq
    %v9518 = vshrl.u32 %v9517, 7
    %v9519 = vsub.s32 %v9516, %v9518
    %v9520 = vrot.slane %v9512, %v9519
    %v9522 = vunpack.c.l.s4 1983009808
    %v9523 = vunpack.c.0.s8 %v9522
    %v9524 = vlaneseq
    %v9525 = vshrl.u32 %v9524, 7
    %v9526 = vsub.s32 %v9523, %v9525
    %v9527 = vrot.slane %v9513, %v9526
    %v9528 = vcombine.low %v9520, %v9527
    %v9529 = vcombine.low %v3838, %v3845
    %v9530 = vcombine.low %v3852, %v3859
    %v9532 = vunpack.c.l.s4 1983009808
    %v9533 = vunpack.c.0.s8 %v9532
    %v9534 = vlaneseq
    %v9535 = vshrl.u32 %v9534, 7
    %v9536 = vsub.s32 %v9533, %v9535
    %v9537 = vrot.slane %v9529, %v9536
    %v9539 = vunpack.c.l.s4 1983009808
    %v9540 = vunpack.c.0.s8 %v9539
    %v9541 = vlaneseq
    %v9542 = vshrl.u32 %v9541, 7
    %v9543 = vsub.s32 %v9540, %v9542
    %v9544 = vrot.slane %v9530, %v9543
    %v9545 = vcombine.low %v9537, %v9544
    %v9546 = vcombine.low %v3866, %v3873
    %v9547 = vcombine.low %v3880, %v3887
    %v9549 = vunpack.c.l.s4 1983009808
    %v9550 = vunpack.c.0.s8 %v9549
    %v9551 = vlaneseq
    %v9552 = vshrl.u32 %v9551, 7
    %v9553 = vsub.s32 %v9550, %v9552
    %v9554 = vrot.slane %v9546, %v9553
    %v9556 = vunpack.c.l.s4 1983009808
    %v9557 = vunpack.c.0.s8 %v9556
    %v9558 = vlaneseq
    %v9559 = vshrl.u32 %v9558, 7
    %v9560 = vsub.s32 %v9557, %v9559
    %v9561 = vrot.slane %v9547, %v9560
    %v9562 = vcombine.low %v9554, %v9561
    %v9563 = vcombine.low %v3894, %v3901
    %v9564 = vcombine.low %v3908, %v3915
    %v9566 = vunpack.c.l.s4 1983009808
    %v9567 = vunpack.c.0.s8 %v9566
    %v9568 = vlaneseq
    %v9569 = vshrl.u32 %v9568, 7
    %v9570 = vsub.s32 %v9567, %v9569
    %v9571 = vrot.slane %v9563, %v9570
    %v9573 = vunpack.c.l.s4 1983009808
    %v9574 = vunpack.c.0.s8 %v9573
    %v9575 = vlaneseq
    %v9576 = vshrl.u32 %v9575, 7
    %v9577 = vsub.s32 %v9574, %v9576
    %v9578 = vrot.slane %v9564, %v9577
    %v9579 = vcombine.low %v9571, %v9578
    %v9580 = vcombine.low %v3922, %v3929
    %v9581 = vcombine.low %v3936, %v3943
    %v9583 = vunpack.c.l.s4 1983009808
    %v9584 = vunpack.c.0.s8 %v9583
    %v9585 = vlaneseq
    %v9586 = vshrl.u32 %v9585, 7
    %v9587 = vsub.s32 %v9584, %v9586
    %v9588 = vrot.slane %v9580, %v9587
    %v9590 = vunpack.c.l.s4 1983009808
    %v9591 = vunpack.c.0.s8 %v9590
    %v9592 = vlaneseq
    %v9593 = vshrl.u32 %v9592, 7
    %v9594 = vsub.s32 %v9591, %v9593
    %v9595 = vrot.slane %v9581, %v9594
    %v9596 = vcombine.low %v9588, %v9595
    %v9597 = vcombine.low %v3950, %v3957
    %v9598 = vcombine.low %v3964, %v3971
    %v9600 = vunpack.c.l.s4 1983009808
    %v9601 = vunpack.c.0.s8 %v9600
    %v9602 = vlaneseq
    %v9603 = vshrl.u32 %v9602, 7
    %v9604 = vsub.s32 %v9601, %v9603
    %v9605 = vrot.slane %v9597, %v9604
    %v9607 = vunpack.c.l.s4 1983009808
    %v9608 = vunpack.c.0.s8 %v9607
    %v9609 = vlaneseq
    %v9610 = vshrl.u32 %v9609, 7
    %v9611 = vsub.s32 %v9608, %v9610
    %v9612 = vrot.slane %v9598, %v9611
    %v9613 = vcombine.low %v9605, %v9612
    %v9614 = vcombine.low %v3978, %v3985
    %v9615 = vcombine.low %v3992, %v3999
    %v9617 = vunpack.c.l.s4 1983009808
    %v9618 = vunpack.c.0.s8 %v9617
    %v9619 = vlaneseq
    %v9620 = vshrl.u32 %v9619, 7
    %v9621 = vsub.s32 %v9618, %v9620
    %v9622 = vrot.slane %v9614, %v9621
    %v9624 = vunpack.c.l.s4 1983009808
    %v9625 = vunpack.c.0.s8 %v9624
    %v9626 = vlaneseq
    %v9627 = vshrl.u32 %v9626, 7
    %v9628 = vsub.s32 %v9625, %v9627
    %v9629 = vrot.slane %v9615, %v9628
    %v9630 = vcombine.low %v9622, %v9629
    %v9631 = vcombine.low %v4006, %v4013
    %v9632 = vcombine.low %v4020, %v4027
    %v9634 = vunpack.c.l.s4 1983009808
    %v9635 = vunpack.c.0.s8 %v9634
    %v9636 = vlaneseq
    %v9637 = vshrl.u32 %v9636, 7
    %v9638 = vsub.s32 %v9635, %v9637
    %v9639 = vrot.slane %v9631, %v9638
    %v9641 = vunpack.c.l.s4 1983009808
    %v9642 = vunpack.c.0.s8 %v9641
    %v9643 = vlaneseq
    %v9644 = vshrl.u32 %v9643, 7
    %v9645 = vsub.s32 %v9642, %v9644
    %v9646 = vrot.slane %v9632, %v9645
    %v9647 = vcombine.low %v9639, %v9646
    %v9648 = vcombine.low %v4034, %v4041
    %v9649 = vcombine.low %v4048, %v4055
    %v9651 = vunpack.c.l.s4 1983009808
    %v9652 = vunpack.c.0.s8 %v9651
    %v9653 = vlaneseq
    %v9654 = vshrl.u32 %v9653, 7
    %v9655 = vsub.s32 %v9652, %v9654
    %v9656 = vrot.slane %v9648, %v9655
    %v9658 = vunpack.c.l.s4 1983009808
    %v9659 = vunpack.c.0.s8 %v9658
    %v9660 = vlaneseq
    %v9661 = vshrl.u32 %v9660, 7
    %v9662 = vsub.s32 %v9659, %v9661
    %v9663 = vrot.slane %v9649, %v9662
    %v9664 = vcombine.low %v9656, %v9663
    %v9665 = vcombine.low %v4062, %v4069
    %v9666 = vcombine.low %v4076, %v4083
    %v9668 = vunpack.c.l.s4 1983009808
    %v9669 = vunpack.c.0.s8 %v9668
    %v9670 = vlaneseq
    %v9671 = vshrl.u32 %v9670, 7
    %v9672 = vsub.s32 %v9669, %v9671
    %v9673 = vrot.slane %v9665, %v9672
    %v9675 = vunpack.c.l.s4 1983009808
    %v9676 = vunpack.c.0.s8 %v9675
    %v9677 = vlaneseq
    %v9678 = vshrl.u32 %v9677, 7
    %v9679 = vsub.s32 %v9676, %v9678
    %v9680 = vrot.slane %v9666, %v9679
    %v9681 = vcombine.low %v9673, %v9680
    %v9682 = vcombine.low %v4090, %v4097
    %v9683 = vcombine.low %v4104, %v4111
    %v9685 = vunpack.c.l.s4 1983009808
    %v9686 = vunpack.c.0.s8 %v9685
    %v9687 = vlaneseq
    %v9688 = vshrl.u32 %v9687, 7
    %v9689 = vsub.s32 %v9686, %v9688
    %v9690 = vrot.slane %v9682, %v9689
    %v9692 = vunpack.c.l.s4 1983009808
    %v9693 = vunpack.c.0.s8 %v9692
    %v9694 = vlaneseq
    %v9695 = vshrl.u32 %v9694, 7
    %v9696 = vsub.s32 %v9693, %v9695
    %v9697 = vrot.slane %v9683, %v9696
    %v9698 = vcombine.low %v9690, %v9697
    %v9699 = vcombine.low %v4118, %v4125
    %v9700 = vcombine.low %v4132, %v4139
    %v9702 = vunpack.c.l.s4 1983009808
    %v9703 = vunpack.c.0.s8 %v9702
    %v9704 = vlaneseq
    %v9705 = vshrl.u32 %v9704, 7
    %v9706 = vsub.s32 %v9703, %v9705
    %v9707 = vrot.slane %v9699, %v9706
    %v9709 = vunpack.c.l.s4 1983009808
    %v9710 = vunpack.c.0.s8 %v9709
    %v9711 = vlaneseq
    %v9712 = vshrl.u32 %v9711, 7
    %v9713 = vsub.s32 %v9710, %v9712
    %v9714 = vrot.slane %v9700, %v9713
    %v9715 = vcombine.low %v9707, %v9714
    %v9716 = vcombine.low %v4146, %v4153
    %v9717 = vcombine.low %v4160, %v4167
    %v9719 = vunpack.c.l.s4 1983009808
    %v9720 = vunpack.c.0.s8 %v9719
    %v9721 = vlaneseq
    %v9722 = vshrl.u32 %v9721, 7
    %v9723 = vsub.s32 %v9720, %v9722
    %v9724 = vrot.slane %v9716, %v9723
    %v9726 = vunpack.c.l.s4 1983009808
    %v9727 = vunpack.c.0.s8 %v9726
    %v9728 = vlaneseq
    %v9729 = vshrl.u32 %v9728, 7
    %v9730 = vsub.s32 %v9727, %v9729
    %v9731 = vrot.slane %v9717, %v9730
    %v9732 = vcombine.low %v9724, %v9731
    %v9733 = vcombine.low %v4174, %v4181
    %v9734 = vcombine.low %v4188, %v4195
    %v9736 = vunpack.c.l.s4 1983009808
    %v9737 = vunpack.c.0.s8 %v9736
    %v9738 = vlaneseq
    %v9739 = vshrl.u32 %v9738, 7
    %v9740 = vsub.s32 %v9737, %v9739
    %v9741 = vrot.slane %v9733, %v9740
    %v9743 = vunpack.c.l.s4 1983009808
    %v9744 = vunpack.c.0.s8 %v9743
    %v9745 = vlaneseq
    %v9746 = vshrl.u32 %v9745, 7
    %v9747 = vsub.s32 %v9744, %v9746
    %v9748 = vrot.slane %v9734, %v9747
    %v9749 = vcombine.low %v9741, %v9748
    %v9750 = vcombine.low %v4202, %v4209
    %v9751 = vcombine.low %v4216, %v4223
    %v9753 = vunpack.c.l.s4 1983009808
    %v9754 = vunpack.c.0.s8 %v9753
    %v9755 = vlaneseq
    %v9756 = vshrl.u32 %v9755, 7
    %v9757 = vsub.s32 %v9754, %v9756
    %v9758 = vrot.slane %v9750, %v9757
    %v9760 = vunpack.c.l.s4 1983009808
    %v9761 = vunpack.c.0.s8 %v9760
    %v9762 = vlaneseq
    %v9763 = vshrl.u32 %v9762, 7
    %v9764 = vsub.s32 %v9761, %v9763
    %v9765 = vrot.slane %v9751, %v9764
    %v9766 = vcombine.low %v9758, %v9765
    %v9767 = vcombine.low %v4230, %v4237
    %v9768 = vcombine.low %v4244, %v4251
    %v9770 = vunpack.c.l.s4 1983009808
    %v9771 = vunpack.c.0.s8 %v9770
    %v9772 = vlaneseq
    %v9773 = vshrl.u32 %v9772, 7
    %v9774 = vsub.s32 %v9771, %v9773
    %v9775 = vrot.slane %v9767, %v9774
    %v9777 = vunpack.c.l.s4 1983009808
    %v9778 = vunpack.c.0.s8 %v9777
    %v9779 = vlaneseq
    %v9780 = vshrl.u32 %v9779, 7
    %v9781 = vsub.s32 %v9778, %v9780
    %v9782 = vrot.slane %v9768, %v9781
    %v9783 = vcombine.low %v9775, %v9782
    %v9784 = vcombine.low %v4258, %v4265
    %v9785 = vcombine.low %v4272, %v4279
    %v9787 = vunpack.c.l.s4 1983009808
    %v9788 = vunpack.c.0.s8 %v9787
    %v9789 = vlaneseq
    %v9790 = vshrl.u32 %v9789, 7
    %v9791 = vsub.s32 %v9788, %v9790
    %v9792 = vrot.slane %v9784, %v9791
    %v9794 = vunpack.c.l.s4 1983009808
    %v9795 = vunpack.c.0.s8 %v9794
    %v9796 = vlaneseq
    %v9797 = vshrl.u32 %v9796, 7
    %v9798 = vsub.s32 %v9795, %v9797
    %v9799 = vrot.slane %v9785, %v9798
    %v9800 = vcombine.low %v9792, %v9799
    %v9801 = vcombine.low %v4286, %v4293
    %v9802 = vcombine.low %v4300, %v4307
    %v9804 = vunpack.c.l.s4 1983009808
    %v9805 = vunpack.c.0.s8 %v9804
    %v9806 = vlaneseq
    %v9807 = vshrl.u32 %v9806, 7
    %v9808 = vsub.s32 %v9805, %v9807
    %v9809 = vrot.slane %v9801, %v9808
    %v9811 = vunpack.c.l.s4 1983009808
    %v9812 = vunpack.c.0.s8 %v9811
    %v9813 = vlaneseq
    %v9814 = vshrl.u32 %v9813, 7
    %v9815 = vsub.s32 %v9812, %v9814
    %v9816 = vrot.slane %v9802, %v9815
    %v9817 = vcombine.low %v9809, %v9816
    %v9818 = vcombine.low %v4314, %v4321
    %v9819 = vcombine.low %v4328, %v4335
    %v9821 = vunpack.c.l.s4 1983009808
    %v9822 = vunpack.c.0.s8 %v9821
    %v9823 = vlaneseq
    %v9824 = vshrl.u32 %v9823, 7
    %v9825 = vsub.s32 %v9822, %v9824
    %v9826 = vrot.slane %v9818, %v9825
    %v9828 = vunpack.c.l.s4 1983009808
    %v9829 = vunpack.c.0.s8 %v9828
    %v9830 = vlaneseq
    %v9831 = vshrl.u32 %v9830, 7
    %v9832 = vsub.s32 %v9829, %v9831
    %v9833 = vrot.slane %v9819, %v9832
    %v9834 = vcombine.low %v9826, %v9833
    %v9835 = vcombine.low %v4342, %v4349
    %v9836 = vcombine.low %v4356, %v4363
    %v9838 = vunpack.c.l.s4 1983009808
    %v9839 = vunpack.c.0.s8 %v9838
    %v9840 = vlaneseq
    %v9841 = vshrl.u32 %v9840, 7
    %v9842 = vsub.s32 %v9839, %v9841
    %v9843 = vrot.slane %v9835, %v9842
    %v9845 = vunpack.c.l.s4 1983009808
    %v9846 = vunpack.c.0.s8 %v9845
    %v9847 = vlaneseq
    %v9848 = vshrl.u32 %v9847, 7
    %v9849 = vsub.s32 %v9846, %v9848
    %v9850 = vrot.slane %v9836, %v9849
    %v9851 = vcombine.low %v9843, %v9850
    %v9852 = vcombine.low %v4370, %v4377
    %v9853 = vcombine.low %v4384, %v4391
    %v9855 = vunpack.c.l.s4 1983009808
    %v9856 = vunpack.c.0.s8 %v9855
    %v9857 = vlaneseq
    %v9858 = vshrl.u32 %v9857, 7
    %v9859 = vsub.s32 %v9856, %v9858
    %v9860 = vrot.slane %v9852, %v9859
    %v9862 = vunpack.c.l.s4 1983009808
    %v9863 = vunpack.c.0.s8 %v9862
    %v9864 = vlaneseq
    %v9865 = vshrl.u32 %v9864, 7
    %v9866 = vsub.s32 %v9863, %v9865
    %v9867 = vrot.slane %v9853, %v9866
    %v9868 = vcombine.low %v9860, %v9867
    %v9869 = vcombine.low %v4398, %v4405
    %v9870 = vcombine.low %v4412, %v4419
    %v9872 = vunpack.c.l.s4 1983009808
    %v9873 = vunpack.c.0.s8 %v9872
    %v9874 = vlaneseq
    %v9875 = vshrl.u32 %v9874, 7
    %v9876 = vsub.s32 %v9873, %v9875
    %v9877 = vrot.slane %v9869, %v9876
    %v9879 = vunpack.c.l.s4 1983009808
    %v9880 = vunpack.c.0.s8 %v9879
    %v9881 = vlaneseq
    %v9882 = vshrl.u32 %v9881, 7
    %v9883 = vsub.s32 %v9880, %v9882
    %v9884 = vrot.slane %v9870, %v9883
    %v9885 = vcombine.low %v9877, %v9884
    %v9886 = vcombine.low %v4426, %v4433
    %v9887 = vcombine.low %v4440, %v4447
    %v9889 = vunpack.c.l.s4 1983009808
    %v9890 = vunpack.c.0.s8 %v9889
    %v9891 = vlaneseq
    %v9892 = vshrl.u32 %v9891, 7
    %v9893 = vsub.s32 %v9890, %v9892
    %v9894 = vrot.slane %v9886, %v9893
    %v9896 = vunpack.c.l.s4 1983009808
    %v9897 = vunpack.c.0.s8 %v9896
    %v9898 = vlaneseq
    %v9899 = vshrl.u32 %v9898, 7
    %v9900 = vsub.s32 %v9897, %v9899
    %v9901 = vrot.slane %v9887, %v9900
    %v9902 = vcombine.low %v9894, %v9901
    %v9903 = vcombine.low %v4454, %v4461
    %v9904 = vcombine.low %v4468, %v4475
    %v9906 = vunpack.c.l.s4 1983009808
    %v9907 = vunpack.c.0.s8 %v9906
    %v9908 = vlaneseq
    %v9909 = vshrl.u32 %v9908, 7
    %v9910 = vsub.s32 %v9907, %v9909
    %v9911 = vrot.slane %v9903, %v9910
    %v9913 = vunpack.c.l.s4 1983009808
    %v9914 = vunpack.c.0.s8 %v9913
    %v9915 = vlaneseq
    %v9916 = vshrl.u32 %v9915, 7
    %v9917 = vsub.s32 %v9914, %v9916
    %v9918 = vrot.slane %v9904, %v9917
    %v9919 = vcombine.low %v9911, %v9918
    %v9920 = vcombine.low %v4482, %v4489
    %v9921 = vcombine.low %v4496, %v4503
    %v9923 = vunpack.c.l.s4 1983009808
    %v9924 = vunpack.c.0.s8 %v9923
    %v9925 = vlaneseq
    %v9926 = vshrl.u32 %v9925, 7
    %v9927 = vsub.s32 %v9924, %v9926
    %v9928 = vrot.slane %v9920, %v9927
    %v9930 = vunpack.c.l.s4 1983009808
    %v9931 = vunpack.c.0.s8 %v9930
    %v9932 = vlaneseq
    %v9933 = vshrl.u32 %v9932, 7
    %v9934 = vsub.s32 %v9931, %v9933
    %v9935 = vrot.slane %v9921, %v9934
    %v9936 = vcombine.low %v9928, %v9935
    %v9937 = vcombine.low %v4510, %v4517
    %v9938 = vcombine.low %v4524, %v4531
    %v9940 = vunpack.c.l.s4 1983009808
    %v9941 = vunpack.c.0.s8 %v9940
    %v9942 = vlaneseq
    %v9943 = vshrl.u32 %v9942, 7
    %v9944 = vsub.s32 %v9941, %v9943
    %v9945 = vrot.slane %v9937, %v9944
    %v9947 = vunpack.c.l.s4 1983009808
    %v9948 = vunpack.c.0.s8 %v9947
    %v9949 = vlaneseq
    %v9950 = vshrl.u32 %v9949, 7
    %v9951 = vsub.s32 %v9948, %v9950
    %v9952 = vrot.slane %v9938, %v9951
    %v9953 = vcombine.low %v9945, %v9952
    %v9954 = vcombine.low %v4538, %v4545
    %v9955 = vcombine.low %v4552, %v4559
    %v9957 = vunpack.c.l.s4 1983009808
    %v9958 = vunpack.c.0.s8 %v9957
    %v9959 = vlaneseq
    %v9960 = vshrl.u32 %v9959, 7
    %v9961 = vsub.s32 %v9958, %v9960
    %v9962 = vrot.slane %v9954, %v9961
    %v9964 = vunpack.c.l.s4 1983009808
    %v9965 = vunpack.c.0.s8 %v9964
    %v9966 = vlaneseq
    %v9967 = vshrl.u32 %v9966, 7
    %v9968 = vsub.s32 %v9965, %v9967
    %v9969 = vrot.slane %v9955, %v9968
    %v9970 = vcombine.low %v9962, %v9969
    %v9971 = vcombine.low %v4566, %v4573
    %v9972 = vcombine.low %v4580, %v4587
    %v9974 = vunpack.c.l.s4 1983009808
    %v9975 = vunpack.c.0.s8 %v9974
    %v9976 = vlaneseq
    %v9977 = vshrl.u32 %v9976, 7
    %v9978 = vsub.s32 %v9975, %v9977
    %v9979 = vrot.slane %v9971, %v9978
    %v9981 = vunpack.c.l.s4 1983009808
    %v9982 = vunpack.c.0.s8 %v9981
    %v9983 = vlaneseq
    %v9984 = vshrl.u32 %v9983, 7
    %v9985 = vsub.s32 %v9982, %v9984
    %v9986 = vrot.slane %v9972, %v9985
    %v9987 = vcombine.low %v9979, %v9986
    %v9988 = vcombine.low %v4594, %v4601
    %v9989 = vcombine.low %v4608, %v4615
    %v9991 = vunpack.c.l.s4 1983009808
    %v9992 = vunpack.c.0.s8 %v9991
    %v9993 = vlaneseq
    %v9994 = vshrl.u32 %v9993, 7
    %v9995 = vsub.s32 %v9992, %v9994
    %v9996 = vrot.slane %v9988, %v9995
    %v9998 = vunpack.c.l.s4 1983009808
    %v9999 = vunpack.c.0.s8 %v9998
    %v10000 = vlaneseq
    %v10001 = vshrl.u32 %v10000, 7
    %v10002 = vsub.s32 %v9999, %v10001
    %v10003 = vrot.slane %v9989, %v10002
    %v10004 = vcombine.low %v9996, %v10003
    %v10005 = vcombine.low %v4622, %v4629
    %v10006 = vcombine.low %v4636, %v4643
    %v10008 = vunpack.c.l.s4 1983009808
    %v10009 = vunpack.c.0.s8 %v10008
    %v10010 = vlaneseq
    %v10011 = vshrl.u32 %v10010, 7
    %v10012 = vsub.s32 %v10009, %v10011
    %v10013 = vrot.slane %v10005, %v10012
    %v10015 = vunpack.c.l.s4 1983009808
    %v10016 = vunpack.c.0.s8 %v10015
    %v10017 = vlaneseq
    %v10018 = vshrl.u32 %v10017, 7
    %v10019 = vsub.s32 %v10016, %v10018
    %v10020 = vrot.slane %v10006, %v10019
    %v10021 = vcombine.low %v10013, %v10020
    %v10022 = vcombine.low %v4650, %v4657
    %v10023 = vcombine.low %v4664, %v4671
    %v10025 = vunpack.c.l.s4 1983009808
    %v10026 = vunpack.c.0.s8 %v10025
    %v10027 = vlaneseq
    %v10028 = vshrl.u32 %v10027, 7
    %v10029 = vsub.s32 %v10026, %v10028
    %v10030 = vrot.slane %v10022, %v10029
    %v10032 = vunpack.c.l.s4 1983009808
    %v10033 = vunpack.c.0.s8 %v10032
    %v10034 = vlaneseq
    %v10035 = vshrl.u32 %v10034, 7
    %v10036 = vsub.s32 %v10033, %v10035
    %v10037 = vrot.slane %v10023, %v10036
    %v10038 = vcombine.low %v10030, %v10037
    %v10039 = vcombine.low %v4678, %v4685
    %v10040 = vcombine.low %v4692, %v4699
    %v10042 = vunpack.c.l.s4 1983009808
    %v10043 = vunpack.c.0.s8 %v10042
    %v10044 = vlaneseq
    %v10045 = vshrl.u32 %v10044, 7
    %v10046 = vsub.s32 %v10043, %v10045
    %v10047 = vrot.slane %v10039, %v10046
    %v10049 = vunpack.c.l.s4 1983009808
    %v10050 = vunpack.c.0.s8 %v10049
    %v10051 = vlaneseq
    %v10052 = vshrl.u32 %v10051, 7
    %v10053 = vsub.s32 %v10050, %v10052
    %v10054 = vrot.slane %v10040, %v10053
    %v10055 = vcombine.low %v10047, %v10054
    %v10056 = vcombine.low %v4706, %v4713
    %v10057 = vcombine.low %v4720, %v4727
    %v10059 = vunpack.c.l.s4 1983009808
    %v10060 = vunpack.c.0.s8 %v10059
    %v10061 = vlaneseq
    %v10062 = vshrl.u32 %v10061, 7
    %v10063 = vsub.s32 %v10060, %v10062
    %v10064 = vrot.slane %v10056, %v10063
    %v10066 = vunpack.c.l.s4 1983009808
    %v10067 = vunpack.c.0.s8 %v10066
    %v10068 = vlaneseq
    %v10069 = vshrl.u32 %v10068, 7
    %v10070 = vsub.s32 %v10067, %v10069
    %v10071 = vrot.slane %v10057, %v10070
    %v10072 = vcombine.low %v10064, %v10071
    %v10073 = vcombine.low %v4734, %v4741
    %v10074 = vcombine.low %v4748, %v4755
    %v10076 = vunpack.c.l.s4 1983009808
    %v10077 = vunpack.c.0.s8 %v10076
    %v10078 = vlaneseq
    %v10079 = vshrl.u32 %v10078, 7
    %v10080 = vsub.s32 %v10077, %v10079
    %v10081 = vrot.slane %v10073, %v10080
    %v10083 = vunpack.c.l.s4 1983009808
    %v10084 = vunpack.c.0.s8 %v10083
    %v10085 = vlaneseq
    %v10086 = vshrl.u32 %v10085, 7
    %v10087 = vsub.s32 %v10084, %v10086
    %v10088 = vrot.slane %v10074, %v10087
    %v10089 = vcombine.low %v10081, %v10088
    %v10090 = vcombine.low %v4762, %v4769
    %v10091 = vcombine.low %v4776, %v4783
    %v10093 = vunpack.c.l.s4 1983009808
    %v10094 = vunpack.c.0.s8 %v10093
    %v10095 = vlaneseq
    %v10096 = vshrl.u32 %v10095, 7
    %v10097 = vsub.s32 %v10094, %v10096
    %v10098 = vrot.slane %v10090, %v10097
    %v10100 = vunpack.c.l.s4 1983009808
    %v10101 = vunpack.c.0.s8 %v10100
    %v10102 = vlaneseq
    %v10103 = vshrl.u32 %v10102, 7
    %v10104 = vsub.s32 %v10101, %v10103
    %v10105 = vrot.slane %v10091, %v10104
    %v10106 = vcombine.low %v10098, %v10105
    %v10107 = vcombine.low %v4790, %v4797
    %v10108 = vcombine.low %v4804, %v4811
    %v10110 = vunpack.c.l.s4 1983009808
    %v10111 = vunpack.c.0.s8 %v10110
    %v10112 = vlaneseq
    %v10113 = vshrl.u32 %v10112, 7
    %v10114 = vsub.s32 %v10111, %v10113
    %v10115 = vrot.slane %v10107, %v10114
    %v10117 = vunpack.c.l.s4 1983009808
    %v10118 = vunpack.c.0.s8 %v10117
    %v10119 = vlaneseq
    %v10120 = vshrl.u32 %v10119, 7
    %v10121 = vsub.s32 %v10118, %v10120
    %v10122 = vrot.slane %v10108, %v10121
    %v10123 = vcombine.low %v10115, %v10122
    %v10124 = vcombine.low %v4818, %v4825
    %v10125 = vcombine.low %v4832, %v4839
    %v10127 = vunpack.c.l.s4 1983009808
    %v10128 = vunpack.c.0.s8 %v10127
    %v10129 = vlaneseq
    %v10130 = vshrl.u32 %v10129, 7
    %v10131 = vsub.s32 %v10128, %v10130
    %v10132 = vrot.slane %v10124, %v10131
    %v10134 = vunpack.c.l.s4 1983009808
    %v10135 = vunpack.c.0.s8 %v10134
    %v10136 = vlaneseq
    %v10137 = vshrl.u32 %v10136, 7
    %v10138 = vsub.s32 %v10135, %v10137
    %v10139 = vrot.slane %v10125, %v10138
    %v10140 = vcombine.low %v10132, %v10139
    %v10141 = vcombine.low %v4846, %v4853
    %v10142 = vcombine.low %v4860, %v4867
    %v10144 = vunpack.c.l.s4 1983009808
    %v10145 = vunpack.c.0.s8 %v10144
    %v10146 = vlaneseq
    %v10147 = vshrl.u32 %v10146, 7
    %v10148 = vsub.s32 %v10145, %v10147
    %v10149 = vrot.slane %v10141, %v10148
    %v10151 = vunpack.c.l.s4 1983009808
    %v10152 = vunpack.c.0.s8 %v10151
    %v10153 = vlaneseq
    %v10154 = vshrl.u32 %v10153, 7
    %v10155 = vsub.s32 %v10152, %v10154
    %v10156 = vrot.slane %v10142, %v10155
    %v10157 = vcombine.low %v10149, %v10156
    %v10158 = vcombine.low %v4874, %v4881
    %v10159 = vcombine.low %v4888, %v4895
    %v10161 = vunpack.c.l.s4 1983009808
    %v10162 = vunpack.c.0.s8 %v10161
    %v10163 = vlaneseq
    %v10164 = vshrl.u32 %v10163, 7
    %v10165 = vsub.s32 %v10162, %v10164
    %v10166 = vrot.slane %v10158, %v10165
    %v10168 = vunpack.c.l.s4 1983009808
    %v10169 = vunpack.c.0.s8 %v10168
    %v10170 = vlaneseq
    %v10171 = vshrl.u32 %v10170, 7
    %v10172 = vsub.s32 %v10169, %v10171
    %v10173 = vrot.slane %v10159, %v10172
    %v10174 = vcombine.low %v10166, %v10173
    %v10175 = vcombine.low %v4902, %v4909
    %v10176 = vcombine.low %v4916, %v4923
    %v10178 = vunpack.c.l.s4 1983009808
    %v10179 = vunpack.c.0.s8 %v10178
    %v10180 = vlaneseq
    %v10181 = vshrl.u32 %v10180, 7
    %v10182 = vsub.s32 %v10179, %v10181
    %v10183 = vrot.slane %v10175, %v10182
    %v10185 = vunpack.c.l.s4 1983009808
    %v10186 = vunpack.c.0.s8 %v10185
    %v10187 = vlaneseq
    %v10188 = vshrl.u32 %v10187, 7
    %v10189 = vsub.s32 %v10186, %v10188
    %v10190 = vrot.slane %v10176, %v10189
    %v10191 = vcombine.low %v10183, %v10190
    %v10192 = vcombine.low %v4930, %v4937
    %v10193 = vcombine.low %v4944, %v4951
    %v10195 = vunpack.c.l.s4 1983009808
    %v10196 = vunpack.c.0.s8 %v10195
    %v10197 = vlaneseq
    %v10198 = vshrl.u32 %v10197, 7
    %v10199 = vsub.s32 %v10196, %v10198
    %v10200 = vrot.slane %v10192, %v10199
    %v10202 = vunpack.c.l.s4 1983009808
    %v10203 = vunpack.c.0.s8 %v10202
    %v10204 = vlaneseq
    %v10205 = vshrl.u32 %v10204, 7
    %v10206 = vsub.s32 %v10203, %v10205
    %v10207 = vrot.slane %v10193, %v10206
    %v10208 = vcombine.low %v10200, %v10207
    %v10209 = vcombine.low %v4958, %v4965
    %v10210 = vcombine.low %v4972, %v4979
    %v10212 = vunpack.c.l.s4 1983009808
    %v10213 = vunpack.c.0.s8 %v10212
    %v10214 = vlaneseq
    %v10215 = vshrl.u32 %v10214, 7
    %v10216 = vsub.s32 %v10213, %v10215
    %v10217 = vrot.slane %v10209, %v10216
    %v10219 = vunpack.c.l.s4 1983009808
    %v10220 = vunpack.c.0.s8 %v10219
    %v10221 = vlaneseq
    %v10222 = vshrl.u32 %v10221, 7
    %v10223 = vsub.s32 %v10220, %v10222
    %v10224 = vrot.slane %v10210, %v10223
    %v10225 = vcombine.low %v10217, %v10224
    %v10226 = vcombine.low %v4986, %v4993
    %v10227 = vcombine.low %v5000, %v5007
    %v10229 = vunpack.c.l.s4 1983009808
    %v10230 = vunpack.c.0.s8 %v10229
    %v10231 = vlaneseq
    %v10232 = vshrl.u32 %v10231, 7
    %v10233 = vsub.s32 %v10230, %v10232
    %v10234 = vrot.slane %v10226, %v10233
    %v10236 = vunpack.c.l.s4 1983009808
    %v10237 = vunpack.c.0.s8 %v10236
    %v10238 = vlaneseq
    %v10239 = vshrl.u32 %v10238, 7
    %v10240 = vsub.s32 %v10237, %v10239
    %v10241 = vrot.slane %v10227, %v10240
    %v10242 = vcombine.low %v10234, %v10241
    %v10243 = vcombine.low %v5014, %v5021
    %v10244 = vcombine.low %v5028, %v5035
    %v10246 = vunpack.c.l.s4 1983009808
    %v10247 = vunpack.c.0.s8 %v10246
    %v10248 = vlaneseq
    %v10249 = vshrl.u32 %v10248, 7
    %v10250 = vsub.s32 %v10247, %v10249
    %v10251 = vrot.slane %v10243, %v10250
    %v10253 = vunpack.c.l.s4 1983009808
    %v10254 = vunpack.c.0.s8 %v10253
    %v10255 = vlaneseq
    %v10256 = vshrl.u32 %v10255, 7
    %v10257 = vsub.s32 %v10254, %v10256
    %v10258 = vrot.slane %v10244, %v10257
    %v10259 = vcombine.low %v10251, %v10258
    %v10260 = vcombine.low %v5042, %v5049
    %v10261 = vcombine.low %v5056, %v5063
    %v10263 = vunpack.c.l.s4 1983009808
    %v10264 = vunpack.c.0.s8 %v10263
    %v10265 = vlaneseq
    %v10266 = vshrl.u32 %v10265, 7
    %v10267 = vsub.s32 %v10264, %v10266
    %v10268 = vrot.slane %v10260, %v10267
    %v10270 = vunpack.c.l.s4 1983009808
    %v10271 = vunpack.c.0.s8 %v10270
    %v10272 = vlaneseq
    %v10273 = vshrl.u32 %v10272, 7
    %v10274 = vsub.s32 %v10271, %v10273
    %v10275 = vrot.slane %v10261, %v10274
    %v10276 = vcombine.low %v10268, %v10275
    %v10277 = vcombine.low %v5070, %v5077
    %v10278 = vcombine.low %v5084, %v5091
    %v10280 = vunpack.c.l.s4 1983009808
    %v10281 = vunpack.c.0.s8 %v10280
    %v10282 = vlaneseq
    %v10283 = vshrl.u32 %v10282, 7
    %v10284 = vsub.s32 %v10281, %v10283
    %v10285 = vrot.slane %v10277, %v10284
    %v10287 = vunpack.c.l.s4 1983009808
    %v10288 = vunpack.c.0.s8 %v10287
    %v10289 = vlaneseq
    %v10290 = vshrl.u32 %v10289, 7
    %v10291 = vsub.s32 %v10288, %v10290
    %v10292 = vrot.slane %v10278, %v10291
    %v10293 = vcombine.low %v10285, %v10292
    %v10294 = vcombine.low %v5098, %v5105
    %v10295 = vcombine.low %v5112, %v5119
    %v10297 = vunpack.c.l.s4 1983009808
    %v10298 = vunpack.c.0.s8 %v10297
    %v10299 = vlaneseq
    %v10300 = vshrl.u32 %v10299, 7
    %v10301 = vsub.s32 %v10298, %v10300
    %v10302 = vrot.slane %v10294, %v10301
    %v10304 = vunpack.c.l.s4 1983009808
    %v10305 = vunpack.c.0.s8 %v10304
    %v10306 = vlaneseq
    %v10307 = vshrl.u32 %v10306, 7
    %v10308 = vsub.s32 %v10305, %v10307
    %v10309 = vrot.slane %v10295, %v10308
    %v10310 = vcombine.low %v10302, %v10309
    %v10311 = vcombine.low %v5126, %v5133
    %v10312 = vcombine.low %v5140, %v5147
    %v10314 = vunpack.c.l.s4 1983009808
    %v10315 = vunpack.c.0.s8 %v10314
    %v10316 = vlaneseq
    %v10317 = vshrl.u32 %v10316, 7
    %v10318 = vsub.s32 %v10315, %v10317
    %v10319 = vrot.slane %v10311, %v10318
    %v10321 = vunpack.c.l.s4 1983009808
    %v10322 = vunpack.c.0.s8 %v10321
    %v10323 = vlaneseq
    %v10324 = vshrl.u32 %v10323, 7
    %v10325 = vsub.s32 %v10322, %v10324
    %v10326 = vrot.slane %v10312, %v10325
    %v10327 = vcombine.low %v10319, %v10326
    %v10328 = vcombine.low %v5154, %v5161
    %v10329 = vcombine.low %v5168, %v5175
    %v10331 = vunpack.c.l.s4 1983009808
    %v10332 = vunpack.c.0.s8 %v10331
    %v10333 = vlaneseq
    %v10334 = vshrl.u32 %v10333, 7
    %v10335 = vsub.s32 %v10332, %v10334
    %v10336 = vrot.slane %v10328, %v10335
    %v10338 = vunpack.c.l.s4 1983009808
    %v10339 = vunpack.c.0.s8 %v10338
    %v10340 = vlaneseq
    %v10341 = vshrl.u32 %v10340, 7
    %v10342 = vsub.s32 %v10339, %v10341
    %v10343 = vrot.slane %v10329, %v10342
    %v10344 = vcombine.low %v10336, %v10343
    %v10345 = vcombine.low %v5182, %v5189
    %v10346 = vcombine.low %v5196, %v5203
    %v10348 = vunpack.c.l.s4 1983009808
    %v10349 = vunpack.c.0.s8 %v10348
    %v10350 = vlaneseq
    %v10351 = vshrl.u32 %v10350, 7
    %v10352 = vsub.s32 %v10349, %v10351
    %v10353 = vrot.slane %v10345, %v10352
    %v10355 = vunpack.c.l.s4 1983009808
    %v10356 = vunpack.c.0.s8 %v10355
    %v10357 = vlaneseq
    %v10358 = vshrl.u32 %v10357, 7
    %v10359 = vsub.s32 %v10356, %v10358
    %v10360 = vrot.slane %v10346, %v10359
    %v10361 = vcombine.low %v10353, %v10360
    %v10362 = vcombine.low %v5210, %v5217
    %v10363 = vcombine.low %v5224, %v5231
    %v10365 = vunpack.c.l.s4 1983009808
    %v10366 = vunpack.c.0.s8 %v10365
    %v10367 = vlaneseq
    %v10368 = vshrl.u32 %v10367, 7
    %v10369 = vsub.s32 %v10366, %v10368
    %v10370 = vrot.slane %v10362, %v10369
    %v10372 = vunpack.c.l.s4 1983009808
    %v10373 = vunpack.c.0.s8 %v10372
    %v10374 = vlaneseq
    %v10375 = vshrl.u32 %v10374, 7
    %v10376 = vsub.s32 %v10373, %v10375
    %v10377 = vrot.slane %v10363, %v10376
    %v10378 = vcombine.low %v10370, %v10377
    %v10379 = vcombine.low %v5238, %v5245
    %v10380 = vcombine.low %v5252, %v5259
    %v10382 = vunpack.c.l.s4 1983009808
    %v10383 = vunpack.c.0.s8 %v10382
    %v10384 = vlaneseq
    %v10385 = vshrl.u32 %v10384, 7
    %v10386 = vsub.s32 %v10383, %v10385
    %v10387 = vrot.slane %v10379, %v10386
    %v10389 = vunpack.c.l.s4 1983009808
    %v10390 = vunpack.c.0.s8 %v10389
    %v10391 = vlaneseq
    %v10392 = vshrl.u32 %v10391, 7
    %v10393 = vsub.s32 %v10390, %v10392
    %v10394 = vrot.slane %v10380, %v10393
    %v10395 = vcombine.low %v10387, %v10394
    %v10396 = vcombine.low %v5266, %v5273
    %v10397 = vcombine.low %v5280, %v5287
    %v10399 = vunpack.c.l.s4 1983009808
    %v10400 = vunpack.c.0.s8 %v10399
    %v10401 = vlaneseq
    %v10402 = vshrl.u32 %v10401, 7
    %v10403 = vsub.s32 %v10400, %v10402
    %v10404 = vrot.slane %v10396, %v10403
    %v10406 = vunpack.c.l.s4 1983009808
    %v10407 = vunpack.c.0.s8 %v10406
    %v10408 = vlaneseq
    %v10409 = vshrl.u32 %v10408, 7
    %v10410 = vsub.s32 %v10407, %v10409
    %v10411 = vrot.slane %v10397, %v10410
    %v10412 = vcombine.low %v10404, %v10411
    %v10413 = vcombine.low %v5294, %v5301
    %v10414 = vcombine.low %v5308, %v5315
    %v10416 = vunpack.c.l.s4 1983009808
    %v10417 = vunpack.c.0.s8 %v10416
    %v10418 = vlaneseq
    %v10419 = vshrl.u32 %v10418, 7
    %v10420 = vsub.s32 %v10417, %v10419
    %v10421 = vrot.slane %v10413, %v10420
    %v10423 = vunpack.c.l.s4 1983009808
    %v10424 = vunpack.c.0.s8 %v10423
    %v10425 = vlaneseq
    %v10426 = vshrl.u32 %v10425, 7
    %v10427 = vsub.s32 %v10424, %v10426
    %v10428 = vrot.slane %v10414, %v10427
    %v10429 = vcombine.low %v10421, %v10428
    %v10430 = vcombine.low %v5322, %v5329
    %v10431 = vcombine.low %v5336, %v5343
    %v10433 = vunpack.c.l.s4 1983009808
    %v10434 = vunpack.c.0.s8 %v10433
    %v10435 = vlaneseq
    %v10436 = vshrl.u32 %v10435, 7
    %v10437 = vsub.s32 %v10434, %v10436
    %v10438 = vrot.slane %v10430, %v10437
    %v10440 = vunpack.c.l.s4 1983009808
    %v10441 = vunpack.c.0.s8 %v10440
    %v10442 = vlaneseq
    %v10443 = vshrl.u32 %v10442, 7
    %v10444 = vsub.s32 %v10441, %v10443
    %v10445 = vrot.slane %v10431, %v10444
    %v10446 = vcombine.low %v10438, %v10445
    %v10447 = vcombine.low %v5350, %v5357
    %v10448 = vcombine.low %v5364, %v5371
    %v10450 = vunpack.c.l.s4 1983009808
    %v10451 = vunpack.c.0.s8 %v10450
    %v10452 = vlaneseq
    %v10453 = vshrl.u32 %v10452, 7
    %v10454 = vsub.s32 %v10451, %v10453
    %v10455 = vrot.slane %v10447, %v10454
    %v10457 = vunpack.c.l.s4 1983009808
    %v10458 = vunpack.c.0.s8 %v10457
    %v10459 = vlaneseq
    %v10460 = vshrl.u32 %v10459, 7
    %v10461 = vsub.s32 %v10458, %v10460
    %v10462 = vrot.slane %v10448, %v10461
    %v10463 = vcombine.low %v10455, %v10462
    %v10464 = vcombine.low %v5378, %v5385
    %v10465 = vcombine.low %v5392, %v5399
    %v10467 = vunpack.c.l.s4 1983009808
    %v10468 = vunpack.c.0.s8 %v10467
    %v10469 = vlaneseq
    %v10470 = vshrl.u32 %v10469, 7
    %v10471 = vsub.s32 %v10468, %v10470
    %v10472 = vrot.slane %v10464, %v10471
    %v10474 = vunpack.c.l.s4 1983009808
    %v10475 = vunpack.c.0.s8 %v10474
    %v10476 = vlaneseq
    %v10477 = vshrl.u32 %v10476, 7
    %v10478 = vsub.s32 %v10475, %v10477
    %v10479 = vrot.slane %v10465, %v10478
    %v10480 = vcombine.low %v10472, %v10479
    %v10481 = vcombine.low %v5406, %v5413
    %v10482 = vcombine.low %v5420, %v5427
    %v10484 = vunpack.c.l.s4 1983009808
    %v10485 = vunpack.c.0.s8 %v10484
    %v10486 = vlaneseq
    %v10487 = vshrl.u32 %v10486, 7
    %v10488 = vsub.s32 %v10485, %v10487
    %v10489 = vrot.slane %v10481, %v10488
    %v10491 = vunpack.c.l.s4 1983009808
    %v10492 = vunpack.c.0.s8 %v10491
    %v10493 = vlaneseq
    %v10494 = vshrl.u32 %v10493, 7
    %v10495 = vsub.s32 %v10492, %v10494
    %v10496 = vrot.slane %v10482, %v10495
    %v10497 = vcombine.low %v10489, %v10496
    %v10498 = vcombine.low %v5434, %v5441
    %v10499 = vcombine.low %v5448, %v5455
    %v10501 = vunpack.c.l.s4 1983009808
    %v10502 = vunpack.c.0.s8 %v10501
    %v10503 = vlaneseq
    %v10504 = vshrl.u32 %v10503, 7
    %v10505 = vsub.s32 %v10502, %v10504
    %v10506 = vrot.slane %v10498, %v10505
    %v10508 = vunpack.c.l.s4 1983009808
    %v10509 = vunpack.c.0.s8 %v10508
    %v10510 = vlaneseq
    %v10511 = vshrl.u32 %v10510, 7
    %v10512 = vsub.s32 %v10509, %v10511
    %v10513 = vrot.slane %v10499, %v10512
    %v10514 = vcombine.low %v10506, %v10513
    %v10515 = vcombine.low %v5462, %v5469
    %v10516 = vcombine.low %v5476, %v5483
    %v10518 = vunpack.c.l.s4 1983009808
    %v10519 = vunpack.c.0.s8 %v10518
    %v10520 = vlaneseq
    %v10521 = vshrl.u32 %v10520, 7
    %v10522 = vsub.s32 %v10519, %v10521
    %v10523 = vrot.slane %v10515, %v10522
    %v10525 = vunpack.c.l.s4 1983009808
    %v10526 = vunpack.c.0.s8 %v10525
    %v10527 = vlaneseq
    %v10528 = vshrl.u32 %v10527, 7
    %v10529 = vsub.s32 %v10526, %v10528
    %v10530 = vrot.slane %v10516, %v10529
    %v10531 = vcombine.low %v10523, %v10530
    %v10532 = vcombine.low %v5490, %v5497
    %v10533 = vcombine.low %v5504, %v5511
    %v10535 = vunpack.c.l.s4 1983009808
    %v10536 = vunpack.c.0.s8 %v10535
    %v10537 = vlaneseq
    %v10538 = vshrl.u32 %v10537, 7
    %v10539 = vsub.s32 %v10536, %v10538
    %v10540 = vrot.slane %v10532, %v10539
    %v10542 = vunpack.c.l.s4 1983009808
    %v10543 = vunpack.c.0.s8 %v10542
    %v10544 = vlaneseq
    %v10545 = vshrl.u32 %v10544, 7
    %v10546 = vsub.s32 %v10543, %v10545
    %v10547 = vrot.slane %v10533, %v10546
    %v10548 = vcombine.low %v10540, %v10547
    %v10549 = vcombine.low %v5518, %v5525
    %v10550 = vcombine.low %v5532, %v5539
    %v10552 = vunpack.c.l.s4 1983009808
    %v10553 = vunpack.c.0.s8 %v10552
    %v10554 = vlaneseq
    %v10555 = vshrl.u32 %v10554, 7
    %v10556 = vsub.s32 %v10553, %v10555
    %v10557 = vrot.slane %v10549, %v10556
    %v10559 = vunpack.c.l.s4 1983009808
    %v10560 = vunpack.c.0.s8 %v10559
    %v10561 = vlaneseq
    %v10562 = vshrl.u32 %v10561, 7
    %v10563 = vsub.s32 %v10560, %v10562
    %v10564 = vrot.slane %v10550, %v10563
    %v10565 = vcombine.low %v10557, %v10564
    %v10566 = vcombine.low %v5546, %v5553
    %v10567 = vcombine.low %v5560, %v5567
    %v10569 = vunpack.c.l.s4 1983009808
    %v10570 = vunpack.c.0.s8 %v10569
    %v10571 = vlaneseq
    %v10572 = vshrl.u32 %v10571, 7
    %v10573 = vsub.s32 %v10570, %v10572
    %v10574 = vrot.slane %v10566, %v10573
    %v10576 = vunpack.c.l.s4 1983009808
    %v10577 = vunpack.c.0.s8 %v10576
    %v10578 = vlaneseq
    %v10579 = vshrl.u32 %v10578, 7
    %v10580 = vsub.s32 %v10577, %v10579
    %v10581 = vrot.slane %v10567, %v10580
    %v10582 = vcombine.low %v10574, %v10581
    %v10583 = vcombine.low %v5574, %v5581
    %v10584 = vcombine.low %v5588, %v5595
    %v10586 = vunpack.c.l.s4 1983009808
    %v10587 = vunpack.c.0.s8 %v10586
    %v10588 = vlaneseq
    %v10589 = vshrl.u32 %v10588, 7
    %v10590 = vsub.s32 %v10587, %v10589
    %v10591 = vrot.slane %v10583, %v10590
    %v10593 = vunpack.c.l.s4 1983009808
    %v10594 = vunpack.c.0.s8 %v10593
    %v10595 = vlaneseq
    %v10596 = vshrl.u32 %v10595, 7
    %v10597 = vsub.s32 %v10594, %v10596
    %v10598 = vrot.slane %v10584, %v10597
    %v10599 = vcombine.low %v10591, %v10598
    %v10600 = vcombine.low %v5602, %v5609
    %v10601 = vcombine.low %v5616, %v5623
    %v10603 = vunpack.c.l.s4 1983009808
    %v10604 = vunpack.c.0.s8 %v10603
    %v10605 = vlaneseq
    %v10606 = vshrl.u32 %v10605, 7
    %v10607 = vsub.s32 %v10604, %v10606
    %v10608 = vrot.slane %v10600, %v10607
    %v10610 = vunpack.c.l.s4 1983009808
    %v10611 = vunpack.c.0.s8 %v10610
    %v10612 = vlaneseq
    %v10613 = vshrl.u32 %v10612, 7
    %v10614 = vsub.s32 %v10611, %v10613
    %v10615 = vrot.slane %v10601, %v10614
    %v10616 = vcombine.low %v10608, %v10615
    %v10617 = vcombine.low %v5630, %v5637
    %v10618 = vcombine.low %v5644, %v5651
    %v10620 = vunpack.c.l.s4 1983009808
    %v10621 = vunpack.c.0.s8 %v10620
    %v10622 = vlaneseq
    %v10623 = vshrl.u32 %v10622, 7
    %v10624 = vsub.s32 %v10621, %v10623
    %v10625 = vrot.slane %v10617, %v10624
    %v10627 = vunpack.c.l.s4 1983009808
    %v10628 = vunpack.c.0.s8 %v10627
    %v10629 = vlaneseq
    %v10630 = vshrl.u32 %v10629, 7
    %v10631 = vsub.s32 %v10628, %v10630
    %v10632 = vrot.slane %v10618, %v10631
    %v10633 = vcombine.low %v10625, %v10632
    %v10634 = vcombine.low %v5658, %v5665
    %v10635 = vcombine.low %v5672, %v5679
    %v10637 = vunpack.c.l.s4 1983009808
    %v10638 = vunpack.c.0.s8 %v10637
    %v10639 = vlaneseq
    %v10640 = vshrl.u32 %v10639, 7
    %v10641 = vsub.s32 %v10638, %v10640
    %v10642 = vrot.slane %v10634, %v10641
    %v10644 = vunpack.c.l.s4 1983009808
    %v10645 = vunpack.c.0.s8 %v10644
    %v10646 = vlaneseq
    %v10647 = vshrl.u32 %v10646, 7
    %v10648 = vsub.s32 %v10645, %v10647
    %v10649 = vrot.slane %v10635, %v10648
    %v10650 = vcombine.low %v10642, %v10649
    %v10651 = vcombine.low %v5686, %v5693
    %v10652 = vcombine.low %v5700, %v5707
    %v10654 = vunpack.c.l.s4 1983009808
    %v10655 = vunpack.c.0.s8 %v10654
    %v10656 = vlaneseq
    %v10657 = vshrl.u32 %v10656, 7
    %v10658 = vsub.s32 %v10655, %v10657
    %v10659 = vrot.slane %v10651, %v10658
    %v10661 = vunpack.c.l.s4 1983009808
    %v10662 = vunpack.c.0.s8 %v10661
    %v10663 = vlaneseq
    %v10664 = vshrl.u32 %v10663, 7
    %v10665 = vsub.s32 %v10662, %v10664
    %v10666 = vrot.slane %v10652, %v10665
    %v10667 = vcombine.low %v10659, %v10666
    %v10668 = vcombine.low %v5714, %v5721
    %v10669 = vcombine.low %v5728, %v5735
    %v10671 = vunpack.c.l.s4 1983009808
    %v10672 = vunpack.c.0.s8 %v10671
    %v10673 = vlaneseq
    %v10674 = vshrl.u32 %v10673, 7
    %v10675 = vsub.s32 %v10672, %v10674
    %v10676 = vrot.slane %v10668, %v10675
    %v10678 = vunpack.c.l.s4 1983009808
    %v10679 = vunpack.c.0.s8 %v10678
    %v10680 = vlaneseq
    %v10681 = vshrl.u32 %v10680, 7
    %v10682 = vsub.s32 %v10679, %v10681
    %v10683 = vrot.slane %v10669, %v10682
    %v10684 = vcombine.low %v10676, %v10683
    %v10685 = vcombine.low %v5742, %v5749
    %v10686 = vcombine.low %v5756, %v5763
    %v10688 = vunpack.c.l.s4 1983009808
    %v10689 = vunpack.c.0.s8 %v10688
    %v10690 = vlaneseq
    %v10691 = vshrl.u32 %v10690, 7
    %v10692 = vsub.s32 %v10689, %v10691
    %v10693 = vrot.slane %v10685, %v10692
    %v10695 = vunpack.c.l.s4 1983009808
    %v10696 = vunpack.c.0.s8 %v10695
    %v10697 = vlaneseq
    %v10698 = vshrl.u32 %v10697, 7
    %v10699 = vsub.s32 %v10696, %v10698
    %v10700 = vrot.slane %v10686, %v10699
    %v10701 = vcombine.low %v10693, %v10700
    %v10702 = vcombine.low %v5770, %v5777
    %v10703 = vcombine.low %v5784, %v5791
    %v10705 = vunpack.c.l.s4 1983009808
    %v10706 = vunpack.c.0.s8 %v10705
    %v10707 = vlaneseq
    %v10708 = vshrl.u32 %v10707, 7
    %v10709 = vsub.s32 %v10706, %v10708
    %v10710 = vrot.slane %v10702, %v10709
    %v10712 = vunpack.c.l.s4 1983009808
    %v10713 = vunpack.c.0.s8 %v10712
    %v10714 = vlaneseq
    %v10715 = vshrl.u32 %v10714, 7
    %v10716 = vsub.s32 %v10713, %v10715
    %v10717 = vrot.slane %v10703, %v10716
    %v10718 = vcombine.low %v10710, %v10717
    %v10719 = vcombine.low %v5798, %v5805
    %v10720 = vcombine.low %v5812, %v5819
    %v10722 = vunpack.c.l.s4 1983009808
    %v10723 = vunpack.c.0.s8 %v10722
    %v10724 = vlaneseq
    %v10725 = vshrl.u32 %v10724, 7
    %v10726 = vsub.s32 %v10723, %v10725
    %v10727 = vrot.slane %v10719, %v10726
    %v10729 = vunpack.c.l.s4 1983009808
    %v10730 = vunpack.c.0.s8 %v10729
    %v10731 = vlaneseq
    %v10732 = vshrl.u32 %v10731, 7
    %v10733 = vsub.s32 %v10730, %v10732
    %v10734 = vrot.slane %v10720, %v10733
    %v10735 = vcombine.low %v10727, %v10734
    %v10736 = vcombine.low %v5826, %v5833
    %v10737 = vcombine.low %v5840, %v5847
    %v10739 = vunpack.c.l.s4 1983009808
    %v10740 = vunpack.c.0.s8 %v10739
    %v10741 = vlaneseq
    %v10742 = vshrl.u32 %v10741, 7
    %v10743 = vsub.s32 %v10740, %v10742
    %v10744 = vrot.slane %v10736, %v10743
    %v10746 = vunpack.c.l.s4 1983009808
    %v10747 = vunpack.c.0.s8 %v10746
    %v10748 = vlaneseq
    %v10749 = vshrl.u32 %v10748, 7
    %v10750 = vsub.s32 %v10747, %v10749
    %v10751 = vrot.slane %v10737, %v10750
    %v10752 = vcombine.low %v10744, %v10751
    %v10753 = vcombine.low %v5854, %v5861
    %v10754 = vcombine.low %v5868, %v5875
    %v10756 = vunpack.c.l.s4 1983009808
    %v10757 = vunpack.c.0.s8 %v10756
    %v10758 = vlaneseq
    %v10759 = vshrl.u32 %v10758, 7
    %v10760 = vsub.s32 %v10757, %v10759
    %v10761 = vrot.slane %v10753, %v10760
    %v10763 = vunpack.c.l.s4 1983009808
    %v10764 = vunpack.c.0.s8 %v10763
    %v10765 = vlaneseq
    %v10766 = vshrl.u32 %v10765, 7
    %v10767 = vsub.s32 %v10764, %v10766
    %v10768 = vrot.slane %v10754, %v10767
    %v10769 = vcombine.low %v10761, %v10768
    %v10770 = vcombine.low %v5882, %v5889
    %v10771 = vcombine.low %v5896, %v5903
    %v10773 = vunpack.c.l.s4 1983009808
    %v10774 = vunpack.c.0.s8 %v10773
    %v10775 = vlaneseq
    %v10776 = vshrl.u32 %v10775, 7
    %v10777 = vsub.s32 %v10774, %v10776
    %v10778 = vrot.slane %v10770, %v10777
    %v10780 = vunpack.c.l.s4 1983009808
    %v10781 = vunpack.c.0.s8 %v10780
    %v10782 = vlaneseq
    %v10783 = vshrl.u32 %v10782, 7
    %v10784 = vsub.s32 %v10781, %v10783
    %v10785 = vrot.slane %v10771, %v10784
    %v10786 = vcombine.low %v10778, %v10785
    %v10787 = vcombine.low %v5910, %v5917
    %v10788 = vcombine.low %v5924, %v5931
    %v10790 = vunpack.c.l.s4 1983009808
    %v10791 = vunpack.c.0.s8 %v10790
    %v10792 = vlaneseq
    %v10793 = vshrl.u32 %v10792, 7
    %v10794 = vsub.s32 %v10791, %v10793
    %v10795 = vrot.slane %v10787, %v10794
    %v10797 = vunpack.c.l.s4 1983009808
    %v10798 = vunpack.c.0.s8 %v10797
    %v10799 = vlaneseq
    %v10800 = vshrl.u32 %v10799, 7
    %v10801 = vsub.s32 %v10798, %v10800
    %v10802 = vrot.slane %v10788, %v10801
    %v10803 = vcombine.low %v10795, %v10802
    %v10804 = vcombine.low %v5938, %v5945
    %v10805 = vcombine.low %v5952, %v5959
    %v10807 = vunpack.c.l.s4 1983009808
    %v10808 = vunpack.c.0.s8 %v10807
    %v10809 = vlaneseq
    %v10810 = vshrl.u32 %v10809, 7
    %v10811 = vsub.s32 %v10808, %v10810
    %v10812 = vrot.slane %v10804, %v10811
    %v10814 = vunpack.c.l.s4 1983009808
    %v10815 = vunpack.c.0.s8 %v10814
    %v10816 = vlaneseq
    %v10817 = vshrl.u32 %v10816, 7
    %v10818 = vsub.s32 %v10815, %v10817
    %v10819 = vrot.slane %v10805, %v10818
    %v10820 = vcombine.low %v10812, %v10819
    %v10821 = vcombine.low %v5966, %v5973
    %v10822 = vcombine.low %v5980, %v5987
    %v10824 = vunpack.c.l.s4 1983009808
    %v10825 = vunpack.c.0.s8 %v10824
    %v10826 = vlaneseq
    %v10827 = vshrl.u32 %v10826, 7
    %v10828 = vsub.s32 %v10825, %v10827
    %v10829 = vrot.slane %v10821, %v10828
    %v10831 = vunpack.c.l.s4 1983009808
    %v10832 = vunpack.c.0.s8 %v10831
    %v10833 = vlaneseq
    %v10834 = vshrl.u32 %v10833, 7
    %v10835 = vsub.s32 %v10832, %v10834
    %v10836 = vrot.slane %v10822, %v10835
    %v10837 = vcombine.low %v10829, %v10836
    %v10838 = vcombine.low %v5994, %v6001
    %v10839 = vcombine.low %v6008, %v6015
    %v10841 = vunpack.c.l.s4 1983009808
    %v10842 = vunpack.c.0.s8 %v10841
    %v10843 = vlaneseq
    %v10844 = vshrl.u32 %v10843, 7
    %v10845 = vsub.s32 %v10842, %v10844
    %v10846 = vrot.slane %v10838, %v10845
    %v10848 = vunpack.c.l.s4 1983009808
    %v10849 = vunpack.c.0.s8 %v10848
    %v10850 = vlaneseq
    %v10851 = vshrl.u32 %v10850, 7
    %v10852 = vsub.s32 %v10849, %v10851
    %v10853 = vrot.slane %v10839, %v10852
    %v10854 = vcombine.low %v10846, %v10853
    %v10855 = vcombine.low %v6022, %v6029
    %v10856 = vcombine.low %v6036, %v6043
    %v10858 = vunpack.c.l.s4 1983009808
    %v10859 = vunpack.c.0.s8 %v10858
    %v10860 = vlaneseq
    %v10861 = vshrl.u32 %v10860, 7
    %v10862 = vsub.s32 %v10859, %v10861
    %v10863 = vrot.slane %v10855, %v10862
    %v10865 = vunpack.c.l.s4 1983009808
    %v10866 = vunpack.c.0.s8 %v10865
    %v10867 = vlaneseq
    %v10868 = vshrl.u32 %v10867, 7
    %v10869 = vsub.s32 %v10866, %v10868
    %v10870 = vrot.slane %v10856, %v10869
    %v10871 = vcombine.low %v10863, %v10870
    %v10872 = vcombine.low %v6050, %v6057
    %v10873 = vcombine.low %v6064, %v6071
    %v10875 = vunpack.c.l.s4 1983009808
    %v10876 = vunpack.c.0.s8 %v10875
    %v10877 = vlaneseq
    %v10878 = vshrl.u32 %v10877, 7
    %v10879 = vsub.s32 %v10876, %v10878
    %v10880 = vrot.slane %v10872, %v10879
    %v10882 = vunpack.c.l.s4 1983009808
    %v10883 = vunpack.c.0.s8 %v10882
    %v10884 = vlaneseq
    %v10885 = vshrl.u32 %v10884, 7
    %v10886 = vsub.s32 %v10883, %v10885
    %v10887 = vrot.slane %v10873, %v10886
    %v10888 = vcombine.low %v10880, %v10887
    %v10889 = vcombine.low %v6078, %v6085
    %v10890 = vcombine.low %v6092, %v6099
    %v10892 = vunpack.c.l.s4 1983009808
    %v10893 = vunpack.c.0.s8 %v10892
    %v10894 = vlaneseq
    %v10895 = vshrl.u32 %v10894, 7
    %v10896 = vsub.s32 %v10893, %v10895
    %v10897 = vrot.slane %v10889, %v10896
    %v10899 = vunpack.c.l.s4 1983009808
    %v10900 = vunpack.c.0.s8 %v10899
    %v10901 = vlaneseq
    %v10902 = vshrl.u32 %v10901, 7
    %v10903 = vsub.s32 %v10900, %v10902
    %v10904 = vrot.slane %v10890, %v10903
    %v10905 = vcombine.low %v10897, %v10904
    %v10906 = vcombine.low %v6106, %v6113
    %v10907 = vcombine.low %v6120, %v6127
    %v10909 = vunpack.c.l.s4 1983009808
    %v10910 = vunpack.c.0.s8 %v10909
    %v10911 = vlaneseq
    %v10912 = vshrl.u32 %v10911, 7
    %v10913 = vsub.s32 %v10910, %v10912
    %v10914 = vrot.slane %v10906, %v10913
    %v10916 = vunpack.c.l.s4 1983009808
    %v10917 = vunpack.c.0.s8 %v10916
    %v10918 = vlaneseq
    %v10919 = vshrl.u32 %v10918, 7
    %v10920 = vsub.s32 %v10917, %v10919
    %v10921 = vrot.slane %v10907, %v10920
    %v10922 = vcombine.low %v10914, %v10921
    %v10923 = vcombine.low %v6134, %v6141
    %v10924 = vcombine.low %v6148, %v6155
    %v10926 = vunpack.c.l.s4 1983009808
    %v10927 = vunpack.c.0.s8 %v10926
    %v10928 = vlaneseq
    %v10929 = vshrl.u32 %v10928, 7
    %v10930 = vsub.s32 %v10927, %v10929
    %v10931 = vrot.slane %v10923, %v10930
    %v10933 = vunpack.c.l.s4 1983009808
    %v10934 = vunpack.c.0.s8 %v10933
    %v10935 = vlaneseq
    %v10936 = vshrl.u32 %v10935, 7
    %v10937 = vsub.s32 %v10934, %v10936
    %v10938 = vrot.slane %v10924, %v10937
    %v10939 = vcombine.low %v10931, %v10938
    %v10940 = vcombine.low %v6162, %v6169
    %v10941 = vcombine.low %v6176, %v6183
    %v10943 = vunpack.c.l.s4 1983009808
    %v10944 = vunpack.c.0.s8 %v10943
    %v10945 = vlaneseq
    %v10946 = vshrl.u32 %v10945, 7
    %v10947 = vsub.s32 %v10944, %v10946
    %v10948 = vrot.slane %v10940, %v10947
    %v10950 = vunpack.c.l.s4 1983009808
    %v10951 = vunpack.c.0.s8 %v10950
    %v10952 = vlaneseq
    %v10953 = vshrl.u32 %v10952, 7
    %v10954 = vsub.s32 %v10951, %v10953
    %v10955 = vrot.slane %v10941, %v10954
    %v10956 = vcombine.low %v10948, %v10955
    %v10957 = vcombine.low %v6190, %v6197
    %v10958 = vcombine.low %v6204, %v6211
    %v10960 = vunpack.c.l.s4 1983009808
    %v10961 = vunpack.c.0.s8 %v10960
    %v10962 = vlaneseq
    %v10963 = vshrl.u32 %v10962, 7
    %v10964 = vsub.s32 %v10961, %v10963
    %v10965 = vrot.slane %v10957, %v10964
    %v10967 = vunpack.c.l.s4 1983009808
    %v10968 = vunpack.c.0.s8 %v10967
    %v10969 = vlaneseq
    %v10970 = vshrl.u32 %v10969, 7
    %v10971 = vsub.s32 %v10968, %v10970
    %v10972 = vrot.slane %v10958, %v10971
    %v10973 = vcombine.low %v10965, %v10972
    %v10974 = vcombine.low %v6218, %v6225
    %v10975 = vcombine.low %v6232, %v6239
    %v10977 = vunpack.c.l.s4 1983009808
    %v10978 = vunpack.c.0.s8 %v10977
    %v10979 = vlaneseq
    %v10980 = vshrl.u32 %v10979, 7
    %v10981 = vsub.s32 %v10978, %v10980
    %v10982 = vrot.slane %v10974, %v10981
    %v10984 = vunpack.c.l.s4 1983009808
    %v10985 = vunpack.c.0.s8 %v10984
    %v10986 = vlaneseq
    %v10987 = vshrl.u32 %v10986, 7
    %v10988 = vsub.s32 %v10985, %v10987
    %v10989 = vrot.slane %v10975, %v10988
    %v10990 = vcombine.low %v10982, %v10989
    %v10991 = vcombine.low %v6246, %v6253
    %v10992 = vcombine.low %v6260, %v6267
    %v10994 = vunpack.c.l.s4 1983009808
    %v10995 = vunpack.c.0.s8 %v10994
    %v10996 = vlaneseq
    %v10997 = vshrl.u32 %v10996, 7
    %v10998 = vsub.s32 %v10995, %v10997
    %v10999 = vrot.slane %v10991, %v10998
    %v11001 = vunpack.c.l.s4 1983009808
    %v11002 = vunpack.c.0.s8 %v11001
    %v11003 = vlaneseq
    %v11004 = vshrl.u32 %v11003, 7
    %v11005 = vsub.s32 %v11002, %v11004
    %v11006 = vrot.slane %v10992, %v11005
    %v11007 = vcombine.low %v10999, %v11006
    %v11008 = vcombine.low %v6274, %v6281
    %v11009 = vcombine.low %v6288, %v6295
    %v11011 = vunpack.c.l.s4 1983009808
    %v11012 = vunpack.c.0.s8 %v11011
    %v11013 = vlaneseq
    %v11014 = vshrl.u32 %v11013, 7
    %v11015 = vsub.s32 %v11012, %v11014
    %v11016 = vrot.slane %v11008, %v11015
    %v11018 = vunpack.c.l.s4 1983009808
    %v11019 = vunpack.c.0.s8 %v11018
    %v11020 = vlaneseq
    %v11021 = vshrl.u32 %v11020, 7
    %v11022 = vsub.s32 %v11019, %v11021
    %v11023 = vrot.slane %v11009, %v11022
    %v11024 = vcombine.low %v11016, %v11023
    %v11025 = vcombine.low %v6302, %v6309
    %v11026 = vcombine.low %v6316, %v6323
    %v11028 = vunpack.c.l.s4 1983009808
    %v11029 = vunpack.c.0.s8 %v11028
    %v11030 = vlaneseq
    %v11031 = vshrl.u32 %v11030, 7
    %v11032 = vsub.s32 %v11029, %v11031
    %v11033 = vrot.slane %v11025, %v11032
    %v11035 = vunpack.c.l.s4 1983009808
    %v11036 = vunpack.c.0.s8 %v11035
    %v11037 = vlaneseq
    %v11038 = vshrl.u32 %v11037, 7
    %v11039 = vsub.s32 %v11036, %v11038
    %v11040 = vrot.slane %v11026, %v11039
    %v11041 = vcombine.low %v11033, %v11040
    %v11042 = vcombine.low %v6330, %v6337
    %v11043 = vcombine.low %v6344, %v6351
    %v11045 = vunpack.c.l.s4 1983009808
    %v11046 = vunpack.c.0.s8 %v11045
    %v11047 = vlaneseq
    %v11048 = vshrl.u32 %v11047, 7
    %v11049 = vsub.s32 %v11046, %v11048
    %v11050 = vrot.slane %v11042, %v11049
    %v11052 = vunpack.c.l.s4 1983009808
    %v11053 = vunpack.c.0.s8 %v11052
    %v11054 = vlaneseq
    %v11055 = vshrl.u32 %v11054, 7
    %v11056 = vsub.s32 %v11053, %v11055
    %v11057 = vrot.slane %v11043, %v11056
    %v11058 = vcombine.low %v11050, %v11057
    %v11059 = vcombine.low %v6358, %v6365
    %v11060 = vcombine.low %v6372, %v6379
    %v11062 = vunpack.c.l.s4 1983009808
    %v11063 = vunpack.c.0.s8 %v11062
    %v11064 = vlaneseq
    %v11065 = vshrl.u32 %v11064, 7
    %v11066 = vsub.s32 %v11063, %v11065
    %v11067 = vrot.slane %v11059, %v11066
    %v11069 = vunpack.c.l.s4 1983009808
    %v11070 = vunpack.c.0.s8 %v11069
    %v11071 = vlaneseq
    %v11072 = vshrl.u32 %v11071, 7
    %v11073 = vsub.s32 %v11070, %v11072
    %v11074 = vrot.slane %v11060, %v11073
    %v11075 = vcombine.low %v11067, %v11074
    %v11076 = vcombine.low %v6386, %v6393
    %v11077 = vcombine.low %v6400, %v6407
    %v11079 = vunpack.c.l.s4 1983009808
    %v11080 = vunpack.c.0.s8 %v11079
    %v11081 = vlaneseq
    %v11082 = vshrl.u32 %v11081, 7
    %v11083 = vsub.s32 %v11080, %v11082
    %v11084 = vrot.slane %v11076, %v11083
    %v11086 = vunpack.c.l.s4 1983009808
    %v11087 = vunpack.c.0.s8 %v11086
    %v11088 = vlaneseq
    %v11089 = vshrl.u32 %v11088, 7
    %v11090 = vsub.s32 %v11087, %v11089
    %v11091 = vrot.slane %v11077, %v11090
    %v11092 = vcombine.low %v11084, %v11091
    %v11093 = vcombine.low %v6414, %v6421
    %v11094 = vcombine.low %v6428, %v6435
    %v11096 = vunpack.c.l.s4 1983009808
    %v11097 = vunpack.c.0.s8 %v11096
    %v11098 = vlaneseq
    %v11099 = vshrl.u32 %v11098, 7
    %v11100 = vsub.s32 %v11097, %v11099
    %v11101 = vrot.slane %v11093, %v11100
    %v11103 = vunpack.c.l.s4 1983009808
    %v11104 = vunpack.c.0.s8 %v11103
    %v11105 = vlaneseq
    %v11106 = vshrl.u32 %v11105, 7
    %v11107 = vsub.s32 %v11104, %v11106
    %v11108 = vrot.slane %v11094, %v11107
    %v11109 = vcombine.low %v11101, %v11108
    %v11110 = vcombine.low %v6442, %v6449
    %v11111 = vcombine.low %v6456, %v6463
    %v11113 = vunpack.c.l.s4 1983009808
    %v11114 = vunpack.c.0.s8 %v11113
    %v11115 = vlaneseq
    %v11116 = vshrl.u32 %v11115, 7
    %v11117 = vsub.s32 %v11114, %v11116
    %v11118 = vrot.slane %v11110, %v11117
    %v11120 = vunpack.c.l.s4 1983009808
    %v11121 = vunpack.c.0.s8 %v11120
    %v11122 = vlaneseq
    %v11123 = vshrl.u32 %v11122, 7
    %v11124 = vsub.s32 %v11121, %v11123
    %v11125 = vrot.slane %v11111, %v11124
    %v11126 = vcombine.low %v11118, %v11125
    %v11127 = vcombine.low %v6470, %v6477
    %v11128 = vcombine.low %v6484, %v6491
    %v11130 = vunpack.c.l.s4 1983009808
    %v11131 = vunpack.c.0.s8 %v11130
    %v11132 = vlaneseq
    %v11133 = vshrl.u32 %v11132, 7
    %v11134 = vsub.s32 %v11131, %v11133
    %v11135 = vrot.slane %v11127, %v11134
    %v11137 = vunpack.c.l.s4 1983009808
    %v11138 = vunpack.c.0.s8 %v11137
    %v11139 = vlaneseq
    %v11140 = vshrl.u32 %v11139, 7
    %v11141 = vsub.s32 %v11138, %v11140
    %v11142 = vrot.slane %v11128, %v11141
    %v11143 = vcombine.low %v11135, %v11142
    %v11144 = vcombine.low %v6498, %v6505
    %v11145 = vcombine.low %v6512, %v6519
    %v11147 = vunpack.c.l.s4 1983009808
    %v11148 = vunpack.c.0.s8 %v11147
    %v11149 = vlaneseq
    %v11150 = vshrl.u32 %v11149, 7
    %v11151 = vsub.s32 %v11148, %v11150
    %v11152 = vrot.slane %v11144, %v11151
    %v11154 = vunpack.c.l.s4 1983009808
    %v11155 = vunpack.c.0.s8 %v11154
    %v11156 = vlaneseq
    %v11157 = vshrl.u32 %v11156, 7
    %v11158 = vsub.s32 %v11155, %v11157
    %v11159 = vrot.slane %v11145, %v11158
    %v11160 = vcombine.low %v11152, %v11159
    %v11161 = vcombine.low %v6526, %v6533
    %v11162 = vcombine.low %v6540, %v6547
    %v11164 = vunpack.c.l.s4 1983009808
    %v11165 = vunpack.c.0.s8 %v11164
    %v11166 = vlaneseq
    %v11167 = vshrl.u32 %v11166, 7
    %v11168 = vsub.s32 %v11165, %v11167
    %v11169 = vrot.slane %v11161, %v11168
    %v11171 = vunpack.c.l.s4 1983009808
    %v11172 = vunpack.c.0.s8 %v11171
    %v11173 = vlaneseq
    %v11174 = vshrl.u32 %v11173, 7
    %v11175 = vsub.s32 %v11172, %v11174
    %v11176 = vrot.slane %v11162, %v11175
    %v11177 = vcombine.low %v11169, %v11176
    %v11178 = vcombine.low %v6554, %v6561
    %v11179 = vcombine.low %v6568, %v6575
    %v11181 = vunpack.c.l.s4 1983009808
    %v11182 = vunpack.c.0.s8 %v11181
    %v11183 = vlaneseq
    %v11184 = vshrl.u32 %v11183, 7
    %v11185 = vsub.s32 %v11182, %v11184
    %v11186 = vrot.slane %v11178, %v11185
    %v11188 = vunpack.c.l.s4 1983009808
    %v11189 = vunpack.c.0.s8 %v11188
    %v11190 = vlaneseq
    %v11191 = vshrl.u32 %v11190, 7
    %v11192 = vsub.s32 %v11189, %v11191
    %v11193 = vrot.slane %v11179, %v11192
    %v11194 = vcombine.low %v11186, %v11193
    %v11195 = vcombine.low %v6582, %v6589
    %v11196 = vcombine.low %v6596, %v6603
    %v11198 = vunpack.c.l.s4 1983009808
    %v11199 = vunpack.c.0.s8 %v11198
    %v11200 = vlaneseq
    %v11201 = vshrl.u32 %v11200, 7
    %v11202 = vsub.s32 %v11199, %v11201
    %v11203 = vrot.slane %v11195, %v11202
    %v11205 = vunpack.c.l.s4 1983009808
    %v11206 = vunpack.c.0.s8 %v11205
    %v11207 = vlaneseq
    %v11208 = vshrl.u32 %v11207, 7
    %v11209 = vsub.s32 %v11206, %v11208
    %v11210 = vrot.slane %v11196, %v11209
    %v11211 = vcombine.low %v11203, %v11210
    %v11212 = vcombine.low %v6610, %v6617
    %v11213 = vcombine.low %v6624, %v6631
    %v11215 = vunpack.c.l.s4 1983009808
    %v11216 = vunpack.c.0.s8 %v11215
    %v11217 = vlaneseq
    %v11218 = vshrl.u32 %v11217, 7
    %v11219 = vsub.s32 %v11216, %v11218
    %v11220 = vrot.slane %v11212, %v11219
    %v11222 = vunpack.c.l.s4 1983009808
    %v11223 = vunpack.c.0.s8 %v11222
    %v11224 = vlaneseq
    %v11225 = vshrl.u32 %v11224, 7
    %v11226 = vsub.s32 %v11223, %v11225
    %v11227 = vrot.slane %v11213, %v11226
    %v11228 = vcombine.low %v11220, %v11227
    %v11229 = vcombine.low %v6638, %v6645
    %v11230 = vcombine.low %v6652, %v6659
    %v11232 = vunpack.c.l.s4 1983009808
    %v11233 = vunpack.c.0.s8 %v11232
    %v11234 = vlaneseq
    %v11235 = vshrl.u32 %v11234, 7
    %v11236 = vsub.s32 %v11233, %v11235
    %v11237 = vrot.slane %v11229, %v11236
    %v11239 = vunpack.c.l.s4 1983009808
    %v11240 = vunpack.c.0.s8 %v11239
    %v11241 = vlaneseq
    %v11242 = vshrl.u32 %v11241, 7
    %v11243 = vsub.s32 %v11240, %v11242
    %v11244 = vrot.slane %v11230, %v11243
    %v11245 = vcombine.low %v11237, %v11244
    %v11246 = vcombine.low %v6666, %v6673
    %v11247 = vcombine.low %v6680, %v6687
    %v11249 = vunpack.c.l.s4 1983009808
    %v11250 = vunpack.c.0.s8 %v11249
    %v11251 = vlaneseq
    %v11252 = vshrl.u32 %v11251, 7
    %v11253 = vsub.s32 %v11250, %v11252
    %v11254 = vrot.slane %v11246, %v11253
    %v11256 = vunpack.c.l.s4 1983009808
    %v11257 = vunpack.c.0.s8 %v11256
    %v11258 = vlaneseq
    %v11259 = vshrl.u32 %v11258, 7
    %v11260 = vsub.s32 %v11257, %v11259
    %v11261 = vrot.slane %v11247, %v11260
    %v11262 = vcombine.low %v11254, %v11261
    %v11263 = vcombine.low %v6694, %v6701
    %v11264 = vcombine.low %v6708, %v6715
    %v11266 = vunpack.c.l.s4 1983009808
    %v11267 = vunpack.c.0.s8 %v11266
    %v11268 = vlaneseq
    %v11269 = vshrl.u32 %v11268, 7
    %v11270 = vsub.s32 %v11267, %v11269
    %v11271 = vrot.slane %v11263, %v11270
    %v11273 = vunpack.c.l.s4 1983009808
    %v11274 = vunpack.c.0.s8 %v11273
    %v11275 = vlaneseq
    %v11276 = vshrl.u32 %v11275, 7
    %v11277 = vsub.s32 %v11274, %v11276
    %v11278 = vrot.slane %v11264, %v11277
    %v11279 = vcombine.low %v11271, %v11278
    %v11280 = vcombine.low %v6722, %v6729
    %v11281 = vcombine.low %v6736, %v6743
    %v11283 = vunpack.c.l.s4 1983009808
    %v11284 = vunpack.c.0.s8 %v11283
    %v11285 = vlaneseq
    %v11286 = vshrl.u32 %v11285, 7
    %v11287 = vsub.s32 %v11284, %v11286
    %v11288 = vrot.slane %v11280, %v11287
    %v11290 = vunpack.c.l.s4 1983009808
    %v11291 = vunpack.c.0.s8 %v11290
    %v11292 = vlaneseq
    %v11293 = vshrl.u32 %v11292, 7
    %v11294 = vsub.s32 %v11291, %v11293
    %v11295 = vrot.slane %v11281, %v11294
    %v11296 = vcombine.low %v11288, %v11295
    %v11297 = vcombine.low %v6750, %v6757
    %v11298 = vcombine.low %v6764, %v6771
    %v11300 = vunpack.c.l.s4 1983009808
    %v11301 = vunpack.c.0.s8 %v11300
    %v11302 = vlaneseq
    %v11303 = vshrl.u32 %v11302, 7
    %v11304 = vsub.s32 %v11301, %v11303
    %v11305 = vrot.slane %v11297, %v11304
    %v11307 = vunpack.c.l.s4 1983009808
    %v11308 = vunpack.c.0.s8 %v11307
    %v11309 = vlaneseq
    %v11310 = vshrl.u32 %v11309, 7
    %v11311 = vsub.s32 %v11308, %v11310
    %v11312 = vrot.slane %v11298, %v11311
    %v11313 = vcombine.low %v11305, %v11312
    %v11314 = vcombine.low %v6778, %v6785
    %v11315 = vcombine.low %v6792, %v6799
    %v11317 = vunpack.c.l.s4 1983009808
    %v11318 = vunpack.c.0.s8 %v11317
    %v11319 = vlaneseq
    %v11320 = vshrl.u32 %v11319, 7
    %v11321 = vsub.s32 %v11318, %v11320
    %v11322 = vrot.slane %v11314, %v11321
    %v11324 = vunpack.c.l.s4 1983009808
    %v11325 = vunpack.c.0.s8 %v11324
    %v11326 = vlaneseq
    %v11327 = vshrl.u32 %v11326, 7
    %v11328 = vsub.s32 %v11325, %v11327
    %v11329 = vrot.slane %v11315, %v11328
    %v11330 = vcombine.low %v11322, %v11329
    %v11331 = vcombine.low %v6806, %v6813
    %v11332 = vcombine.low %v6820, %v6827
    %v11334 = vunpack.c.l.s4 1983009808
    %v11335 = vunpack.c.0.s8 %v11334
    %v11336 = vlaneseq
    %v11337 = vshrl.u32 %v11336, 7
    %v11338 = vsub.s32 %v11335, %v11337
    %v11339 = vrot.slane %v11331, %v11338
    %v11341 = vunpack.c.l.s4 1983009808
    %v11342 = vunpack.c.0.s8 %v11341
    %v11343 = vlaneseq
    %v11344 = vshrl.u32 %v11343, 7
    %v11345 = vsub.s32 %v11342, %v11344
    %v11346 = vrot.slane %v11332, %v11345
    %v11347 = vcombine.low %v11339, %v11346
    %v11348 = vcombine.low %v6834, %v6841
    %v11349 = vcombine.low %v6848, %v6855
    %v11351 = vunpack.c.l.s4 1983009808
    %v11352 = vunpack.c.0.s8 %v11351
    %v11353 = vlaneseq
    %v11354 = vshrl.u32 %v11353, 7
    %v11355 = vsub.s32 %v11352, %v11354
    %v11356 = vrot.slane %v11348, %v11355
    %v11358 = vunpack.c.l.s4 1983009808
    %v11359 = vunpack.c.0.s8 %v11358
    %v11360 = vlaneseq
    %v11361 = vshrl.u32 %v11360, 7
    %v11362 = vsub.s32 %v11359, %v11361
    %v11363 = vrot.slane %v11349, %v11362
    %v11364 = vcombine.low %v11356, %v11363
    %v11365 = vcombine.low %v6862, %v6869
    %v11366 = vcombine.low %v6876, %v6883
    %v11368 = vunpack.c.l.s4 1983009808
    %v11369 = vunpack.c.0.s8 %v11368
    %v11370 = vlaneseq
    %v11371 = vshrl.u32 %v11370, 7
    %v11372 = vsub.s32 %v11369, %v11371
    %v11373 = vrot.slane %v11365, %v11372
    %v11375 = vunpack.c.l.s4 1983009808
    %v11376 = vunpack.c.0.s8 %v11375
    %v11377 = vlaneseq
    %v11378 = vshrl.u32 %v11377, 7
    %v11379 = vsub.s32 %v11376, %v11378
    %v11380 = vrot.slane %v11366, %v11379
    %v11381 = vcombine.low %v11373, %v11380
    %v11382 = vcombine.low %v6890, %v6897
    %v11383 = vcombine.low %v6904, %v6911
    %v11385 = vunpack.c.l.s4 1983009808
    %v11386 = vunpack.c.0.s8 %v11385
    %v11387 = vlaneseq
    %v11388 = vshrl.u32 %v11387, 7
    %v11389 = vsub.s32 %v11386, %v11388
    %v11390 = vrot.slane %v11382, %v11389
    %v11392 = vunpack.c.l.s4 1983009808
    %v11393 = vunpack.c.0.s8 %v11392
    %v11394 = vlaneseq
    %v11395 = vshrl.u32 %v11394, 7
    %v11396 = vsub.s32 %v11393, %v11395
    %v11397 = vrot.slane %v11383, %v11396
    %v11398 = vcombine.low %v11390, %v11397
    %v11399 = vcombine.low %v6918, %v6925
    %v11400 = vcombine.low %v6932, %v6939
    %v11402 = vunpack.c.l.s4 1983009808
    %v11403 = vunpack.c.0.s8 %v11402
    %v11404 = vlaneseq
    %v11405 = vshrl.u32 %v11404, 7
    %v11406 = vsub.s32 %v11403, %v11405
    %v11407 = vrot.slane %v11399, %v11406
    %v11409 = vunpack.c.l.s4 1983009808
    %v11410 = vunpack.c.0.s8 %v11409
    %v11411 = vlaneseq
    %v11412 = vshrl.u32 %v11411, 7
    %v11413 = vsub.s32 %v11410, %v11412
    %v11414 = vrot.slane %v11400, %v11413
    %v11415 = vcombine.low %v11407, %v11414
    %v11416 = vcombine.low %v6946, %v6953
    %v11417 = vcombine.low %v6960, %v6967
    %v11419 = vunpack.c.l.s4 1983009808
    %v11420 = vunpack.c.0.s8 %v11419
    %v11421 = vlaneseq
    %v11422 = vshrl.u32 %v11421, 7
    %v11423 = vsub.s32 %v11420, %v11422
    %v11424 = vrot.slane %v11416, %v11423
    %v11426 = vunpack.c.l.s4 1983009808
    %v11427 = vunpack.c.0.s8 %v11426
    %v11428 = vlaneseq
    %v11429 = vshrl.u32 %v11428, 7
    %v11430 = vsub.s32 %v11427, %v11429
    %v11431 = vrot.slane %v11417, %v11430
    %v11432 = vcombine.low %v11424, %v11431
    %v11433 = vcombine.low %v6974, %v6981
    %v11434 = vcombine.low %v6988, %v6995
    %v11436 = vunpack.c.l.s4 1983009808
    %v11437 = vunpack.c.0.s8 %v11436
    %v11438 = vlaneseq
    %v11439 = vshrl.u32 %v11438, 7
    %v11440 = vsub.s32 %v11437, %v11439
    %v11441 = vrot.slane %v11433, %v11440
    %v11443 = vunpack.c.l.s4 1983009808
    %v11444 = vunpack.c.0.s8 %v11443
    %v11445 = vlaneseq
    %v11446 = vshrl.u32 %v11445, 7
    %v11447 = vsub.s32 %v11444, %v11446
    %v11448 = vrot.slane %v11434, %v11447
    %v11449 = vcombine.low %v11441, %v11448
    %v11450 = vcombine.low %v7002, %v7009
    %v11451 = vcombine.low %v7016, %v7023
    %v11453 = vunpack.c.l.s4 1983009808
    %v11454 = vunpack.c.0.s8 %v11453
    %v11455 = vlaneseq
    %v11456 = vshrl.u32 %v11455, 7
    %v11457 = vsub.s32 %v11454, %v11456
    %v11458 = vrot.slane %v11450, %v11457
    %v11460 = vunpack.c.l.s4 1983009808
    %v11461 = vunpack.c.0.s8 %v11460
    %v11462 = vlaneseq
    %v11463 = vshrl.u32 %v11462, 7
    %v11464 = vsub.s32 %v11461, %v11463
    %v11465 = vrot.slane %v11451, %v11464
    %v11466 = vcombine.low %v11458, %v11465
    %v11467 = vcombine.low %v7030, %v7037
    %v11468 = vcombine.low %v7044, %v7051
    %v11470 = vunpack.c.l.s4 1983009808
    %v11471 = vunpack.c.0.s8 %v11470
    %v11472 = vlaneseq
    %v11473 = vshrl.u32 %v11472, 7
    %v11474 = vsub.s32 %v11471, %v11473
    %v11475 = vrot.slane %v11467, %v11474
    %v11477 = vunpack.c.l.s4 1983009808
    %v11478 = vunpack.c.0.s8 %v11477
    %v11479 = vlaneseq
    %v11480 = vshrl.u32 %v11479, 7
    %v11481 = vsub.s32 %v11478, %v11480
    %v11482 = vrot.slane %v11468, %v11481
    %v11483 = vcombine.low %v11475, %v11482
    %v11484 = vcombine.low %v7058, %v7065
    %v11485 = vcombine.low %v7072, %v7079
    %v11487 = vunpack.c.l.s4 1983009808
    %v11488 = vunpack.c.0.s8 %v11487
    %v11489 = vlaneseq
    %v11490 = vshrl.u32 %v11489, 7
    %v11491 = vsub.s32 %v11488, %v11490
    %v11492 = vrot.slane %v11484, %v11491
    %v11494 = vunpack.c.l.s4 1983009808
    %v11495 = vunpack.c.0.s8 %v11494
    %v11496 = vlaneseq
    %v11497 = vshrl.u32 %v11496, 7
    %v11498 = vsub.s32 %v11495, %v11497
    %v11499 = vrot.slane %v11485, %v11498
    %v11500 = vcombine.low %v11492, %v11499
    %v11501 = vcombine.low %v7086, %v7093
    %v11502 = vcombine.low %v7100, %v7107
    %v11504 = vunpack.c.l.s4 1983009808
    %v11505 = vunpack.c.0.s8 %v11504
    %v11506 = vlaneseq
    %v11507 = vshrl.u32 %v11506, 7
    %v11508 = vsub.s32 %v11505, %v11507
    %v11509 = vrot.slane %v11501, %v11508
    %v11511 = vunpack.c.l.s4 1983009808
    %v11512 = vunpack.c.0.s8 %v11511
    %v11513 = vlaneseq
    %v11514 = vshrl.u32 %v11513, 7
    %v11515 = vsub.s32 %v11512, %v11514
    %v11516 = vrot.slane %v11502, %v11515
    %v11517 = vcombine.low %v11509, %v11516
    %v11518 = vcombine.low %v7114, %v7121
    %v11519 = vcombine.low %v7128, %v7135
    %v11521 = vunpack.c.l.s4 1983009808
    %v11522 = vunpack.c.0.s8 %v11521
    %v11523 = vlaneseq
    %v11524 = vshrl.u32 %v11523, 7
    %v11525 = vsub.s32 %v11522, %v11524
    %v11526 = vrot.slane %v11518, %v11525
    %v11528 = vunpack.c.l.s4 1983009808
    %v11529 = vunpack.c.0.s8 %v11528
    %v11530 = vlaneseq
    %v11531 = vshrl.u32 %v11530, 7
    %v11532 = vsub.s32 %v11529, %v11531
    %v11533 = vrot.slane %v11519, %v11532
    %v11534 = vcombine.low %v11526, %v11533
    %v11535 = vcombine.low %v7142, %v7149
    %v11536 = vcombine.low %v7156, %v7163
    %v11538 = vunpack.c.l.s4 1983009808
    %v11539 = vunpack.c.0.s8 %v11538
    %v11540 = vlaneseq
    %v11541 = vshrl.u32 %v11540, 7
    %v11542 = vsub.s32 %v11539, %v11541
    %v11543 = vrot.slane %v11535, %v11542
    %v11545 = vunpack.c.l.s4 1983009808
    %v11546 = vunpack.c.0.s8 %v11545
    %v11547 = vlaneseq
    %v11548 = vshrl.u32 %v11547, 7
    %v11549 = vsub.s32 %v11546, %v11548
    %v11550 = vrot.slane %v11536, %v11549
    %v11551 = vcombine.low %v11543, %v11550
    %v11552 = vcombine.low %v7170, %v7177
    %v11553 = vcombine.low %v7184, %v7191
    %v11555 = vunpack.c.l.s4 1983009808
    %v11556 = vunpack.c.0.s8 %v11555
    %v11557 = vlaneseq
    %v11558 = vshrl.u32 %v11557, 7
    %v11559 = vsub.s32 %v11556, %v11558
    %v11560 = vrot.slane %v11552, %v11559
    %v11562 = vunpack.c.l.s4 1983009808
    %v11563 = vunpack.c.0.s8 %v11562
    %v11564 = vlaneseq
    %v11565 = vshrl.u32 %v11564, 7
    %v11566 = vsub.s32 %v11563, %v11565
    %v11567 = vrot.slane %v11553, %v11566
    %v11568 = vcombine.low %v11560, %v11567
    %v11569 = vcombine.low %v7198, %v7205
    %v11570 = vcombine.low %v7212, %v7219
    %v11572 = vunpack.c.l.s4 1983009808
    %v11573 = vunpack.c.0.s8 %v11572
    %v11574 = vlaneseq
    %v11575 = vshrl.u32 %v11574, 7
    %v11576 = vsub.s32 %v11573, %v11575
    %v11577 = vrot.slane %v11569, %v11576
    %v11579 = vunpack.c.l.s4 1983009808
    %v11580 = vunpack.c.0.s8 %v11579
    %v11581 = vlaneseq
    %v11582 = vshrl.u32 %v11581, 7
    %v11583 = vsub.s32 %v11580, %v11582
    %v11584 = vrot.slane %v11570, %v11583
    %v11585 = vcombine.low %v11577, %v11584
    %v11586 = vcombine.low %v7226, %v7233
    %v11587 = vcombine.low %v7240, %v7247
    %v11589 = vunpack.c.l.s4 1983009808
    %v11590 = vunpack.c.0.s8 %v11589
    %v11591 = vlaneseq
    %v11592 = vshrl.u32 %v11591, 7
    %v11593 = vsub.s32 %v11590, %v11592
    %v11594 = vrot.slane %v11586, %v11593
    %v11596 = vunpack.c.l.s4 1983009808
    %v11597 = vunpack.c.0.s8 %v11596
    %v11598 = vlaneseq
    %v11599 = vshrl.u32 %v11598, 7
    %v11600 = vsub.s32 %v11597, %v11599
    %v11601 = vrot.slane %v11587, %v11600
    %v11602 = vcombine.low %v11594, %v11601
    %v11603 = vcombine.low %v7254, %v7261
    %v11604 = vcombine.low %v7268, %v7275
    %v11606 = vunpack.c.l.s4 1983009808
    %v11607 = vunpack.c.0.s8 %v11606
    %v11608 = vlaneseq
    %v11609 = vshrl.u32 %v11608, 7
    %v11610 = vsub.s32 %v11607, %v11609
    %v11611 = vrot.slane %v11603, %v11610
    %v11613 = vunpack.c.l.s4 1983009808
    %v11614 = vunpack.c.0.s8 %v11613
    %v11615 = vlaneseq
    %v11616 = vshrl.u32 %v11615, 7
    %v11617 = vsub.s32 %v11614, %v11616
    %v11618 = vrot.slane %v11604, %v11617
    %v11619 = vcombine.low %v11611, %v11618
    %v11620 = vcombine.low %v7282, %v7289
    %v11621 = vcombine.low %v7296, %v7303
    %v11623 = vunpack.c.l.s4 1983009808
    %v11624 = vunpack.c.0.s8 %v11623
    %v11625 = vlaneseq
    %v11626 = vshrl.u32 %v11625, 7
    %v11627 = vsub.s32 %v11624, %v11626
    %v11628 = vrot.slane %v11620, %v11627
    %v11630 = vunpack.c.l.s4 1983009808
    %v11631 = vunpack.c.0.s8 %v11630
    %v11632 = vlaneseq
    %v11633 = vshrl.u32 %v11632, 7
    %v11634 = vsub.s32 %v11631, %v11633
    %v11635 = vrot.slane %v11621, %v11634
    %v11636 = vcombine.low %v11628, %v11635
    %v11637 = vcombine.low %v7310, %v7317
    %v11638 = vcombine.low %v7324, %v7331
    %v11640 = vunpack.c.l.s4 1983009808
    %v11641 = vunpack.c.0.s8 %v11640
    %v11642 = vlaneseq
    %v11643 = vshrl.u32 %v11642, 7
    %v11644 = vsub.s32 %v11641, %v11643
    %v11645 = vrot.slane %v11637, %v11644
    %v11647 = vunpack.c.l.s4 1983009808
    %v11648 = vunpack.c.0.s8 %v11647
    %v11649 = vlaneseq
    %v11650 = vshrl.u32 %v11649, 7
    %v11651 = vsub.s32 %v11648, %v11650
    %v11652 = vrot.slane %v11638, %v11651
    %v11653 = vcombine.low %v11645, %v11652
    %v11654 = vcombine.low %v7338, %v7345
    %v11655 = vcombine.low %v7352, %v7359
    %v11657 = vunpack.c.l.s4 1983009808
    %v11658 = vunpack.c.0.s8 %v11657
    %v11659 = vlaneseq
    %v11660 = vshrl.u32 %v11659, 7
    %v11661 = vsub.s32 %v11658, %v11660
    %v11662 = vrot.slane %v11654, %v11661
    %v11664 = vunpack.c.l.s4 1983009808
    %v11665 = vunpack.c.0.s8 %v11664
    %v11666 = vlaneseq
    %v11667 = vshrl.u32 %v11666, 7
    %v11668 = vsub.s32 %v11665, %v11667
    %v11669 = vrot.slane %v11655, %v11668
    %v11670 = vcombine.low %v11662, %v11669
    %v11671 = vcombine.low %v7366, %v7373
    %v11672 = vcombine.low %v7380, %v7387
    %v11674 = vunpack.c.l.s4 1983009808
    %v11675 = vunpack.c.0.s8 %v11674
    %v11676 = vlaneseq
    %v11677 = vshrl.u32 %v11676, 7
    %v11678 = vsub.s32 %v11675, %v11677
    %v11679 = vrot.slane %v11671, %v11678
    %v11681 = vunpack.c.l.s4 1983009808
    %v11682 = vunpack.c.0.s8 %v11681
    %v11683 = vlaneseq
    %v11684 = vshrl.u32 %v11683, 7
    %v11685 = vsub.s32 %v11682, %v11684
    %v11686 = vrot.slane %v11672, %v11685
    %v11687 = vcombine.low %v11679, %v11686
    %v11688 = vcombine.low %v7394, %v7401
    %v11689 = vcombine.low %v7408, %v7415
    %v11691 = vunpack.c.l.s4 1983009808
    %v11692 = vunpack.c.0.s8 %v11691
    %v11693 = vlaneseq
    %v11694 = vshrl.u32 %v11693, 7
    %v11695 = vsub.s32 %v11692, %v11694
    %v11696 = vrot.slane %v11688, %v11695
    %v11698 = vunpack.c.l.s4 1983009808
    %v11699 = vunpack.c.0.s8 %v11698
    %v11700 = vlaneseq
    %v11701 = vshrl.u32 %v11700, 7
    %v11702 = vsub.s32 %v11699, %v11701
    %v11703 = vrot.slane %v11689, %v11702
    %v11704 = vcombine.low %v11696, %v11703
    %v11705 = vcombine.low %v7422, %v7429
    %v11706 = vcombine.low %v7436, %v7443
    %v11708 = vunpack.c.l.s4 1983009808
    %v11709 = vunpack.c.0.s8 %v11708
    %v11710 = vlaneseq
    %v11711 = vshrl.u32 %v11710, 7
    %v11712 = vsub.s32 %v11709, %v11711
    %v11713 = vrot.slane %v11705, %v11712
    %v11715 = vunpack.c.l.s4 1983009808
    %v11716 = vunpack.c.0.s8 %v11715
    %v11717 = vlaneseq
    %v11718 = vshrl.u32 %v11717, 7
    %v11719 = vsub.s32 %v11716, %v11718
    %v11720 = vrot.slane %v11706, %v11719
    %v11721 = vcombine.low %v11713, %v11720
    %v11722 = vcombine.low %v7450, %v7457
    %v11723 = vcombine.low %v7464, %v7471
    %v11725 = vunpack.c.l.s4 1983009808
    %v11726 = vunpack.c.0.s8 %v11725
    %v11727 = vlaneseq
    %v11728 = vshrl.u32 %v11727, 7
    %v11729 = vsub.s32 %v11726, %v11728
    %v11730 = vrot.slane %v11722, %v11729
    %v11732 = vunpack.c.l.s4 1983009808
    %v11733 = vunpack.c.0.s8 %v11732
    %v11734 = vlaneseq
    %v11735 = vshrl.u32 %v11734, 7
    %v11736 = vsub.s32 %v11733, %v11735
    %v11737 = vrot.slane %v11723, %v11736
    %v11738 = vcombine.low %v11730, %v11737
    %v11739 = vcombine.low %v7478, %v7485
    %v11740 = vcombine.low %v7492, %v7499
    %v11742 = vunpack.c.l.s4 1983009808
    %v11743 = vunpack.c.0.s8 %v11742
    %v11744 = vlaneseq
    %v11745 = vshrl.u32 %v11744, 7
    %v11746 = vsub.s32 %v11743, %v11745
    %v11747 = vrot.slane %v11739, %v11746
    %v11749 = vunpack.c.l.s4 1983009808
    %v11750 = vunpack.c.0.s8 %v11749
    %v11751 = vlaneseq
    %v11752 = vshrl.u32 %v11751, 7
    %v11753 = vsub.s32 %v11750, %v11752
    %v11754 = vrot.slane %v11740, %v11753
    %v11755 = vcombine.low %v11747, %v11754
    %v11756 = vcombine.low %v7506, %v7513
    %v11757 = vcombine.low %v7520, %v7527
    %v11759 = vunpack.c.l.s4 1983009808
    %v11760 = vunpack.c.0.s8 %v11759
    %v11761 = vlaneseq
    %v11762 = vshrl.u32 %v11761, 7
    %v11763 = vsub.s32 %v11760, %v11762
    %v11764 = vrot.slane %v11756, %v11763
    %v11766 = vunpack.c.l.s4 1983009808
    %v11767 = vunpack.c.0.s8 %v11766
    %v11768 = vlaneseq
    %v11769 = vshrl.u32 %v11768, 7
    %v11770 = vsub.s32 %v11767, %v11769
    %v11771 = vrot.slane %v11757, %v11770
    %v11772 = vcombine.low %v11764, %v11771
    %v11773 = vcombine.low %v7534, %v7541
    %v11774 = vcombine.low %v7548, %v7555
    %v11776 = vunpack.c.l.s4 1983009808
    %v11777 = vunpack.c.0.s8 %v11776
    %v11778 = vlaneseq
    %v11779 = vshrl.u32 %v11778, 7
    %v11780 = vsub.s32 %v11777, %v11779
    %v11781 = vrot.slane %v11773, %v11780
    %v11783 = vunpack.c.l.s4 1983009808
    %v11784 = vunpack.c.0.s8 %v11783
    %v11785 = vlaneseq
    %v11786 = vshrl.u32 %v11785, 7
    %v11787 = vsub.s32 %v11784, %v11786
    %v11788 = vrot.slane %v11774, %v11787
    %v11789 = vcombine.low %v11781, %v11788
    %v11790 = vcombine.low %v7562, %v7569
    %v11791 = vcombine.low %v7576, %v7583
    %v11793 = vunpack.c.l.s4 1983009808
    %v11794 = vunpack.c.0.s8 %v11793
    %v11795 = vlaneseq
    %v11796 = vshrl.u32 %v11795, 7
    %v11797 = vsub.s32 %v11794, %v11796
    %v11798 = vrot.slane %v11790, %v11797
    %v11800 = vunpack.c.l.s4 1983009808
    %v11801 = vunpack.c.0.s8 %v11800
    %v11802 = vlaneseq
    %v11803 = vshrl.u32 %v11802, 7
    %v11804 = vsub.s32 %v11801, %v11803
    %v11805 = vrot.slane %v11791, %v11804
    %v11806 = vcombine.low %v11798, %v11805
    %v11807 = vcombine.low %v7590, %v7597
    %v11808 = vcombine.low %v7604, %v7611
    %v11810 = vunpack.c.l.s4 1983009808
    %v11811 = vunpack.c.0.s8 %v11810
    %v11812 = vlaneseq
    %v11813 = vshrl.u32 %v11812, 7
    %v11814 = vsub.s32 %v11811, %v11813
    %v11815 = vrot.slane %v11807, %v11814
    %v11817 = vunpack.c.l.s4 1983009808
    %v11818 = vunpack.c.0.s8 %v11817
    %v11819 = vlaneseq
    %v11820 = vshrl.u32 %v11819, 7
    %v11821 = vsub.s32 %v11818, %v11820
    %v11822 = vrot.slane %v11808, %v11821
    %v11823 = vcombine.low %v11815, %v11822
    %v11824 = vcombine.low %v7618, %v7625
    %v11825 = vcombine.low %v7632, %v7639
    %v11827 = vunpack.c.l.s4 1983009808
    %v11828 = vunpack.c.0.s8 %v11827
    %v11829 = vlaneseq
    %v11830 = vshrl.u32 %v11829, 7
    %v11831 = vsub.s32 %v11828, %v11830
    %v11832 = vrot.slane %v11824, %v11831
    %v11834 = vunpack.c.l.s4 1983009808
    %v11835 = vunpack.c.0.s8 %v11834
    %v11836 = vlaneseq
    %v11837 = vshrl.u32 %v11836, 7
    %v11838 = vsub.s32 %v11835, %v11837
    %v11839 = vrot.slane %v11825, %v11838
    %v11840 = vcombine.low %v11832, %v11839
    %v11841 = vcombine.low %v7646, %v7653
    %v11842 = vcombine.low %v7660, %v7667
    %v11844 = vunpack.c.l.s4 1983009808
    %v11845 = vunpack.c.0.s8 %v11844
    %v11846 = vlaneseq
    %v11847 = vshrl.u32 %v11846, 7
    %v11848 = vsub.s32 %v11845, %v11847
    %v11849 = vrot.slane %v11841, %v11848
    %v11851 = vunpack.c.l.s4 1983009808
    %v11852 = vunpack.c.0.s8 %v11851
    %v11853 = vlaneseq
    %v11854 = vshrl.u32 %v11853, 7
    %v11855 = vsub.s32 %v11852, %v11854
    %v11856 = vrot.slane %v11842, %v11855
    %v11857 = vcombine.low %v11849, %v11856
    %v11858 = vcombine.low %v7674, %v7681
    %v11859 = vcombine.low %v7688, %v7695
    %v11861 = vunpack.c.l.s4 1983009808
    %v11862 = vunpack.c.0.s8 %v11861
    %v11863 = vlaneseq
    %v11864 = vshrl.u32 %v11863, 7
    %v11865 = vsub.s32 %v11862, %v11864
    %v11866 = vrot.slane %v11858, %v11865
    %v11868 = vunpack.c.l.s4 1983009808
    %v11869 = vunpack.c.0.s8 %v11868
    %v11870 = vlaneseq
    %v11871 = vshrl.u32 %v11870, 7
    %v11872 = vsub.s32 %v11869, %v11871
    %v11873 = vrot.slane %v11859, %v11872
    %v11874 = vcombine.low %v11866, %v11873
    %v11875 = vcombine.low %v7702, %v7709
    %v11876 = vcombine.low %v7716, %v7723
    %v11878 = vunpack.c.l.s4 1983009808
    %v11879 = vunpack.c.0.s8 %v11878
    %v11880 = vlaneseq
    %v11881 = vshrl.u32 %v11880, 7
    %v11882 = vsub.s32 %v11879, %v11881
    %v11883 = vrot.slane %v11875, %v11882
    %v11885 = vunpack.c.l.s4 1983009808
    %v11886 = vunpack.c.0.s8 %v11885
    %v11887 = vlaneseq
    %v11888 = vshrl.u32 %v11887, 7
    %v11889 = vsub.s32 %v11886, %v11888
    %v11890 = vrot.slane %v11876, %v11889
    %v11891 = vcombine.low %v11883, %v11890
    %v11892 = vcombine.low %v7730, %v7737
    %v11893 = vcombine.low %v7744, %v7751
    %v11895 = vunpack.c.l.s4 1983009808
    %v11896 = vunpack.c.0.s8 %v11895
    %v11897 = vlaneseq
    %v11898 = vshrl.u32 %v11897, 7
    %v11899 = vsub.s32 %v11896, %v11898
    %v11900 = vrot.slane %v11892, %v11899
    %v11902 = vunpack.c.l.s4 1983009808
    %v11903 = vunpack.c.0.s8 %v11902
    %v11904 = vlaneseq
    %v11905 = vshrl.u32 %v11904, 7
    %v11906 = vsub.s32 %v11903, %v11905
    %v11907 = vrot.slane %v11893, %v11906
    %v11908 = vcombine.low %v11900, %v11907
    %v11909 = vcombine.low %v7758, %v7765
    %v11910 = vcombine.low %v7772, %v7779
    %v11912 = vunpack.c.l.s4 1983009808
    %v11913 = vunpack.c.0.s8 %v11912
    %v11914 = vlaneseq
    %v11915 = vshrl.u32 %v11914, 7
    %v11916 = vsub.s32 %v11913, %v11915
    %v11917 = vrot.slane %v11909, %v11916
    %v11919 = vunpack.c.l.s4 1983009808
    %v11920 = vunpack.c.0.s8 %v11919
    %v11921 = vlaneseq
    %v11922 = vshrl.u32 %v11921, 7
    %v11923 = vsub.s32 %v11920, %v11922
    %v11924 = vrot.slane %v11910, %v11923
    %v11925 = vcombine.low %v11917, %v11924
    %v11926 = vcombine.low %v7786, %v7793
    %v11927 = vcombine.low %v7800, %v7807
    %v11929 = vunpack.c.l.s4 1983009808
    %v11930 = vunpack.c.0.s8 %v11929
    %v11931 = vlaneseq
    %v11932 = vshrl.u32 %v11931, 7
    %v11933 = vsub.s32 %v11930, %v11932
    %v11934 = vrot.slane %v11926, %v11933
    %v11936 = vunpack.c.l.s4 1983009808
    %v11937 = vunpack.c.0.s8 %v11936
    %v11938 = vlaneseq
    %v11939 = vshrl.u32 %v11938, 7
    %v11940 = vsub.s32 %v11937, %v11939
    %v11941 = vrot.slane %v11927, %v11940
    %v11942 = vcombine.low %v11934, %v11941
    %v11943 = vcombine.low %v7814, %v7821
    %v11944 = vcombine.low %v7828, %v7835
    %v11946 = vunpack.c.l.s4 1983009808
    %v11947 = vunpack.c.0.s8 %v11946
    %v11948 = vlaneseq
    %v11949 = vshrl.u32 %v11948, 7
    %v11950 = vsub.s32 %v11947, %v11949
    %v11951 = vrot.slane %v11943, %v11950
    %v11953 = vunpack.c.l.s4 1983009808
    %v11954 = vunpack.c.0.s8 %v11953
    %v11955 = vlaneseq
    %v11956 = vshrl.u32 %v11955, 7
    %v11957 = vsub.s32 %v11954, %v11956
    %v11958 = vrot.slane %v11944, %v11957
    %v11959 = vcombine.low %v11951, %v11958
    %v11960 = vcombine.low %v7842, %v7849
    %v11961 = vcombine.low %v7856, %v7863
    %v11963 = vunpack.c.l.s4 1983009808
    %v11964 = vunpack.c.0.s8 %v11963
    %v11965 = vlaneseq
    %v11966 = vshrl.u32 %v11965, 7
    %v11967 = vsub.s32 %v11964, %v11966
    %v11968 = vrot.slane %v11960, %v11967
    %v11970 = vunpack.c.l.s4 1983009808
    %v11971 = vunpack.c.0.s8 %v11970
    %v11972 = vlaneseq
    %v11973 = vshrl.u32 %v11972, 7
    %v11974 = vsub.s32 %v11971, %v11973
    %v11975 = vrot.slane %v11961, %v11974
    %v11976 = vcombine.low %v11968, %v11975
    %v11977 = vcombine.low %v7870, %v7877
    %v11978 = vcombine.low %v7884, %v7891
    %v11980 = vunpack.c.l.s4 1983009808
    %v11981 = vunpack.c.0.s8 %v11980
    %v11982 = vlaneseq
    %v11983 = vshrl.u32 %v11982, 7
    %v11984 = vsub.s32 %v11981, %v11983
    %v11985 = vrot.slane %v11977, %v11984
    %v11987 = vunpack.c.l.s4 1983009808
    %v11988 = vunpack.c.0.s8 %v11987
    %v11989 = vlaneseq
    %v11990 = vshrl.u32 %v11989, 7
    %v11991 = vsub.s32 %v11988, %v11990
    %v11992 = vrot.slane %v11978, %v11991
    %v11993 = vcombine.low %v11985, %v11992
    %v11994 = vcombine.low %v7898, %v7905
    %v11995 = vcombine.low %v7912, %v7919
    %v11997 = vunpack.c.l.s4 1983009808
    %v11998 = vunpack.c.0.s8 %v11997
    %v11999 = vlaneseq
    %v12000 = vshrl.u32 %v11999, 7
    %v12001 = vsub.s32 %v11998, %v12000
    %v12002 = vrot.slane %v11994, %v12001
    %v12004 = vunpack.c.l.s4 1983009808
    %v12005 = vunpack.c.0.s8 %v12004
    %v12006 = vlaneseq
    %v12007 = vshrl.u32 %v12006, 7
    %v12008 = vsub.s32 %v12005, %v12007
    %v12009 = vrot.slane %v11995, %v12008
    %v12010 = vcombine.low %v12002, %v12009
    %v12011 = vcombine.low %v7926, %v7933
    %v12012 = vcombine.low %v7940, %v7947
    %v12014 = vunpack.c.l.s4 1983009808
    %v12015 = vunpack.c.0.s8 %v12014
    %v12016 = vlaneseq
    %v12017 = vshrl.u32 %v12016, 7
    %v12018 = vsub.s32 %v12015, %v12017
    %v12019 = vrot.slane %v12011, %v12018
    %v12021 = vunpack.c.l.s4 1983009808
    %v12022 = vunpack.c.0.s8 %v12021
    %v12023 = vlaneseq
    %v12024 = vshrl.u32 %v12023, 7
    %v12025 = vsub.s32 %v12022, %v12024
    %v12026 = vrot.slane %v12012, %v12025
    %v12027 = vcombine.low %v12019, %v12026
    %12028 = vset.pattern.permute.xlu0 0
    %12029 = vperm.xlu0 %12028, %v7964
    %v12030 = vpop.permute.xlu0 %12029
    %12031 = vset.pattern.permute.xlu0 0
    %12032 = vperm.xlu0 %12031, %v7981
    %v12033 = vpop.permute.xlu0 %12032
    %12034 = vset.pattern.permute.xlu0 0
    %12035 = vperm.xlu0 %12034, %v7998
    %v12036 = vpop.permute.xlu0 %12035
    %12037 = vset.pattern.permute.xlu0 0
    %12038 = vperm.xlu0 %12037, %v8015
    %v12039 = vpop.permute.xlu0 %12038
    %12040 = vset.pattern.permute.xlu0 0
    %12041 = vperm.xlu0 %12040, %v8032
    %v12042 = vpop.permute.xlu0 %12041
    %12043 = vset.pattern.permute.xlu0 0
    %12044 = vperm.xlu0 %12043, %v8049
    %v12045 = vpop.permute.xlu0 %12044
    %12046 = vset.pattern.permute.xlu0 0
    %12047 = vperm.xlu0 %12046, %v8066
    %v12048 = vpop.permute.xlu0 %12047
    %12049 = vset.pattern.permute.xlu0 0
    %12050 = vperm.xlu0 %12049, %v8083
    %v12051 = vpop.permute.xlu0 %12050
    %12052 = vset.pattern.permute.xlu0 0
    %12053 = vperm.xlu0 %12052, %v8100
    %v12054 = vpop.permute.xlu0 %12053
    %12055 = vset.pattern.permute.xlu0 0
    %12056 = vperm.xlu0 %12055, %v8117
    %v12057 = vpop.permute.xlu0 %12056
    %12058 = vset.pattern.permute.xlu0 0
    %12059 = vperm.xlu0 %12058, %v8134
    %v12060 = vpop.permute.xlu0 %12059
    %12061 = vset.pattern.permute.xlu0 0
    %12062 = vperm.xlu0 %12061, %v8151
    %v12063 = vpop.permute.xlu0 %12062
    %12064 = vset.pattern.permute.xlu0 0
    %12065 = vperm.xlu0 %12064, %v8168
    %v12066 = vpop.permute.xlu0 %12065
    %12067 = vset.pattern.permute.xlu0 0
    %12068 = vperm.xlu0 %12067, %v8185
    %v12069 = vpop.permute.xlu0 %12068
    %12070 = vset.pattern.permute.xlu0 0
    %12071 = vperm.xlu0 %12070, %v8202
    %v12072 = vpop.permute.xlu0 %12071
    %12073 = vset.pattern.permute.xlu0 0
    %12074 = vperm.xlu0 %12073, %v8219
    %v12075 = vpop.permute.xlu0 %12074
    %12076 = vset.pattern.permute.xlu0 0
    %12077 = vperm.xlu0 %12076, %v8236
    %v12078 = vpop.permute.xlu0 %12077
    %12079 = vset.pattern.permute.xlu0 0
    %12080 = vperm.xlu0 %12079, %v8253
    %v12081 = vpop.permute.xlu0 %12080
    %12082 = vset.pattern.permute.xlu0 0
    %12083 = vperm.xlu0 %12082, %v8270
    %v12084 = vpop.permute.xlu0 %12083
    %12085 = vset.pattern.permute.xlu0 0
    %12086 = vperm.xlu0 %12085, %v8287
    %v12087 = vpop.permute.xlu0 %12086
    %12088 = vset.pattern.permute.xlu0 0
    %12089 = vperm.xlu0 %12088, %v8304
    %v12090 = vpop.permute.xlu0 %12089
    %12091 = vset.pattern.permute.xlu0 0
    %12092 = vperm.xlu0 %12091, %v8321
    %v12093 = vpop.permute.xlu0 %12092
    %12094 = vset.pattern.permute.xlu0 0
    %12095 = vperm.xlu0 %12094, %v8338
    %v12096 = vpop.permute.xlu0 %12095
    %12097 = vset.pattern.permute.xlu0 0
    %12098 = vperm.xlu0 %12097, %v8355
    %v12099 = vpop.permute.xlu0 %12098
    %12100 = vset.pattern.permute.xlu0 0
    %12101 = vperm.xlu0 %12100, %v8372
    %v12102 = vpop.permute.xlu0 %12101
    %12103 = vset.pattern.permute.xlu0 0
    %12104 = vperm.xlu0 %12103, %v8389
    %v12105 = vpop.permute.xlu0 %12104
    %12106 = vset.pattern.permute.xlu0 0
    %12107 = vperm.xlu0 %12106, %v8406
    %v12108 = vpop.permute.xlu0 %12107
    %12109 = vset.pattern.permute.xlu0 0
    %12110 = vperm.xlu0 %12109, %v8423
    %v12111 = vpop.permute.xlu0 %12110
    %12112 = vset.pattern.permute.xlu0 0
    %12113 = vperm.xlu0 %12112, %v8440
    %v12114 = vpop.permute.xlu0 %12113
    %12115 = vset.pattern.permute.xlu0 0
    %12116 = vperm.xlu0 %12115, %v8457
    %v12117 = vpop.permute.xlu0 %12116
    %12118 = vset.pattern.permute.xlu0 0
    %12119 = vperm.xlu0 %12118, %v8474
    %v12120 = vpop.permute.xlu0 %12119
    %12121 = vset.pattern.permute.xlu0 0
    %12122 = vperm.xlu0 %12121, %v8491
    %v12123 = vpop.permute.xlu0 %12122
    %12124 = vset.pattern.permute.xlu0 0
    %12125 = vperm.xlu0 %12124, %v8508
    %v12126 = vpop.permute.xlu0 %12125
    %12127 = vset.pattern.permute.xlu0 0
    %12128 = vperm.xlu0 %12127, %v8525
    %v12129 = vpop.permute.xlu0 %12128
    %12130 = vset.pattern.permute.xlu0 0
    %12131 = vperm.xlu0 %12130, %v8542
    %v12132 = vpop.permute.xlu0 %12131
    %12133 = vset.pattern.permute.xlu0 0
    %12134 = vperm.xlu0 %12133, %v8559
    %v12135 = vpop.permute.xlu0 %12134
    %12136 = vset.pattern.permute.xlu0 0
    %12137 = vperm.xlu0 %12136, %v8576
    %v12138 = vpop.permute.xlu0 %12137
    %12139 = vset.pattern.permute.xlu0 0
    %12140 = vperm.xlu0 %12139, %v8593
    %v12141 = vpop.permute.xlu0 %12140
    %12142 = vset.pattern.permute.xlu0 0
    %12143 = vperm.xlu0 %12142, %v8610
    %v12144 = vpop.permute.xlu0 %12143
    %12145 = vset.pattern.permute.xlu0 0
    %12146 = vperm.xlu0 %12145, %v8627
    %v12147 = vpop.permute.xlu0 %12146
    %12148 = vset.pattern.permute.xlu0 0
    %12149 = vperm.xlu0 %12148, %v8644
    %v12150 = vpop.permute.xlu0 %12149
    %12151 = vset.pattern.permute.xlu0 0
    %12152 = vperm.xlu0 %12151, %v8661
    %v12153 = vpop.permute.xlu0 %12152
    %12154 = vset.pattern.permute.xlu0 0
    %12155 = vperm.xlu0 %12154, %v8678
    %v12156 = vpop.permute.xlu0 %12155
    %12157 = vset.pattern.permute.xlu0 0
    %12158 = vperm.xlu0 %12157, %v8695
    %v12159 = vpop.permute.xlu0 %12158
    %12160 = vset.pattern.permute.xlu0 0
    %12161 = vperm.xlu0 %12160, %v8712
    %v12162 = vpop.permute.xlu0 %12161
    %12163 = vset.pattern.permute.xlu0 0
    %12164 = vperm.xlu0 %12163, %v8729
    %v12165 = vpop.permute.xlu0 %12164
    %12166 = vset.pattern.permute.xlu0 0
    %12167 = vperm.xlu0 %12166, %v8746
    %v12168 = vpop.permute.xlu0 %12167
    %12169 = vset.pattern.permute.xlu0 0
    %12170 = vperm.xlu0 %12169, %v8763
    %v12171 = vpop.permute.xlu0 %12170
    %12172 = vset.pattern.permute.xlu0 0
    %12173 = vperm.xlu0 %12172, %v8780
    %v12174 = vpop.permute.xlu0 %12173
    %12175 = vset.pattern.permute.xlu0 0
    %12176 = vperm.xlu0 %12175, %v8797
    %v12177 = vpop.permute.xlu0 %12176
    %12178 = vset.pattern.permute.xlu0 0
    %12179 = vperm.xlu0 %12178, %v8814
    %v12180 = vpop.permute.xlu0 %12179
    %12181 = vset.pattern.permute.xlu0 0
    %12182 = vperm.xlu0 %12181, %v8831
    %v12183 = vpop.permute.xlu0 %12182
    %12184 = vset.pattern.permute.xlu0 0
    %12185 = vperm.xlu0 %12184, %v8848
    %v12186 = vpop.permute.xlu0 %12185
    %12187 = vset.pattern.permute.xlu0 0
    %12188 = vperm.xlu0 %12187, %v8865
    %v12189 = vpop.permute.xlu0 %12188
    %12190 = vset.pattern.permute.xlu0 0
    %12191 = vperm.xlu0 %12190, %v8882
    %v12192 = vpop.permute.xlu0 %12191
    %12193 = vset.pattern.permute.xlu0 0
    %12194 = vperm.xlu0 %12193, %v8899
    %v12195 = vpop.permute.xlu0 %12194
    %12196 = vset.pattern.permute.xlu0 0
    %12197 = vperm.xlu0 %12196, %v8916
    %v12198 = vpop.permute.xlu0 %12197
    %12199 = vset.pattern.permute.xlu0 0
    %12200 = vperm.xlu0 %12199, %v8933
    %v12201 = vpop.permute.xlu0 %12200
    %12202 = vset.pattern.permute.xlu0 0
    %12203 = vperm.xlu0 %12202, %v8950
    %v12204 = vpop.permute.xlu0 %12203
    %12205 = vset.pattern.permute.xlu0 0
    %12206 = vperm.xlu0 %12205, %v8967
    %v12207 = vpop.permute.xlu0 %12206
    %12208 = vset.pattern.permute.xlu0 0
    %12209 = vperm.xlu0 %12208, %v8984
    %v12210 = vpop.permute.xlu0 %12209
    %12211 = vset.pattern.permute.xlu0 0
    %12212 = vperm.xlu0 %12211, %v9001
    %v12213 = vpop.permute.xlu0 %12212
    %12214 = vset.pattern.permute.xlu0 0
    %12215 = vperm.xlu0 %12214, %v9018
    %v12216 = vpop.permute.xlu0 %12215
    %12217 = vset.pattern.permute.xlu0 0
    %12218 = vperm.xlu0 %12217, %v9035
    %v12219 = vpop.permute.xlu0 %12218
    %12220 = vset.pattern.permute.xlu0 0
    %12221 = vperm.xlu0 %12220, %v9052
    %v12222 = vpop.permute.xlu0 %12221
    %12223 = vset.pattern.permute.xlu0 0
    %12224 = vperm.xlu0 %12223, %v9069
    %v12225 = vpop.permute.xlu0 %12224
    %12226 = vset.pattern.permute.xlu0 0
    %12227 = vperm.xlu0 %12226, %v9086
    %v12228 = vpop.permute.xlu0 %12227
    %12229 = vset.pattern.permute.xlu0 0
    %12230 = vperm.xlu0 %12229, %v9103
    %v12231 = vpop.permute.xlu0 %12230
    %12232 = vset.pattern.permute.xlu0 0
    %12233 = vperm.xlu0 %12232, %v9120
    %v12234 = vpop.permute.xlu0 %12233
    %12235 = vset.pattern.permute.xlu0 0
    %12236 = vperm.xlu0 %12235, %v9137
    %v12237 = vpop.permute.xlu0 %12236
    %12238 = vset.pattern.permute.xlu0 0
    %12239 = vperm.xlu0 %12238, %v9154
    %v12240 = vpop.permute.xlu0 %12239
    %12241 = vset.pattern.permute.xlu0 0
    %12242 = vperm.xlu0 %12241, %v9171
    %v12243 = vpop.permute.xlu0 %12242
    %12244 = vset.pattern.permute.xlu0 0
    %12245 = vperm.xlu0 %12244, %v9188
    %v12246 = vpop.permute.xlu0 %12245
    %12247 = vset.pattern.permute.xlu0 0
    %12248 = vperm.xlu0 %12247, %v9205
    %v12249 = vpop.permute.xlu0 %12248
    %12250 = vset.pattern.permute.xlu0 0
    %12251 = vperm.xlu0 %12250, %v9222
    %v12252 = vpop.permute.xlu0 %12251
    %12253 = vset.pattern.permute.xlu0 0
    %12254 = vperm.xlu0 %12253, %v9239
    %v12255 = vpop.permute.xlu0 %12254
    %12256 = vset.pattern.permute.xlu0 0
    %12257 = vperm.xlu0 %12256, %v9256
    %v12258 = vpop.permute.xlu0 %12257
    %12259 = vset.pattern.permute.xlu0 0
    %12260 = vperm.xlu0 %12259, %v9273
    %v12261 = vpop.permute.xlu0 %12260
    %12262 = vset.pattern.permute.xlu0 0
    %12263 = vperm.xlu0 %12262, %v9290
    %v12264 = vpop.permute.xlu0 %12263
    %12265 = vset.pattern.permute.xlu0 0
    %12266 = vperm.xlu0 %12265, %v9307
    %v12267 = vpop.permute.xlu0 %12266
    %12268 = vset.pattern.permute.xlu0 0
    %12269 = vperm.xlu0 %12268, %v9324
    %v12270 = vpop.permute.xlu0 %12269
    %12271 = vset.pattern.permute.xlu0 0
    %12272 = vperm.xlu0 %12271, %v9341
    %v12273 = vpop.permute.xlu0 %12272
    %12274 = vset.pattern.permute.xlu0 0
    %12275 = vperm.xlu0 %12274, %v9358
    %v12276 = vpop.permute.xlu0 %12275
    %12277 = vset.pattern.permute.xlu0 0
    %12278 = vperm.xlu0 %12277, %v9375
    %v12279 = vpop.permute.xlu0 %12278
    %12280 = vset.pattern.permute.xlu0 0
    %12281 = vperm.xlu0 %12280, %v9392
    %v12282 = vpop.permute.xlu0 %12281
    %12283 = vset.pattern.permute.xlu0 0
    %12284 = vperm.xlu0 %12283, %v9409
    %v12285 = vpop.permute.xlu0 %12284
    %12286 = vset.pattern.permute.xlu0 0
    %12287 = vperm.xlu0 %12286, %v9426
    %v12288 = vpop.permute.xlu0 %12287
    %12289 = vset.pattern.permute.xlu0 0
    %12290 = vperm.xlu0 %12289, %v9443
    %v12291 = vpop.permute.xlu0 %12290
    %12292 = vset.pattern.permute.xlu0 0
    %12293 = vperm.xlu0 %12292, %v9460
    %v12294 = vpop.permute.xlu0 %12293
    %12295 = vset.pattern.permute.xlu0 0
    %12296 = vperm.xlu0 %12295, %v9477
    %v12297 = vpop.permute.xlu0 %12296
    %12298 = vset.pattern.permute.xlu0 0
    %12299 = vperm.xlu0 %12298, %v9494
    %v12300 = vpop.permute.xlu0 %12299
    %12301 = vset.pattern.permute.xlu0 0
    %12302 = vperm.xlu0 %12301, %v9511
    %v12303 = vpop.permute.xlu0 %12302
    %12304 = vset.pattern.permute.xlu0 0
    %12305 = vperm.xlu0 %12304, %v9528
    %v12306 = vpop.permute.xlu0 %12305
    %12307 = vset.pattern.permute.xlu0 0
    %12308 = vperm.xlu0 %12307, %v9545
    %v12309 = vpop.permute.xlu0 %12308
    %12310 = vset.pattern.permute.xlu0 0
    %12311 = vperm.xlu0 %12310, %v9562
    %v12312 = vpop.permute.xlu0 %12311
    %12313 = vset.pattern.permute.xlu0 0
    %12314 = vperm.xlu0 %12313, %v9579
    %v12315 = vpop.permute.xlu0 %12314
    %12316 = vset.pattern.permute.xlu0 0
    %12317 = vperm.xlu0 %12316, %v9596
    %v12318 = vpop.permute.xlu0 %12317
    %12319 = vset.pattern.permute.xlu0 0
    %12320 = vperm.xlu0 %12319, %v9613
    %v12321 = vpop.permute.xlu0 %12320
    %12322 = vset.pattern.permute.xlu0 0
    %12323 = vperm.xlu0 %12322, %v9630
    %v12324 = vpop.permute.xlu0 %12323
    %12325 = vset.pattern.permute.xlu0 0
    %12326 = vperm.xlu0 %12325, %v9647
    %v12327 = vpop.permute.xlu0 %12326
    %12328 = vset.pattern.permute.xlu0 0
    %12329 = vperm.xlu0 %12328, %v9664
    %v12330 = vpop.permute.xlu0 %12329
    %12331 = vset.pattern.permute.xlu0 0
    %12332 = vperm.xlu0 %12331, %v9681
    %v12333 = vpop.permute.xlu0 %12332
    %12334 = vset.pattern.permute.xlu0 0
    %12335 = vperm.xlu0 %12334, %v9698
    %v12336 = vpop.permute.xlu0 %12335
    %12337 = vset.pattern.permute.xlu0 0
    %12338 = vperm.xlu0 %12337, %v9715
    %v12339 = vpop.permute.xlu0 %12338
    %12340 = vset.pattern.permute.xlu0 0
    %12341 = vperm.xlu0 %12340, %v9732
    %v12342 = vpop.permute.xlu0 %12341
    %12343 = vset.pattern.permute.xlu0 0
    %12344 = vperm.xlu0 %12343, %v9749
    %v12345 = vpop.permute.xlu0 %12344
    %12346 = vset.pattern.permute.xlu0 0
    %12347 = vperm.xlu0 %12346, %v9766
    %v12348 = vpop.permute.xlu0 %12347
    %12349 = vset.pattern.permute.xlu0 0
    %12350 = vperm.xlu0 %12349, %v9783
    %v12351 = vpop.permute.xlu0 %12350
    %12352 = vset.pattern.permute.xlu0 0
    %12353 = vperm.xlu0 %12352, %v9800
    %v12354 = vpop.permute.xlu0 %12353
    %12355 = vset.pattern.permute.xlu0 0
    %12356 = vperm.xlu0 %12355, %v9817
    %v12357 = vpop.permute.xlu0 %12356
    %12358 = vset.pattern.permute.xlu0 0
    %12359 = vperm.xlu0 %12358, %v9834
    %v12360 = vpop.permute.xlu0 %12359
    %12361 = vset.pattern.permute.xlu0 0
    %12362 = vperm.xlu0 %12361, %v9851
    %v12363 = vpop.permute.xlu0 %12362
    %12364 = vset.pattern.permute.xlu0 0
    %12365 = vperm.xlu0 %12364, %v9868
    %v12366 = vpop.permute.xlu0 %12365
    %12367 = vset.pattern.permute.xlu0 0
    %12368 = vperm.xlu0 %12367, %v9885
    %v12369 = vpop.permute.xlu0 %12368
    %12370 = vset.pattern.permute.xlu0 0
    %12371 = vperm.xlu0 %12370, %v9902
    %v12372 = vpop.permute.xlu0 %12371
    %12373 = vset.pattern.permute.xlu0 0
    %12374 = vperm.xlu0 %12373, %v9919
    %v12375 = vpop.permute.xlu0 %12374
    %12376 = vset.pattern.permute.xlu0 0
    %12377 = vperm.xlu0 %12376, %v9936
    %v12378 = vpop.permute.xlu0 %12377
    %12379 = vset.pattern.permute.xlu0 0
    %12380 = vperm.xlu0 %12379, %v9953
    %v12381 = vpop.permute.xlu0 %12380
    %12382 = vset.pattern.permute.xlu0 0
    %12383 = vperm.xlu0 %12382, %v9970
    %v12384 = vpop.permute.xlu0 %12383
    %12385 = vset.pattern.permute.xlu0 0
    %12386 = vperm.xlu0 %12385, %v9987
    %v12387 = vpop.permute.xlu0 %12386
    %12388 = vset.pattern.permute.xlu0 0
    %12389 = vperm.xlu0 %12388, %v10004
    %v12390 = vpop.permute.xlu0 %12389
    %12391 = vset.pattern.permute.xlu0 0
    %12392 = vperm.xlu0 %12391, %v10021
    %v12393 = vpop.permute.xlu0 %12392
    %12394 = vset.pattern.permute.xlu0 0
    %12395 = vperm.xlu0 %12394, %v10038
    %v12396 = vpop.permute.xlu0 %12395
    %12397 = vset.pattern.permute.xlu0 0
    %12398 = vperm.xlu0 %12397, %v10055
    %v12399 = vpop.permute.xlu0 %12398
    %12400 = vset.pattern.permute.xlu0 0
    %12401 = vperm.xlu0 %12400, %v10072
    %v12402 = vpop.permute.xlu0 %12401
    %12403 = vset.pattern.permute.xlu0 0
    %12404 = vperm.xlu0 %12403, %v10089
    %v12405 = vpop.permute.xlu0 %12404
    %12406 = vset.pattern.permute.xlu0 0
    %12407 = vperm.xlu0 %12406, %v10106
    %v12408 = vpop.permute.xlu0 %12407
    %12409 = vset.pattern.permute.xlu0 0
    %12410 = vperm.xlu0 %12409, %v10123
    %v12411 = vpop.permute.xlu0 %12410
    %12412 = vset.pattern.permute.xlu0 0
    %12413 = vperm.xlu0 %12412, %v10140
    %v12414 = vpop.permute.xlu0 %12413
    %12415 = vset.pattern.permute.xlu0 0
    %12416 = vperm.xlu0 %12415, %v10157
    %v12417 = vpop.permute.xlu0 %12416
    %12418 = vset.pattern.permute.xlu0 0
    %12419 = vperm.xlu0 %12418, %v10174
    %v12420 = vpop.permute.xlu0 %12419
    %12421 = vset.pattern.permute.xlu0 0
    %12422 = vperm.xlu0 %12421, %v10191
    %v12423 = vpop.permute.xlu0 %12422
    %12424 = vset.pattern.permute.xlu0 0
    %12425 = vperm.xlu0 %12424, %v10208
    %v12426 = vpop.permute.xlu0 %12425
    %12427 = vset.pattern.permute.xlu0 0
    %12428 = vperm.xlu0 %12427, %v10225
    %v12429 = vpop.permute.xlu0 %12428
    %12430 = vset.pattern.permute.xlu0 0
    %12431 = vperm.xlu0 %12430, %v10242
    %v12432 = vpop.permute.xlu0 %12431
    %12433 = vset.pattern.permute.xlu0 0
    %12434 = vperm.xlu0 %12433, %v10259
    %v12435 = vpop.permute.xlu0 %12434
    %12436 = vset.pattern.permute.xlu0 0
    %12437 = vperm.xlu0 %12436, %v10276
    %v12438 = vpop.permute.xlu0 %12437
    %12439 = vset.pattern.permute.xlu0 0
    %12440 = vperm.xlu0 %12439, %v10293
    %v12441 = vpop.permute.xlu0 %12440
    %12442 = vset.pattern.permute.xlu0 0
    %12443 = vperm.xlu0 %12442, %v10310
    %v12444 = vpop.permute.xlu0 %12443
    %12445 = vset.pattern.permute.xlu0 0
    %12446 = vperm.xlu0 %12445, %v10327
    %v12447 = vpop.permute.xlu0 %12446
    %12448 = vset.pattern.permute.xlu0 0
    %12449 = vperm.xlu0 %12448, %v10344
    %v12450 = vpop.permute.xlu0 %12449
    %12451 = vset.pattern.permute.xlu0 0
    %12452 = vperm.xlu0 %12451, %v10361
    %v12453 = vpop.permute.xlu0 %12452
    %12454 = vset.pattern.permute.xlu0 0
    %12455 = vperm.xlu0 %12454, %v10378
    %v12456 = vpop.permute.xlu0 %12455
    %12457 = vset.pattern.permute.xlu0 0
    %12458 = vperm.xlu0 %12457, %v10395
    %v12459 = vpop.permute.xlu0 %12458
    %12460 = vset.pattern.permute.xlu0 0
    %12461 = vperm.xlu0 %12460, %v10412
    %v12462 = vpop.permute.xlu0 %12461
    %12463 = vset.pattern.permute.xlu0 0
    %12464 = vperm.xlu0 %12463, %v10429
    %v12465 = vpop.permute.xlu0 %12464
    %12466 = vset.pattern.permute.xlu0 0
    %12467 = vperm.xlu0 %12466, %v10446
    %v12468 = vpop.permute.xlu0 %12467
    %12469 = vset.pattern.permute.xlu0 0
    %12470 = vperm.xlu0 %12469, %v10463
    %v12471 = vpop.permute.xlu0 %12470
    %12472 = vset.pattern.permute.xlu0 0
    %12473 = vperm.xlu0 %12472, %v10480
    %v12474 = vpop.permute.xlu0 %12473
    %12475 = vset.pattern.permute.xlu0 0
    %12476 = vperm.xlu0 %12475, %v10497
    %v12477 = vpop.permute.xlu0 %12476
    %12478 = vset.pattern.permute.xlu0 0
    %12479 = vperm.xlu0 %12478, %v10514
    %v12480 = vpop.permute.xlu0 %12479
    %12481 = vset.pattern.permute.xlu0 0
    %12482 = vperm.xlu0 %12481, %v10531
    %v12483 = vpop.permute.xlu0 %12482
    %12484 = vset.pattern.permute.xlu0 0
    %12485 = vperm.xlu0 %12484, %v10548
    %v12486 = vpop.permute.xlu0 %12485
    %12487 = vset.pattern.permute.xlu0 0
    %12488 = vperm.xlu0 %12487, %v10565
    %v12489 = vpop.permute.xlu0 %12488
    %12490 = vset.pattern.permute.xlu0 0
    %12491 = vperm.xlu0 %12490, %v10582
    %v12492 = vpop.permute.xlu0 %12491
    %12493 = vset.pattern.permute.xlu0 0
    %12494 = vperm.xlu0 %12493, %v10599
    %v12495 = vpop.permute.xlu0 %12494
    %12496 = vset.pattern.permute.xlu0 0
    %12497 = vperm.xlu0 %12496, %v10616
    %v12498 = vpop.permute.xlu0 %12497
    %12499 = vset.pattern.permute.xlu0 0
    %12500 = vperm.xlu0 %12499, %v10633
    %v12501 = vpop.permute.xlu0 %12500
    %12502 = vset.pattern.permute.xlu0 0
    %12503 = vperm.xlu0 %12502, %v10650
    %v12504 = vpop.permute.xlu0 %12503
    %12505 = vset.pattern.permute.xlu0 0
    %12506 = vperm.xlu0 %12505, %v10667
    %v12507 = vpop.permute.xlu0 %12506
    %12508 = vset.pattern.permute.xlu0 0
    %12509 = vperm.xlu0 %12508, %v10684
    %v12510 = vpop.permute.xlu0 %12509
    %12511 = vset.pattern.permute.xlu0 0
    %12512 = vperm.xlu0 %12511, %v10701
    %v12513 = vpop.permute.xlu0 %12512
    %12514 = vset.pattern.permute.xlu0 0
    %12515 = vperm.xlu0 %12514, %v10718
    %v12516 = vpop.permute.xlu0 %12515
    %12517 = vset.pattern.permute.xlu0 0
    %12518 = vperm.xlu0 %12517, %v10735
    %v12519 = vpop.permute.xlu0 %12518
    %12520 = vset.pattern.permute.xlu0 0
    %12521 = vperm.xlu0 %12520, %v10752
    %v12522 = vpop.permute.xlu0 %12521
    %12523 = vset.pattern.permute.xlu0 0
    %12524 = vperm.xlu0 %12523, %v10769
    %v12525 = vpop.permute.xlu0 %12524
    %12526 = vset.pattern.permute.xlu0 0
    %12527 = vperm.xlu0 %12526, %v10786
    %v12528 = vpop.permute.xlu0 %12527
    %12529 = vset.pattern.permute.xlu0 0
    %12530 = vperm.xlu0 %12529, %v10803
    %v12531 = vpop.permute.xlu0 %12530
    %12532 = vset.pattern.permute.xlu0 0
    %12533 = vperm.xlu0 %12532, %v10820
    %v12534 = vpop.permute.xlu0 %12533
    %12535 = vset.pattern.permute.xlu0 0
    %12536 = vperm.xlu0 %12535, %v10837
    %v12537 = vpop.permute.xlu0 %12536
    %12538 = vset.pattern.permute.xlu0 0
    %12539 = vperm.xlu0 %12538, %v10854
    %v12540 = vpop.permute.xlu0 %12539
    %12541 = vset.pattern.permute.xlu0 0
    %12542 = vperm.xlu0 %12541, %v10871
    %v12543 = vpop.permute.xlu0 %12542
    %12544 = vset.pattern.permute.xlu0 0
    %12545 = vperm.xlu0 %12544, %v10888
    %v12546 = vpop.permute.xlu0 %12545
    %12547 = vset.pattern.permute.xlu0 0
    %12548 = vperm.xlu0 %12547, %v10905
    %v12549 = vpop.permute.xlu0 %12548
    %12550 = vset.pattern.permute.xlu0 0
    %12551 = vperm.xlu0 %12550, %v10922
    %v12552 = vpop.permute.xlu0 %12551
    %12553 = vset.pattern.permute.xlu0 0
    %12554 = vperm.xlu0 %12553, %v10939
    %v12555 = vpop.permute.xlu0 %12554
    %12556 = vset.pattern.permute.xlu0 0
    %12557 = vperm.xlu0 %12556, %v10956
    %v12558 = vpop.permute.xlu0 %12557
    %12559 = vset.pattern.permute.xlu0 0
    %12560 = vperm.xlu0 %12559, %v10973
    %v12561 = vpop.permute.xlu0 %12560
    %12562 = vset.pattern.permute.xlu0 0
    %12563 = vperm.xlu0 %12562, %v10990
    %v12564 = vpop.permute.xlu0 %12563
    %12565 = vset.pattern.permute.xlu0 0
    %12566 = vperm.xlu0 %12565, %v11007
    %v12567 = vpop.permute.xlu0 %12566
    %12568 = vset.pattern.permute.xlu0 0
    %12569 = vperm.xlu0 %12568, %v11024
    %v12570 = vpop.permute.xlu0 %12569
    %12571 = vset.pattern.permute.xlu0 0
    %12572 = vperm.xlu0 %12571, %v11041
    %v12573 = vpop.permute.xlu0 %12572
    %12574 = vset.pattern.permute.xlu0 0
    %12575 = vperm.xlu0 %12574, %v11058
    %v12576 = vpop.permute.xlu0 %12575
    %12577 = vset.pattern.permute.xlu0 0
    %12578 = vperm.xlu0 %12577, %v11075
    %v12579 = vpop.permute.xlu0 %12578
    %12580 = vset.pattern.permute.xlu0 0
    %12581 = vperm.xlu0 %12580, %v11092
    %v12582 = vpop.permute.xlu0 %12581
    %12583 = vset.pattern.permute.xlu0 0
    %12584 = vperm.xlu0 %12583, %v11109
    %v12585 = vpop.permute.xlu0 %12584
    %12586 = vset.pattern.permute.xlu0 0
    %12587 = vperm.xlu0 %12586, %v11126
    %v12588 = vpop.permute.xlu0 %12587
    %12589 = vset.pattern.permute.xlu0 0
    %12590 = vperm.xlu0 %12589, %v11143
    %v12591 = vpop.permute.xlu0 %12590
    %12592 = vset.pattern.permute.xlu0 0
    %12593 = vperm.xlu0 %12592, %v11160
    %v12594 = vpop.permute.xlu0 %12593
    %12595 = vset.pattern.permute.xlu0 0
    %12596 = vperm.xlu0 %12595, %v11177
    %v12597 = vpop.permute.xlu0 %12596
    %12598 = vset.pattern.permute.xlu0 0
    %12599 = vperm.xlu0 %12598, %v11194
    %v12600 = vpop.permute.xlu0 %12599
    %12601 = vset.pattern.permute.xlu0 0
    %12602 = vperm.xlu0 %12601, %v11211
    %v12603 = vpop.permute.xlu0 %12602
    %12604 = vset.pattern.permute.xlu0 0
    %12605 = vperm.xlu0 %12604, %v11228
    %v12606 = vpop.permute.xlu0 %12605
    %12607 = vset.pattern.permute.xlu0 0
    %12608 = vperm.xlu0 %12607, %v11245
    %v12609 = vpop.permute.xlu0 %12608
    %12610 = vset.pattern.permute.xlu0 0
    %12611 = vperm.xlu0 %12610, %v11262
    %v12612 = vpop.permute.xlu0 %12611
    %12613 = vset.pattern.permute.xlu0 0
    %12614 = vperm.xlu0 %12613, %v11279
    %v12615 = vpop.permute.xlu0 %12614
    %12616 = vset.pattern.permute.xlu0 0
    %12617 = vperm.xlu0 %12616, %v11296
    %v12618 = vpop.permute.xlu0 %12617
    %12619 = vset.pattern.permute.xlu0 0
    %12620 = vperm.xlu0 %12619, %v11313
    %v12621 = vpop.permute.xlu0 %12620
    %12622 = vset.pattern.permute.xlu0 0
    %12623 = vperm.xlu0 %12622, %v11330
    %v12624 = vpop.permute.xlu0 %12623
    %12625 = vset.pattern.permute.xlu0 0
    %12626 = vperm.xlu0 %12625, %v11347
    %v12627 = vpop.permute.xlu0 %12626
    %12628 = vset.pattern.permute.xlu0 0
    %12629 = vperm.xlu0 %12628, %v11364
    %v12630 = vpop.permute.xlu0 %12629
    %12631 = vset.pattern.permute.xlu0 0
    %12632 = vperm.xlu0 %12631, %v11381
    %v12633 = vpop.permute.xlu0 %12632
    %12634 = vset.pattern.permute.xlu0 0
    %12635 = vperm.xlu0 %12634, %v11398
    %v12636 = vpop.permute.xlu0 %12635
    %12637 = vset.pattern.permute.xlu0 0
    %12638 = vperm.xlu0 %12637, %v11415
    %v12639 = vpop.permute.xlu0 %12638
    %12640 = vset.pattern.permute.xlu0 0
    %12641 = vperm.xlu0 %12640, %v11432
    %v12642 = vpop.permute.xlu0 %12641
    %12643 = vset.pattern.permute.xlu0 0
    %12644 = vperm.xlu0 %12643, %v11449
    %v12645 = vpop.permute.xlu0 %12644
    %12646 = vset.pattern.permute.xlu0 0
    %12647 = vperm.xlu0 %12646, %v11466
    %v12648 = vpop.permute.xlu0 %12647
    %12649 = vset.pattern.permute.xlu0 0
    %12650 = vperm.xlu0 %12649, %v11483
    %v12651 = vpop.permute.xlu0 %12650
    %12652 = vset.pattern.permute.xlu0 0
    %12653 = vperm.xlu0 %12652, %v11500
    %v12654 = vpop.permute.xlu0 %12653
    %12655 = vset.pattern.permute.xlu0 0
    %12656 = vperm.xlu0 %12655, %v11517
    %v12657 = vpop.permute.xlu0 %12656
    %12658 = vset.pattern.permute.xlu0 0
    %12659 = vperm.xlu0 %12658, %v11534
    %v12660 = vpop.permute.xlu0 %12659
    %12661 = vset.pattern.permute.xlu0 0
    %12662 = vperm.xlu0 %12661, %v11551
    %v12663 = vpop.permute.xlu0 %12662
    %12664 = vset.pattern.permute.xlu0 0
    %12665 = vperm.xlu0 %12664, %v11568
    %v12666 = vpop.permute.xlu0 %12665
    %12667 = vset.pattern.permute.xlu0 0
    %12668 = vperm.xlu0 %12667, %v11585
    %v12669 = vpop.permute.xlu0 %12668
    %12670 = vset.pattern.permute.xlu0 0
    %12671 = vperm.xlu0 %12670, %v11602
    %v12672 = vpop.permute.xlu0 %12671
    %12673 = vset.pattern.permute.xlu0 0
    %12674 = vperm.xlu0 %12673, %v11619
    %v12675 = vpop.permute.xlu0 %12674
    %12676 = vset.pattern.permute.xlu0 0
    %12677 = vperm.xlu0 %12676, %v11636
    %v12678 = vpop.permute.xlu0 %12677
    %12679 = vset.pattern.permute.xlu0 0
    %12680 = vperm.xlu0 %12679, %v11653
    %v12681 = vpop.permute.xlu0 %12680
    %12682 = vset.pattern.permute.xlu0 0
    %12683 = vperm.xlu0 %12682, %v11670
    %v12684 = vpop.permute.xlu0 %12683
    %12685 = vset.pattern.permute.xlu0 0
    %12686 = vperm.xlu0 %12685, %v11687
    %v12687 = vpop.permute.xlu0 %12686
    %12688 = vset.pattern.permute.xlu0 0
    %12689 = vperm.xlu0 %12688, %v11704
    %v12690 = vpop.permute.xlu0 %12689
    %12691 = vset.pattern.permute.xlu0 0
    %12692 = vperm.xlu0 %12691, %v11721
    %v12693 = vpop.permute.xlu0 %12692
    %12694 = vset.pattern.permute.xlu0 0
    %12695 = vperm.xlu0 %12694, %v11738
    %v12696 = vpop.permute.xlu0 %12695
    %12697 = vset.pattern.permute.xlu0 0
    %12698 = vperm.xlu0 %12697, %v11755
    %v12699 = vpop.permute.xlu0 %12698
    %12700 = vset.pattern.permute.xlu0 0
    %12701 = vperm.xlu0 %12700, %v11772
    %v12702 = vpop.permute.xlu0 %12701
    %12703 = vset.pattern.permute.xlu0 0
    %12704 = vperm.xlu0 %12703, %v11789
    %v12705 = vpop.permute.xlu0 %12704
    %12706 = vset.pattern.permute.xlu0 0
    %12707 = vperm.xlu0 %12706, %v11806
    %v12708 = vpop.permute.xlu0 %12707
    %12709 = vset.pattern.permute.xlu0 0
    %12710 = vperm.xlu0 %12709, %v11823
    %v12711 = vpop.permute.xlu0 %12710
    %12712 = vset.pattern.permute.xlu0 0
    %12713 = vperm.xlu0 %12712, %v11840
    %v12714 = vpop.permute.xlu0 %12713
    %12715 = vset.pattern.permute.xlu0 0
    %12716 = vperm.xlu0 %12715, %v11857
    %v12717 = vpop.permute.xlu0 %12716
    %12718 = vset.pattern.permute.xlu0 0
    %12719 = vperm.xlu0 %12718, %v11874
    %v12720 = vpop.permute.xlu0 %12719
    %12721 = vset.pattern.permute.xlu0 0
    %12722 = vperm.xlu0 %12721, %v11891
    %v12723 = vpop.permute.xlu0 %12722
    %12724 = vset.pattern.permute.xlu0 0
    %12725 = vperm.xlu0 %12724, %v11908
    %v12726 = vpop.permute.xlu0 %12725
    %12727 = vset.pattern.permute.xlu0 0
    %12728 = vperm.xlu0 %12727, %v11925
    %v12729 = vpop.permute.xlu0 %12728
    %12730 = vset.pattern.permute.xlu0 0
    %12731 = vperm.xlu0 %12730, %v11942
    %v12732 = vpop.permute.xlu0 %12731
    %12733 = vset.pattern.permute.xlu0 0
    %12734 = vperm.xlu0 %12733, %v11959
    %v12735 = vpop.permute.xlu0 %12734
    %12736 = vset.pattern.permute.xlu0 0
    %12737 = vperm.xlu0 %12736, %v11976
    %v12738 = vpop.permute.xlu0 %12737
    %12739 = vset.pattern.permute.xlu0 0
    %12740 = vperm.xlu0 %12739, %v11993
    %v12741 = vpop.permute.xlu0 %12740
    %12742 = vset.pattern.permute.xlu0 0
    %12743 = vperm.xlu0 %12742, %v12010
    %v12744 = vpop.permute.xlu0 %12743
    %12745 = vset.pattern.permute.xlu0 0
    %12746 = vperm.xlu0 %12745, %v12027
    %v12747 = vpop.permute.xlu0 %12746
    %v12748 = vlaneseq
    %v12749 = vand.u32 %v12748, 127
    %v12750 = vlaneseq
    %v12751 = vshrl.u32 %v12750, 7
    %v12752 = vsub.s32 %v12749, %v12751
    %v12753 = vrot.slane %v12030, %v12752
    %v12754 = vadd.s32 %v12749, 4294967288
    %v12755 = vlaneseq
    %v12756 = vshrl.u32 %v12755, 7
    %v12757 = vsub.s32 %v12754, %v12756
    %v12758 = vrot.slane %v12033, %v12757
    %vm12759 = vcmask 130112
    %v12760 = vsel %vm12759, %v12758, %v12753
    %v12761 = vadd.s32 %v12749, 4294967280
    %v12762 = vlaneseq
    %v12763 = vshrl.u32 %v12762, 7
    %v12764 = vsub.s32 %v12761, %v12763
    %v12765 = vrot.slane %v12036, %v12764
    %vm12766 = vcmask 195712
    %v12767 = vsel %vm12766, %v12765, %v12760
    %v12768 = vadd.s32 %v12749, 4294967272
    %v12769 = vlaneseq
    %v12770 = vshrl.u32 %v12769, 7
    %v12771 = vsub.s32 %v12768, %v12770
    %v12772 = vrot.slane %v12039, %v12771
    %vm12773 = vcmask 261312
    %v12774 = vsel %vm12773, %v12772, %v12767
    %v12775 = vadd.s32 %v12749, 4294967264
    %v12776 = vlaneseq
    %v12777 = vshrl.u32 %v12776, 7
    %v12778 = vsub.s32 %v12775, %v12777
    %v12779 = vrot.slane %v12042, %v12778
    %vm12780 = vcmask 326912
    %v12781 = vsel %vm12780, %v12779, %v12774
    %v12782 = vadd.s32 %v12749, 4294967256
    %v12783 = vlaneseq
    %v12784 = vshrl.u32 %v12783, 7
    %v12785 = vsub.s32 %v12782, %v12784
    %v12786 = vrot.slane %v12045, %v12785
    %vm12787 = vcmask 392512
    %v12788 = vsel %vm12787, %v12786, %v12781
    %v12789 = vadd.s32 %v12749, 4294967248
    %v12790 = vlaneseq
    %v12791 = vshrl.u32 %v12790, 7
    %v12792 = vsub.s32 %v12789, %v12791
    %v12793 = vrot.slane %v12048, %v12792
    %vm12794 = vcmask 458112
    %v12795 = vsel %vm12794, %v12793, %v12788
    %v12796 = vadd.s32 %v12749, 4294967240
    %v12797 = vlaneseq
    %v12798 = vshrl.u32 %v12797, 7
    %v12799 = vsub.s32 %v12796, %v12798
    %v12800 = vrot.slane %v12051, %v12799
    %vm12801 = vcmask 523712
    %v12802 = vsel %vm12801, %v12800, %v12795
    %v12803 = vadd.s32 %v12749, 4294967232
    %v12804 = vlaneseq
    %v12805 = vshrl.u32 %v12804, 7
    %v12806 = vsub.s32 %v12803, %v12805
    %v12807 = vrot.slane %v12054, %v12806
    %vm12808 = vcmask 589312
    %v12809 = vsel %vm12808, %v12807, %v12802
    %v12810 = vadd.s32 %v12749, 4294967224
    %v12811 = vlaneseq
    %v12812 = vshrl.u32 %v12811, 7
    %v12813 = vsub.s32 %v12810, %v12812
    %v12814 = vrot.slane %v12057, %v12813
    %vm12815 = vcmask 654912
    %v12816 = vsel %vm12815, %v12814, %v12809
    %v12817 = vadd.s32 %v12749, 4294967216
    %v12818 = vlaneseq
    %v12819 = vshrl.u32 %v12818, 7
    %v12820 = vsub.s32 %v12817, %v12819
    %v12821 = vrot.slane %v12060, %v12820
    %vm12822 = vcmask 720512
    %v12823 = vsel %vm12822, %v12821, %v12816
    %v12824 = vadd.s32 %v12749, 4294967208
    %v12825 = vlaneseq
    %v12826 = vshrl.u32 %v12825, 7
    %v12827 = vsub.s32 %v12824, %v12826
    %v12828 = vrot.slane %v12063, %v12827
    %vm12829 = vcmask 786112
    %v12830 = vsel %vm12829, %v12828, %v12823
    %v12831 = vadd.s32 %v12749, 4294967200
    %v12832 = vlaneseq
    %v12833 = vshrl.u32 %v12832, 7
    %v12834 = vsub.s32 %v12831, %v12833
    %v12835 = vrot.slane %v12066, %v12834
    %vm12836 = vcmask 851712
    %v12837 = vsel %vm12836, %v12835, %v12830
    %v12838 = vadd.s32 %v12749, 4294967192
    %v12839 = vlaneseq
    %v12840 = vshrl.u32 %v12839, 7
    %v12841 = vsub.s32 %v12838, %v12840
    %v12842 = vrot.slane %v12069, %v12841
    %vm12843 = vcmask 917312
    %v12844 = vsel %vm12843, %v12842, %v12837
    %v12845 = vadd.s32 %v12749, 4294967184
    %v12846 = vlaneseq
    %v12847 = vshrl.u32 %v12846, 7
    %v12848 = vsub.s32 %v12845, %v12847
    %v12849 = vrot.slane %v12072, %v12848
    %vm12850 = vcmask 982912
    %v12851 = vsel %vm12850, %v12849, %v12844
    %v12852 = vadd.s32 %v12749, 4294967176
    %v12853 = vlaneseq
    %v12854 = vshrl.u32 %v12853, 7
    %v12855 = vsub.s32 %v12852, %v12854
    %v12856 = vrot.slane %v12075, %v12855
    %vm12857 = vcmask 1048512
    %v12858 = vsel %vm12857, %v12856, %v12851
    %v12859 = vlaneseq
    %v12860 = vshrl.u32 %v12859, 7
    %v12861 = vsub.s32 %v12749, %v12860
    %v12862 = vrot.slane %v12078, %v12861
    %v12863 = vlaneseq
    %v12864 = vshrl.u32 %v12863, 7
    %v12865 = vsub.s32 %v12754, %v12864
    %v12866 = vrot.slane %v12081, %v12865
    %v12867 = vsel %vm12759, %v12866, %v12862
    %v12868 = vlaneseq
    %v12869 = vshrl.u32 %v12868, 7
    %v12870 = vsub.s32 %v12761, %v12869
    %v12871 = vrot.slane %v12084, %v12870
    %v12872 = vsel %vm12766, %v12871, %v12867
    %v12873 = vlaneseq
    %v12874 = vshrl.u32 %v12873, 7
    %v12875 = vsub.s32 %v12768, %v12874
    %v12876 = vrot.slane %v12087, %v12875
    %v12877 = vsel %vm12773, %v12876, %v12872
    %v12878 = vlaneseq
    %v12879 = vshrl.u32 %v12878, 7
    %v12880 = vsub.s32 %v12775, %v12879
    %v12881 = vrot.slane %v12090, %v12880
    %v12882 = vsel %vm12780, %v12881, %v12877
    %v12883 = vlaneseq
    %v12884 = vshrl.u32 %v12883, 7
    %v12885 = vsub.s32 %v12782, %v12884
    %v12886 = vrot.slane %v12093, %v12885
    %v12887 = vsel %vm12787, %v12886, %v12882
    %v12888 = vlaneseq
    %v12889 = vshrl.u32 %v12888, 7
    %v12890 = vsub.s32 %v12789, %v12889
    %v12891 = vrot.slane %v12096, %v12890
    %v12892 = vsel %vm12794, %v12891, %v12887
    %v12893 = vlaneseq
    %v12894 = vshrl.u32 %v12893, 7
    %v12895 = vsub.s32 %v12796, %v12894
    %v12896 = vrot.slane %v12099, %v12895
    %v12897 = vsel %vm12801, %v12896, %v12892
    %v12898 = vlaneseq
    %v12899 = vshrl.u32 %v12898, 7
    %v12900 = vsub.s32 %v12803, %v12899
    %v12901 = vrot.slane %v12102, %v12900
    %v12902 = vsel %vm12808, %v12901, %v12897
    %v12903 = vlaneseq
    %v12904 = vshrl.u32 %v12903, 7
    %v12905 = vsub.s32 %v12810, %v12904
    %v12906 = vrot.slane %v12105, %v12905
    %v12907 = vsel %vm12815, %v12906, %v12902
    %v12908 = vlaneseq
    %v12909 = vshrl.u32 %v12908, 7
    %v12910 = vsub.s32 %v12817, %v12909
    %v12911 = vrot.slane %v12108, %v12910
    %v12912 = vsel %vm12822, %v12911, %v12907
    %v12913 = vlaneseq
    %v12914 = vshrl.u32 %v12913, 7
    %v12915 = vsub.s32 %v12824, %v12914
    %v12916 = vrot.slane %v12111, %v12915
    %v12917 = vsel %vm12829, %v12916, %v12912
    %v12918 = vlaneseq
    %v12919 = vshrl.u32 %v12918, 7
    %v12920 = vsub.s32 %v12831, %v12919
    %v12921 = vrot.slane %v12114, %v12920
    %v12922 = vsel %vm12836, %v12921, %v12917
    %v12923 = vlaneseq
    %v12924 = vshrl.u32 %v12923, 7
    %v12925 = vsub.s32 %v12838, %v12924
    %v12926 = vrot.slane %v12117, %v12925
    %v12927 = vsel %vm12843, %v12926, %v12922
    %v12928 = vlaneseq
    %v12929 = vshrl.u32 %v12928, 7
    %v12930 = vsub.s32 %v12845, %v12929
    %v12931 = vrot.slane %v12120, %v12930
    %v12932 = vsel %vm12850, %v12931, %v12927
    %v12933 = vlaneseq
    %v12934 = vshrl.u32 %v12933, 7
    %v12935 = vsub.s32 %v12852, %v12934
    %v12936 = vrot.slane %v12123, %v12935
    %v12937 = vsel %vm12857, %v12936, %v12932
    %v12938 = vlaneseq
    %v12939 = vshrl.u32 %v12938, 7
    %v12940 = vsub.s32 %v12749, %v12939
    %v12941 = vrot.slane %v12126, %v12940
    %v12942 = vlaneseq
    %v12943 = vshrl.u32 %v12942, 7
    %v12944 = vsub.s32 %v12754, %v12943
    %v12945 = vrot.slane %v12129, %v12944
    %v12946 = vsel %vm12759, %v12945, %v12941
    %v12947 = vlaneseq
    %v12948 = vshrl.u32 %v12947, 7
    %v12949 = vsub.s32 %v12761, %v12948
    %v12950 = vrot.slane %v12132, %v12949
    %v12951 = vsel %vm12766, %v12950, %v12946
    %v12952 = vlaneseq
    %v12953 = vshrl.u32 %v12952, 7
    %v12954 = vsub.s32 %v12768, %v12953
    %v12955 = vrot.slane %v12135, %v12954
    %v12956 = vsel %vm12773, %v12955, %v12951
    %v12957 = vlaneseq
    %v12958 = vshrl.u32 %v12957, 7
    %v12959 = vsub.s32 %v12775, %v12958
    %v12960 = vrot.slane %v12138, %v12959
    %v12961 = vsel %vm12780, %v12960, %v12956
    %v12962 = vlaneseq
    %v12963 = vshrl.u32 %v12962, 7
    %v12964 = vsub.s32 %v12782, %v12963
    %v12965 = vrot.slane %v12141, %v12964
    %v12966 = vsel %vm12787, %v12965, %v12961
    %v12967 = vlaneseq
    %v12968 = vshrl.u32 %v12967, 7
    %v12969 = vsub.s32 %v12789, %v12968
    %v12970 = vrot.slane %v12144, %v12969
    %v12971 = vsel %vm12794, %v12970, %v12966
    %v12972 = vlaneseq
    %v12973 = vshrl.u32 %v12972, 7
    %v12974 = vsub.s32 %v12796, %v12973
    %v12975 = vrot.slane %v12147, %v12974
    %v12976 = vsel %vm12801, %v12975, %v12971
    %v12977 = vlaneseq
    %v12978 = vshrl.u32 %v12977, 7
    %v12979 = vsub.s32 %v12803, %v12978
    %v12980 = vrot.slane %v12150, %v12979
    %v12981 = vsel %vm12808, %v12980, %v12976
    %v12982 = vlaneseq
    %v12983 = vshrl.u32 %v12982, 7
    %v12984 = vsub.s32 %v12810, %v12983
    %v12985 = vrot.slane %v12153, %v12984
    %v12986 = vsel %vm12815, %v12985, %v12981
    %v12987 = vlaneseq
    %v12988 = vshrl.u32 %v12987, 7
    %v12989 = vsub.s32 %v12817, %v12988
    %v12990 = vrot.slane %v12156, %v12989
    %v12991 = vsel %vm12822, %v12990, %v12986
    %v12992 = vlaneseq
    %v12993 = vshrl.u32 %v12992, 7
    %v12994 = vsub.s32 %v12824, %v12993
    %v12995 = vrot.slane %v12159, %v12994
    %v12996 = vsel %vm12829, %v12995, %v12991
    %v12997 = vlaneseq
    %v12998 = vshrl.u32 %v12997, 7
    %v12999 = vsub.s32 %v12831, %v12998
    %v13000 = vrot.slane %v12162, %v12999
    %v13001 = vsel %vm12836, %v13000, %v12996
    %v13002 = vlaneseq
    %v13003 = vshrl.u32 %v13002, 7
    %v13004 = vsub.s32 %v12838, %v13003
    %v13005 = vrot.slane %v12165, %v13004
    %v13006 = vsel %vm12843, %v13005, %v13001
    %v13007 = vlaneseq
    %v13008 = vshrl.u32 %v13007, 7
    %v13009 = vsub.s32 %v12845, %v13008
    %v13010 = vrot.slane %v12168, %v13009
    %v13011 = vsel %vm12850, %v13010, %v13006
    %v13012 = vlaneseq
    %v13013 = vshrl.u32 %v13012, 7
    %v13014 = vsub.s32 %v12852, %v13013
    %v13015 = vrot.slane %v12171, %v13014
    %v13016 = vsel %vm12857, %v13015, %v13011
    %v13017 = vlaneseq
    %v13018 = vshrl.u32 %v13017, 7
    %v13019 = vsub.s32 %v12749, %v13018
    %v13020 = vrot.slane %v12174, %v13019
    %v13021 = vlaneseq
    %v13022 = vshrl.u32 %v13021, 7
    %v13023 = vsub.s32 %v12754, %v13022
    %v13024 = vrot.slane %v12177, %v13023
    %v13025 = vsel %vm12759, %v13024, %v13020
    %v13026 = vlaneseq
    %v13027 = vshrl.u32 %v13026, 7
    %v13028 = vsub.s32 %v12761, %v13027
    %v13029 = vrot.slane %v12180, %v13028
    %v13030 = vsel %vm12766, %v13029, %v13025
    %v13031 = vlaneseq
    %v13032 = vshrl.u32 %v13031, 7
    %v13033 = vsub.s32 %v12768, %v13032
    %v13034 = vrot.slane %v12183, %v13033
    %v13035 = vsel %vm12773, %v13034, %v13030
    %v13036 = vlaneseq
    %v13037 = vshrl.u32 %v13036, 7
    %v13038 = vsub.s32 %v12775, %v13037
    %v13039 = vrot.slane %v12186, %v13038
    %v13040 = vsel %vm12780, %v13039, %v13035
    %v13041 = vlaneseq
    %v13042 = vshrl.u32 %v13041, 7
    %v13043 = vsub.s32 %v12782, %v13042
    %v13044 = vrot.slane %v12189, %v13043
    %v13045 = vsel %vm12787, %v13044, %v13040
    %v13046 = vlaneseq
    %v13047 = vshrl.u32 %v13046, 7
    %v13048 = vsub.s32 %v12789, %v13047
    %v13049 = vrot.slane %v12192, %v13048
    %v13050 = vsel %vm12794, %v13049, %v13045
    %v13051 = vlaneseq
    %v13052 = vshrl.u32 %v13051, 7
    %v13053 = vsub.s32 %v12796, %v13052
    %v13054 = vrot.slane %v12195, %v13053
    %v13055 = vsel %vm12801, %v13054, %v13050
    %v13056 = vlaneseq
    %v13057 = vshrl.u32 %v13056, 7
    %v13058 = vsub.s32 %v12803, %v13057
    %v13059 = vrot.slane %v12198, %v13058
    %v13060 = vsel %vm12808, %v13059, %v13055
    %v13061 = vlaneseq
    %v13062 = vshrl.u32 %v13061, 7
    %v13063 = vsub.s32 %v12810, %v13062
    %v13064 = vrot.slane %v12201, %v13063
    %v13065 = vsel %vm12815, %v13064, %v13060
    %v13066 = vlaneseq
    %v13067 = vshrl.u32 %v13066, 7
    %v13068 = vsub.s32 %v12817, %v13067
    %v13069 = vrot.slane %v12204, %v13068
    %v13070 = vsel %vm12822, %v13069, %v13065
    %v13071 = vlaneseq
    %v13072 = vshrl.u32 %v13071, 7
    %v13073 = vsub.s32 %v12824, %v13072
    %v13074 = vrot.slane %v12207, %v13073
    %v13075 = vsel %vm12829, %v13074, %v13070
    %v13076 = vlaneseq
    %v13077 = vshrl.u32 %v13076, 7
    %v13078 = vsub.s32 %v12831, %v13077
    %v13079 = vrot.slane %v12210, %v13078
    %v13080 = vsel %vm12836, %v13079, %v13075
    %v13081 = vlaneseq
    %v13082 = vshrl.u32 %v13081, 7
    %v13083 = vsub.s32 %v12838, %v13082
    %v13084 = vrot.slane %v12213, %v13083
    %v13085 = vsel %vm12843, %v13084, %v13080
    %v13086 = vlaneseq
    %v13087 = vshrl.u32 %v13086, 7
    %v13088 = vsub.s32 %v12845, %v13087
    %v13089 = vrot.slane %v12216, %v13088
    %v13090 = vsel %vm12850, %v13089, %v13085
    %v13091 = vlaneseq
    %v13092 = vshrl.u32 %v13091, 7
    %v13093 = vsub.s32 %v12852, %v13092
    %v13094 = vrot.slane %v12219, %v13093
    %v13095 = vsel %vm12857, %v13094, %v13090
    %v13096 = vlaneseq
    %v13097 = vshrl.u32 %v13096, 7
    %v13098 = vsub.s32 %v12749, %v13097
    %v13099 = vrot.slane %v12222, %v13098
    %v13100 = vlaneseq
    %v13101 = vshrl.u32 %v13100, 7
    %v13102 = vsub.s32 %v12754, %v13101
    %v13103 = vrot.slane %v12225, %v13102
    %v13104 = vsel %vm12759, %v13103, %v13099
    %v13105 = vlaneseq
    %v13106 = vshrl.u32 %v13105, 7
    %v13107 = vsub.s32 %v12761, %v13106
    %v13108 = vrot.slane %v12228, %v13107
    %v13109 = vsel %vm12766, %v13108, %v13104
    %v13110 = vlaneseq
    %v13111 = vshrl.u32 %v13110, 7
    %v13112 = vsub.s32 %v12768, %v13111
    %v13113 = vrot.slane %v12231, %v13112
    %v13114 = vsel %vm12773, %v13113, %v13109
    %v13115 = vlaneseq
    %v13116 = vshrl.u32 %v13115, 7
    %v13117 = vsub.s32 %v12775, %v13116
    %v13118 = vrot.slane %v12234, %v13117
    %v13119 = vsel %vm12780, %v13118, %v13114
    %v13120 = vlaneseq
    %v13121 = vshrl.u32 %v13120, 7
    %v13122 = vsub.s32 %v12782, %v13121
    %v13123 = vrot.slane %v12237, %v13122
    %v13124 = vsel %vm12787, %v13123, %v13119
    %v13125 = vlaneseq
    %v13126 = vshrl.u32 %v13125, 7
    %v13127 = vsub.s32 %v12789, %v13126
    %v13128 = vrot.slane %v12240, %v13127
    %v13129 = vsel %vm12794, %v13128, %v13124
    %v13130 = vlaneseq
    %v13131 = vshrl.u32 %v13130, 7
    %v13132 = vsub.s32 %v12796, %v13131
    %v13133 = vrot.slane %v12243, %v13132
    %v13134 = vsel %vm12801, %v13133, %v13129
    %v13135 = vlaneseq
    %v13136 = vshrl.u32 %v13135, 7
    %v13137 = vsub.s32 %v12803, %v13136
    %v13138 = vrot.slane %v12246, %v13137
    %v13139 = vsel %vm12808, %v13138, %v13134
    %v13140 = vlaneseq
    %v13141 = vshrl.u32 %v13140, 7
    %v13142 = vsub.s32 %v12810, %v13141
    %v13143 = vrot.slane %v12249, %v13142
    %v13144 = vsel %vm12815, %v13143, %v13139
    %v13145 = vlaneseq
    %v13146 = vshrl.u32 %v13145, 7
    %v13147 = vsub.s32 %v12817, %v13146
    %v13148 = vrot.slane %v12252, %v13147
    %v13149 = vsel %vm12822, %v13148, %v13144
    %v13150 = vlaneseq
    %v13151 = vshrl.u32 %v13150, 7
    %v13152 = vsub.s32 %v12824, %v13151
    %v13153 = vrot.slane %v12255, %v13152
    %v13154 = vsel %vm12829, %v13153, %v13149
    %v13155 = vlaneseq
    %v13156 = vshrl.u32 %v13155, 7
    %v13157 = vsub.s32 %v12831, %v13156
    %v13158 = vrot.slane %v12258, %v13157
    %v13159 = vsel %vm12836, %v13158, %v13154
    %v13160 = vlaneseq
    %v13161 = vshrl.u32 %v13160, 7
    %v13162 = vsub.s32 %v12838, %v13161
    %v13163 = vrot.slane %v12261, %v13162
    %v13164 = vsel %vm12843, %v13163, %v13159
    %v13165 = vlaneseq
    %v13166 = vshrl.u32 %v13165, 7
    %v13167 = vsub.s32 %v12845, %v13166
    %v13168 = vrot.slane %v12264, %v13167
    %v13169 = vsel %vm12850, %v13168, %v13164
    %v13170 = vlaneseq
    %v13171 = vshrl.u32 %v13170, 7
    %v13172 = vsub.s32 %v12852, %v13171
    %v13173 = vrot.slane %v12267, %v13172
    %v13174 = vsel %vm12857, %v13173, %v13169
    %v13175 = vlaneseq
    %v13176 = vshrl.u32 %v13175, 7
    %v13177 = vsub.s32 %v12749, %v13176
    %v13178 = vrot.slane %v12270, %v13177
    %v13179 = vlaneseq
    %v13180 = vshrl.u32 %v13179, 7
    %v13181 = vsub.s32 %v12754, %v13180
    %v13182 = vrot.slane %v12273, %v13181
    %v13183 = vsel %vm12759, %v13182, %v13178
    %v13184 = vlaneseq
    %v13185 = vshrl.u32 %v13184, 7
    %v13186 = vsub.s32 %v12761, %v13185
    %v13187 = vrot.slane %v12276, %v13186
    %v13188 = vsel %vm12766, %v13187, %v13183
    %v13189 = vlaneseq
    %v13190 = vshrl.u32 %v13189, 7
    %v13191 = vsub.s32 %v12768, %v13190
    %v13192 = vrot.slane %v12279, %v13191
    %v13193 = vsel %vm12773, %v13192, %v13188
    %v13194 = vlaneseq
    %v13195 = vshrl.u32 %v13194, 7
    %v13196 = vsub.s32 %v12775, %v13195
    %v13197 = vrot.slane %v12282, %v13196
    %v13198 = vsel %vm12780, %v13197, %v13193
    %v13199 = vlaneseq
    %v13200 = vshrl.u32 %v13199, 7
    %v13201 = vsub.s32 %v12782, %v13200
    %v13202 = vrot.slane %v12285, %v13201
    %v13203 = vsel %vm12787, %v13202, %v13198
    %v13204 = vlaneseq
    %v13205 = vshrl.u32 %v13204, 7
    %v13206 = vsub.s32 %v12789, %v13205
    %v13207 = vrot.slane %v12288, %v13206
    %v13208 = vsel %vm12794, %v13207, %v13203
    %v13209 = vlaneseq
    %v13210 = vshrl.u32 %v13209, 7
    %v13211 = vsub.s32 %v12796, %v13210
    %v13212 = vrot.slane %v12291, %v13211
    %v13213 = vsel %vm12801, %v13212, %v13208
    %v13214 = vlaneseq
    %v13215 = vshrl.u32 %v13214, 7
    %v13216 = vsub.s32 %v12803, %v13215
    %v13217 = vrot.slane %v12294, %v13216
    %v13218 = vsel %vm12808, %v13217, %v13213
    %v13219 = vlaneseq
    %v13220 = vshrl.u32 %v13219, 7
    %v13221 = vsub.s32 %v12810, %v13220
    %v13222 = vrot.slane %v12297, %v13221
    %v13223 = vsel %vm12815, %v13222, %v13218
    %v13224 = vlaneseq
    %v13225 = vshrl.u32 %v13224, 7
    %v13226 = vsub.s32 %v12817, %v13225
    %v13227 = vrot.slane %v12300, %v13226
    %v13228 = vsel %vm12822, %v13227, %v13223
    %v13229 = vlaneseq
    %v13230 = vshrl.u32 %v13229, 7
    %v13231 = vsub.s32 %v12824, %v13230
    %v13232 = vrot.slane %v12303, %v13231
    %v13233 = vsel %vm12829, %v13232, %v13228
    %v13234 = vlaneseq
    %v13235 = vshrl.u32 %v13234, 7
    %v13236 = vsub.s32 %v12831, %v13235
    %v13237 = vrot.slane %v12306, %v13236
    %v13238 = vsel %vm12836, %v13237, %v13233
    %v13239 = vlaneseq
    %v13240 = vshrl.u32 %v13239, 7
    %v13241 = vsub.s32 %v12838, %v13240
    %v13242 = vrot.slane %v12309, %v13241
    %v13243 = vsel %vm12843, %v13242, %v13238
    %v13244 = vlaneseq
    %v13245 = vshrl.u32 %v13244, 7
    %v13246 = vsub.s32 %v12845, %v13245
    %v13247 = vrot.slane %v12312, %v13246
    %v13248 = vsel %vm12850, %v13247, %v13243
    %v13249 = vlaneseq
    %v13250 = vshrl.u32 %v13249, 7
    %v13251 = vsub.s32 %v12852, %v13250
    %v13252 = vrot.slane %v12315, %v13251
    %v13253 = vsel %vm12857, %v13252, %v13248
    %v13254 = vlaneseq
    %v13255 = vshrl.u32 %v13254, 7
    %v13256 = vsub.s32 %v12749, %v13255
    %v13257 = vrot.slane %v12318, %v13256
    %v13258 = vlaneseq
    %v13259 = vshrl.u32 %v13258, 7
    %v13260 = vsub.s32 %v12754, %v13259
    %v13261 = vrot.slane %v12321, %v13260
    %v13262 = vsel %vm12759, %v13261, %v13257
    %v13263 = vlaneseq
    %v13264 = vshrl.u32 %v13263, 7
    %v13265 = vsub.s32 %v12761, %v13264
    %v13266 = vrot.slane %v12324, %v13265
    %v13267 = vsel %vm12766, %v13266, %v13262
    %v13268 = vlaneseq
    %v13269 = vshrl.u32 %v13268, 7
    %v13270 = vsub.s32 %v12768, %v13269
    %v13271 = vrot.slane %v12327, %v13270
    %v13272 = vsel %vm12773, %v13271, %v13267
    %v13273 = vlaneseq
    %v13274 = vshrl.u32 %v13273, 7
    %v13275 = vsub.s32 %v12775, %v13274
    %v13276 = vrot.slane %v12330, %v13275
    %v13277 = vsel %vm12780, %v13276, %v13272
    %v13278 = vlaneseq
    %v13279 = vshrl.u32 %v13278, 7
    %v13280 = vsub.s32 %v12782, %v13279
    %v13281 = vrot.slane %v12333, %v13280
    %v13282 = vsel %vm12787, %v13281, %v13277
    %v13283 = vlaneseq
    %v13284 = vshrl.u32 %v13283, 7
    %v13285 = vsub.s32 %v12789, %v13284
    %v13286 = vrot.slane %v12336, %v13285
    %v13287 = vsel %vm12794, %v13286, %v13282
    %v13288 = vlaneseq
    %v13289 = vshrl.u32 %v13288, 7
    %v13290 = vsub.s32 %v12796, %v13289
    %v13291 = vrot.slane %v12339, %v13290
    %v13292 = vsel %vm12801, %v13291, %v13287
    %v13293 = vlaneseq
    %v13294 = vshrl.u32 %v13293, 7
    %v13295 = vsub.s32 %v12803, %v13294
    %v13296 = vrot.slane %v12342, %v13295
    %v13297 = vsel %vm12808, %v13296, %v13292
    %v13298 = vlaneseq
    %v13299 = vshrl.u32 %v13298, 7
    %v13300 = vsub.s32 %v12810, %v13299
    %v13301 = vrot.slane %v12345, %v13300
    %v13302 = vsel %vm12815, %v13301, %v13297
    %v13303 = vlaneseq
    %v13304 = vshrl.u32 %v13303, 7
    %v13305 = vsub.s32 %v12817, %v13304
    %v13306 = vrot.slane %v12348, %v13305
    %v13307 = vsel %vm12822, %v13306, %v13302
    %v13308 = vlaneseq
    %v13309 = vshrl.u32 %v13308, 7
    %v13310 = vsub.s32 %v12824, %v13309
    %v13311 = vrot.slane %v12351, %v13310
    %v13312 = vsel %vm12829, %v13311, %v13307
    %v13313 = vlaneseq
    %v13314 = vshrl.u32 %v13313, 7
    %v13315 = vsub.s32 %v12831, %v13314
    %v13316 = vrot.slane %v12354, %v13315
    %v13317 = vsel %vm12836, %v13316, %v13312
    %v13318 = vlaneseq
    %v13319 = vshrl.u32 %v13318, 7
    %v13320 = vsub.s32 %v12838, %v13319
    %v13321 = vrot.slane %v12357, %v13320
    %v13322 = vsel %vm12843, %v13321, %v13317
    %v13323 = vlaneseq
    %v13324 = vshrl.u32 %v13323, 7
    %v13325 = vsub.s32 %v12845, %v13324
    %v13326 = vrot.slane %v12360, %v13325
    %v13327 = vsel %vm12850, %v13326, %v13322
    %v13328 = vlaneseq
    %v13329 = vshrl.u32 %v13328, 7
    %v13330 = vsub.s32 %v12852, %v13329
    %v13331 = vrot.slane %v12363, %v13330
    %v13332 = vsel %vm12857, %v13331, %v13327
    %v13333 = vlaneseq
    %v13334 = vshrl.u32 %v13333, 7
    %v13335 = vsub.s32 %v12749, %v13334
    %v13336 = vrot.slane %v12366, %v13335
    %v13337 = vlaneseq
    %v13338 = vshrl.u32 %v13337, 7
    %v13339 = vsub.s32 %v12754, %v13338
    %v13340 = vrot.slane %v12369, %v13339
    %v13341 = vsel %vm12759, %v13340, %v13336
    %v13342 = vlaneseq
    %v13343 = vshrl.u32 %v13342, 7
    %v13344 = vsub.s32 %v12761, %v13343
    %v13345 = vrot.slane %v12372, %v13344
    %v13346 = vsel %vm12766, %v13345, %v13341
    %v13347 = vlaneseq
    %v13348 = vshrl.u32 %v13347, 7
    %v13349 = vsub.s32 %v12768, %v13348
    %v13350 = vrot.slane %v12375, %v13349
    %v13351 = vsel %vm12773, %v13350, %v13346
    %v13352 = vlaneseq
    %v13353 = vshrl.u32 %v13352, 7
    %v13354 = vsub.s32 %v12775, %v13353
    %v13355 = vrot.slane %v12378, %v13354
    %v13356 = vsel %vm12780, %v13355, %v13351
    %v13357 = vlaneseq
    %v13358 = vshrl.u32 %v13357, 7
    %v13359 = vsub.s32 %v12782, %v13358
    %v13360 = vrot.slane %v12381, %v13359
    %v13361 = vsel %vm12787, %v13360, %v13356
    %v13362 = vlaneseq
    %v13363 = vshrl.u32 %v13362, 7
    %v13364 = vsub.s32 %v12789, %v13363
    %v13365 = vrot.slane %v12384, %v13364
    %v13366 = vsel %vm12794, %v13365, %v13361
    %v13367 = vlaneseq
    %v13368 = vshrl.u32 %v13367, 7
    %v13369 = vsub.s32 %v12796, %v13368
    %v13370 = vrot.slane %v12387, %v13369
    %v13371 = vsel %vm12801, %v13370, %v13366
    %v13372 = vlaneseq
    %v13373 = vshrl.u32 %v13372, 7
    %v13374 = vsub.s32 %v12749, %v13373
    %v13375 = vrot.slane %v12390, %v13374
    %v13376 = vlaneseq
    %v13377 = vshrl.u32 %v13376, 7
    %v13378 = vsub.s32 %v12754, %v13377
    %v13379 = vrot.slane %v12393, %v13378
    %v13380 = vsel %vm12759, %v13379, %v13375
    %v13381 = vlaneseq
    %v13382 = vshrl.u32 %v13381, 7
    %v13383 = vsub.s32 %v12761, %v13382
    %v13384 = vrot.slane %v12396, %v13383
    %v13385 = vsel %vm12766, %v13384, %v13380
    %v13386 = vlaneseq
    %v13387 = vshrl.u32 %v13386, 7
    %v13388 = vsub.s32 %v12768, %v13387
    %v13389 = vrot.slane %v12399, %v13388
    %v13390 = vsel %vm12773, %v13389, %v13385
    %v13391 = vlaneseq
    %v13392 = vshrl.u32 %v13391, 7
    %v13393 = vsub.s32 %v12775, %v13392
    %v13394 = vrot.slane %v12402, %v13393
    %v13395 = vsel %vm12780, %v13394, %v13390
    %v13396 = vlaneseq
    %v13397 = vshrl.u32 %v13396, 7
    %v13398 = vsub.s32 %v12782, %v13397
    %v13399 = vrot.slane %v12405, %v13398
    %v13400 = vsel %vm12787, %v13399, %v13395
    %v13401 = vlaneseq
    %v13402 = vshrl.u32 %v13401, 7
    %v13403 = vsub.s32 %v12789, %v13402
    %v13404 = vrot.slane %v12408, %v13403
    %v13405 = vsel %vm12794, %v13404, %v13400
    %v13406 = vlaneseq
    %v13407 = vshrl.u32 %v13406, 7
    %v13408 = vsub.s32 %v12796, %v13407
    %v13409 = vrot.slane %v12411, %v13408
    %v13410 = vsel %vm12801, %v13409, %v13405
    %v13411 = vlaneseq
    %v13412 = vshrl.u32 %v13411, 7
    %v13413 = vsub.s32 %v12803, %v13412
    %v13414 = vrot.slane %v12414, %v13413
    %v13415 = vsel %vm12808, %v13414, %v13410
    %v13416 = vlaneseq
    %v13417 = vshrl.u32 %v13416, 7
    %v13418 = vsub.s32 %v12810, %v13417
    %v13419 = vrot.slane %v12417, %v13418
    %v13420 = vsel %vm12815, %v13419, %v13415
    %v13421 = vlaneseq
    %v13422 = vshrl.u32 %v13421, 7
    %v13423 = vsub.s32 %v12817, %v13422
    %v13424 = vrot.slane %v12420, %v13423
    %v13425 = vsel %vm12822, %v13424, %v13420
    %v13426 = vlaneseq
    %v13427 = vshrl.u32 %v13426, 7
    %v13428 = vsub.s32 %v12824, %v13427
    %v13429 = vrot.slane %v12423, %v13428
    %v13430 = vsel %vm12829, %v13429, %v13425
    %v13431 = vlaneseq
    %v13432 = vshrl.u32 %v13431, 7
    %v13433 = vsub.s32 %v12831, %v13432
    %v13434 = vrot.slane %v12426, %v13433
    %v13435 = vsel %vm12836, %v13434, %v13430
    %v13436 = vlaneseq
    %v13437 = vshrl.u32 %v13436, 7
    %v13438 = vsub.s32 %v12838, %v13437
    %v13439 = vrot.slane %v12429, %v13438
    %v13440 = vsel %vm12843, %v13439, %v13435
    %v13441 = vlaneseq
    %v13442 = vshrl.u32 %v13441, 7
    %v13443 = vsub.s32 %v12845, %v13442
    %v13444 = vrot.slane %v12432, %v13443
    %v13445 = vsel %vm12850, %v13444, %v13440
    %v13446 = vlaneseq
    %v13447 = vshrl.u32 %v13446, 7
    %v13448 = vsub.s32 %v12852, %v13447
    %v13449 = vrot.slane %v12435, %v13448
    %v13450 = vsel %vm12857, %v13449, %v13445
    %v13451 = vlaneseq
    %v13452 = vshrl.u32 %v13451, 7
    %v13453 = vsub.s32 %v12749, %v13452
    %v13454 = vrot.slane %v12438, %v13453
    %v13455 = vlaneseq
    %v13456 = vshrl.u32 %v13455, 7
    %v13457 = vsub.s32 %v12754, %v13456
    %v13458 = vrot.slane %v12441, %v13457
    %v13459 = vsel %vm12759, %v13458, %v13454
    %v13460 = vlaneseq
    %v13461 = vshrl.u32 %v13460, 7
    %v13462 = vsub.s32 %v12761, %v13461
    %v13463 = vrot.slane %v12444, %v13462
    %v13464 = vsel %vm12766, %v13463, %v13459
    %v13465 = vlaneseq
    %v13466 = vshrl.u32 %v13465, 7
    %v13467 = vsub.s32 %v12768, %v13466
    %v13468 = vrot.slane %v12447, %v13467
    %v13469 = vsel %vm12773, %v13468, %v13464
    %v13470 = vlaneseq
    %v13471 = vshrl.u32 %v13470, 7
    %v13472 = vsub.s32 %v12775, %v13471
    %v13473 = vrot.slane %v12450, %v13472
    %v13474 = vsel %vm12780, %v13473, %v13469
    %v13475 = vlaneseq
    %v13476 = vshrl.u32 %v13475, 7
    %v13477 = vsub.s32 %v12782, %v13476
    %v13478 = vrot.slane %v12453, %v13477
    %v13479 = vsel %vm12787, %v13478, %v13474
    %v13480 = vlaneseq
    %v13481 = vshrl.u32 %v13480, 7
    %v13482 = vsub.s32 %v12789, %v13481
    %v13483 = vrot.slane %v12456, %v13482
    %v13484 = vsel %vm12794, %v13483, %v13479
    %v13485 = vlaneseq
    %v13486 = vshrl.u32 %v13485, 7
    %v13487 = vsub.s32 %v12796, %v13486
    %v13488 = vrot.slane %v12459, %v13487
    %v13489 = vsel %vm12801, %v13488, %v13484
    %v13490 = vlaneseq
    %v13491 = vshrl.u32 %v13490, 7
    %v13492 = vsub.s32 %v12803, %v13491
    %v13493 = vrot.slane %v12462, %v13492
    %v13494 = vsel %vm12808, %v13493, %v13489
    %v13495 = vlaneseq
    %v13496 = vshrl.u32 %v13495, 7
    %v13497 = vsub.s32 %v12810, %v13496
    %v13498 = vrot.slane %v12465, %v13497
    %v13499 = vsel %vm12815, %v13498, %v13494
    %v13500 = vlaneseq
    %v13501 = vshrl.u32 %v13500, 7
    %v13502 = vsub.s32 %v12817, %v13501
    %v13503 = vrot.slane %v12468, %v13502
    %v13504 = vsel %vm12822, %v13503, %v13499
    %v13505 = vlaneseq
    %v13506 = vshrl.u32 %v13505, 7
    %v13507 = vsub.s32 %v12824, %v13506
    %v13508 = vrot.slane %v12471, %v13507
    %v13509 = vsel %vm12829, %v13508, %v13504
    %v13510 = vlaneseq
    %v13511 = vshrl.u32 %v13510, 7
    %v13512 = vsub.s32 %v12831, %v13511
    %v13513 = vrot.slane %v12474, %v13512
    %v13514 = vsel %vm12836, %v13513, %v13509
    %v13515 = vlaneseq
    %v13516 = vshrl.u32 %v13515, 7
    %v13517 = vsub.s32 %v12838, %v13516
    %v13518 = vrot.slane %v12477, %v13517
    %v13519 = vsel %vm12843, %v13518, %v13514
    %v13520 = vlaneseq
    %v13521 = vshrl.u32 %v13520, 7
    %v13522 = vsub.s32 %v12845, %v13521
    %v13523 = vrot.slane %v12480, %v13522
    %v13524 = vsel %vm12850, %v13523, %v13519
    %v13525 = vlaneseq
    %v13526 = vshrl.u32 %v13525, 7
    %v13527 = vsub.s32 %v12852, %v13526
    %v13528 = vrot.slane %v12483, %v13527
    %v13529 = vsel %vm12857, %v13528, %v13524
    %v13530 = vlaneseq
    %v13531 = vshrl.u32 %v13530, 7
    %v13532 = vsub.s32 %v12749, %v13531
    %v13533 = vrot.slane %v12486, %v13532
    %v13534 = vlaneseq
    %v13535 = vshrl.u32 %v13534, 7
    %v13536 = vsub.s32 %v12754, %v13535
    %v13537 = vrot.slane %v12489, %v13536
    %v13538 = vsel %vm12759, %v13537, %v13533
    %v13539 = vlaneseq
    %v13540 = vshrl.u32 %v13539, 7
    %v13541 = vsub.s32 %v12761, %v13540
    %v13542 = vrot.slane %v12492, %v13541
    %v13543 = vsel %vm12766, %v13542, %v13538
    %v13544 = vlaneseq
    %v13545 = vshrl.u32 %v13544, 7
    %v13546 = vsub.s32 %v12768, %v13545
    %v13547 = vrot.slane %v12495, %v13546
    %v13548 = vsel %vm12773, %v13547, %v13543
    %v13549 = vlaneseq
    %v13550 = vshrl.u32 %v13549, 7
    %v13551 = vsub.s32 %v12775, %v13550
    %v13552 = vrot.slane %v12498, %v13551
    %v13553 = vsel %vm12780, %v13552, %v13548
    %v13554 = vlaneseq
    %v13555 = vshrl.u32 %v13554, 7
    %v13556 = vsub.s32 %v12782, %v13555
    %v13557 = vrot.slane %v12501, %v13556
    %v13558 = vsel %vm12787, %v13557, %v13553
    %v13559 = vlaneseq
    %v13560 = vshrl.u32 %v13559, 7
    %v13561 = vsub.s32 %v12789, %v13560
    %v13562 = vrot.slane %v12504, %v13561
    %v13563 = vsel %vm12794, %v13562, %v13558
    %v13564 = vlaneseq
    %v13565 = vshrl.u32 %v13564, 7
    %v13566 = vsub.s32 %v12796, %v13565
    %v13567 = vrot.slane %v12507, %v13566
    %v13568 = vsel %vm12801, %v13567, %v13563
    %v13569 = vlaneseq
    %v13570 = vshrl.u32 %v13569, 7
    %v13571 = vsub.s32 %v12803, %v13570
    %v13572 = vrot.slane %v12510, %v13571
    %v13573 = vsel %vm12808, %v13572, %v13568
    %v13574 = vlaneseq
    %v13575 = vshrl.u32 %v13574, 7
    %v13576 = vsub.s32 %v12810, %v13575
    %v13577 = vrot.slane %v12513, %v13576
    %v13578 = vsel %vm12815, %v13577, %v13573
    %v13579 = vlaneseq
    %v13580 = vshrl.u32 %v13579, 7
    %v13581 = vsub.s32 %v12817, %v13580
    %v13582 = vrot.slane %v12516, %v13581
    %v13583 = vsel %vm12822, %v13582, %v13578
    %v13584 = vlaneseq
    %v13585 = vshrl.u32 %v13584, 7
    %v13586 = vsub.s32 %v12824, %v13585
    %v13587 = vrot.slane %v12519, %v13586
    %v13588 = vsel %vm12829, %v13587, %v13583
    %v13589 = vlaneseq
    %v13590 = vshrl.u32 %v13589, 7
    %v13591 = vsub.s32 %v12831, %v13590
    %v13592 = vrot.slane %v12522, %v13591
    %v13593 = vsel %vm12836, %v13592, %v13588
    %v13594 = vlaneseq
    %v13595 = vshrl.u32 %v13594, 7
    %v13596 = vsub.s32 %v12838, %v13595
    %v13597 = vrot.slane %v12525, %v13596
    %v13598 = vsel %vm12843, %v13597, %v13593
    %v13599 = vlaneseq
    %v13600 = vshrl.u32 %v13599, 7
    %v13601 = vsub.s32 %v12845, %v13600
    %v13602 = vrot.slane %v12528, %v13601
    %v13603 = vsel %vm12850, %v13602, %v13598
    %v13604 = vlaneseq
    %v13605 = vshrl.u32 %v13604, 7
    %v13606 = vsub.s32 %v12852, %v13605
    %v13607 = vrot.slane %v12531, %v13606
    %v13608 = vsel %vm12857, %v13607, %v13603
    %v13609 = vlaneseq
    %v13610 = vshrl.u32 %v13609, 7
    %v13611 = vsub.s32 %v12749, %v13610
    %v13612 = vrot.slane %v12534, %v13611
    %v13613 = vlaneseq
    %v13614 = vshrl.u32 %v13613, 7
    %v13615 = vsub.s32 %v12754, %v13614
    %v13616 = vrot.slane %v12537, %v13615
    %v13617 = vsel %vm12759, %v13616, %v13612
    %v13618 = vlaneseq
    %v13619 = vshrl.u32 %v13618, 7
    %v13620 = vsub.s32 %v12761, %v13619
    %v13621 = vrot.slane %v12540, %v13620
    %v13622 = vsel %vm12766, %v13621, %v13617
    %v13623 = vlaneseq
    %v13624 = vshrl.u32 %v13623, 7
    %v13625 = vsub.s32 %v12768, %v13624
    %v13626 = vrot.slane %v12543, %v13625
    %v13627 = vsel %vm12773, %v13626, %v13622
    %v13628 = vlaneseq
    %v13629 = vshrl.u32 %v13628, 7
    %v13630 = vsub.s32 %v12775, %v13629
    %v13631 = vrot.slane %v12546, %v13630
    %v13632 = vsel %vm12780, %v13631, %v13627
    %v13633 = vlaneseq
    %v13634 = vshrl.u32 %v13633, 7
    %v13635 = vsub.s32 %v12782, %v13634
    %v13636 = vrot.slane %v12549, %v13635
    %v13637 = vsel %vm12787, %v13636, %v13632
    %v13638 = vlaneseq
    %v13639 = vshrl.u32 %v13638, 7
    %v13640 = vsub.s32 %v12789, %v13639
    %v13641 = vrot.slane %v12552, %v13640
    %v13642 = vsel %vm12794, %v13641, %v13637
    %v13643 = vlaneseq
    %v13644 = vshrl.u32 %v13643, 7
    %v13645 = vsub.s32 %v12796, %v13644
    %v13646 = vrot.slane %v12555, %v13645
    %v13647 = vsel %vm12801, %v13646, %v13642
    %v13648 = vlaneseq
    %v13649 = vshrl.u32 %v13648, 7
    %v13650 = vsub.s32 %v12803, %v13649
    %v13651 = vrot.slane %v12558, %v13650
    %v13652 = vsel %vm12808, %v13651, %v13647
    %v13653 = vlaneseq
    %v13654 = vshrl.u32 %v13653, 7
    %v13655 = vsub.s32 %v12810, %v13654
    %v13656 = vrot.slane %v12561, %v13655
    %v13657 = vsel %vm12815, %v13656, %v13652
    %v13658 = vlaneseq
    %v13659 = vshrl.u32 %v13658, 7
    %v13660 = vsub.s32 %v12817, %v13659
    %v13661 = vrot.slane %v12564, %v13660
    %v13662 = vsel %vm12822, %v13661, %v13657
    %v13663 = vlaneseq
    %v13664 = vshrl.u32 %v13663, 7
    %v13665 = vsub.s32 %v12824, %v13664
    %v13666 = vrot.slane %v12567, %v13665
    %v13667 = vsel %vm12829, %v13666, %v13662
    %v13668 = vlaneseq
    %v13669 = vshrl.u32 %v13668, 7
    %v13670 = vsub.s32 %v12831, %v13669
    %v13671 = vrot.slane %v12570, %v13670
    %v13672 = vsel %vm12836, %v13671, %v13667
    %v13673 = vlaneseq
    %v13674 = vshrl.u32 %v13673, 7
    %v13675 = vsub.s32 %v12838, %v13674
    %v13676 = vrot.slane %v12573, %v13675
    %v13677 = vsel %vm12843, %v13676, %v13672
    %v13678 = vlaneseq
    %v13679 = vshrl.u32 %v13678, 7
    %v13680 = vsub.s32 %v12845, %v13679
    %v13681 = vrot.slane %v12576, %v13680
    %v13682 = vsel %vm12850, %v13681, %v13677
    %v13683 = vlaneseq
    %v13684 = vshrl.u32 %v13683, 7
    %v13685 = vsub.s32 %v12852, %v13684
    %v13686 = vrot.slane %v12579, %v13685
    %v13687 = vsel %vm12857, %v13686, %v13682
    %v13688 = vlaneseq
    %v13689 = vshrl.u32 %v13688, 7
    %v13690 = vsub.s32 %v12749, %v13689
    %v13691 = vrot.slane %v12582, %v13690
    %v13692 = vlaneseq
    %v13693 = vshrl.u32 %v13692, 7
    %v13694 = vsub.s32 %v12754, %v13693
    %v13695 = vrot.slane %v12585, %v13694
    %v13696 = vsel %vm12759, %v13695, %v13691
    %v13697 = vlaneseq
    %v13698 = vshrl.u32 %v13697, 7
    %v13699 = vsub.s32 %v12761, %v13698
    %v13700 = vrot.slane %v12588, %v13699
    %v13701 = vsel %vm12766, %v13700, %v13696
    %v13702 = vlaneseq
    %v13703 = vshrl.u32 %v13702, 7
    %v13704 = vsub.s32 %v12768, %v13703
    %v13705 = vrot.slane %v12591, %v13704
    %v13706 = vsel %vm12773, %v13705, %v13701
    %v13707 = vlaneseq
    %v13708 = vshrl.u32 %v13707, 7
    %v13709 = vsub.s32 %v12775, %v13708
    %v13710 = vrot.slane %v12594, %v13709
    %v13711 = vsel %vm12780, %v13710, %v13706
    %v13712 = vlaneseq
    %v13713 = vshrl.u32 %v13712, 7
    %v13714 = vsub.s32 %v12782, %v13713
    %v13715 = vrot.slane %v12597, %v13714
    %v13716 = vsel %vm12787, %v13715, %v13711
    %v13717 = vlaneseq
    %v13718 = vshrl.u32 %v13717, 7
    %v13719 = vsub.s32 %v12789, %v13718
    %v13720 = vrot.slane %v12600, %v13719
    %v13721 = vsel %vm12794, %v13720, %v13716
    %v13722 = vlaneseq
    %v13723 = vshrl.u32 %v13722, 7
    %v13724 = vsub.s32 %v12796, %v13723
    %v13725 = vrot.slane %v12603, %v13724
    %v13726 = vsel %vm12801, %v13725, %v13721
    %v13727 = vlaneseq
    %v13728 = vshrl.u32 %v13727, 7
    %v13729 = vsub.s32 %v12803, %v13728
    %v13730 = vrot.slane %v12606, %v13729
    %v13731 = vsel %vm12808, %v13730, %v13726
    %v13732 = vlaneseq
    %v13733 = vshrl.u32 %v13732, 7
    %v13734 = vsub.s32 %v12810, %v13733
    %v13735 = vrot.slane %v12609, %v13734
    %v13736 = vsel %vm12815, %v13735, %v13731
    %v13737 = vlaneseq
    %v13738 = vshrl.u32 %v13737, 7
    %v13739 = vsub.s32 %v12817, %v13738
    %v13740 = vrot.slane %v12612, %v13739
    %v13741 = vsel %vm12822, %v13740, %v13736
    %v13742 = vlaneseq
    %v13743 = vshrl.u32 %v13742, 7
    %v13744 = vsub.s32 %v12824, %v13743
    %v13745 = vrot.slane %v12615, %v13744
    %v13746 = vsel %vm12829, %v13745, %v13741
    %v13747 = vlaneseq
    %v13748 = vshrl.u32 %v13747, 7
    %v13749 = vsub.s32 %v12831, %v13748
    %v13750 = vrot.slane %v12618, %v13749
    %v13751 = vsel %vm12836, %v13750, %v13746
    %v13752 = vlaneseq
    %v13753 = vshrl.u32 %v13752, 7
    %v13754 = vsub.s32 %v12838, %v13753
    %v13755 = vrot.slane %v12621, %v13754
    %v13756 = vsel %vm12843, %v13755, %v13751
    %v13757 = vlaneseq
    %v13758 = vshrl.u32 %v13757, 7
    %v13759 = vsub.s32 %v12845, %v13758
    %v13760 = vrot.slane %v12624, %v13759
    %v13761 = vsel %vm12850, %v13760, %v13756
    %v13762 = vlaneseq
    %v13763 = vshrl.u32 %v13762, 7
    %v13764 = vsub.s32 %v12852, %v13763
    %v13765 = vrot.slane %v12627, %v13764
    %v13766 = vsel %vm12857, %v13765, %v13761
    %v13767 = vlaneseq
    %v13768 = vshrl.u32 %v13767, 7
    %v13769 = vsub.s32 %v12749, %v13768
    %v13770 = vrot.slane %v12630, %v13769
    %v13771 = vlaneseq
    %v13772 = vshrl.u32 %v13771, 7
    %v13773 = vsub.s32 %v12754, %v13772
    %v13774 = vrot.slane %v12633, %v13773
    %v13775 = vsel %vm12759, %v13774, %v13770
    %v13776 = vlaneseq
    %v13777 = vshrl.u32 %v13776, 7
    %v13778 = vsub.s32 %v12761, %v13777
    %v13779 = vrot.slane %v12636, %v13778
    %v13780 = vsel %vm12766, %v13779, %v13775
    %v13781 = vlaneseq
    %v13782 = vshrl.u32 %v13781, 7
    %v13783 = vsub.s32 %v12768, %v13782
    %v13784 = vrot.slane %v12639, %v13783
    %v13785 = vsel %vm12773, %v13784, %v13780
    %v13786 = vlaneseq
    %v13787 = vshrl.u32 %v13786, 7
    %v13788 = vsub.s32 %v12775, %v13787
    %v13789 = vrot.slane %v12642, %v13788
    %v13790 = vsel %vm12780, %v13789, %v13785
    %v13791 = vlaneseq
    %v13792 = vshrl.u32 %v13791, 7
    %v13793 = vsub.s32 %v12782, %v13792
    %v13794 = vrot.slane %v12645, %v13793
    %v13795 = vsel %vm12787, %v13794, %v13790
    %v13796 = vlaneseq
    %v13797 = vshrl.u32 %v13796, 7
    %v13798 = vsub.s32 %v12789, %v13797
    %v13799 = vrot.slane %v12648, %v13798
    %v13800 = vsel %vm12794, %v13799, %v13795
    %v13801 = vlaneseq
    %v13802 = vshrl.u32 %v13801, 7
    %v13803 = vsub.s32 %v12796, %v13802
    %v13804 = vrot.slane %v12651, %v13803
    %v13805 = vsel %vm12801, %v13804, %v13800
    %v13806 = vlaneseq
    %v13807 = vshrl.u32 %v13806, 7
    %v13808 = vsub.s32 %v12803, %v13807
    %v13809 = vrot.slane %v12654, %v13808
    %v13810 = vsel %vm12808, %v13809, %v13805
    %v13811 = vlaneseq
    %v13812 = vshrl.u32 %v13811, 7
    %v13813 = vsub.s32 %v12810, %v13812
    %v13814 = vrot.slane %v12657, %v13813
    %v13815 = vsel %vm12815, %v13814, %v13810
    %v13816 = vlaneseq
    %v13817 = vshrl.u32 %v13816, 7
    %v13818 = vsub.s32 %v12817, %v13817
    %v13819 = vrot.slane %v12660, %v13818
    %v13820 = vsel %vm12822, %v13819, %v13815
    %v13821 = vlaneseq
    %v13822 = vshrl.u32 %v13821, 7
    %v13823 = vsub.s32 %v12824, %v13822
    %v13824 = vrot.slane %v12663, %v13823
    %v13825 = vsel %vm12829, %v13824, %v13820
    %v13826 = vlaneseq
    %v13827 = vshrl.u32 %v13826, 7
    %v13828 = vsub.s32 %v12831, %v13827
    %v13829 = vrot.slane %v12666, %v13828
    %v13830 = vsel %vm12836, %v13829, %v13825
    %v13831 = vlaneseq
    %v13832 = vshrl.u32 %v13831, 7
    %v13833 = vsub.s32 %v12838, %v13832
    %v13834 = vrot.slane %v12669, %v13833
    %v13835 = vsel %vm12843, %v13834, %v13830
    %v13836 = vlaneseq
    %v13837 = vshrl.u32 %v13836, 7
    %v13838 = vsub.s32 %v12845, %v13837
    %v13839 = vrot.slane %v12672, %v13838
    %v13840 = vsel %vm12850, %v13839, %v13835
    %v13841 = vlaneseq
    %v13842 = vshrl.u32 %v13841, 7
    %v13843 = vsub.s32 %v12852, %v13842
    %v13844 = vrot.slane %v12675, %v13843
    %v13845 = vsel %vm12857, %v13844, %v13840
    %v13846 = vlaneseq
    %v13847 = vshrl.u32 %v13846, 7
    %v13848 = vsub.s32 %v12749, %v13847
    %v13849 = vrot.slane %v12678, %v13848
    %v13850 = vlaneseq
    %v13851 = vshrl.u32 %v13850, 7
    %v13852 = vsub.s32 %v12754, %v13851
    %v13853 = vrot.slane %v12681, %v13852
    %v13854 = vsel %vm12759, %v13853, %v13849
    %v13855 = vlaneseq
    %v13856 = vshrl.u32 %v13855, 7
    %v13857 = vsub.s32 %v12761, %v13856
    %v13858 = vrot.slane %v12684, %v13857
    %v13859 = vsel %vm12766, %v13858, %v13854
    %v13860 = vlaneseq
    %v13861 = vshrl.u32 %v13860, 7
    %v13862 = vsub.s32 %v12768, %v13861
    %v13863 = vrot.slane %v12687, %v13862
    %v13864 = vsel %vm12773, %v13863, %v13859
    %v13865 = vlaneseq
    %v13866 = vshrl.u32 %v13865, 7
    %v13867 = vsub.s32 %v12775, %v13866
    %v13868 = vrot.slane %v12690, %v13867
    %v13869 = vsel %vm12780, %v13868, %v13864
    %v13870 = vlaneseq
    %v13871 = vshrl.u32 %v13870, 7
    %v13872 = vsub.s32 %v12782, %v13871
    %v13873 = vrot.slane %v12693, %v13872
    %v13874 = vsel %vm12787, %v13873, %v13869
    %v13875 = vlaneseq
    %v13876 = vshrl.u32 %v13875, 7
    %v13877 = vsub.s32 %v12789, %v13876
    %v13878 = vrot.slane %v12696, %v13877
    %v13879 = vsel %vm12794, %v13878, %v13874
    %v13880 = vlaneseq
    %v13881 = vshrl.u32 %v13880, 7
    %v13882 = vsub.s32 %v12796, %v13881
    %v13883 = vrot.slane %v12699, %v13882
    %v13884 = vsel %vm12801, %v13883, %v13879
    %v13885 = vlaneseq
    %v13886 = vshrl.u32 %v13885, 7
    %v13887 = vsub.s32 %v12803, %v13886
    %v13888 = vrot.slane %v12702, %v13887
    %v13889 = vsel %vm12808, %v13888, %v13884
    %v13890 = vlaneseq
    %v13891 = vshrl.u32 %v13890, 7
    %v13892 = vsub.s32 %v12810, %v13891
    %v13893 = vrot.slane %v12705, %v13892
    %v13894 = vsel %vm12815, %v13893, %v13889
    %v13895 = vlaneseq
    %v13896 = vshrl.u32 %v13895, 7
    %v13897 = vsub.s32 %v12817, %v13896
    %v13898 = vrot.slane %v12708, %v13897
    %v13899 = vsel %vm12822, %v13898, %v13894
    %v13900 = vlaneseq
    %v13901 = vshrl.u32 %v13900, 7
    %v13902 = vsub.s32 %v12824, %v13901
    %v13903 = vrot.slane %v12711, %v13902
    %v13904 = vsel %vm12829, %v13903, %v13899
    %v13905 = vlaneseq
    %v13906 = vshrl.u32 %v13905, 7
    %v13907 = vsub.s32 %v12831, %v13906
    %v13908 = vrot.slane %v12714, %v13907
    %v13909 = vsel %vm12836, %v13908, %v13904
    %v13910 = vlaneseq
    %v13911 = vshrl.u32 %v13910, 7
    %v13912 = vsub.s32 %v12838, %v13911
    %v13913 = vrot.slane %v12717, %v13912
    %v13914 = vsel %vm12843, %v13913, %v13909
    %v13915 = vlaneseq
    %v13916 = vshrl.u32 %v13915, 7
    %v13917 = vsub.s32 %v12845, %v13916
    %v13918 = vrot.slane %v12720, %v13917
    %v13919 = vsel %vm12850, %v13918, %v13914
    %v13920 = vlaneseq
    %v13921 = vshrl.u32 %v13920, 7
    %v13922 = vsub.s32 %v12852, %v13921
    %v13923 = vrot.slane %v12723, %v13922
    %v13924 = vsel %vm12857, %v13923, %v13919
    %v13925 = vlaneseq
    %v13926 = vshrl.u32 %v13925, 7
    %v13927 = vsub.s32 %v12749, %v13926
    %v13928 = vrot.slane %v12726, %v13927
    %v13929 = vlaneseq
    %v13930 = vshrl.u32 %v13929, 7
    %v13931 = vsub.s32 %v12754, %v13930
    %v13932 = vrot.slane %v12729, %v13931
    %v13933 = vsel %vm12759, %v13932, %v13928
    %v13934 = vlaneseq
    %v13935 = vshrl.u32 %v13934, 7
    %v13936 = vsub.s32 %v12761, %v13935
    %v13937 = vrot.slane %v12732, %v13936
    %v13938 = vsel %vm12766, %v13937, %v13933
    %v13939 = vlaneseq
    %v13940 = vshrl.u32 %v13939, 7
    %v13941 = vsub.s32 %v12768, %v13940
    %v13942 = vrot.slane %v12735, %v13941
    %v13943 = vsel %vm12773, %v13942, %v13938
    %v13944 = vlaneseq
    %v13945 = vshrl.u32 %v13944, 7
    %v13946 = vsub.s32 %v12775, %v13945
    %v13947 = vrot.slane %v12738, %v13946
    %v13948 = vsel %vm12780, %v13947, %v13943
    %v13949 = vlaneseq
    %v13950 = vshrl.u32 %v13949, 7
    %v13951 = vsub.s32 %v12782, %v13950
    %v13952 = vrot.slane %v12741, %v13951
    %v13953 = vsel %vm12787, %v13952, %v13948
    %v13954 = vlaneseq
    %v13955 = vshrl.u32 %v13954, 7
    %v13956 = vsub.s32 %v12789, %v13955
    %v13957 = vrot.slane %v12744, %v13956
    %v13958 = vsel %vm12794, %v13957, %v13953
    %v13959 = vlaneseq
    %v13960 = vshrl.u32 %v13959, 7
    %v13961 = vsub.s32 %v12796, %v13960
    %v13962 = vrot.slane %v12747, %v13961
    %v13963 = vsel %vm12801, %v13962, %v13958
    %vm13964 = vcmask 1041409
    %v13965 = vsel %vm13964, %v13450, %v12858
    %v13966 = vsel %vm13964, %v13529, %v12937
    %v13967 = vsel %vm13964, %v13608, %v13016
    %v13968 = vsel %vm13964, %v13687, %v13095
    %v13969 = vsel %vm13964, %v13766, %v13174
    %v13970 = vsel %vm13964, %v13845, %v13253
    %v13971 = vsel %vm13964, %v13924, %v13332
    %v13972 = vsel %vm13964, %v13963, %v13371
    %v13973 = vcombine.low %v13965, %v13966
    %v13974 = vcombine.low %v13967, %v13968
    %v13976 = vunpack.c.l.s4 1983009808
    %v13977 = vunpack.c.0.s8 %v13976
    %v13978 = vlaneseq
    %v13979 = vshrl.u32 %v13978, 7
    %v13980 = vsub.s32 %v13977, %v13979
    %v13981 = vrot.slane %v13973, %v13980
    %v13983 = vunpack.c.l.s4 1983009808
    %v13984 = vunpack.c.0.s8 %v13983
    %v13985 = vlaneseq
    %v13986 = vshrl.u32 %v13985, 7
    %v13987 = vsub.s32 %v13984, %v13986
    %v13988 = vrot.slane %v13974, %v13987
    %v13989 = vcombine.low %v13981, %v13988
    %v13990 = vcombine.low %v13969, %v13970
    %v13991 = vcombine.low %v13971, %v13972
    %v13993 = vunpack.c.l.s4 1983009808
    %v13994 = vunpack.c.0.s8 %v13993
    %v13995 = vlaneseq
    %v13996 = vshrl.u32 %v13995, 7
    %v13997 = vsub.s32 %v13994, %v13996
    %v13998 = vrot.slane %v13990, %v13997
    %v14000 = vunpack.c.l.s4 1983009808
    %v14001 = vunpack.c.0.s8 %v14000
    %v14002 = vlaneseq
    %v14003 = vshrl.u32 %v14002, 7
    %v14004 = vsub.s32 %v14001, %v14003
    %v14005 = vrot.slane %v13991, %v14004
    %v14006 = vcombine.low %v13998, %v14005
    %v14009 = vadd.f32 %v265, %v13989
    %v14010 = vadd.f32 %v266, %v14006
    %14011 = vst [vmem:[#allocation2] sm:$0xff] %v14009
    %vm14012 = vcmask 1041408
    %vm14013 = vcmask 1043458
    %vm14014 = vmor %vm14013, %vm14012
    %vm14015 = vcmask 1045508
    %vm14016 = vmor %vm14015, %vm14014
    %vm14017 = vcmask 523270
    %vm14018 = vmor %vm14017, %vm14016
    %14019 = vst.msk [vmem:[#allocation2 + $0x8] sm:$0xff] %vm14018, %v14010
    // Predicated region
    $region14: #{tpu_custom_call.1} parent=1 // pred_check
      %p14020 = pneg %p12
    $region15: #{tpu_custom_call.1} parent=1 // pred_check_branch
      %14022 = sbr.rel (%p14020) target = $region17
    $region16: #{tpu_custom_call.1} parent=1 // pred_region
      %v14023 = vld [vmem:[#allocation2] sm:$0xff]
      %v14024 = vld [vmem:[#allocation2 + $0x8] sm:$0xff]
      %v14025 = vmul.f32 %v14023, 0.015625
      %v14026 = vmul.f32 %v14024, 0.015625
      %v14027 = vld [vmem:[%s1] sm:$0xff]
      %v14028 = vld [vmem:[%s1 + $0x8] sm:$0xff]
      %v14029 = vld [vmem:[%s1 + $0x10] sm:$0xff]
      %v14030 = vld [vmem:[%s1 + $0x18] sm:$0xff]
      %v14031 = vld [vmem:[%s1 + $0x20] sm:$0xff]
      %v14032 = vld [vmem:[%s1 + $0x28] sm:$0xff]
      %v14033 = vld [vmem:[%s1 + $0x30] sm:$0xff]
      %v14034 = vld [vmem:[%s1 + $0x38] sm:$0xff]
      %v14035 = vld [vmem:[%s1 + $0x40] sm:$0xff]
      %v14036 = vld [vmem:[%s1 + $0x48] sm:$0xff]
      %v14037 = vld [vmem:[%s1 + $0x50] sm:$0xff]
      %v14038 = vld [vmem:[%s1 + $0x58] sm:$0xff]
      %v14039 = vld [vmem:[%s1 + $0x60] sm:$0xff]
      %v14040 = vld [vmem:[%s1 + $0x68] sm:$0xff]
      %v14041 = vld [vmem:[%s1 + $0x70] sm:$0xff]
      %v14042 = vld [vmem:[%s1 + $0x78] sm:$0xff]
      %v14043 = vld [vmem:[%s1 + $0x80] sm:$0xff]
      %v14044 = vld [vmem:[%s1 + $0x88] sm:$0xff]
      %v14045 = vld [vmem:[%s1 + $0x90] sm:$0xff]
      %v14046 = vld [vmem:[%s1 + $0x98] sm:$0xff]
      %v14047 = vld [vmem:[%s1 + $0xa0] sm:$0xff]
      %v14048 = vld [vmem:[%s1 + $0xa8] sm:$0xff]
      %v14049 = vld [vmem:[%s1 + $0xb0] sm:$0xff]
      %v14050 = vld [vmem:[%s1 + $0xb8] sm:$0xff]
      %v14051 = vld [vmem:[%s1 + $0xc0] sm:$0xff]
      %v14052 = vld [vmem:[%s1 + $0xc8] sm:$0xff]
      %v14053 = vld [vmem:[%s1 + $0xd0] sm:$0xff]
      %v14054 = vld [vmem:[%s1 + $0xd8] sm:$0xff]
      %v14055 = vld [vmem:[%s1 + $0xe0] sm:$0xff]
      %v14056 = vld [vmem:[%s1 + $0xe8] sm:$0xff]
      %v14057 = vld [vmem:[%s1 + $0xf0] sm:$0xff]
      %v14058 = vld [vmem:[%s1 + $0xf8] sm:$0xff]
      %v14059 = vld [vmem:[%s1 + $0x100] sm:$0xff]
      %v14060 = vld [vmem:[%s1 + $0x108] sm:$0xff]
      %v14061 = vld [vmem:[%s1 + $0x110] sm:$0xff]
      %v14062 = vld [vmem:[%s1 + $0x118] sm:$0xff]
      %v14063 = vld [vmem:[%s1 + $0x120] sm:$0xff]
      %v14064 = vld [vmem:[%s1 + $0x128] sm:$0xff]
      %v14065 = vld [vmem:[%s1 + $0x130] sm:$0xff]
      %v14066 = vld [vmem:[%s1 + $0x138] sm:$0xff]
      %v14067 = vld [vmem:[%s1 + $0x140] sm:$0xff]
      %v14068 = vld [vmem:[%s1 + $0x148] sm:$0xff]
      %v14069 = vld [vmem:[%s1 + $0x150] sm:$0xff]
      %v14070 = vld [vmem:[%s1 + $0x158] sm:$0xff]
      %v14071 = vld [vmem:[%s1 + $0x160] sm:$0xff]
      %v14072 = vld [vmem:[%s1 + $0x168] sm:$0xff]
      %v14073 = vld [vmem:[%s1 + $0x170] sm:$0xff]
      %v14074 = vld [vmem:[%s1 + $0x178] sm:$0xff]
      %v14075 = vld [vmem:[%s1 + $0x180] sm:$0xff]
      %v14076 = vld [vmem:[%s1 + $0x188] sm:$0xff]
      %v14077 = vld [vmem:[%s1 + $0x190] sm:$0xff]
      %v14078 = vld [vmem:[%s1 + $0x198] sm:$0xff]
      %v14079 = vld [vmem:[%s1 + $0x1a0] sm:$0xff]
      %v14080 = vld [vmem:[%s1 + $0x1a8] sm:$0xff]
      %v14081 = vld [vmem:[%s1 + $0x1b0] sm:$0xff]
      %v14082 = vld [vmem:[%s1 + $0x1b8] sm:$0xff]
      %v14083 = vld [vmem:[%s1 + $0x1c0] sm:$0xff]
      %v14084 = vld [vmem:[%s1 + $0x1c8] sm:$0xff]
      %v14085 = vld [vmem:[%s1 + $0x1d0] sm:$0xff]
      %v14086 = vld [vmem:[%s1 + $0x1d8] sm:$0xff]
      %v14087 = vld [vmem:[%s1 + $0x1e0] sm:$0xff]
      %v14088 = vld [vmem:[%s1 + $0x1e8] sm:$0xff]
      %v14089 = vld [vmem:[%s1 + $0x1f0] sm:$0xff]
      %v14090 = vld [vmem:[%s1 + $0x1f8] sm:$0xff]
      %v14091 = vld [vmem:[%s1 + $0x200] sm:$0xff]
      %v14092 = vld [vmem:[%s1 + $0x208] sm:$0xff]
      %v14093 = vld [vmem:[%s1 + $0x210] sm:$0xff]
      %v14094 = vld [vmem:[%s1 + $0x218] sm:$0xff]
      %v14095 = vld [vmem:[%s1 + $0x220] sm:$0xff]
      %v14096 = vld [vmem:[%s1 + $0x228] sm:$0xff]
      %v14097 = vld [vmem:[%s1 + $0x230] sm:$0xff]
      %v14098 = vld [vmem:[%s1 + $0x238] sm:$0xff]
      %v14099 = vld [vmem:[%s1 + $0x240] sm:$0xff]
      %v14100 = vld [vmem:[%s1 + $0x248] sm:$0xff]
      %v14101 = vld [vmem:[%s1 + $0x250] sm:$0xff]
      %v14102 = vld [vmem:[%s1 + $0x258] sm:$0xff]
      %v14103 = vld [vmem:[%s1 + $0x260] sm:$0xff]
      %v14104 = vld [vmem:[%s1 + $0x268] sm:$0xff]
      %v14105 = vld [vmem:[%s1 + $0x270] sm:$0xff]
      %v14106 = vld [vmem:[%s1 + $0x278] sm:$0xff]
      %v14107 = vld [vmem:[%s1 + $0x280] sm:$0xff]
      %v14108 = vld [vmem:[%s1 + $0x288] sm:$0xff]
      %v14109 = vld [vmem:[%s1 + $0x290] sm:$0xff]
      %v14110 = vld [vmem:[%s1 + $0x298] sm:$0xff]
      %v14111 = vld [vmem:[%s1 + $0x2a0] sm:$0xff]
      %v14112 = vld [vmem:[%s1 + $0x2a8] sm:$0xff]
      %v14113 = vld [vmem:[%s1 + $0x2b0] sm:$0xff]
      %v14114 = vld [vmem:[%s1 + $0x2b8] sm:$0xff]
      %v14115 = vld [vmem:[%s1 + $0x2c0] sm:$0xff]
      %v14116 = vld [vmem:[%s1 + $0x2c8] sm:$0xff]
      %v14117 = vld [vmem:[%s1 + $0x2d0] sm:$0xff]
      %v14118 = vld [vmem:[%s1 + $0x2d8] sm:$0xff]
      %v14119 = vld [vmem:[%s1 + $0x2e0] sm:$0xff]
      %v14120 = vld [vmem:[%s1 + $0x2e8] sm:$0xff]
      %v14121 = vld [vmem:[%s1 + $0x2f0] sm:$0xff]
      %v14122 = vld [vmem:[%s1 + $0x2f8] sm:$0xff]
      %v14123 = vld [vmem:[%s1 + $0x300] sm:$0xff]
      %v14124 = vld [vmem:[%s1 + $0x308] sm:$0xff]
      %v14125 = vld [vmem:[%s1 + $0x310] sm:$0xff]
      %v14126 = vld [vmem:[%s1 + $0x318] sm:$0xff]
      %v14127 = vld [vmem:[%s1 + $0x320] sm:$0xff]
      %v14128 = vld [vmem:[%s1 + $0x328] sm:$0xff]
      %v14129 = vld [vmem:[%s1 + $0x330] sm:$0xff]
      %v14130 = vld [vmem:[%s1 + $0x338] sm:$0xff]
      %v14131 = vld [vmem:[%s1 + $0x340] sm:$0xff]
      %v14132 = vld [vmem:[%s1 + $0x348] sm:$0xff]
      %v14133 = vld [vmem:[%s1 + $0x350] sm:$0xff]
      %v14134 = vld [vmem:[%s1 + $0x358] sm:$0xff]
      %v14135 = vld [vmem:[%s1 + $0x360] sm:$0xff]
      %v14136 = vld [vmem:[%s1 + $0x368] sm:$0xff]
      %v14137 = vld [vmem:[%s1 + $0x370] sm:$0xff]
      %v14138 = vld [vmem:[%s1 + $0x378] sm:$0xff]
      %v14139 = vld [vmem:[%s1 + $0x380] sm:$0xff]
      %v14140 = vld [vmem:[%s1 + $0x388] sm:$0xff]
      %v14141 = vld [vmem:[%s1 + $0x390] sm:$0xff]
      %v14142 = vld [vmem:[%s1 + $0x398] sm:$0xff]
      %v14143 = vld [vmem:[%s1 + $0x3a0] sm:$0xff]
      %v14144 = vld [vmem:[%s1 + $0x3a8] sm:$0xff]
      %v14145 = vld [vmem:[%s1 + $0x3b0] sm:$0xff]
      %v14146 = vld [vmem:[%s1 + $0x3b8] sm:$0xff]
      %v14149 = vcombine.high %v14025, %v14025
      %v14151 = vunpack.c.l.s4 1983009808
      %v14152 = vunpack.c.0.s8 %v14151
      %v14153 = vlaneseq
      %v14154 = vshrl.u32 %v14153, 7
      %v14155 = vsub.s32 %v14152, %v14154
      %v14156 = vrot.slane %v14025, %v14155
      %v14158 = vunpack.c.l.s4 1983009808
      %v14159 = vunpack.c.0.s8 %v14158
      %v14160 = vlaneseq
      %v14161 = vshrl.u32 %v14160, 7
      %v14162 = vsub.s32 %v14159, %v14161
      %v14163 = vrot.slane %v14149, %v14162
      %v14164 = vcombine.high %v14156, %v14156
      %v14165 = vcombine.high %v14163, %v14163
      %v14166 = vcombine.high %v14026, %v14026
      %v14168 = vunpack.c.l.s4 1983009808
      %v14169 = vunpack.c.0.s8 %v14168
      %v14170 = vlaneseq
      %v14171 = vshrl.u32 %v14170, 7
      %v14172 = vsub.s32 %v14169, %v14171
      %v14173 = vrot.slane %v14026, %v14172
      %v14175 = vunpack.c.l.s4 1983009808
      %v14176 = vunpack.c.0.s8 %v14175
      %v14177 = vlaneseq
      %v14178 = vshrl.u32 %v14177, 7
      %v14179 = vsub.s32 %v14176, %v14178
      %v14180 = vrot.slane %v14166, %v14179
      %v14181 = vcombine.high %v14173, %v14173
      %v14182 = vcombine.high %v14180, %v14180
      %v14190 = vsel %vm267, %v14182, 0
      %14192 = vmatprep.subr.mxu0 0.0
      %14193 = vmatpush1.msra.mxu0 %v14042
      %14194 = vmatprep.subr.mxu0 0.0
      %14195 = vmatpush1.msra.mxu0 %v14041
      %14196 = vmatprep.subr.mxu0 0.0
      %14197 = vmatpush1.msra.mxu0 %v14040
      %14198 = vmatprep.subr.mxu0 0.0
      %14199 = vmatpush1.msra.mxu0 %v14039
      %14200 = vmatprep.subr.mxu0 0.0
      %14201 = vmatpush1.msra.mxu0 %v14038
      %14202 = vmatprep.subr.mxu0 0.0
      %14203 = vmatpush1.msra.mxu0 %v14037
      %14204 = vmatprep.subr.mxu0 0.0
      %14205 = vmatpush1.msra.mxu0 %v14036
      %14206 = vmatprep.subr.mxu0 0.0
      %14207 = vmatpush1.msra.mxu0 %v14035
      %14208 = vmatprep.subr.mxu0 0.0
      %14209 = vmatpush1.msra.mxu0 %v14034
      %14210 = vmatprep.subr.mxu0 0.0
      %14211 = vmatpush1.msra.mxu0 %v14033
      %14212 = vmatprep.subr.mxu0 0.0
      %14213 = vmatpush1.msra.mxu0 %v14032
      %14214 = vmatprep.subr.mxu0 0.0
      %14215 = vmatpush1.msra.mxu0 %v14031
      %14216 = vmatprep.subr.mxu0 0.0
      %14217 = vmatpush1.msra.mxu0 %v14030
      %14218 = vmatprep.subr.mxu0 0.0
      %14219 = vmatpush1.msra.mxu0 %v14029
      %14220 = vmatprep.subr.mxu0 0.0
      %14221 = vmatpush1.msra.mxu0 %v14028
      %14222 = vmatprep.subr.mxu0 0.0
      %14223 = vmatpush1.msra.mxu0 %v14027
      %14224 = vmatprep.subr.mxu0 0.0
      %14225 = vmatpush2.msra.mxu0 %v14058
      %14226 = vmatprep.subr.mxu0 0.0
      %14227 = vmatpush2.msra.mxu0 %v14057
      %14228 = vmatprep.subr.mxu0 0.0
      %14229 = vmatpush2.msra.mxu0 %v14056
      %14230 = vmatprep.subr.mxu0 0.0
      %14231 = vmatpush2.msra.mxu0 %v14055
      %14232 = vmatprep.subr.mxu0 0.0
      %14233 = vmatpush2.msra.mxu0 %v14054
      %14234 = vmatprep.subr.mxu0 0.0
      %14235 = vmatpush2.msra.mxu0 %v14053
      %14236 = vmatprep.subr.mxu0 0.0
      %14237 = vmatpush2.msra.mxu0 %v14052
      %14238 = vmatprep.subr.mxu0 0.0
      %14239 = vmatpush2.msra.mxu0 %v14051
      %14240 = vmatprep.subr.mxu0 0.0
      %14241 = vmatpush2.msra.mxu0 %v14050
      %14242 = vmatprep.subr.mxu0 0.0
      %14243 = vmatpush2.msra.mxu0 %v14049
      %14244 = vmatprep.subr.mxu0 0.0
      %14245 = vmatpush2.msra.mxu0 %v14048
      %14246 = vmatprep.subr.mxu0 0.0
      %14247 = vmatpush2.msra.mxu0 %v14047
      %14248 = vmatprep.subr.mxu0 0.0
      %14249 = vmatpush2.msra.mxu0 %v14046
      %14250 = vmatprep.subr.mxu0 0.0
      %14251 = vmatpush2.msra.mxu0 %v14045
      %14252 = vmatprep.subr.mxu0 0.0
      %14253 = vmatpush2.msra.mxu0 %v14044
      %14254 = vmatprep.subr.mxu0 0.0
      %14255 = vmatpush2.msra.mxu0 %v14043
      %14256 = vmatprep.mubr.f32.mxu0 %v14164
      %14257 = vmatmul.mubr.f32.gmra.mxu0 %v14156
      %v14258 = vpop.f32.mrf.mxu0
      %v14259 = vadd.f32 0.0, %v14258
      %v14260 = vpop.f32.mrf.mxu0
      %14261 = vdwg.mxu0
      %14262 = vmatprep.subr.mxu0 0.0
      %14263 = vmatpush1.msra.mxu0 %v14074
      %14264 = vmatprep.subr.mxu0 0.0
      %14265 = vmatpush1.msra.mxu0 %v14073
      %14266 = vmatprep.subr.mxu0 0.0
      %14267 = vmatpush1.msra.mxu0 %v14072
      %14268 = vmatprep.subr.mxu0 0.0
      %14269 = vmatpush1.msra.mxu0 %v14071
      %14270 = vmatprep.subr.mxu0 0.0
      %14271 = vmatpush1.msra.mxu0 %v14070
      %14272 = vmatprep.subr.mxu0 0.0
      %14273 = vmatpush1.msra.mxu0 %v14069
      %14274 = vmatprep.subr.mxu0 0.0
      %14275 = vmatpush1.msra.mxu0 %v14068
      %14276 = vmatprep.subr.mxu0 0.0
      %14277 = vmatpush1.msra.mxu0 %v14067
      %14278 = vmatprep.subr.mxu0 0.0
      %14279 = vmatpush1.msra.mxu0 %v14066
      %14280 = vmatprep.subr.mxu0 0.0
      %14281 = vmatpush1.msra.mxu0 %v14065
      %14282 = vmatprep.subr.mxu0 0.0
      %14283 = vmatpush1.msra.mxu0 %v14064
      %14284 = vmatprep.subr.mxu0 0.0
      %14285 = vmatpush1.msra.mxu0 %v14063
      %14286 = vmatprep.subr.mxu0 0.0
      %14287 = vmatpush1.msra.mxu0 %v14062
      %14288 = vmatprep.subr.mxu0 0.0
      %14289 = vmatpush1.msra.mxu0 %v14061
      %14290 = vmatprep.subr.mxu0 0.0
      %14291 = vmatpush1.msra.mxu0 %v14060
      %14292 = vmatprep.subr.mxu0 0.0
      %14293 = vmatpush1.msra.mxu0 %v14059
      %14294 = vmatprep.subr.mxu0 0.0
      %14295 = vmatpush2.msra.mxu0 %v14090
      %14296 = vmatprep.subr.mxu0 0.0
      %14297 = vmatpush2.msra.mxu0 %v14089
      %14298 = vmatprep.subr.mxu0 0.0
      %14299 = vmatpush2.msra.mxu0 %v14088
      %14300 = vmatprep.subr.mxu0 0.0
      %14301 = vmatpush2.msra.mxu0 %v14087
      %14302 = vmatprep.subr.mxu0 0.0
      %14303 = vmatpush2.msra.mxu0 %v14086
      %14304 = vmatprep.subr.mxu0 0.0
      %14305 = vmatpush2.msra.mxu0 %v14085
      %14306 = vmatprep.subr.mxu0 0.0
      %14307 = vmatpush2.msra.mxu0 %v14084
      %14308 = vmatprep.subr.mxu0 0.0
      %14309 = vmatpush2.msra.mxu0 %v14083
      %14310 = vmatprep.subr.mxu0 0.0
      %14311 = vmatpush2.msra.mxu0 %v14082
      %14312 = vmatprep.subr.mxu0 0.0
      %14313 = vmatpush2.msra.mxu0 %v14081
      %14314 = vmatprep.subr.mxu0 0.0
      %14315 = vmatpush2.msra.mxu0 %v14080
      %14316 = vmatprep.subr.mxu0 0.0
      %14317 = vmatpush2.msra.mxu0 %v14079
      %14318 = vmatprep.subr.mxu0 0.0
      %14319 = vmatpush2.msra.mxu0 %v14078
      %14320 = vmatprep.subr.mxu0 0.0
      %14321 = vmatpush2.msra.mxu0 %v14077
      %14322 = vmatprep.subr.mxu0 0.0
      %14323 = vmatpush2.msra.mxu0 %v14076
      %14324 = vmatprep.subr.mxu0 0.0
      %14325 = vmatpush2.msra.mxu0 %v14075
      %14326 = vmatprep.mubr.f32.mxu0 %v14165
      %14327 = vmatmul.mubr.f32.gmra.mxu0 %v14163
      %v14328 = vpop.f32.mrf.mxu0
      %v14329 = vadd.f32 %v14259, %v14328
      %v14330 = vpop.f32.mrf.mxu0
      %14331 = vdwg.mxu0
      %14332 = vmatprep.subr.mxu0 0.0
      %14333 = vmatpush1.msra.mxu0 %v14106
      %14334 = vmatprep.subr.mxu0 0.0
      %14335 = vmatpush1.msra.mxu0 %v14105
      %14336 = vmatprep.subr.mxu0 0.0
      %14337 = vmatpush1.msra.mxu0 %v14104
      %14338 = vmatprep.subr.mxu0 0.0
      %14339 = vmatpush1.msra.mxu0 %v14103
      %14340 = vmatprep.subr.mxu0 0.0
      %14341 = vmatpush1.msra.mxu0 %v14102
      %14342 = vmatprep.subr.mxu0 0.0
      %14343 = vmatpush1.msra.mxu0 %v14101
      %14344 = vmatprep.subr.mxu0 0.0
      %14345 = vmatpush1.msra.mxu0 %v14100
      %14346 = vmatprep.subr.mxu0 0.0
      %14347 = vmatpush1.msra.mxu0 %v14099
      %14348 = vmatprep.subr.mxu0 0.0
      %14349 = vmatpush1.msra.mxu0 %v14098
      %14350 = vmatprep.subr.mxu0 0.0
      %14351 = vmatpush1.msra.mxu0 %v14097
      %14352 = vmatprep.subr.mxu0 0.0
      %14353 = vmatpush1.msra.mxu0 %v14096
      %14354 = vmatprep.subr.mxu0 0.0
      %14355 = vmatpush1.msra.mxu0 %v14095
      %14356 = vmatprep.subr.mxu0 0.0
      %14357 = vmatpush1.msra.mxu0 %v14094
      %14358 = vmatprep.subr.mxu0 0.0
      %14359 = vmatpush1.msra.mxu0 %v14093
      %14360 = vmatprep.subr.mxu0 0.0
      %14361 = vmatpush1.msra.mxu0 %v14092
      %14362 = vmatprep.subr.mxu0 0.0
      %14363 = vmatpush1.msra.mxu0 %v14091
      %14364 = vmatprep.subr.mxu0 0.0
      %14365 = vmatpush2.msra.mxu0 %v14122
      %14366 = vmatprep.subr.mxu0 0.0
      %14367 = vmatpush2.msra.mxu0 %v14121
      %14368 = vmatprep.subr.mxu0 0.0
      %14369 = vmatpush2.msra.mxu0 %v14120
      %14370 = vmatprep.subr.mxu0 0.0
      %14371 = vmatpush2.msra.mxu0 %v14119
      %14372 = vmatprep.subr.mxu0 0.0
      %14373 = vmatpush2.msra.mxu0 %v14118
      %14374 = vmatprep.subr.mxu0 0.0
      %14375 = vmatpush2.msra.mxu0 %v14117
      %14376 = vmatprep.subr.mxu0 0.0
      %14377 = vmatpush2.msra.mxu0 %v14116
      %14378 = vmatprep.subr.mxu0 0.0
      %14379 = vmatpush2.msra.mxu0 %v14115
      %14380 = vmatprep.subr.mxu0 0.0
      %14381 = vmatpush2.msra.mxu0 %v14114
      %14382 = vmatprep.subr.mxu0 0.0
      %14383 = vmatpush2.msra.mxu0 %v14113
      %14384 = vmatprep.subr.mxu0 0.0
      %14385 = vmatpush2.msra.mxu0 %v14112
      %14386 = vmatprep.subr.mxu0 0.0
      %14387 = vmatpush2.msra.mxu0 %v14111
      %14388 = vmatprep.subr.mxu0 0.0
      %14389 = vmatpush2.msra.mxu0 %v14110
      %14390 = vmatprep.subr.mxu0 0.0
      %14391 = vmatpush2.msra.mxu0 %v14109
      %14392 = vmatprep.subr.mxu0 0.0
      %14393 = vmatpush2.msra.mxu0 %v14108
      %14394 = vmatprep.subr.mxu0 0.0
      %14395 = vmatpush2.msra.mxu0 %v14107
      %14396 = vmatprep.mubr.f32.mxu0 %v14181
      %14397 = vmatmul.mubr.f32.gmra.mxu0 %v14173
      %v14398 = vpop.f32.mrf.mxu0
      %v14399 = vadd.f32 %v14329, %v14398
      %v14400 = vpop.f32.mrf.mxu0
      %14401 = vdwg.mxu0
      %14402 = vmatprep.subr.mxu0 0.0
      %14403 = vmatpush1.msra.mxu0 %v14138
      %14404 = vmatprep.subr.mxu0 0.0
      %14405 = vmatpush1.msra.mxu0 %v14137
      %14406 = vmatprep.subr.mxu0 0.0
      %14407 = vmatpush1.msra.mxu0 %v14136
      %14408 = vmatprep.subr.mxu0 0.0
      %14409 = vmatpush1.msra.mxu0 %v14135
      %14410 = vmatprep.subr.mxu0 0.0
      %14411 = vmatpush1.msra.mxu0 %v14134
      %14412 = vmatprep.subr.mxu0 0.0
      %14413 = vmatpush1.msra.mxu0 %v14133
      %14414 = vmatprep.subr.mxu0 0.0
      %14415 = vmatpush1.msra.mxu0 %v14132
      %14416 = vmatprep.subr.mxu0 0.0
      %14417 = vmatpush1.msra.mxu0 %v14131
      %14418 = vmatprep.subr.mxu0 0.0
      %14419 = vmatpush1.msra.mxu0 %v14130
      %14420 = vmatprep.subr.mxu0 0.0
      %14421 = vmatpush1.msra.mxu0 %v14129
      %14422 = vmatprep.subr.mxu0 0.0
      %14423 = vmatpush1.msra.mxu0 %v14128
      %14424 = vmatprep.subr.mxu0 0.0
      %14425 = vmatpush1.msra.mxu0 %v14127
      %14426 = vmatprep.subr.mxu0 0.0
      %14427 = vmatpush1.msra.mxu0 %v14126
      %14428 = vmatprep.subr.mxu0 0.0
      %14429 = vmatpush1.msra.mxu0 %v14125
      %14430 = vmatprep.subr.mxu0 0.0
      %14431 = vmatpush1.msra.mxu0 %v14124
      %14432 = vmatprep.subr.mxu0 0.0
      %14433 = vmatpush1.msra.mxu0 %v14123
      %14434 = vmatprep.subr.mxu0 0.0
      %14435 = vmatpush2.msra.mxu0 0.0
      %14436 = vmatprep.subr.mxu0 0.0
      %14437 = vmatpush2.msra.mxu0 0.0
      %14438 = vmatprep.subr.mxu0 0.0
      %14439 = vmatpush2.msra.mxu0 0.0
      %14440 = vmatprep.subr.mxu0 0.0
      %14441 = vmatpush2.msra.mxu0 0.0
      %14442 = vmatprep.subr.mxu0 0.0
      %14443 = vmatpush2.msra.mxu0 0.0
      %14444 = vmatprep.subr.mxu0 0.0
      %14445 = vmatpush2.msra.mxu0 0.0
      %14446 = vmatprep.subr.mxu0 0.0
      %14447 = vmatpush2.msra.mxu0 0.0
      %14448 = vmatprep.subr.mxu0 0.0
      %14449 = vmatpush2.msra.mxu0 0.0
      %14450 = vmatprep.subr.mxu0 0.0
      %14451 = vmatpush2.msra.mxu0 %v14146
      %14452 = vmatprep.subr.mxu0 0.0
      %14453 = vmatpush2.msra.mxu0 %v14145
      %14454 = vmatprep.subr.mxu0 0.0
      %14455 = vmatpush2.msra.mxu0 %v14144
      %14456 = vmatprep.subr.mxu0 0.0
      %14457 = vmatpush2.msra.mxu0 %v14143
      %14458 = vmatprep.subr.mxu0 0.0
      %14459 = vmatpush2.msra.mxu0 %v14142
      %14460 = vmatprep.subr.mxu0 0.0
      %14461 = vmatpush2.msra.mxu0 %v14141
      %14462 = vmatprep.subr.mxu0 0.0
      %14463 = vmatpush2.msra.mxu0 %v14140
      %14464 = vmatprep.subr.mxu0 0.0
      %14465 = vmatpush2.msra.mxu0 %v14139
      %14466 = vmatprep.mubr.f32.mxu0 %v14190
      %14467 = vmatmul.mubr.f32.gmra.mxu0 %v14180
      %v14468 = vpop.f32.mrf.mxu0
      %v14469 = vadd.f32 %v14399, %v14468
      %v14470 = vpop.f32.mrf.mxu0
      %14471 = vdwg.mxu0
      %vm14472 = vcmask 25600
      %14473 = vst.msk [vmem:[#allocation3] sm:$0x3] %vm14472, %v14469
    $region17: #{tpu_custom_call.1} parent=1 // pred_fallthru
      _
    // Predicated region
    $region18: #{tpu_custom_call.1} parent=1 // pred_check
      _
    $region19: #{tpu_custom_call.1} parent=1 // pred_check_branch
      %14475 = sbr.rel (0) target = $region21
    $region20: #{tpu_custom_call.1} parent=1 // pred_region
      %s14477 = ssub.s32 32, 32
      %14478 = vsyncadd [#allocation4], %s14477
      %s14480 = sshll.u32 [#allocation3], 4
      %s14481 = int_to_ptr.vmem [resolvable:$true] %s14480
      %14483 = dma.vmem_to_hbm [thread:$0]  %s14481, 32, %s2, [#allocation4]
    $region21: #{tpu_custom_call.1} parent=1 // pred_fallthru
      _
    // Predicated region
    $region22: #{tpu_custom_call.1} parent=1 // pred_check
      _
    $region23: #{tpu_custom_call.1} parent=1 // pred_check_branch
      %14485 = sbr.rel (0) target = $region25
    $region24: #{tpu_custom_call.1} parent=1 // pred_region
      %14486 = dma.done [#allocation4], 32
    $region25: #{tpu_custom_call.1} parent=1 // pred_fallthru
      _
    %14487 = vsyncpa [#allocation4], 1

</llo_original>
